<compile_context>
chip_gen: v7x
topology: tpu7x:2x2x1
jax: 0.10.0
libtpu: 0.0.40
codegen_flags: <defaults>
</compile_context>

<pallas_src>
import functools

import jax
import jax.numpy as jnp
from jax.experimental import pallas as pl
from jax.experimental.pallas import tpu as pltpu

NEG_SLOPE = 0.1


def _leaky(x):
    # LeakyReLU(0.1) == max(x, 0.1*x)
    return jnp.maximum(x, NEG_SLOPE * x)


# --------------------------------- kernel ---------------------------------
def _disc_kernel(x_ref, pf_ref,
                 w0a_ref, b0a_ref, w0b_ref, b0b_ref, w0p_ref, b0p_ref,
                 wc1_ref, bc1_ref, wc2_ref, bc2_ref, wbp_ref, bbp_ref,
                 wfc_ref, bfc_ref,
                 out_ref, pool_ref, *, L):
    f32 = jnp.float32
    bf16 = jnp.bfloat16

    x = x_ref[0].astype(f32)                    # (M0, CP): batch folded into M
    M0 = x.shape[0]

    def keep_masks(M, Lcur):
        # One boolean (M,1) mask pair per level (reused by both convs of the
        # level): marks the first/last position of each batch element.
        pos = jax.lax.broadcasted_iota(jnp.int32, (M, 1), 0) % Lcur
        return pos != 0, pos != (Lcur - 1)

    def conv_k3(v, taps, b, keep_p, keep_n):
        # 'same' Conv1d(k=3, pad=1) as three accumulating bf16 (M,CP)x(CP,CP)
        # dots with f32 accumulation (no (M,3CP) concat temporary).  Halo rows
        # at batch-element boundaries are zeroed via the boolean masks.
        M = v.shape[0]
        vp = jnp.where(keep_p, pltpu.roll(v, shift=1, axis=0), 0.0)      # v[l-1]
        vn = jnp.where(keep_n, pltpu.roll(v, shift=M - 1, axis=0), 0.0)  # v[l+1]
        acc = jnp.dot(vp.astype(bf16), taps[0], preferred_element_type=f32)
        acc = acc + jnp.dot(v.astype(bf16), taps[1], preferred_element_type=f32)
        acc = acc + jnp.dot(vn.astype(bf16), taps[2], preferred_element_type=f32)
        return acc + b

    def avgpool2(v):
        # AvgPool1d(2): stage in the persistent VMEM scratch, read back
        # even/odd rows with sublane-strided loads.  O(M*CP) VPU work.
        M = v.shape[0]
        pool_ref[pl.ds(0, M), :] = v
        ev = pool_ref[pl.ds(0, M // 2, stride=2), :]
        od = pool_ref[pl.ds(1, M // 2, stride=2), :]
        return (ev + od) * 0.5

    # ---- ResBlockD_0: [conv,LReLU,conv,pool] + [pool,1x1]; the bypass conv is
    #      commuted in front of the pool and fused -> one pooling pass. ----
    kp0, kn0 = keep_masks(M0, L)
    h = conv_k3(x, (w0a_ref[0], w0a_ref[1], w0a_ref[2]), b0a_ref[...], kp0, kn0)
    h = _leaky(h)
    h = conv_k3(h, (w0b_ref[0], w0b_ref[1], w0b_ref[2]), b0b_ref[...], kp0, kn0)
    byp = jnp.dot(x.astype(bf16), w0p_ref[...],
                  preferred_element_type=f32) + b0p_ref[...]
    y = avgpool2(h + byp)

    # ---- 3 x ResBlockD(stride=2): [LReLU,conv,LReLU,conv,pool] + [1x1,pool] ----
    Lcur = L // 2
    for i in range(3):
        M = y.shape[0]
        keep_p, keep_n = keep_masks(M, Lcur)
        h = _leaky(y)
        h = conv_k3(h, (wc1_ref[3 * i], wc1_ref[3 * i + 1], wc1_ref[3 * i + 2]),
                    bc1_ref[i], keep_p, keep_n)
        h = _leaky(h)
        h = conv_k3(h, (wc2_ref[3 * i], wc2_ref[3 * i + 1], wc2_ref[3 * i + 2]),
                    bc2_ref[i], keep_p, keep_n)
        byp = jnp.dot(y.astype(bf16), wbp_ref[i],
                      preferred_element_type=f32) + bbp_ref[i]
        y = avgpool2(h + byp)
        Lcur //= 2

    # ---- LeakyReLU -> per-batch-element mean -> Linear (lane-dense output) ----
    y = _leaky(y)
    pooled = jnp.dot(pf_ref[...], y, preferred_element_type=f32)         # (bb, CP)
    out = jnp.dot(pooled, wfc_ref[...],
                  preferred_element_type=f32) + bfc_ref[...]             # (bb, 128)
    out_ref[0] = out            # lane-dense store; lane 0 carries the real logit


# --------------------------------- wrapper ---------------------------------
def _mean_pool_matrix(bb, lf):
    # Per-batch-element mean over the remaining lf positions: (bb, bb*lf).
    r = jnp.arange(bb)[:, None]
    c = jnp.arange(bb * lf)[None, :]
    return jnp.where(c // lf == r, 1.0 / lf, 0.0).astype(jnp.float32)


def _pick_batch_block(B, L, CP):
    # Largest divisor of B that (a) keeps G >= 2 when B > 1 (both v7x TCs are
    # used by the "parallel" grid axis) and (b) keeps the live f32 activation
    # working set comfortably inside VMEM (v7x has only 64 MiB).
    cap = min(8, B // 2) if B > 1 else 1
    budget = 20 * 1024 * 1024
    bb = 1
    for d in range(1, cap + 1):
        if B % d == 0 and 10 * d * L * CP * 4 <= budget:
            bb = d
    return bb


def _flops_estimate(B, L, CP):
    f = 0
    M = B * L
    f += 2 * (2 * M * (3 * CP) * CP) + 2 * M * CP * CP     # level-0 convs + bypass
    M //= 2
    for _ in range(3):
        f += 2 * (2 * M * (3 * CP) * CP) + 2 * M * CP * CP
        M //= 2
    f += 2 * B * (L // 16) * CP                             # final mean
    f += 2 * B * CP * 128                                   # fc
    return int(f)


def resnet_sn_discriminator(x, kp, *, batch_block=None):
    B, L, C = x.shape
    assert L % 16 == 0 and L >= 16, "seq_len must be a multiple of 16"
    CP = kp['w0p'].shape[0]                   # lane-padded channel count
    assert C <= CP and kp['wfc'].shape[0] == CP

    bb = batch_block if batch_block is not None else _pick_batch_block(B, L, CP)
    assert B % bb == 0, "batch must be divisible by batch_block"
    G = B // bb
    M0 = bb * L

    # channels-last, lane-padded, bf16-streamed; batch folded into matmul M.
    xg = jnp.pad(x, ((0, 0), (0, 0), (0, CP - C))).astype(jnp.bfloat16)
    xg = xg.reshape(G, M0, CP)
    pf = _mean_pool_matrix(bb, L // 16)       # tiny (bb, bb*L/16) final-mean matrix

    arrs = (xg, pf,
            kp['w0a'], kp['b0a'], kp['w0b'], kp['b0b'], kp['w0p'], kp['b0p'],
            kp['wc1'], kp['bc1'], kp['wc2'], kp['bc2'], kp['wbp'], kp['bbp'],
            kp['wfc'], kp['bfc'])

    # explicit VMEM budget: x block (double-buffered) + single-buffered weights
    # + scratch + ~10 live (M0, CP) f32 activation slabs, with 2x headroom.
    weight_bytes = int(sum(a.size * a.dtype.itemsize for a in arrs[1:]))
    est = (2 * M0 * CP * 2 + weight_bytes + 10 * M0 * CP * 4 + 2 * bb * 128 * 4)
    vmem_limit = int(min(56 * 1024 * 1024, max(32 * 1024 * 1024, 2 * est)))

    bytes_accessed = int(sum(a.size * a.dtype.itemsize for a in arrs)
                         + G * bb * 128 * 4)

    def build_specs(single_buffer):
        def invariant(a):
            idx = lambda g, _n=a.ndim: (0,) * _n
            if single_buffer:
                # grid-invariant: never re-fetched, no need for double buffers
                return pl.BlockSpec(a.shape, idx, pipeline_mode=pl.Buffered(1))
            return pl.BlockSpec(a.shape, idx)
        in_specs = [pl.BlockSpec((1, M0, CP), lambda g: (g, 0, 0))]
        in_specs += [invariant(a) for a in arrs[1:]]
        out_spec = pl.BlockSpec((1, bb, 128), lambda g: (g, 0, 0))
        return in_specs, out_spec

    def run(single_buffer):
        in_specs, out_spec = build_specs(single_buffer)
        return pl.pallas_call(
            functools.partial(_disc_kernel, L=L),
            out_shape=jax.ShapeDtypeStruct((G, bb, 128), jnp.float32),
            grid=(G,),
            in_specs=in_specs,
            out_specs=out_spec,
            scratch_shapes=[pltpu.VMEM((M0, CP), jnp.float32)],
            compiler_params=pltpu.CompilerParams(
                dimension_semantics=("parallel",),
                vmem_limit_bytes=vmem_limit),
            cost_estimate=pl.CostEstimate(
                flops=_flops_estimate(B, L, CP),
                transcendentals=0,
                bytes_accessed=bytes_accessed),
        )(*arrs)

    try:
        out = run(single_buffer=True)
    except Exception:  # conservative fallback if pipeline_mode is unsupported
        out = run(single_buffer=False)
    return out.reshape(B, 128)[:, :1]


# --------------------- deterministic parameter creation ---------------------
def _xavier_uniform(key, shape, gain):
    if len(shape) == 3:                        # Conv1d (Cout, Cin, K)
        fan_out, fan_in = shape[0] * shape[2], shape[1] * shape[2]
    else:                                      # Linear (out, in)
        fan_out, fan_in = shape
    limit = gain * (6.0 / (fan_in + fan_out)) ** 0.5
    return jax.random.uniform(key, shape, jnp.float32, -limit, limit)


def _bias_init(key, shape, fan_in):
    bound = 1.0 / (fan_in ** 0.5)
    return jax.random.uniform(key, shape, jnp.float32, -bound, bound)


def _spectral_norm(w, key, n_power_iters=1):
    # SpectralNorm forward: w / sigma, sigma via power iteration on w.view(out,-1)
    h = w.shape[0]
    w2 = w.reshape(h, -1)
    u = jax.random.normal(key, (h,), jnp.float32)
    u = u / (jnp.linalg.norm(u) + 1e-12)
    v = None
    for _ in range(n_power_iters):
        v = w2.T @ u
        v = v / (jnp.linalg.norm(v) + 1e-12)
        u = w2 @ v
        u = u / (jnp.linalg.norm(u) + 1e-12)
    sigma = u @ (w2 @ v)
    return w / sigma


def make_params(key, hidden, n_chars, lanes=128):
    keys = iter(jax.random.split(key, 64))
    pt = {}

    def conv(out_c, in_c, k, gain):
        w = _xavier_uniform(next(keys), (out_c, in_c, k), gain)
        w = _spectral_norm(w, next(keys))
        b = _bias_init(next(keys), (out_c,), in_c * k)
        return w, b

    pt['w0a'], pt['b0a'] = conv(hidden, n_chars, 3, 1.0)          # ResBlockD_0.conv1
    pt['w0b'], pt['b0b'] = conv(hidden, hidden, 3, 1.0)           # ResBlockD_0.conv2
    pt['w0p'], pt['b0p'] = conv(hidden, n_chars, 1, 2.0 ** 0.5)   # ResBlockD_0.bypass

    for name, gain, k in (('wc1', 1.0, 3), ('wc2', 1.0, 3), ('wbp', 2.0 ** 0.5, 1)):
        ws, bs = [], []
        for _ in range(3):                                        # 3 ResBlockD(stride=2)
            w, b = conv(hidden, hidden, k, gain)
            ws.append(w)
            bs.append(b)
        pt[name] = jnp.stack(ws)
        pt[name.replace('w', 'b', 1)] = jnp.stack(bs)

    wfc = _spectral_norm(_xavier_uniform(next(keys), (1, hidden), 1.0), next(keys))
    pt['wfc'] = wfc
    pt['bfc'] = _bias_init(next(keys), (1,), hidden)

    # ---- kernel layout: channels-last, lane-padded to CP, bf16 MXU weights ----
    CP = lanes * max(1, -(-max(hidden, n_chars) // lanes))
    bf16 = jnp.bfloat16

    def pad_cc(w):                 # (..., Cin, Cout) -> (..., CP, CP), zero-padded
        pads = [(0, 0)] * (w.ndim - 2) + [(0, CP - w.shape[-2]), (0, CP - w.shape[-1])]
        return jnp.pad(w, pads)

    def pad_b(b, width=None):
        width = CP if width is None else width
        return jnp.pad(b, [(0, 0)] * (b.ndim - 1) + [(0, width - b.shape[-1])])

    kp = {}
    # k=3 convs stored per-tap: (3, CP, CP) / stride blocks flattened (9, CP, CP)
    kp['w0a'] = pad_cc(jnp.transpose(pt['w0a'], (2, 1, 0))).astype(bf16)      # (3,CP,CP)
    kp['b0a'] = pad_b(pt['b0a'])[None, :]                                     # f32
    kp['w0b'] = pad_cc(jnp.transpose(pt['w0b'], (2, 1, 0))).astype(bf16)
    kp['b0b'] = pad_b(pt['b0b'])[None, :]
    kp['w0p'] = pad_cc(pt['w0p'][:, :, 0].T).astype(bf16)                     # (CP,CP)
    kp['b0p'] = pad_b(pt['b0p'])[None, :]
    w = pad_cc(jnp.transpose(pt['wc1'], (0, 3, 2, 1)))                        # (3,3,CP,CP)
    kp['wc1'] = w.reshape(9, CP, CP).astype(bf16)
    kp['bc1'] = pad_b(pt['bc1'])[:, None, :]                                  # (3,1,CP)
    w = pad_cc(jnp.transpose(pt['wc2'], (0, 3, 2, 1)))
    kp['wc2'] = w.reshape(9, CP, CP).astype(bf16)
    kp['bc2'] = pad_b(pt['bc2'])[:, None, :]
    kp['wbp'] = pad_cc(jnp.transpose(pt['wbp'][:, :, :, 0], (0, 2, 1))).astype(bf16)
    kp['bbp'] = pad_b(pt['bbp'])[:, None, :]
    kp['wfc'] = jnp.pad(pt['wfc'].T, ((0, CP - hidden), (0, 128 - 1)))        # (CP,128) f32
    kp['bfc'] = pad_b(pt['bfc'], 128)[None, :]
    return pt, kp


# ----------------------- plain-JAX reference (NCL) -------------------------
def ref_forward(x, pt):
    def conv1d(v, w, b, pad):
        out = jax.lax.conv_general_dilated(
            v, w, window_strides=(1,), padding=[(pad, pad)],
            dimension_numbers=('NCH', 'OIH', 'NCH'))
        return out + b[None, :, None]

    def leaky(v):
        return jnp.where(v >= 0, v, NEG_SLOPE * v)

    def avgpool(v, k):
        B_, C_, L_ = v.shape
        return v.reshape(B_, C_, L_ // k, k).mean(-1)

    y = jnp.transpose(x, (0, 2, 1))                      # input.transpose(1, 2)
    h = conv1d(y, pt['w0a'], pt['b0a'], 1)
    h = leaky(h)
    h = conv1d(h, pt['w0b'], pt['b0b'], 1)
    h = avgpool(h, 2)
    byp = avgpool(y, 2)
    byp = conv1d(byp, pt['w0p'], pt['b0p'], 0)
    y = h + byp
    for i in range(3):
        h = leaky(y)
        h = conv1d(h, pt['wc1'][i], pt['bc1'][i], 1)
        h = leaky(h)
        h = conv1d(h, pt['wc2'][i], pt['bc2'][i], 1)
        h = avgpool(h, 2)
        byp = conv1d(y, pt['wbp'][i], pt['bbp'][i], 0)
        byp = avgpool(byp, 2)
        y = h + byp
    y = leaky(y)
    y = avgpool(y, y.shape[-1])[:, :, 0]                 # (B, hidden)
    return y @ pt['wfc'].T + pt['bfc'][None, :]


if __name__ == "__main__":
    hidden, seq_len, n_chars, batch = 32, 32, 21, 2      # seq_len divisible by 16
    key = jax.random.PRNGKey(0)
    kx, kparams = jax.random.split(key)
    x = jax.random.normal(kx, (batch, seq_len, n_chars), jnp.float32)

    pt_params, kernel_params = make_params(kparams, hidden, n_chars)
    ref = ref_forward(x, pt_params)

    # default path: bb=1 -> G=2 batch blocks on the "parallel" grid axis
    out = jax.block_until_ready(resnet_sn_discriminator(x, kernel_params))
    assert out.shape == (batch, 1)
    # bf16 MXU with f32 accumulation vs f32 reference -> loose tolerance
    if not jnp.allclose(out, ref, rtol=6e-2, atol=6e-2):
        raise AssertionError(f"Pallas/JAX mismatch (grid):\n{out}\nvs\n{ref}")

    # fused path: whole batch folded into one grid step
    out2 = jax.block_until_ready(
        resnet_sn_discriminator(x, kernel_params, batch_block=batch))
    if not jnp.allclose(out2, ref, rtol=6e-2, atol=6e-2):
        raise AssertionError(f"Pallas/JAX mismatch (fused):\n{out2}\nvs\n{ref}")

    print("KERNEL_OK")
</pallas_src>

<mosaic_0001>
module attributes {stable_mosaic.version = 11 : i64} {
  func.func @_disc_kernel(%arg0: i32, %arg1: memref<1x32x128xbf16, #tpu.memory_space<vmem>>, %arg2: memref<1x2xf32, #tpu.memory_space<vmem>>, %arg3: memref<3x128x128xbf16, #tpu.memory_space<vmem>>, %arg4: memref<1x128xf32, #tpu.memory_space<vmem>>, %arg5: memref<3x128x128xbf16, #tpu.memory_space<vmem>>, %arg6: memref<1x128xf32, #tpu.memory_space<vmem>>, %arg7: memref<128x128xbf16, #tpu.memory_space<vmem>>, %arg8: memref<1x128xf32, #tpu.memory_space<vmem>>, %arg9: memref<9x128x128xbf16, #tpu.memory_space<vmem>>, %arg10: memref<3x1x128xf32, #tpu.memory_space<vmem>>, %arg11: memref<9x128x128xbf16, #tpu.memory_space<vmem>>, %arg12: memref<3x1x128xf32, #tpu.memory_space<vmem>>, %arg13: memref<3x128x128xbf16, #tpu.memory_space<vmem>>, %arg14: memref<3x1x128xf32, #tpu.memory_space<vmem>>, %arg15: memref<128x128xf32, #tpu.memory_space<vmem>>, %arg16: memref<1x128xf32, #tpu.memory_space<vmem>>, %arg17: memref<1x1x128xf32, #tpu.memory_space<vmem>>, %arg18: memref<32x128xf32, #tpu.memory_space<vmem>>) attributes {dimension_semantics = [#tpu.dimension_semantics<parallel>], iteration_bounds = array<i64: 2>, scalar_prefetch = 0 : i64, scratch_operands = 1 : i64, tpu.core_type = #tpu.core_type<tc>, window_params = [{transform_indices = @transform_0, window_bounds = array<i64: 1, 32, 128>}, {pipeline_mode = #tpu.pipeline_mode<synchronous>, transform_indices = @transform_1, window_bounds = array<i64: 1, 2>}, {pipeline_mode = #tpu.pipeline_mode<synchronous>, transform_indices = @transform_2, window_bounds = array<i64: 3, 128, 128>}, {pipeline_mode = #tpu.pipeline_mode<synchronous>, transform_indices = @transform_3, window_bounds = array<i64: 1, 128>}, {pipeline_mode = #tpu.pipeline_mode<synchronous>, transform_indices = @transform_4, window_bounds = array<i64: 3, 128, 128>}, {pipeline_mode = #tpu.pipeline_mode<synchronous>, transform_indices = @transform_5, window_bounds = array<i64: 1, 128>}, {pipeline_mode = #tpu.pipeline_mode<synchronous>, transform_indices = @transform_6, window_bounds = array<i64: 128, 128>}, {pipeline_mode = #tpu.pipeline_mode<synchronous>, transform_indices = @transform_7, window_bounds = array<i64: 1, 128>}, {pipeline_mode = #tpu.pipeline_mode<synchronous>, transform_indices = @transform_8, window_bounds = array<i64: 9, 128, 128>}, {pipeline_mode = #tpu.pipeline_mode<synchronous>, transform_indices = @transform_9, window_bounds = array<i64: 3, 1, 128>}, {pipeline_mode = #tpu.pipeline_mode<synchronous>, transform_indices = @transform_10, window_bounds = array<i64: 9, 128, 128>}, {pipeline_mode = #tpu.pipeline_mode<synchronous>, transform_indices = @transform_11, window_bounds = array<i64: 3, 1, 128>}, {pipeline_mode = #tpu.pipeline_mode<synchronous>, transform_indices = @transform_12, window_bounds = array<i64: 3, 128, 128>}, {pipeline_mode = #tpu.pipeline_mode<synchronous>, transform_indices = @transform_13, window_bounds = array<i64: 3, 1, 128>}, {pipeline_mode = #tpu.pipeline_mode<synchronous>, transform_indices = @transform_14, window_bounds = array<i64: 128, 128>}, {pipeline_mode = #tpu.pipeline_mode<synchronous>, transform_indices = @transform_15, window_bounds = array<i64: 1, 128>}, {transform_indices = @transform_16, window_bounds = array<i64: 1, 1, 128>}]} {
    %c0 = arith.constant 0 : index
    %c0_0 = arith.constant 0 : index
    %c0_1 = arith.constant 0 : index
    %0 = vector.load %arg1[%c0, %c0_0, %c0_1] : memref<1x32x128xbf16, #tpu.memory_space<vmem>>, vector<1x32x128xbf16>
    %1 = vector.shape_cast %0 : vector<1x32x128xbf16> to vector<32x128xbf16>
    %2 = arith.extf %1 : vector<32x128xbf16> to vector<32x128xf32>
    %3 = tpu.iota {dimensions = array<i32: 0>} : vector<32x1xi32>
    %c32_i32 = arith.constant 32 : i32
    %c0_i32 = arith.constant 0 : i32
    %4 = arith.cmpi eq, %c32_i32, %c0_i32 : i32
    %c1_i32 = arith.constant 1 : i32
    %5 = arith.select %4, %c1_i32, %c32_i32 : i32
    %6 = vector.broadcast %5 : i32 to vector<32x1xi32>
    %7 = arith.remsi %3, %6 : vector<32x1xi32>
    %c0_i32_2 = arith.constant 0 : i32
    %8 = vector.broadcast %c0_i32_2 : i32 to vector<32x1xi32>
    %9 = arith.cmpi ne, %7, %8 : vector<32x1xi32>
    %c0_i32_3 = arith.constant 0 : i32
    %10 = vector.broadcast %c0_i32_3 : i32 to vector<32x1xi32>
    %11 = arith.cmpi slt, %7, %10 : vector<32x1xi32>
    %c0_i32_4 = arith.constant 0 : i32
    %12 = arith.cmpi slt, %5, %c0_i32_4 : i32
    %13 = vector.broadcast %12 : i1 to vector<32x1xi1>
    %14 = vector.broadcast %13 : vector<32x1xi1> to vector<32x1xi1>
    %15 = arith.xori %11, %14 : vector<32x1xi1>
    %16 = arith.andi %15, %9 : vector<32x1xi1>
    %17 = vector.broadcast %5 : i32 to vector<32x1xi32>
    %18 = arith.addi %7, %17 : vector<32x1xi32>
    %19 = arith.select %16, %18, %7 : vector<32x1xi1>, vector<32x1xi32>
    %c0_i32_5 = arith.constant 0 : i32
    %20 = vector.broadcast %c0_i32_5 : i32 to vector<32x1xi32>
    %21 = arith.cmpi ne, %19, %20 : vector<32x1xi32>
    %c31_i32 = arith.constant 31 : i32
    %22 = vector.broadcast %c31_i32 : i32 to vector<32x1xi32>
    %23 = arith.cmpi ne, %19, %22 : vector<32x1xi32>
    %c0_6 = arith.constant 0 : index
    %c0_7 = arith.constant 0 : index
    %c0_8 = arith.constant 0 : index
    %24 = vector.load %arg3[%c0_6, %c0_7, %c0_8] : memref<3x128x128xbf16, #tpu.memory_space<vmem>>, vector<1x128x128xbf16>
    %25 = vector.shape_cast %24 : vector<1x128x128xbf16> to vector<128x128xbf16>
    %c1 = arith.constant 1 : index
    %c0_9 = arith.constant 0 : index
    %c0_10 = arith.constant 0 : index
    %26 = vector.load %arg3[%c1, %c0_9, %c0_10] : memref<3x128x128xbf16, #tpu.memory_space<vmem>>, vector<1x128x128xbf16>
    %27 = vector.shape_cast %26 : vector<1x128x128xbf16> to vector<128x128xbf16>
    %c2 = arith.constant 2 : index
    %c0_11 = arith.constant 0 : index
    %c0_12 = arith.constant 0 : index
    %28 = vector.load %arg3[%c2, %c0_11, %c0_12] : memref<3x128x128xbf16, #tpu.memory_space<vmem>>, vector<1x128x128xbf16>
    %29 = vector.shape_cast %28 : vector<1x128x128xbf16> to vector<128x128xbf16>
    %c0_13 = arith.constant 0 : index
    %c0_14 = arith.constant 0 : index
    %30 = vector.load %arg4[%c0_13, %c0_14] : memref<1x128xf32, #tpu.memory_space<vmem>>, vector<1x128xf32>
    %c1_i32_15 = arith.constant 1 : i32
    %31 = tpu.dynamic_rotate %2 by %c1_i32_15 dim 0 : vector<32x128xf32>, i32 -> vector<32x128xf32>
    %cst = arith.constant 0.000000e+00 : f32
    %32 = vector.shape_cast %21 : vector<32x1xi1> to vector<32x1xi1>
    %33 = vector.broadcast %32 : vector<32x1xi1> to vector<32x128xi1>
    %34 = vector.broadcast %cst : f32 to vector<32x128xf32>
    %35 = arith.select %33, %31, %34 : vector<32x128xi1>, vector<32x128xf32>
    %c31_i32_16 = arith.constant 31 : i32
    %36 = tpu.dynamic_rotate %2 by %c31_i32_16 dim 0 : vector<32x128xf32>, i32 -> vector<32x128xf32>
    %cst_17 = arith.constant 0.000000e+00 : f32
    %37 = vector.shape_cast %23 : vector<32x1xi1> to vector<32x1xi1>
    %38 = vector.broadcast %37 : vector<32x1xi1> to vector<32x128xi1>
    %39 = vector.broadcast %cst_17 : f32 to vector<32x128xf32>
    %40 = arith.select %38, %36, %39 : vector<32x128xi1>, vector<32x128xf32>
    %41 = arith.truncf %35 : vector<32x128xf32> to vector<32x128xbf16>
    %cst_18 = arith.constant dense<0.000000e+00> : vector<32x128xf32>
    %42 = tpu.matmul %41, %25, %cst_18 {dimension_numbers = #tpu.dot_dimension_numbers<[1], [0], [0], [1], [0, 0, 1, 1], [], []>} : vector<32x128xbf16>, vector<128x128xbf16>, vector<32x128xf32> -> vector<32x128xf32>
    %43 = arith.truncf %2 : vector<32x128xf32> to vector<32x128xbf16>
    %cst_19 = arith.constant dense<0.000000e+00> : vector<32x128xf32>
    %44 = tpu.matmul %43, %27, %cst_19 {dimension_numbers = #tpu.dot_dimension_numbers<[1], [0], [0], [1], [0, 0, 1, 1], [], []>} : vector<32x128xbf16>, vector<128x128xbf16>, vector<32x128xf32> -> vector<32x128xf32>
    %45 = arith.addf %42, %44 : vector<32x128xf32>
    %46 = arith.truncf %40 : vector<32x128xf32> to vector<32x128xbf16>
    %cst_20 = arith.constant dense<0.000000e+00> : vector<32x128xf32>
    %47 = tpu.matmul %46, %29, %cst_20 {dimension_numbers = #tpu.dot_dimension_numbers<[1], [0], [0], [1], [0, 0, 1, 1], [], []>} : vector<32x128xbf16>, vector<128x128xbf16>, vector<32x128xf32> -> vector<32x128xf32>
    %48 = arith.addf %45, %47 : vector<32x128xf32>
    %49 = vector.broadcast %30 : vector<1x128xf32> to vector<32x128xf32>
    %50 = arith.addf %48, %49 : vector<32x128xf32>
    %cst_21 = arith.constant 1.000000e-01 : f32
    %51 = vector.broadcast %cst_21 : f32 to vector<32x128xf32>
    %52 = arith.mulf %51, %50 : vector<32x128xf32>
    %53 = arith.maximumf %50, %52 : vector<32x128xf32>
    %c0_22 = arith.constant 0 : index
    %c0_23 = arith.constant 0 : index
    %c0_24 = arith.constant 0 : index
    %54 = vector.load %arg5[%c0_22, %c0_23, %c0_24] : memref<3x128x128xbf16, #tpu.memory_space<vmem>>, vector<1x128x128xbf16>
    %55 = vector.shape_cast %54 : vector<1x128x128xbf16> to vector<128x128xbf16>
    %c1_25 = arith.constant 1 : index
    %c0_26 = arith.constant 0 : index
    %c0_27 = arith.constant 0 : index
    %56 = vector.load %arg5[%c1_25, %c0_26, %c0_27] : memref<3x128x128xbf16, #tpu.memory_space<vmem>>, vector<1x128x128xbf16>
    %57 = vector.shape_cast %56 : vector<1x128x128xbf16> to vector<128x128xbf16>
    %c2_28 = arith.constant 2 : index
    %c0_29 = arith.constant 0 : index
    %c0_30 = arith.constant 0 : index
    %58 = vector.load %arg5[%c2_28, %c0_29, %c0_30] : memref<3x128x128xbf16, #tpu.memory_space<vmem>>, vector<1x128x128xbf16>
    %59 = vector.shape_cast %58 : vector<1x128x128xbf16> to vector<128x128xbf16>
    %c0_31 = arith.constant 0 : index
    %c0_32 = arith.constant 0 : index
    %60 = vector.load %arg6[%c0_31, %c0_32] : memref<1x128xf32, #tpu.memory_space<vmem>>, vector<1x128xf32>
    %c1_i32_33 = arith.constant 1 : i32
    %61 = tpu.dynamic_rotate %53 by %c1_i32_33 dim 0 : vector<32x128xf32>, i32 -> vector<32x128xf32>
    %cst_34 = arith.constant 0.000000e+00 : f32
    %62 = vector.shape_cast %21 : vector<32x1xi1> to vector<32x1xi1>
    %63 = vector.broadcast %62 : vector<32x1xi1> to vector<32x128xi1>
    %64 = vector.broadcast %cst_34 : f32 to vector<32x128xf32>
    %65 = arith.select %63, %61, %64 : vector<32x128xi1>, vector<32x128xf32>
    %c31_i32_35 = arith.constant 31 : i32
    %66 = tpu.dynamic_rotate %53 by %c31_i32_35 dim 0 : vector<32x128xf32>, i32 -> vector<32x128xf32>
    %cst_36 = arith.constant 0.000000e+00 : f32
    %67 = vector.shape_cast %23 : vector<32x1xi1> to vector<32x1xi1>
    %68 = vector.broadcast %67 : vector<32x1xi1> to vector<32x128xi1>
    %69 = vector.broadcast %cst_36 : f32 to vector<32x128xf32>
    %70 = arith.select %68, %66, %69 : vector<32x128xi1>, vector<32x128xf32>
    %71 = arith.truncf %65 : vector<32x128xf32> to vector<32x128xbf16>
    %cst_37 = arith.constant dense<0.000000e+00> : vector<32x128xf32>
    %72 = tpu.matmul %71, %55, %cst_37 {dimension_numbers = #tpu.dot_dimension_numbers<[1], [0], [0], [1], [0, 0, 1, 1], [], []>} : vector<32x128xbf16>, vector<128x128xbf16>, vector<32x128xf32> -> vector<32x128xf32>
    %73 = arith.truncf %53 : vector<32x128xf32> to vector<32x128xbf16>
    %cst_38 = arith.constant dense<0.000000e+00> : vector<32x128xf32>
    %74 = tpu.matmul %73, %57, %cst_38 {dimension_numbers = #tpu.dot_dimension_numbers<[1], [0], [0], [1], [0, 0, 1, 1], [], []>} : vector<32x128xbf16>, vector<128x128xbf16>, vector<32x128xf32> -> vector<32x128xf32>
    %75 = arith.addf %72, %74 : vector<32x128xf32>
    %76 = arith.truncf %70 : vector<32x128xf32> to vector<32x128xbf16>
    %cst_39 = arith.constant dense<0.000000e+00> : vector<32x128xf32>
    %77 = tpu.matmul %76, %59, %cst_39 {dimension_numbers = #tpu.dot_dimension_numbers<[1], [0], [0], [1], [0, 0, 1, 1], [], []>} : vector<32x128xbf16>, vector<128x128xbf16>, vector<32x128xf32> -> vector<32x128xf32>
    %78 = arith.addf %75, %77 : vector<32x128xf32>
    %79 = vector.broadcast %60 : vector<1x128xf32> to vector<32x128xf32>
    %80 = arith.addf %78, %79 : vector<32x128xf32>
    %81 = arith.truncf %2 : vector<32x128xf32> to vector<32x128xbf16>
    %c0_40 = arith.constant 0 : index
    %c0_41 = arith.constant 0 : index
    %82 = vector.load %arg7[%c0_40, %c0_41] : memref<128x128xbf16, #tpu.memory_space<vmem>>, vector<128x128xbf16>
    %cst_42 = arith.constant dense<0.000000e+00> : vector<32x128xf32>
    %83 = tpu.matmul %81, %82, %cst_42 {dimension_numbers = #tpu.dot_dimension_numbers<[1], [0], [0], [1], [0, 0, 1, 1], [], []>} : vector<32x128xbf16>, vector<128x128xbf16>, vector<32x128xf32> -> vector<32x128xf32>
    %c0_43 = arith.constant 0 : index
    %c0_44 = arith.constant 0 : index
    %84 = vector.load %arg8[%c0_43, %c0_44] : memref<1x128xf32, #tpu.memory_space<vmem>>, vector<1x128xf32>
    %85 = vector.broadcast %84 : vector<1x128xf32> to vector<32x128xf32>
    %86 = arith.addf %83, %85 : vector<32x128xf32>
    %87 = arith.addf %80, %86 : vector<32x128xf32>
    %c0_45 = arith.constant 0 : index
    %c0_46 = arith.constant 0 : index
    %88 = vector.load %arg18[%c0_45, %c0_46] : memref<32x128xf32, #tpu.memory_space<vmem>>, vector<32x128xf32>
    tpu.vector_store %arg18[%c0_45, %c0_46], %87 {strides = array<i32>} : memref<32x128xf32, #tpu.memory_space<vmem>>, vector<32x128xf32>,
    %c0_47 = arith.constant 0 : index
    %c0_48 = arith.constant 0 : index
    %89 = tpu.strided_load %arg18[%c0_47, %c0_48] {strides = array<i32: 2, 1>} : memref<32x128xf32, #tpu.memory_space<vmem>>, vector<16x128xf32>
    %c1_49 = arith.constant 1 : index
    %c0_50 = arith.constant 0 : index
    %90 = tpu.strided_load %arg18[%c1_49, %c0_50] {strides = array<i32: 2, 1>} : memref<32x128xf32, #tpu.memory_space<vmem>>, vector<16x128xf32>
    %91 = arith.addf %89, %90 : vector<16x128xf32>
    %cst_51 = arith.constant 5.000000e-01 : f32
    %92 = vector.broadcast %cst_51 : f32 to vector<16x128xf32>
    %93 = arith.mulf %91, %92 : vector<16x128xf32>
    %94 = tpu.iota {dimensions = array<i32: 0>} : vector<16x1xi32>
    %c16_i32 = arith.constant 16 : i32
    %c0_i32_52 = arith.constant 0 : i32
    %95 = arith.cmpi eq, %c16_i32, %c0_i32_52 : i32
    %c1_i32_53 = arith.constant 1 : i32
    %96 = arith.select %95, %c1_i32_53, %c16_i32 : i32
    %97 = vector.broadcast %96 : i32 to vector<16x1xi32>
    %98 = arith.remsi %94, %97 : vector<16x1xi32>
    %c0_i32_54 = arith.constant 0 : i32
    %99 = vector.broadcast %c0_i32_54 : i32 to vector<16x1xi32>
    %100 = arith.cmpi ne, %98, %99 : vector<16x1xi32>
    %c0_i32_55 = arith.constant 0 : i32
    %101 = vector.broadcast %c0_i32_55 : i32 to vector<16x1xi32>
    %102 = arith.cmpi slt, %98, %101 : vector<16x1xi32>
    %c0_i32_56 = arith.constant 0 : i32
    %103 = arith.cmpi slt, %96, %c0_i32_56 : i32
    %104 = vector.broadcast %103 : i1 to vector<16x1xi1>
    %105 = vector.broadcast %104 : vector<16x1xi1> to vector<16x1xi1>
    %106 = arith.xori %102, %105 : vector<16x1xi1>
    %107 = arith.andi %106, %100 : vector<16x1xi1>
    %108 = vector.broadcast %96 : i32 to vector<16x1xi32>
    %109 = arith.addi %98, %108 : vector<16x1xi32>
    %110 = arith.select %107, %109, %98 : vector<16x1xi1>, vector<16x1xi32>
    %c0_i32_57 = arith.constant 0 : i32
    %111 = vector.broadcast %c0_i32_57 : i32 to vector<16x1xi32>
    %112 = arith.cmpi ne, %110, %111 : vector<16x1xi32>
    %c15_i32 = arith.constant 15 : i32
    %113 = vector.broadcast %c15_i32 : i32 to vector<16x1xi32>
    %114 = arith.cmpi ne, %110, %113 : vector<16x1xi32>
    %cst_58 = arith.constant 1.000000e-01 : f32
    %115 = vector.broadcast %cst_58 : f32 to vector<16x128xf32>
    %116 = arith.mulf %115, %93 : vector<16x128xf32>
    %117 = arith.maximumf %93, %116 : vector<16x128xf32>
    %c0_59 = arith.constant 0 : index
    %c0_60 = arith.constant 0 : index
    %c0_61 = arith.constant 0 : index
    %118 = vector.load %arg9[%c0_59, %c0_60, %c0_61] : memref<9x128x128xbf16, #tpu.memory_space<vmem>>, vector<1x128x128xbf16>
    %119 = vector.shape_cast %118 : vector<1x128x128xbf16> to vector<128x128xbf16>
    %c1_62 = arith.constant 1 : index
    %c0_63 = arith.constant 0 : index
    %c0_64 = arith.constant 0 : index
    %120 = vector.load %arg9[%c1_62, %c0_63, %c0_64] : memref<9x128x128xbf16, #tpu.memory_space<vmem>>, vector<1x128x128xbf16>
    %121 = vector.shape_cast %120 : vector<1x128x128xbf16> to vector<128x128xbf16>
    %c2_65 = arith.constant 2 : index
    %c0_66 = arith.constant 0 : index
    %c0_67 = arith.constant 0 : index
    %122 = vector.load %arg9[%c2_65, %c0_66, %c0_67] : memref<9x128x128xbf16, #tpu.memory_space<vmem>>, vector<1x128x128xbf16>
    %123 = vector.shape_cast %122 : vector<1x128x128xbf16> to vector<128x128xbf16>
    %c0_68 = arith.constant 0 : index
    %c0_69 = arith.constant 0 : index
    %c0_70 = arith.constant 0 : index
    %124 = vector.load %arg10[%c0_68, %c0_69, %c0_70] : memref<3x1x128xf32, #tpu.memory_space<vmem>>, vector<1x1x128xf32>
    %125 = vector.shape_cast %124 : vector<1x1x128xf32> to vector<1x128xf32>
    %c1_i32_71 = arith.constant 1 : i32
    %126 = tpu.dynamic_rotate %117 by %c1_i32_71 dim 0 : vector<16x128xf32>, i32 -> vector<16x128xf32>
    %cst_72 = arith.constant 0.000000e+00 : f32
    %127 = vector.shape_cast %112 : vector<16x1xi1> to vector<16x1xi1>
    %128 = vector.broadcast %127 : vector<16x1xi1> to vector<16x128xi1>
    %129 = vector.broadcast %cst_72 : f32 to vector<16x128xf32>
    %130 = arith.select %128, %126, %129 : vector<16x128xi1>, vector<16x128xf32>
    %c15_i32_73 = arith.constant 15 : i32
    %131 = tpu.dynamic_rotate %117 by %c15_i32_73 dim 0 : vector<16x128xf32>, i32 -> vector<16x128xf32>
    %cst_74 = arith.constant 0.000000e+00 : f32
    %132 = vector.shape_cast %114 : vector<16x1xi1> to vector<16x1xi1>
    %133 = vector.broadcast %132 : vector<16x1xi1> to vector<16x128xi1>
    %134 = vector.broadcast %cst_74 : f32 to vector<16x128xf32>
    %135 = arith.select %133, %131, %134 : vector<16x128xi1>, vector<16x128xf32>
    %136 = arith.truncf %130 : vector<16x128xf32> to vector<16x128xbf16>
    %cst_75 = arith.constant dense<0.000000e+00> : vector<16x128xf32>
    %137 = tpu.matmul %136, %119, %cst_75 {dimension_numbers = #tpu.dot_dimension_numbers<[1], [0], [0], [1], [0, 0, 1, 1], [], []>} : vector<16x128xbf16>, vector<128x128xbf16>, vector<16x128xf32> -> vector<16x128xf32>
    %138 = arith.truncf %117 : vector<16x128xf32> to vector<16x128xbf16>
    %cst_76 = arith.constant dense<0.000000e+00> : vector<16x128xf32>
    %139 = tpu.matmul %138, %121, %cst_76 {dimension_numbers = #tpu.dot_dimension_numbers<[1], [0], [0], [1], [0, 0, 1, 1], [], []>} : vector<16x128xbf16>, vector<128x128xbf16>, vector<16x128xf32> -> vector<16x128xf32>
    %140 = arith.addf %137, %139 : vector<16x128xf32>
    %141 = arith.truncf %135 : vector<16x128xf32> to vector<16x128xbf16>
    %cst_77 = arith.constant dense<0.000000e+00> : vector<16x128xf32>
    %142 = tpu.matmul %141, %123, %cst_77 {dimension_numbers = #tpu.dot_dimension_numbers<[1], [0], [0], [1], [0, 0, 1, 1], [], []>} : vector<16x128xbf16>, vector<128x128xbf16>, vector<16x128xf32> -> vector<16x128xf32>
    %143 = arith.addf %140, %142 : vector<16x128xf32>
    %144 = vector.broadcast %125 : vector<1x128xf32> to vector<16x128xf32>
    %145 = arith.addf %143, %144 : vector<16x128xf32>
    %cst_78 = arith.constant 1.000000e-01 : f32
    %146 = vector.broadcast %cst_78 : f32 to vector<16x128xf32>
    %147 = arith.mulf %146, %145 : vector<16x128xf32>
    %148 = arith.maximumf %145, %147 : vector<16x128xf32>
    %c0_79 = arith.constant 0 : index
    %c0_80 = arith.constant 0 : index
    %c0_81 = arith.constant 0 : index
    %149 = vector.load %arg11[%c0_79, %c0_80, %c0_81] : memref<9x128x128xbf16, #tpu.memory_space<vmem>>, vector<1x128x128xbf16>
    %150 = vector.shape_cast %149 : vector<1x128x128xbf16> to vector<128x128xbf16>
    %c1_82 = arith.constant 1 : index
    %c0_83 = arith.constant 0 : index
    %c0_84 = arith.constant 0 : index
    %151 = vector.load %arg11[%c1_82, %c0_83, %c0_84] : memref<9x128x128xbf16, #tpu.memory_space<vmem>>, vector<1x128x128xbf16>
    %152 = vector.shape_cast %151 : vector<1x128x128xbf16> to vector<128x128xbf16>
    %c2_85 = arith.constant 2 : index
    %c0_86 = arith.constant 0 : index
    %c0_87 = arith.constant 0 : index
    %153 = vector.load %arg11[%c2_85, %c0_86, %c0_87] : memref<9x128x128xbf16, #tpu.memory_space<vmem>>, vector<1x128x128xbf16>
    %154 = vector.shape_cast %153 : vector<1x128x128xbf16> to vector<128x128xbf16>
    %c0_88 = arith.constant 0 : index
    %c0_89 = arith.constant 0 : index
    %c0_90 = arith.constant 0 : index
    %155 = vector.load %arg12[%c0_88, %c0_89, %c0_90] : memref<3x1x128xf32, #tpu.memory_space<vmem>>, vector<1x1x128xf32>
    %156 = vector.shape_cast %155 : vector<1x1x128xf32> to vector<1x128xf32>
    %c1_i32_91 = arith.constant 1 : i32
    %157 = tpu.dynamic_rotate %148 by %c1_i32_91 dim 0 : vector<16x128xf32>, i32 -> vector<16x128xf32>
    %cst_92 = arith.constant 0.000000e+00 : f32
    %158 = vector.shape_cast %112 : vector<16x1xi1> to vector<16x1xi1>
    %159 = vector.broadcast %158 : vector<16x1xi1> to vector<16x128xi1>
    %160 = vector.broadcast %cst_92 : f32 to vector<16x128xf32>
    %161 = arith.select %159, %157, %160 : vector<16x128xi1>, vector<16x128xf32>
    %c15_i32_93 = arith.constant 15 : i32
    %162 = tpu.dynamic_rotate %148 by %c15_i32_93 dim 0 : vector<16x128xf32>, i32 -> vector<16x128xf32>
    %cst_94 = arith.constant 0.000000e+00 : f32
    %163 = vector.shape_cast %114 : vector<16x1xi1> to vector<16x1xi1>
    %164 = vector.broadcast %163 : vector<16x1xi1> to vector<16x128xi1>
    %165 = vector.broadcast %cst_94 : f32 to vector<16x128xf32>
    %166 = arith.select %164, %162, %165 : vector<16x128xi1>, vector<16x128xf32>
    %167 = arith.truncf %161 : vector<16x128xf32> to vector<16x128xbf16>
    %cst_95 = arith.constant dense<0.000000e+00> : vector<16x128xf32>
    %168 = tpu.matmul %167, %150, %cst_95 {dimension_numbers = #tpu.dot_dimension_numbers<[1], [0], [0], [1], [0, 0, 1, 1], [], []>} : vector<16x128xbf16>, vector<128x128xbf16>, vector<16x128xf32> -> vector<16x128xf32>
    %169 = arith.truncf %148 : vector<16x128xf32> to vector<16x128xbf16>
    %cst_96 = arith.constant dense<0.000000e+00> : vector<16x128xf32>
    %170 = tpu.matmul %169, %152, %cst_96 {dimension_numbers = #tpu.dot_dimension_numbers<[1], [0], [0], [1], [0, 0, 1, 1], [], []>} : vector<16x128xbf16>, vector<128x128xbf16>, vector<16x128xf32> -> vector<16x128xf32>
    %171 = arith.addf %168, %170 : vector<16x128xf32>
    %172 = arith.truncf %166 : vector<16x128xf32> to vector<16x128xbf16>
    %cst_97 = arith.constant dense<0.000000e+00> : vector<16x128xf32>
    %173 = tpu.matmul %172, %154, %cst_97 {dimension_numbers = #tpu.dot_dimension_numbers<[1], [0], [0], [1], [0, 0, 1, 1], [], []>} : vector<16x128xbf16>, vector<128x128xbf16>, vector<16x128xf32> -> vector<16x128xf32>
    %174 = arith.addf %171, %173 : vector<16x128xf32>
    %175 = vector.broadcast %156 : vector<1x128xf32> to vector<16x128xf32>
    %176 = arith.addf %174, %175 : vector<16x128xf32>
    %177 = arith.truncf %93 : vector<16x128xf32> to vector<16x128xbf16>
    %c0_98 = arith.constant 0 : index
    %c0_99 = arith.constant 0 : index
    %c0_100 = arith.constant 0 : index
    %178 = vector.load %arg13[%c0_98, %c0_99, %c0_100] : memref<3x128x128xbf16, #tpu.memory_space<vmem>>, vector<1x128x128xbf16>
    %179 = vector.shape_cast %178 : vector<1x128x128xbf16> to vector<128x128xbf16>
    %cst_101 = arith.constant dense<0.000000e+00> : vector<16x128xf32>
    %180 = tpu.matmul %177, %179, %cst_101 {dimension_numbers = #tpu.dot_dimension_numbers<[1], [0], [0], [1], [0, 0, 1, 1], [], []>} : vector<16x128xbf16>, vector<128x128xbf16>, vector<16x128xf32> -> vector<16x128xf32>
    %c0_102 = arith.constant 0 : index
    %c0_103 = arith.constant 0 : index
    %c0_104 = arith.constant 0 : index
    %181 = vector.load %arg14[%c0_102, %c0_103, %c0_104] : memref<3x1x128xf32, #tpu.memory_space<vmem>>, vector<1x1x128xf32>
    %182 = vector.shape_cast %181 : vector<1x1x128xf32> to vector<1x128xf32>
    %183 = vector.broadcast %182 : vector<1x128xf32> to vector<16x128xf32>
    %184 = arith.addf %180, %183 : vector<16x128xf32>
    %185 = arith.addf %176, %184 : vector<16x128xf32>
    %c0_105 = arith.constant 0 : index
    %c0_106 = arith.constant 0 : index
    %186 = vector.load %arg18[%c0_105, %c0_106] : memref<32x128xf32, #tpu.memory_space<vmem>>, vector<16x128xf32>
    tpu.vector_store %arg18[%c0_105, %c0_106], %185 {strides = array<i32>} : memref<32x128xf32, #tpu.memory_space<vmem>>, vector<16x128xf32>,
    %c0_107 = arith.constant 0 : index
    %c0_108 = arith.constant 0 : index
    %187 = tpu.strided_load %arg18[%c0_107, %c0_108] {strides = array<i32: 2, 1>} : memref<32x128xf32, #tpu.memory_space<vmem>>, vector<8x128xf32>
    %c1_109 = arith.constant 1 : index
    %c0_110 = arith.constant 0 : index
    %188 = tpu.strided_load %arg18[%c1_109, %c0_110] {strides = array<i32: 2, 1>} : memref<32x128xf32, #tpu.memory_space<vmem>>, vector<8x128xf32>
    %189 = arith.addf %187, %188 : vector<8x128xf32>
    %cst_111 = arith.constant 5.000000e-01 : f32
    %190 = vector.broadcast %cst_111 : f32 to vector<8x128xf32>
    %191 = arith.mulf %189, %190 : vector<8x128xf32>
    %192 = tpu.iota {dimensions = array<i32: 0>} : vector<8x1xi32>
    %c8_i32 = arith.constant 8 : i32
    %c0_i32_112 = arith.constant 0 : i32
    %193 = arith.cmpi eq, %c8_i32, %c0_i32_112 : i32
    %c1_i32_113 = arith.constant 1 : i32
    %194 = arith.select %193, %c1_i32_113, %c8_i32 : i32
    %195 = vector.broadcast %194 : i32 to vector<8x1xi32>
    %196 = arith.remsi %192, %195 : vector<8x1xi32>
    %c0_i32_114 = arith.constant 0 : i32
    %197 = vector.broadcast %c0_i32_114 : i32 to vector<8x1xi32>
    %198 = arith.cmpi ne, %196, %197 : vector<8x1xi32>
    %c0_i32_115 = arith.constant 0 : i32
    %199 = vector.broadcast %c0_i32_115 : i32 to vector<8x1xi32>
    %200 = arith.cmpi slt, %196, %199 : vector<8x1xi32>
    %c0_i32_116 = arith.constant 0 : i32
    %201 = arith.cmpi slt, %194, %c0_i32_116 : i32
    %202 = vector.broadcast %201 : i1 to vector<8x1xi1>
    %203 = vector.broadcast %202 : vector<8x1xi1> to vector<8x1xi1>
    %204 = arith.xori %200, %203 : vector<8x1xi1>
    %205 = arith.andi %204, %198 : vector<8x1xi1>
    %206 = vector.broadcast %194 : i32 to vector<8x1xi32>
    %207 = arith.addi %196, %206 : vector<8x1xi32>
    %208 = arith.select %205, %207, %196 : vector<8x1xi1>, vector<8x1xi32>
    %c0_i32_117 = arith.constant 0 : i32
    %209 = vector.broadcast %c0_i32_117 : i32 to vector<8x1xi32>
    %210 = arith.cmpi ne, %208, %209 : vector<8x1xi32>
    %c7_i32 = arith.constant 7 : i32
    %211 = vector.broadcast %c7_i32 : i32 to vector<8x1xi32>
    %212 = arith.cmpi ne, %208, %211 : vector<8x1xi32>
    %cst_118 = arith.constant 1.000000e-01 : f32
    %213 = vector.broadcast %cst_118 : f32 to vector<8x128xf32>
    %214 = arith.mulf %213, %191 : vector<8x128xf32>
    %215 = arith.maximumf %191, %214 : vector<8x128xf32>
    %c3 = arith.constant 3 : index
    %c0_119 = arith.constant 0 : index
    %c0_120 = arith.constant 0 : index
    %216 = vector.load %arg9[%c3, %c0_119, %c0_120] : memref<9x128x128xbf16, #tpu.memory_space<vmem>>, vector<1x128x128xbf16>
    %217 = vector.shape_cast %216 : vector<1x128x128xbf16> to vector<128x128xbf16>
    %c4 = arith.constant 4 : index
    %c0_121 = arith.constant 0 : index
    %c0_122 = arith.constant 0 : index
    %218 = vector.load %arg9[%c4, %c0_121, %c0_122] : memref<9x128x128xbf16, #tpu.memory_space<vmem>>, vector<1x128x128xbf16>
    %219 = vector.shape_cast %218 : vector<1x128x128xbf16> to vector<128x128xbf16>
    %c5 = arith.constant 5 : index
    %c0_123 = arith.constant 0 : index
    %c0_124 = arith.constant 0 : index
    %220 = vector.load %arg9[%c5, %c0_123, %c0_124] : memref<9x128x128xbf16, #tpu.memory_space<vmem>>, vector<1x128x128xbf16>
    %221 = vector.shape_cast %220 : vector<1x128x128xbf16> to vector<128x128xbf16>
    %c1_125 = arith.constant 1 : index
    %c0_126 = arith.constant 0 : index
    %c0_127 = arith.constant 0 : index
    %222 = vector.load %arg10[%c1_125, %c0_126, %c0_127] : memref<3x1x128xf32, #tpu.memory_space<vmem>>, vector<1x1x128xf32>
    %223 = vector.shape_cast %222 : vector<1x1x128xf32> to vector<1x128xf32>
    %c1_i32_128 = arith.constant 1 : i32
    %224 = tpu.dynamic_rotate %215 by %c1_i32_128 dim 0 : vector<8x128xf32>, i32 -> vector<8x128xf32>
    %cst_129 = arith.constant 0.000000e+00 : f32
    %225 = vector.shape_cast %210 : vector<8x1xi1> to vector<8x1xi1>
    %226 = vector.broadcast %225 : vector<8x1xi1> to vector<8x128xi1>
    %227 = vector.broadcast %cst_129 : f32 to vector<8x128xf32>
    %228 = arith.select %226, %224, %227 : vector<8x128xi1>, vector<8x128xf32>
    %c7_i32_130 = arith.constant 7 : i32
    %229 = tpu.dynamic_rotate %215 by %c7_i32_130 dim 0 : vector<8x128xf32>, i32 -> vector<8x128xf32>
    %cst_131 = arith.constant 0.000000e+00 : f32
    %230 = vector.shape_cast %212 : vector<8x1xi1> to vector<8x1xi1>
    %231 = vector.broadcast %230 : vector<8x1xi1> to vector<8x128xi1>
    %232 = vector.broadcast %cst_131 : f32 to vector<8x128xf32>
    %233 = arith.select %231, %229, %232 : vector<8x128xi1>, vector<8x128xf32>
    %234 = arith.truncf %228 : vector<8x128xf32> to vector<8x128xbf16>
    %cst_132 = arith.constant dense<0.000000e+00> : vector<8x128xf32>
    %235 = tpu.matmul %234, %217, %cst_132 {dimension_numbers = #tpu.dot_dimension_numbers<[1], [0], [0], [1], [0, 0, 1, 1], [], []>} : vector<8x128xbf16>, vector<128x128xbf16>, vector<8x128xf32> -> vector<8x128xf32>
    %236 = arith.truncf %215 : vector<8x128xf32> to vector<8x128xbf16>
    %cst_133 = arith.constant dense<0.000000e+00> : vector<8x128xf32>
    %237 = tpu.matmul %236, %219, %cst_133 {dimension_numbers = #tpu.dot_dimension_numbers<[1], [0], [0], [1], [0, 0, 1, 1], [], []>} : vector<8x128xbf16>, vector<128x128xbf16>, vector<8x128xf32> -> vector<8x128xf32>
    %238 = arith.addf %235, %237 : vector<8x128xf32>
    %239 = arith.truncf %233 : vector<8x128xf32> to vector<8x128xbf16>
    %cst_134 = arith.constant dense<0.000000e+00> : vector<8x128xf32>
    %240 = tpu.matmul %239, %221, %cst_134 {dimension_numbers = #tpu.dot_dimension_numbers<[1], [0], [0], [1], [0, 0, 1, 1], [], []>} : vector<8x128xbf16>, vector<128x128xbf16>, vector<8x128xf32> -> vector<8x128xf32>
    %241 = arith.addf %238, %240 : vector<8x128xf32>
    %242 = vector.broadcast %223 : vector<1x128xf32> to vector<8x128xf32>
    %243 = arith.addf %241, %242 : vector<8x128xf32>
    %cst_135 = arith.constant 1.000000e-01 : f32
    %244 = vector.broadcast %cst_135 : f32 to vector<8x128xf32>
    %245 = arith.mulf %244, %243 : vector<8x128xf32>
    %246 = arith.maximumf %243, %245 : vector<8x128xf32>
    %c3_136 = arith.constant 3 : index
    %c0_137 = arith.constant 0 : index
    %c0_138 = arith.constant 0 : index
    %247 = vector.load %arg11[%c3_136, %c0_137, %c0_138] : memref<9x128x128xbf16, #tpu.memory_space<vmem>>, vector<1x128x128xbf16>
    %248 = vector.shape_cast %247 : vector<1x128x128xbf16> to vector<128x128xbf16>
    %c4_139 = arith.constant 4 : index
    %c0_140 = arith.constant 0 : index
    %c0_141 = arith.constant 0 : index
    %249 = vector.load %arg11[%c4_139, %c0_140, %c0_141] : memref<9x128x128xbf16, #tpu.memory_space<vmem>>, vector<1x128x128xbf16>
    %250 = vector.shape_cast %249 : vector<1x128x128xbf16> to vector<128x128xbf16>
    %c5_142 = arith.constant 5 : index
    %c0_143 = arith.constant 0 : index
    %c0_144 = arith.constant 0 : index
    %251 = vector.load %arg11[%c5_142, %c0_143, %c0_144] : memref<9x128x128xbf16, #tpu.memory_space<vmem>>, vector<1x128x128xbf16>
    %252 = vector.shape_cast %251 : vector<1x128x128xbf16> to vector<128x128xbf16>
    %c1_145 = arith.constant 1 : index
    %c0_146 = arith.constant 0 : index
    %c0_147 = arith.constant 0 : index
    %253 = vector.load %arg12[%c1_145, %c0_146, %c0_147] : memref<3x1x128xf32, #tpu.memory_space<vmem>>, vector<1x1x128xf32>
    %254 = vector.shape_cast %253 : vector<1x1x128xf32> to vector<1x128xf32>
    %c1_i32_148 = arith.constant 1 : i32
    %255 = tpu.dynamic_rotate %246 by %c1_i32_148 dim 0 : vector<8x128xf32>, i32 -> vector<8x128xf32>
    %cst_149 = arith.constant 0.000000e+00 : f32
    %256 = vector.shape_cast %210 : vector<8x1xi1> to vector<8x1xi1>
    %257 = vector.broadcast %256 : vector<8x1xi1> to vector<8x128xi1>
    %258 = vector.broadcast %cst_149 : f32 to vector<8x128xf32>
    %259 = arith.select %257, %255, %258 : vector<8x128xi1>, vector<8x128xf32>
    %c7_i32_150 = arith.constant 7 : i32
    %260 = tpu.dynamic_rotate %246 by %c7_i32_150 dim 0 : vector<8x128xf32>, i32 -> vector<8x128xf32>
    %cst_151 = arith.constant 0.000000e+00 : f32
    %261 = vector.shape_cast %212 : vector<8x1xi1> to vector<8x1xi1>
    %262 = vector.broadcast %261 : vector<8x1xi1> to vector<8x128xi1>
    %263 = vector.broadcast %cst_151 : f32 to vector<8x128xf32>
    %264 = arith.select %262, %260, %263 : vector<8x128xi1>, vector<8x128xf32>
    %265 = arith.truncf %259 : vector<8x128xf32> to vector<8x128xbf16>
    %cst_152 = arith.constant dense<0.000000e+00> : vector<8x128xf32>
    %266 = tpu.matmul %265, %248, %cst_152 {dimension_numbers = #tpu.dot_dimension_numbers<[1], [0], [0], [1], [0, 0, 1, 1], [], []>} : vector<8x128xbf16>, vector<128x128xbf16>, vector<8x128xf32> -> vector<8x128xf32>
    %267 = arith.truncf %246 : vector<8x128xf32> to vector<8x128xbf16>
    %cst_153 = arith.constant dense<0.000000e+00> : vector<8x128xf32>
    %268 = tpu.matmul %267, %250, %cst_153 {dimension_numbers = #tpu.dot_dimension_numbers<[1], [0], [0], [1], [0, 0, 1, 1], [], []>} : vector<8x128xbf16>, vector<128x128xbf16>, vector<8x128xf32> -> vector<8x128xf32>
    %269 = arith.addf %266, %268 : vector<8x128xf32>
    %270 = arith.truncf %264 : vector<8x128xf32> to vector<8x128xbf16>
    %cst_154 = arith.constant dense<0.000000e+00> : vector<8x128xf32>
    %271 = tpu.matmul %270, %252, %cst_154 {dimension_numbers = #tpu.dot_dimension_numbers<[1], [0], [0], [1], [0, 0, 1, 1], [], []>} : vector<8x128xbf16>, vector<128x128xbf16>, vector<8x128xf32> -> vector<8x128xf32>
    %272 = arith.addf %269, %271 : vector<8x128xf32>
    %273 = vector.broadcast %254 : vector<1x128xf32> to vector<8x128xf32>
    %274 = arith.addf %272, %273 : vector<8x128xf32>
    %275 = arith.truncf %191 : vector<8x128xf32> to vector<8x128xbf16>
    %c1_155 = arith.constant 1 : index
    %c0_156 = arith.constant 0 : index
    %c0_157 = arith.constant 0 : index
    %276 = vector.load %arg13[%c1_155, %c0_156, %c0_157] : memref<3x128x128xbf16, #tpu.memory_space<vmem>>, vector<1x128x128xbf16>
    %277 = vector.shape_cast %276 : vector<1x128x128xbf16> to vector<128x128xbf16>
    %cst_158 = arith.constant dense<0.000000e+00> : vector<8x128xf32>
    %278 = tpu.matmul %275, %277, %cst_158 {dimension_numbers = #tpu.dot_dimension_numbers<[1], [0], [0], [1], [0, 0, 1, 1], [], []>} : vector<8x128xbf16>, vector<128x128xbf16>, vector<8x128xf32> -> vector<8x128xf32>
    %c1_159 = arith.constant 1 : index
    %c0_160 = arith.constant 0 : index
    %c0_161 = arith.constant 0 : index
    %279 = vector.load %arg14[%c1_159, %c0_160, %c0_161] : memref<3x1x128xf32, #tpu.memory_space<vmem>>, vector<1x1x128xf32>
    %280 = vector.shape_cast %279 : vector<1x1x128xf32> to vector<1x128xf32>
    %281 = vector.broadcast %280 : vector<1x128xf32> to vector<8x128xf32>
    %282 = arith.addf %278, %281 : vector<8x128xf32>
    %283 = arith.addf %274, %282 : vector<8x128xf32>
    %c0_162 = arith.constant 0 : index
    %c0_163 = arith.constant 0 : index
    %284 = vector.load %arg18[%c0_162, %c0_163] : memref<32x128xf32, #tpu.memory_space<vmem>>, vector<8x128xf32>
    tpu.vector_store %arg18[%c0_162, %c0_163], %283 {strides = array<i32>} : memref<32x128xf32, #tpu.memory_space<vmem>>, vector<8x128xf32>,
    %c0_164 = arith.constant 0 : index
    %c0_165 = arith.constant 0 : index
    %285 = tpu.strided_load %arg18[%c0_164, %c0_165] {strides = array<i32: 2, 1>} : memref<32x128xf32, #tpu.memory_space<vmem>>, vector<4x128xf32>
    %c1_166 = arith.constant 1 : index
    %c0_167 = arith.constant 0 : index
    %286 = tpu.strided_load %arg18[%c1_166, %c0_167] {strides = array<i32: 2, 1>} : memref<32x128xf32, #tpu.memory_space<vmem>>, vector<4x128xf32>
    %287 = arith.addf %285, %286 : vector<4x128xf32>
    %cst_168 = arith.constant 5.000000e-01 : f32
    %288 = vector.broadcast %cst_168 : f32 to vector<4x128xf32>
    %289 = arith.mulf %287, %288 : vector<4x128xf32>
    %290 = tpu.iota {dimensions = array<i32: 0>} : vector<4x1xi32>
    %c4_i32 = arith.constant 4 : i32
    %c0_i32_169 = arith.constant 0 : i32
    %291 = arith.cmpi eq, %c4_i32, %c0_i32_169 : i32
    %c1_i32_170 = arith.constant 1 : i32
    %292 = arith.select %291, %c1_i32_170, %c4_i32 : i32
    %293 = vector.broadcast %292 : i32 to vector<4x1xi32>
    %294 = arith.remsi %290, %293 : vector<4x1xi32>
    %c0_i32_171 = arith.constant 0 : i32
    %295 = vector.broadcast %c0_i32_171 : i32 to vector<4x1xi32>
    %296 = arith.cmpi ne, %294, %295 : vector<4x1xi32>
    %c0_i32_172 = arith.constant 0 : i32
    %297 = vector.broadcast %c0_i32_172 : i32 to vector<4x1xi32>
    %298 = arith.cmpi slt, %294, %297 : vector<4x1xi32>
    %c0_i32_173 = arith.constant 0 : i32
    %299 = arith.cmpi slt, %292, %c0_i32_173 : i32
    %300 = vector.broadcast %299 : i1 to vector<4x1xi1>
    %301 = vector.broadcast %300 : vector<4x1xi1> to vector<4x1xi1>
    %302 = arith.xori %298, %301 : vector<4x1xi1>
    %303 = arith.andi %302, %296 : vector<4x1xi1>
    %304 = vector.broadcast %292 : i32 to vector<4x1xi32>
    %305 = arith.addi %294, %304 : vector<4x1xi32>
    %306 = arith.select %303, %305, %294 : vector<4x1xi1>, vector<4x1xi32>
    %c0_i32_174 = arith.constant 0 : i32
    %307 = vector.broadcast %c0_i32_174 : i32 to vector<4x1xi32>
    %308 = arith.cmpi ne, %306, %307 : vector<4x1xi32>
    %c3_i32 = arith.constant 3 : i32
    %309 = vector.broadcast %c3_i32 : i32 to vector<4x1xi32>
    %310 = arith.cmpi ne, %306, %309 : vector<4x1xi32>
    %cst_175 = arith.constant 1.000000e-01 : f32
    %311 = vector.broadcast %cst_175 : f32 to vector<4x128xf32>
    %312 = arith.mulf %311, %289 : vector<4x128xf32>
    %313 = arith.maximumf %289, %312 : vector<4x128xf32>
    %c6 = arith.constant 6 : index
    %c0_176 = arith.constant 0 : index
    %c0_177 = arith.constant 0 : index
    %314 = vector.load %arg9[%c6, %c0_176, %c0_177] : memref<9x128x128xbf16, #tpu.memory_space<vmem>>, vector<1x128x128xbf16>
    %315 = vector.shape_cast %314 : vector<1x128x128xbf16> to vector<128x128xbf16>
    %c7 = arith.constant 7 : index
    %c0_178 = arith.constant 0 : index
    %c0_179 = arith.constant 0 : index
    %316 = vector.load %arg9[%c7, %c0_178, %c0_179] : memref<9x128x128xbf16, #tpu.memory_space<vmem>>, vector<1x128x128xbf16>
    %317 = vector.shape_cast %316 : vector<1x128x128xbf16> to vector<128x128xbf16>
    %c8 = arith.constant 8 : index
    %c0_180 = arith.constant 0 : index
    %c0_181 = arith.constant 0 : index
    %318 = vector.load %arg9[%c8, %c0_180, %c0_181] : memref<9x128x128xbf16, #tpu.memory_space<vmem>>, vector<1x128x128xbf16>
    %319 = vector.shape_cast %318 : vector<1x128x128xbf16> to vector<128x128xbf16>
    %c2_182 = arith.constant 2 : index
    %c0_183 = arith.constant 0 : index
    %c0_184 = arith.constant 0 : index
    %320 = vector.load %arg10[%c2_182, %c0_183, %c0_184] : memref<3x1x128xf32, #tpu.memory_space<vmem>>, vector<1x1x128xf32>
    %321 = vector.shape_cast %320 : vector<1x1x128xf32> to vector<1x128xf32>
    %c1_i32_185 = arith.constant 1 : i32
    %322 = tpu.dynamic_rotate %313 by %c1_i32_185 dim 0 : vector<4x128xf32>, i32 -> vector<4x128xf32>
    %cst_186 = arith.constant 0.000000e+00 : f32
    %323 = vector.shape_cast %308 : vector<4x1xi1> to vector<4x1xi1>
    %324 = vector.broadcast %323 : vector<4x1xi1> to vector<4x128xi1>
    %325 = vector.broadcast %cst_186 : f32 to vector<4x128xf32>
    %326 = arith.select %324, %322, %325 : vector<4x128xi1>, vector<4x128xf32>
    %c3_i32_187 = arith.constant 3 : i32
    %327 = tpu.dynamic_rotate %313 by %c3_i32_187 dim 0 : vector<4x128xf32>, i32 -> vector<4x128xf32>
    %cst_188 = arith.constant 0.000000e+00 : f32
    %328 = vector.shape_cast %310 : vector<4x1xi1> to vector<4x1xi1>
    %329 = vector.broadcast %328 : vector<4x1xi1> to vector<4x128xi1>
    %330 = vector.broadcast %cst_188 : f32 to vector<4x128xf32>
    %331 = arith.select %329, %327, %330 : vector<4x128xi1>, vector<4x128xf32>
    %332 = arith.truncf %326 : vector<4x128xf32> to vector<4x128xbf16>
    %cst_189 = arith.constant dense<0.000000e+00> : vector<4x128xf32>
    %333 = tpu.matmul %332, %315, %cst_189 {dimension_numbers = #tpu.dot_dimension_numbers<[1], [0], [0], [1], [0, 0, 1, 1], [], []>} : vector<4x128xbf16>, vector<128x128xbf16>, vector<4x128xf32> -> vector<4x128xf32>
    %334 = arith.truncf %313 : vector<4x128xf32> to vector<4x128xbf16>
    %cst_190 = arith.constant dense<0.000000e+00> : vector<4x128xf32>
    %335 = tpu.matmul %334, %317, %cst_190 {dimension_numbers = #tpu.dot_dimension_numbers<[1], [0], [0], [1], [0, 0, 1, 1], [], []>} : vector<4x128xbf16>, vector<128x128xbf16>, vector<4x128xf32> -> vector<4x128xf32>
    %336 = arith.addf %333, %335 : vector<4x128xf32>
    %337 = arith.truncf %331 : vector<4x128xf32> to vector<4x128xbf16>
    %cst_191 = arith.constant dense<0.000000e+00> : vector<4x128xf32>
    %338 = tpu.matmul %337, %319, %cst_191 {dimension_numbers = #tpu.dot_dimension_numbers<[1], [0], [0], [1], [0, 0, 1, 1], [], []>} : vector<4x128xbf16>, vector<128x128xbf16>, vector<4x128xf32> -> vector<4x128xf32>
    %339 = arith.addf %336, %338 : vector<4x128xf32>
    %340 = vector.broadcast %321 : vector<1x128xf32> to vector<4x128xf32>
    %341 = arith.addf %339, %340 : vector<4x128xf32>
    %cst_192 = arith.constant 1.000000e-01 : f32
    %342 = vector.broadcast %cst_192 : f32 to vector<4x128xf32>
    %343 = arith.mulf %342, %341 : vector<4x128xf32>
    %344 = arith.maximumf %341, %343 : vector<4x128xf32>
    %c6_193 = arith.constant 6 : index
    %c0_194 = arith.constant 0 : index
    %c0_195 = arith.constant 0 : index
    %345 = vector.load %arg11[%c6_193, %c0_194, %c0_195] : memref<9x128x128xbf16, #tpu.memory_space<vmem>>, vector<1x128x128xbf16>
    %346 = vector.shape_cast %345 : vector<1x128x128xbf16> to vector<128x128xbf16>
    %c7_196 = arith.constant 7 : index
    %c0_197 = arith.constant 0 : index
    %c0_198 = arith.constant 0 : index
    %347 = vector.load %arg11[%c7_196, %c0_197, %c0_198] : memref<9x128x128xbf16, #tpu.memory_space<vmem>>, vector<1x128x128xbf16>
    %348 = vector.shape_cast %347 : vector<1x128x128xbf16> to vector<128x128xbf16>
    %c8_199 = arith.constant 8 : index
    %c0_200 = arith.constant 0 : index
    %c0_201 = arith.constant 0 : index
    %349 = vector.load %arg11[%c8_199, %c0_200, %c0_201] : memref<9x128x128xbf16, #tpu.memory_space<vmem>>, vector<1x128x128xbf16>
    %350 = vector.shape_cast %349 : vector<1x128x128xbf16> to vector<128x128xbf16>
    %c2_202 = arith.constant 2 : index
    %c0_203 = arith.constant 0 : index
    %c0_204 = arith.constant 0 : index
    %351 = vector.load %arg12[%c2_202, %c0_203, %c0_204] : memref<3x1x128xf32, #tpu.memory_space<vmem>>, vector<1x1x128xf32>
    %352 = vector.shape_cast %351 : vector<1x1x128xf32> to vector<1x128xf32>
    %c1_i32_205 = arith.constant 1 : i32
    %353 = tpu.dynamic_rotate %344 by %c1_i32_205 dim 0 : vector<4x128xf32>, i32 -> vector<4x128xf32>
    %cst_206 = arith.constant 0.000000e+00 : f32
    %354 = vector.shape_cast %308 : vector<4x1xi1> to vector<4x1xi1>
    %355 = vector.broadcast %354 : vector<4x1xi1> to vector<4x128xi1>
    %356 = vector.broadcast %cst_206 : f32 to vector<4x128xf32>
    %357 = arith.select %355, %353, %356 : vector<4x128xi1>, vector<4x128xf32>
    %c3_i32_207 = arith.constant 3 : i32
    %358 = tpu.dynamic_rotate %344 by %c3_i32_207 dim 0 : vector<4x128xf32>, i32 -> vector<4x128xf32>
    %cst_208 = arith.constant 0.000000e+00 : f32
    %359 = vector.shape_cast %310 : vector<4x1xi1> to vector<4x1xi1>
    %360 = vector.broadcast %359 : vector<4x1xi1> to vector<4x128xi1>
    %361 = vector.broadcast %cst_208 : f32 to vector<4x128xf32>
    %362 = arith.select %360, %358, %361 : vector<4x128xi1>, vector<4x128xf32>
    %363 = arith.truncf %357 : vector<4x128xf32> to vector<4x128xbf16>
    %cst_209 = arith.constant dense<0.000000e+00> : vector<4x128xf32>
    %364 = tpu.matmul %363, %346, %cst_209 {dimension_numbers = #tpu.dot_dimension_numbers<[1], [0], [0], [1], [0, 0, 1, 1], [], []>} : vector<4x128xbf16>, vector<128x128xbf16>, vector<4x128xf32> -> vector<4x128xf32>
    %365 = arith.truncf %344 : vector<4x128xf32> to vector<4x128xbf16>
    %cst_210 = arith.constant dense<0.000000e+00> : vector<4x128xf32>
    %366 = tpu.matmul %365, %348, %cst_210 {dimension_numbers = #tpu.dot_dimension_numbers<[1], [0], [0], [1], [0, 0, 1, 1], [], []>} : vector<4x128xbf16>, vector<128x128xbf16>, vector<4x128xf32> -> vector<4x128xf32>
    %367 = arith.addf %364, %366 : vector<4x128xf32>
    %368 = arith.truncf %362 : vector<4x128xf32> to vector<4x128xbf16>
    %cst_211 = arith.constant dense<0.000000e+00> : vector<4x128xf32>
    %369 = tpu.matmul %368, %350, %cst_211 {dimension_numbers = #tpu.dot_dimension_numbers<[1], [0], [0], [1], [0, 0, 1, 1], [], []>} : vector<4x128xbf16>, vector<128x128xbf16>, vector<4x128xf32> -> vector<4x128xf32>
    %370 = arith.addf %367, %369 : vector<4x128xf32>
    %371 = vector.broadcast %352 : vector<1x128xf32> to vector<4x128xf32>
    %372 = arith.addf %370, %371 : vector<4x128xf32>
    %373 = arith.truncf %289 : vector<4x128xf32> to vector<4x128xbf16>
    %c2_212 = arith.constant 2 : index
    %c0_213 = arith.constant 0 : index
    %c0_214 = arith.constant 0 : index
    %374 = vector.load %arg13[%c2_212, %c0_213, %c0_214] : memref<3x128x128xbf16, #tpu.memory_space<vmem>>, vector<1x128x128xbf16>
    %375 = vector.shape_cast %374 : vector<1x128x128xbf16> to vector<128x128xbf16>
    %cst_215 = arith.constant dense<0.000000e+00> : vector<4x128xf32>
    %376 = tpu.matmul %373, %375, %cst_215 {dimension_numbers = #tpu.dot_dimension_numbers<[1], [0], [0], [1], [0, 0, 1, 1], [], []>} : vector<4x128xbf16>, vector<128x128xbf16>, vector<4x128xf32> -> vector<4x128xf32>
    %c2_216 = arith.constant 2 : index
    %c0_217 = arith.constant 0 : index
    %c0_218 = arith.constant 0 : index
    %377 = vector.load %arg14[%c2_216, %c0_217, %c0_218] : memref<3x1x128xf32, #tpu.memory_space<vmem>>, vector<1x1x128xf32>
    %378 = vector.shape_cast %377 : vector<1x1x128xf32> to vector<1x128xf32>
    %379 = vector.broadcast %378 : vector<1x128xf32> to vector<4x128xf32>
    %380 = arith.addf %376, %379 : vector<4x128xf32>
    %381 = arith.addf %372, %380 : vector<4x128xf32>
    %c0_219 = arith.constant 0 : index
    %c0_220 = arith.constant 0 : index
    %382 = vector.load %arg18[%c0_219, %c0_220] : memref<32x128xf32, #tpu.memory_space<vmem>>, vector<4x128xf32>
    tpu.vector_store %arg18[%c0_219, %c0_220], %381 {strides = array<i32>} : memref<32x128xf32, #tpu.memory_space<vmem>>, vector<4x128xf32>,
    %c0_221 = arith.constant 0 : index
    %c0_222 = arith.constant 0 : index
    %383 = tpu.strided_load %arg18[%c0_221, %c0_222] {strides = array<i32: 2, 1>} : memref<32x128xf32, #tpu.memory_space<vmem>>, vector<2x128xf32>
    %c1_223 = arith.constant 1 : index
    %c0_224 = arith.constant 0 : index
    %384 = tpu.strided_load %arg18[%c1_223, %c0_224] {strides = array<i32: 2, 1>} : memref<32x128xf32, #tpu.memory_space<vmem>>, vector<2x128xf32>
    %385 = arith.addf %383, %384 : vector<2x128xf32>
    %cst_225 = arith.constant 5.000000e-01 : f32
    %386 = vector.broadcast %cst_225 : f32 to vector<2x128xf32>
    %387 = arith.mulf %385, %386 : vector<2x128xf32>
    %cst_226 = arith.constant 1.000000e-01 : f32
    %388 = vector.broadcast %cst_226 : f32 to vector<2x128xf32>
    %389 = arith.mulf %388, %387 : vector<2x128xf32>
    %390 = arith.maximumf %387, %389 : vector<2x128xf32>
    %c0_227 = arith.constant 0 : index
    %c0_228 = arith.constant 0 : index
    %391 = vector.load %arg2[%c0_227, %c0_228] : memref<1x2xf32, #tpu.memory_space<vmem>>, vector<1x2xf32>
    %cst_229 = arith.constant dense<0.000000e+00> : vector<1x128xf32>
    %392 = tpu.matmul %391, %390, %cst_229 {dimension_numbers = #tpu.dot_dimension_numbers<[1], [0], [0], [1], [0, 0, 1, 1], [], []>} : vector<1x2xf32>, vector<2x128xf32>, vector<1x128xf32> -> vector<1x128xf32>
    %c0_230 = arith.constant 0 : index
    %c0_231 = arith.constant 0 : index
    %393 = vector.load %arg15[%c0_230, %c0_231] : memref<128x128xf32, #tpu.memory_space<vmem>>, vector<128x128xf32>
    %cst_232 = arith.constant dense<0.000000e+00> : vector<1x128xf32>
    %394 = tpu.matmul %392, %393, %cst_232 {dimension_numbers = #tpu.dot_dimension_numbers<[1], [0], [0], [1], [0, 0, 1, 1], [], []>} : vector<1x128xf32>, vector<128x128xf32>, vector<1x128xf32> -> vector<1x128xf32>
    %c0_233 = arith.constant 0 : index
    %c0_234 = arith.constant 0 : index
    %395 = vector.load %arg16[%c0_233, %c0_234] : memref<1x128xf32, #tpu.memory_space<vmem>>, vector<1x128xf32>
    %396 = arith.addf %394, %395 : vector<1x128xf32>
    %c0_235 = arith.constant 0 : index
    %c0_236 = arith.constant 0 : index
    %c0_237 = arith.constant 0 : index
    %397 = vector.load %arg17[%c0_235, %c0_236, %c0_237] : memref<1x1x128xf32, #tpu.memory_space<vmem>>, vector<1x1x128xf32>
    %398 = vector.shape_cast %397 : vector<1x1x128xf32> to vector<1x128xf32>
    %399 = vector.shape_cast %396 : vector<1x128xf32> to vector<1x1x128xf32>
    tpu.vector_store %arg17[%c0_235, %c0_236, %c0_237], %399 {strides = array<i32>} : memref<1x1x128xf32, #tpu.memory_space<vmem>>, vector<1x1x128xf32>,
    return
  }
  func.func @transform_0(%arg0: i32) -> (i32, i32, i32) {
    %c0_i32 = arith.constant 0 : i32
    %c0_i32_0 = arith.constant 0 : i32
    %c0_i32_1 = arith.constant 0 : i32
    return %arg0, %c0_i32, %c0_i32_0 : i32, i32, i32
  }
  func.func @transform_1(%arg0: i32) -> (i32, i32) {
    %c0_i32 = arith.constant 0 : i32
    %c0_i32_0 = arith.constant 0 : i32
    %c0_i32_1 = arith.constant 0 : i32
    return %c0_i32, %c0_i32_0 : i32, i32
  }
  func.func @transform_2(%arg0: i32) -> (i32, i32, i32) {
    %c0_i32 = arith.constant 0 : i32
    %c0_i32_0 = arith.constant 0 : i32
    %c0_i32_1 = arith.constant 0 : i32
    %c0_i32_2 = arith.constant 0 : i32
    return %c0_i32, %c0_i32_0, %c0_i32_1 : i32, i32, i32
  }
  func.func @transform_3(%arg0: i32) -> (i32, i32) {
    %c0_i32 = arith.constant 0 : i32
    %c0_i32_0 = arith.constant 0 : i32
    %c0_i32_1 = arith.constant 0 : i32
    return %c0_i32, %c0_i32_0 : i32, i32
  }
  func.func @transform_4(%arg0: i32) -> (i32, i32, i32) {
    %c0_i32 = arith.constant 0 : i32
    %c0_i32_0 = arith.constant 0 : i32
    %c0_i32_1 = arith.constant 0 : i32
    %c0_i32_2 = arith.constant 0 : i32
    return %c0_i32, %c0_i32_0, %c0_i32_1 : i32, i32, i32
  }
  func.func @transform_5(%arg0: i32) -> (i32, i32) {
    %c0_i32 = arith.constant 0 : i32
    %c0_i32_0 = arith.constant 0 : i32
    %c0_i32_1 = arith.constant 0 : i32
    return %c0_i32, %c0_i32_0 : i32, i32
  }
  func.func @transform_6(%arg0: i32) -> (i32, i32) {
    %c0_i32 = arith.constant 0 : i32
    %c0_i32_0 = arith.constant 0 : i32
    %c0_i32_1 = arith.constant 0 : i32
    return %c0_i32, %c0_i32_0 : i32, i32
  }
  func.func @transform_7(%arg0: i32) -> (i32, i32) {
    %c0_i32 = arith.constant 0 : i32
    %c0_i32_0 = arith.constant 0 : i32
    %c0_i32_1 = arith.constant 0 : i32
    return %c0_i32, %c0_i32_0 : i32, i32
  }
  func.func @transform_8(%arg0: i32) -> (i32, i32, i32) {
    %c0_i32 = arith.constant 0 : i32
    %c0_i32_0 = arith.constant 0 : i32
    %c0_i32_1 = arith.constant 0 : i32
    %c0_i32_2 = arith.constant 0 : i32
    return %c0_i32, %c0_i32_0, %c0_i32_1 : i32, i32, i32
  }
  func.func @transform_9(%arg0: i32) -> (i32, i32, i32) {
    %c0_i32 = arith.constant 0 : i32
    %c0_i32_0 = arith.constant 0 : i32
    %c0_i32_1 = arith.constant 0 : i32
    %c0_i32_2 = arith.constant 0 : i32
    return %c0_i32, %c0_i32_0, %c0_i32_1 : i32, i32, i32
  }
  func.func @transform_10(%arg0: i32) -> (i32, i32, i32) {
    %c0_i32 = arith.constant 0 : i32
    %c0_i32_0 = arith.constant 0 : i32
    %c0_i32_1 = arith.constant 0 : i32
    %c0_i32_2 = arith.constant 0 : i32
    return %c0_i32, %c0_i32_0, %c0_i32_1 : i32, i32, i32
  }
  func.func @transform_11(%arg0: i32) -> (i32, i32, i32) {
    %c0_i32 = arith.constant 0 : i32
    %c0_i32_0 = arith.constant 0 : i32
    %c0_i32_1 = arith.constant 0 : i32
    %c0_i32_2 = arith.constant 0 : i32
    return %c0_i32, %c0_i32_0, %c0_i32_1 : i32, i32, i32
  }
  func.func @transform_12(%arg0: i32) -> (i32, i32, i32) {
    %c0_i32 = arith.constant 0 : i32
    %c0_i32_0 = arith.constant 0 : i32
    %c0_i32_1 = arith.constant 0 : i32
    %c0_i32_2 = arith.constant 0 : i32
    return %c0_i32, %c0_i32_0, %c0_i32_1 : i32, i32, i32
  }
  func.func @transform_13(%arg0: i32) -> (i32, i32, i32) {
    %c0_i32 = arith.constant 0 : i32
    %c0_i32_0 = arith.constant 0 : i32
    %c0_i32_1 = arith.constant 0 : i32
    %c0_i32_2 = arith.constant 0 : i32
    return %c0_i32, %c0_i32_0, %c0_i32_1 : i32, i32, i32
  }
  func.func @transform_14(%arg0: i32) -> (i32, i32) {
    %c0_i32 = arith.constant 0 : i32
    %c0_i32_0 = arith.constant 0 : i32
    %c0_i32_1 = arith.constant 0 : i32
    return %c0_i32, %c0_i32_0 : i32, i32
  }
  func.func @transform_15(%arg0: i32) -> (i32, i32) {
    %c0_i32 = arith.constant 0 : i32
    %c0_i32_0 = arith.constant 0 : i32
    %c0_i32_1 = arith.constant 0 : i32
    return %c0_i32, %c0_i32_0 : i32, i32
  }
  func.func @transform_16(%arg0: i32) -> (i32, i32, i32) {
    %c0_i32 = arith.constant 0 : i32
    %c0_i32_0 = arith.constant 0 : i32
    %c0_i32_1 = arith.constant 0 : i32
    return %arg0, %c0_i32, %c0_i32_0 : i32, i32, i32
  }
}

module attributes {stable_mosaic.version = 11 : i64} {
  func.func @_disc_kernel(%arg0: i32, %arg1: memref<1x32x128xbf16, #tpu.memory_space<vmem>>, %arg2: memref<1x2xf32, #tpu.memory_space<vmem>>, %arg3: memref<3x128x128xbf16, #tpu.memory_space<vmem>>, %arg4: memref<1x128xf32, #tpu.memory_space<vmem>>, %arg5: memref<3x128x128xbf16, #tpu.memory_space<vmem>>, %arg6: memref<1x128xf32, #tpu.memory_space<vmem>>, %arg7: memref<128x128xbf16, #tpu.memory_space<vmem>>, %arg8: memref<1x128xf32, #tpu.memory_space<vmem>>, %arg9: memref<9x128x128xbf16, #tpu.memory_space<vmem>>, %arg10: memref<3x1x128xf32, #tpu.memory_space<vmem>>, %arg11: memref<9x128x128xbf16, #tpu.memory_space<vmem>>, %arg12: memref<3x1x128xf32, #tpu.memory_space<vmem>>, %arg13: memref<3x128x128xbf16, #tpu.memory_space<vmem>>, %arg14: memref<3x1x128xf32, #tpu.memory_space<vmem>>, %arg15: memref<128x128xf32, #tpu.memory_space<vmem>>, %arg16: memref<1x128xf32, #tpu.memory_space<vmem>>, %arg17: memref<1x1x128xf32, #tpu.memory_space<vmem>>, %arg18: memref<32x128xf32, #tpu.memory_space<vmem>>) attributes {dimension_semantics = [#tpu.dimension_semantics<parallel>], iteration_bounds = array<i64: 2>, scalar_prefetch = 0 : i64, scratch_operands = 1 : i64, tpu.core_type = #tpu.core_type<tc>, window_params = [{transform_indices = @transform_0, window_bounds = array<i64: 1, 32, 128>}, {pipeline_mode = #tpu.pipeline_mode<synchronous>, transform_indices = @transform_1, window_bounds = array<i64: 1, 2>}, {pipeline_mode = #tpu.pipeline_mode<synchronous>, transform_indices = @transform_2, window_bounds = array<i64: 3, 128, 128>}, {pipeline_mode = #tpu.pipeline_mode<synchronous>, transform_indices = @transform_3, window_bounds = array<i64: 1, 128>}, {pipeline_mode = #tpu.pipeline_mode<synchronous>, transform_indices = @transform_4, window_bounds = array<i64: 3, 128, 128>}, {pipeline_mode = #tpu.pipeline_mode<synchronous>, transform_indices = @transform_5, window_bounds = array<i64: 1, 128>}, {pipeline_mode = #tpu.pipeline_mode<synchronous>, transform_indices = @transform_6, window_bounds = array<i64: 128, 128>}, {pipeline_mode = #tpu.pipeline_mode<synchronous>, transform_indices = @transform_7, window_bounds = array<i64: 1, 128>}, {pipeline_mode = #tpu.pipeline_mode<synchronous>, transform_indices = @transform_8, window_bounds = array<i64: 9, 128, 128>}, {pipeline_mode = #tpu.pipeline_mode<synchronous>, transform_indices = @transform_9, window_bounds = array<i64: 3, 1, 128>}, {pipeline_mode = #tpu.pipeline_mode<synchronous>, transform_indices = @transform_10, window_bounds = array<i64: 9, 128, 128>}, {pipeline_mode = #tpu.pipeline_mode<synchronous>, transform_indices = @transform_11, window_bounds = array<i64: 3, 1, 128>}, {pipeline_mode = #tpu.pipeline_mode<synchronous>, transform_indices = @transform_12, window_bounds = array<i64: 3, 128, 128>}, {pipeline_mode = #tpu.pipeline_mode<synchronous>, transform_indices = @transform_13, window_bounds = array<i64: 3, 1, 128>}, {pipeline_mode = #tpu.pipeline_mode<synchronous>, transform_indices = @transform_14, window_bounds = array<i64: 128, 128>}, {pipeline_mode = #tpu.pipeline_mode<synchronous>, transform_indices = @transform_15, window_bounds = array<i64: 1, 128>}, {transform_indices = @transform_16, window_bounds = array<i64: 1, 1, 128>}]} {
    %c0 = arith.constant 0 : index
    %c0_0 = arith.constant 0 : index
    %c0_1 = arith.constant 0 : index
    %0 = vector.load %arg1[%c0, %c0_0, %c0_1] : memref<1x32x128xbf16, #tpu.memory_space<vmem>>, vector<1x32x128xbf16>
    %1 = vector.shape_cast %0 : vector<1x32x128xbf16> to vector<32x128xbf16>
    %2 = arith.extf %1 : vector<32x128xbf16> to vector<32x128xf32>
    %3 = tpu.iota {dimensions = array<i32: 0>} : vector<32x1xi32>
    %c32_i32 = arith.constant 32 : i32
    %c0_i32 = arith.constant 0 : i32
    %4 = arith.cmpi eq, %c32_i32, %c0_i32 : i32
    %c1_i32 = arith.constant 1 : i32
    %5 = arith.select %4, %c1_i32, %c32_i32 : i32
    %6 = vector.broadcast %5 : i32 to vector<32x1xi32>
    %7 = arith.remsi %3, %6 : vector<32x1xi32>
    %c0_i32_2 = arith.constant 0 : i32
    %8 = vector.broadcast %c0_i32_2 : i32 to vector<32x1xi32>
    %9 = arith.cmpi ne, %7, %8 : vector<32x1xi32>
    %c0_i32_3 = arith.constant 0 : i32
    %10 = vector.broadcast %c0_i32_3 : i32 to vector<32x1xi32>
    %11 = arith.cmpi slt, %7, %10 : vector<32x1xi32>
    %c0_i32_4 = arith.constant 0 : i32
    %12 = arith.cmpi slt, %5, %c0_i32_4 : i32
    %13 = vector.broadcast %12 : i1 to vector<32x1xi1>
    %14 = vector.broadcast %13 : vector<32x1xi1> to vector<32x1xi1>
    %15 = arith.xori %11, %14 : vector<32x1xi1>
    %16 = arith.andi %15, %9 : vector<32x1xi1>
    %17 = vector.broadcast %5 : i32 to vector<32x1xi32>
    %18 = arith.addi %7, %17 : vector<32x1xi32>
    %19 = arith.select %16, %18, %7 : vector<32x1xi1>, vector<32x1xi32>
    %c0_i32_5 = arith.constant 0 : i32
    %20 = vector.broadcast %c0_i32_5 : i32 to vector<32x1xi32>
    %21 = arith.cmpi ne, %19, %20 : vector<32x1xi32>
    %c31_i32 = arith.constant 31 : i32
    %22 = vector.broadcast %c31_i32 : i32 to vector<32x1xi32>
    %23 = arith.cmpi ne, %19, %22 : vector<32x1xi32>
    %c0_6 = arith.constant 0 : index
    %c0_7 = arith.constant 0 : index
    %c0_8 = arith.constant 0 : index
    %24 = vector.load %arg3[%c0_6, %c0_7, %c0_8] : memref<3x128x128xbf16, #tpu.memory_space<vmem>>, vector<1x128x128xbf16>
    %25 = vector.shape_cast %24 : vector<1x128x128xbf16> to vector<128x128xbf16>
    %c1 = arith.constant 1 : index
    %c0_9 = arith.constant 0 : index
    %c0_10 = arith.constant 0 : index
    %26 = vector.load %arg3[%c1, %c0_9, %c0_10] : memref<3x128x128xbf16, #tpu.memory_space<vmem>>, vector<1x128x128xbf16>
    %27 = vector.shape_cast %26 : vector<1x128x128xbf16> to vector<128x128xbf16>
    %c2 = arith.constant 2 : index
    %c0_11 = arith.constant 0 : index
    %c0_12 = arith.constant 0 : index
    %28 = vector.load %arg3[%c2, %c0_11, %c0_12] : memref<3x128x128xbf16, #tpu.memory_space<vmem>>, vector<1x128x128xbf16>
    %29 = vector.shape_cast %28 : vector<1x128x128xbf16> to vector<128x128xbf16>
    %c0_13 = arith.constant 0 : index
    %c0_14 = arith.constant 0 : index
    %30 = vector.load %arg4[%c0_13, %c0_14] : memref<1x128xf32, #tpu.memory_space<vmem>>, vector<1x128xf32>
    %c1_i32_15 = arith.constant 1 : i32
    %31 = tpu.dynamic_rotate %2 by %c1_i32_15 dim 0 : vector<32x128xf32>, i32 -> vector<32x128xf32>
    %cst = arith.constant 0.000000e+00 : f32
    %32 = vector.shape_cast %21 : vector<32x1xi1> to vector<32x1xi1>
    %33 = vector.broadcast %32 : vector<32x1xi1> to vector<32x128xi1>
    %34 = vector.broadcast %cst : f32 to vector<32x128xf32>
    %35 = arith.select %33, %31, %34 : vector<32x128xi1>, vector<32x128xf32>
    %c31_i32_16 = arith.constant 31 : i32
    %36 = tpu.dynamic_rotate %2 by %c31_i32_16 dim 0 : vector<32x128xf32>, i32 -> vector<32x128xf32>
    %cst_17 = arith.constant 0.000000e+00 : f32
    %37 = vector.shape_cast %23 : vector<32x1xi1> to vector<32x1xi1>
    %38 = vector.broadcast %37 : vector<32x1xi1> to vector<32x128xi1>
    %39 = vector.broadcast %cst_17 : f32 to vector<32x128xf32>
    %40 = arith.select %38, %36, %39 : vector<32x128xi1>, vector<32x128xf32>
    %41 = arith.truncf %35 : vector<32x128xf32> to vector<32x128xbf16>
    %cst_18 = arith.constant dense<0.000000e+00> : vector<32x128xf32>
    %42 = tpu.matmul %41, %25, %cst_18 {dimension_numbers = #tpu.dot_dimension_numbers<[1], [0], [0], [1], [0, 0, 1, 1], [], []>} : vector<32x128xbf16>, vector<128x128xbf16>, vector<32x128xf32> -> vector<32x128xf32>
    %43 = arith.truncf %2 : vector<32x128xf32> to vector<32x128xbf16>
    %cst_19 = arith.constant dense<0.000000e+00> : vector<32x128xf32>
    %44 = tpu.matmul %43, %27, %cst_19 {dimension_numbers = #tpu.dot_dimension_numbers<[1], [0], [0], [1], [0, 0, 1, 1], [], []>} : vector<32x128xbf16>, vector<128x128xbf16>, vector<32x128xf32> -> vector<32x128xf32>
    %45 = arith.addf %42, %44 : vector<32x128xf32>
    %46 = arith.truncf %40 : vector<32x128xf32> to vector<32x128xbf16>
    %cst_20 = arith.constant dense<0.000000e+00> : vector<32x128xf32>
    %47 = tpu.matmul %46, %29, %cst_20 {dimension_numbers = #tpu.dot_dimension_numbers<[1], [0], [0], [1], [0, 0, 1, 1], [], []>} : vector<32x128xbf16>, vector<128x128xbf16>, vector<32x128xf32> -> vector<32x128xf32>
    %48 = arith.addf %45, %47 : vector<32x128xf32>
    %49 = vector.broadcast %30 : vector<1x128xf32> to vector<32x128xf32>
    %50 = arith.addf %48, %49 : vector<32x128xf32>
    %cst_21 = arith.constant 1.000000e-01 : f32
    %51 = vector.broadcast %cst_21 : f32 to vector<32x128xf32>
    %52 = arith.mulf %51, %50 : vector<32x128xf32>
    %53 = arith.maximumf %50, %52 : vector<32x128xf32>
    %c0_22 = arith.constant 0 : index
    %c0_23 = arith.constant 0 : index
    %c0_24 = arith.constant 0 : index
    %54 = vector.load %arg5[%c0_22, %c0_23, %c0_24] : memref<3x128x128xbf16, #tpu.memory_space<vmem>>, vector<1x128x128xbf16>
    %55 = vector.shape_cast %54 : vector<1x128x128xbf16> to vector<128x128xbf16>
    %c1_25 = arith.constant 1 : index
    %c0_26 = arith.constant 0 : index
    %c0_27 = arith.constant 0 : index
    %56 = vector.load %arg5[%c1_25, %c0_26, %c0_27] : memref<3x128x128xbf16, #tpu.memory_space<vmem>>, vector<1x128x128xbf16>
    %57 = vector.shape_cast %56 : vector<1x128x128xbf16> to vector<128x128xbf16>
    %c2_28 = arith.constant 2 : index
    %c0_29 = arith.constant 0 : index
    %c0_30 = arith.constant 0 : index
    %58 = vector.load %arg5[%c2_28, %c0_29, %c0_30] : memref<3x128x128xbf16, #tpu.memory_space<vmem>>, vector<1x128x128xbf16>
    %59 = vector.shape_cast %58 : vector<1x128x128xbf16> to vector<128x128xbf16>
    %c0_31 = arith.constant 0 : index
    %c0_32 = arith.constant 0 : index
    %60 = vector.load %arg6[%c0_31, %c0_32] : memref<1x128xf32, #tpu.memory_space<vmem>>, vector<1x128xf32>
    %c1_i32_33 = arith.constant 1 : i32
    %61 = tpu.dynamic_rotate %53 by %c1_i32_33 dim 0 : vector<32x128xf32>, i32 -> vector<32x128xf32>
    %cst_34 = arith.constant 0.000000e+00 : f32
    %62 = vector.shape_cast %21 : vector<32x1xi1> to vector<32x1xi1>
    %63 = vector.broadcast %62 : vector<32x1xi1> to vector<32x128xi1>
    %64 = vector.broadcast %cst_34 : f32 to vector<32x128xf32>
    %65 = arith.select %63, %61, %64 : vector<32x128xi1>, vector<32x128xf32>
    %c31_i32_35 = arith.constant 31 : i32
    %66 = tpu.dynamic_rotate %53 by %c31_i32_35 dim 0 : vector<32x128xf32>, i32 -> vector<32x128xf32>
    %cst_36 = arith.constant 0.000000e+00 : f32
    %67 = vector.shape_cast %23 : vector<32x1xi1> to vector<32x1xi1>
    %68 = vector.broadcast %67 : vector<32x1xi1> to vector<32x128xi1>
    %69 = vector.broadcast %cst_36 : f32 to vector<32x128xf32>
    %70 = arith.select %68, %66, %69 : vector<32x128xi1>, vector<32x128xf32>
    %71 = arith.truncf %65 : vector<32x128xf32> to vector<32x128xbf16>
    %cst_37 = arith.constant dense<0.000000e+00> : vector<32x128xf32>
    %72 = tpu.matmul %71, %55, %cst_37 {dimension_numbers = #tpu.dot_dimension_numbers<[1], [0], [0], [1], [0, 0, 1, 1], [], []>} : vector<32x128xbf16>, vector<128x128xbf16>, vector<32x128xf32> -> vector<32x128xf32>
    %73 = arith.truncf %53 : vector<32x128xf32> to vector<32x128xbf16>
    %cst_38 = arith.constant dense<0.000000e+00> : vector<32x128xf32>
    %74 = tpu.matmul %73, %57, %cst_38 {dimension_numbers = #tpu.dot_dimension_numbers<[1], [0], [0], [1], [0, 0, 1, 1], [], []>} : vector<32x128xbf16>, vector<128x128xbf16>, vector<32x128xf32> -> vector<32x128xf32>
    %75 = arith.addf %72, %74 : vector<32x128xf32>
    %76 = arith.truncf %70 : vector<32x128xf32> to vector<32x128xbf16>
    %cst_39 = arith.constant dense<0.000000e+00> : vector<32x128xf32>
    %77 = tpu.matmul %76, %59, %cst_39 {dimension_numbers = #tpu.dot_dimension_numbers<[1], [0], [0], [1], [0, 0, 1, 1], [], []>} : vector<32x128xbf16>, vector<128x128xbf16>, vector<32x128xf32> -> vector<32x128xf32>
    %78 = arith.addf %75, %77 : vector<32x128xf32>
    %79 = vector.broadcast %60 : vector<1x128xf32> to vector<32x128xf32>
    %80 = arith.addf %78, %79 : vector<32x128xf32>
    %81 = arith.truncf %2 : vector<32x128xf32> to vector<32x128xbf16>
    %c0_40 = arith.constant 0 : index
    %c0_41 = arith.constant 0 : index
    %82 = vector.load %arg7[%c0_40, %c0_41] : memref<128x128xbf16, #tpu.memory_space<vmem>>, vector<128x128xbf16>
    %cst_42 = arith.constant dense<0.000000e+00> : vector<32x128xf32>
    %83 = tpu.matmul %81, %82, %cst_42 {dimension_numbers = #tpu.dot_dimension_numbers<[1], [0], [0], [1], [0, 0, 1, 1], [], []>} : vector<32x128xbf16>, vector<128x128xbf16>, vector<32x128xf32> -> vector<32x128xf32>
    %c0_43 = arith.constant 0 : index
    %c0_44 = arith.constant 0 : index
    %84 = vector.load %arg8[%c0_43, %c0_44] : memref<1x128xf32, #tpu.memory_space<vmem>>, vector<1x128xf32>
    %85 = vector.broadcast %84 : vector<1x128xf32> to vector<32x128xf32>
    %86 = arith.addf %83, %85 : vector<32x128xf32>
    %87 = arith.addf %80, %86 : vector<32x128xf32>
    %c0_45 = arith.constant 0 : index
    %c0_46 = arith.constant 0 : index
    %88 = vector.load %arg18[%c0_45, %c0_46] : memref<32x128xf32, #tpu.memory_space<vmem>>, vector<32x128xf32>
    tpu.vector_store %arg18[%c0_45, %c0_46], %87 {strides = array<i32>} : memref<32x128xf32, #tpu.memory_space<vmem>>, vector<32x128xf32>,
    %c0_47 = arith.constant 0 : index
    %c0_48 = arith.constant 0 : index
    %89 = tpu.strided_load %arg18[%c0_47, %c0_48] {strides = array<i32: 2, 1>} : memref<32x128xf32, #tpu.memory_space<vmem>>, vector<16x128xf32>
    %c1_49 = arith.constant 1 : index
    %c0_50 = arith.constant 0 : index
    %90 = tpu.strided_load %arg18[%c1_49, %c0_50] {strides = array<i32: 2, 1>} : memref<32x128xf32, #tpu.memory_space<vmem>>, vector<16x128xf32>
    %91 = arith.addf %89, %90 : vector<16x128xf32>
    %cst_51 = arith.constant 5.000000e-01 : f32
    %92 = vector.broadcast %cst_51 : f32 to vector<16x128xf32>
    %93 = arith.mulf %91, %92 : vector<16x128xf32>
    %94 = tpu.iota {dimensions = array<i32: 0>} : vector<16x1xi32>
    %c16_i32 = arith.constant 16 : i32
    %c0_i32_52 = arith.constant 0 : i32
    %95 = arith.cmpi eq, %c16_i32, %c0_i32_52 : i32
    %c1_i32_53 = arith.constant 1 : i32
    %96 = arith.select %95, %c1_i32_53, %c16_i32 : i32
    %97 = vector.broadcast %96 : i32 to vector<16x1xi32>
    %98 = arith.remsi %94, %97 : vector<16x1xi32>
    %c0_i32_54 = arith.constant 0 : i32
    %99 = vector.broadcast %c0_i32_54 : i32 to vector<16x1xi32>
    %100 = arith.cmpi ne, %98, %99 : vector<16x1xi32>
    %c0_i32_55 = arith.constant 0 : i32
    %101 = vector.broadcast %c0_i32_55 : i32 to vector<16x1xi32>
    %102 = arith.cmpi slt, %98, %101 : vector<16x1xi32>
    %c0_i32_56 = arith.constant 0 : i32
    %103 = arith.cmpi slt, %96, %c0_i32_56 : i32
    %104 = vector.broadcast %103 : i1 to vector<16x1xi1>
    %105 = vector.broadcast %104 : vector<16x1xi1> to vector<16x1xi1>
    %106 = arith.xori %102, %105 : vector<16x1xi1>
    %107 = arith.andi %106, %100 : vector<16x1xi1>
    %108 = vector.broadcast %96 : i32 to vector<16x1xi32>
    %109 = arith.addi %98, %108 : vector<16x1xi32>
    %110 = arith.select %107, %109, %98 : vector<16x1xi1>, vector<16x1xi32>
    %c0_i32_57 = arith.constant 0 : i32
    %111 = vector.broadcast %c0_i32_57 : i32 to vector<16x1xi32>
    %112 = arith.cmpi ne, %110, %111 : vector<16x1xi32>
    %c15_i32 = arith.constant 15 : i32
    %113 = vector.broadcast %c15_i32 : i32 to vector<16x1xi32>
    %114 = arith.cmpi ne, %110, %113 : vector<16x1xi32>
    %cst_58 = arith.constant 1.000000e-01 : f32
    %115 = vector.broadcast %cst_58 : f32 to vector<16x128xf32>
    %116 = arith.mulf %115, %93 : vector<16x128xf32>
    %117 = arith.maximumf %93, %116 : vector<16x128xf32>
    %c0_59 = arith.constant 0 : index
    %c0_60 = arith.constant 0 : index
    %c0_61 = arith.constant 0 : index
    %118 = vector.load %arg9[%c0_59, %c0_60, %c0_61] : memref<9x128x128xbf16, #tpu.memory_space<vmem>>, vector<1x128x128xbf16>
    %119 = vector.shape_cast %118 : vector<1x128x128xbf16> to vector<128x128xbf16>
    %c1_62 = arith.constant 1 : index
    %c0_63 = arith.constant 0 : index
    %c0_64 = arith.constant 0 : index
    %120 = vector.load %arg9[%c1_62, %c0_63, %c0_64] : memref<9x128x128xbf16, #tpu.memory_space<vmem>>, vector<1x128x128xbf16>
    %121 = vector.shape_cast %120 : vector<1x128x128xbf16> to vector<128x128xbf16>
    %c2_65 = arith.constant 2 : index
    %c0_66 = arith.constant 0 : index
    %c0_67 = arith.constant 0 : index
    %122 = vector.load %arg9[%c2_65, %c0_66, %c0_67] : memref<9x128x128xbf16, #tpu.memory_space<vmem>>, vector<1x128x128xbf16>
    %123 = vector.shape_cast %122 : vector<1x128x128xbf16> to vector<128x128xbf16>
    %c0_68 = arith.constant 0 : index
    %c0_69 = arith.constant 0 : index
    %c0_70 = arith.constant 0 : index
    %124 = vector.load %arg10[%c0_68, %c0_69, %c0_70] : memref<3x1x128xf32, #tpu.memory_space<vmem>>, vector<1x1x128xf32>
    %125 = vector.shape_cast %124 : vector<1x1x128xf32> to vector<1x128xf32>
    %c1_i32_71 = arith.constant 1 : i32
    %126 = tpu.dynamic_rotate %117 by %c1_i32_71 dim 0 : vector<16x128xf32>, i32 -> vector<16x128xf32>
    %cst_72 = arith.constant 0.000000e+00 : f32
    %127 = vector.shape_cast %112 : vector<16x1xi1> to vector<16x1xi1>
    %128 = vector.broadcast %127 : vector<16x1xi1> to vector<16x128xi1>
    %129 = vector.broadcast %cst_72 : f32 to vector<16x128xf32>
    %130 = arith.select %128, %126, %129 : vector<16x128xi1>, vector<16x128xf32>
    %c15_i32_73 = arith.constant 15 : i32
    %131 = tpu.dynamic_rotate %117 by %c15_i32_73 dim 0 : vector<16x128xf32>, i32 -> vector<16x128xf32>
    %cst_74 = arith.constant 0.000000e+00 : f32
    %132 = vector.shape_cast %114 : vector<16x1xi1> to vector<16x1xi1>
    %133 = vector.broadcast %132 : vector<16x1xi1> to vector<16x128xi1>
    %134 = vector.broadcast %cst_74 : f32 to vector<16x128xf32>
    %135 = arith.select %133, %131, %134 : vector<16x128xi1>, vector<16x128xf32>
    %136 = arith.truncf %130 : vector<16x128xf32> to vector<16x128xbf16>
    %cst_75 = arith.constant dense<0.000000e+00> : vector<16x128xf32>
    %137 = tpu.matmul %136, %119, %cst_75 {dimension_numbers = #tpu.dot_dimension_numbers<[1], [0], [0], [1], [0, 0, 1, 1], [], []>} : vector<16x128xbf16>, vector<128x128xbf16>, vector<16x128xf32> -> vector<16x128xf32>
    %138 = arith.truncf %117 : vector<16x128xf32> to vector<16x128xbf16>
    %cst_76 = arith.constant dense<0.000000e+00> : vector<16x128xf32>
    %139 = tpu.matmul %138, %121, %cst_76 {dimension_numbers = #tpu.dot_dimension_numbers<[1], [0], [0], [1], [0, 0, 1, 1], [], []>} : vector<16x128xbf16>, vector<128x128xbf16>, vector<16x128xf32> -> vector<16x128xf32>
    %140 = arith.addf %137, %139 : vector<16x128xf32>
    %141 = arith.truncf %135 : vector<16x128xf32> to vector<16x128xbf16>
    %cst_77 = arith.constant dense<0.000000e+00> : vector<16x128xf32>
    %142 = tpu.matmul %141, %123, %cst_77 {dimension_numbers = #tpu.dot_dimension_numbers<[1], [0], [0], [1], [0, 0, 1, 1], [], []>} : vector<16x128xbf16>, vector<128x128xbf16>, vector<16x128xf32> -> vector<16x128xf32>
    %143 = arith.addf %140, %142 : vector<16x128xf32>
    %144 = vector.broadcast %125 : vector<1x128xf32> to vector<16x128xf32>
    %145 = arith.addf %143, %144 : vector<16x128xf32>
    %cst_78 = arith.constant 1.000000e-01 : f32
    %146 = vector.broadcast %cst_78 : f32 to vector<16x128xf32>
    %147 = arith.mulf %146, %145 : vector<16x128xf32>
    %148 = arith.maximumf %145, %147 : vector<16x128xf32>
    %c0_79 = arith.constant 0 : index
    %c0_80 = arith.constant 0 : index
    %c0_81 = arith.constant 0 : index
    %149 = vector.load %arg11[%c0_79, %c0_80, %c0_81] : memref<9x128x128xbf16, #tpu.memory_space<vmem>>, vector<1x128x128xbf16>
    %150 = vector.shape_cast %149 : vector<1x128x128xbf16> to vector<128x128xbf16>
    %c1_82 = arith.constant 1 : index
    %c0_83 = arith.constant 0 : index
    %c0_84 = arith.constant 0 : index
    %151 = vector.load %arg11[%c1_82, %c0_83, %c0_84] : memref<9x128x128xbf16, #tpu.memory_space<vmem>>, vector<1x128x128xbf16>
    %152 = vector.shape_cast %151 : vector<1x128x128xbf16> to vector<128x128xbf16>
    %c2_85 = arith.constant 2 : index
    %c0_86 = arith.constant 0 : index
    %c0_87 = arith.constant 0 : index
    %153 = vector.load %arg11[%c2_85, %c0_86, %c0_87] : memref<9x128x128xbf16, #tpu.memory_space<vmem>>, vector<1x128x128xbf16>
    %154 = vector.shape_cast %153 : vector<1x128x128xbf16> to vector<128x128xbf16>
    %c0_88 = arith.constant 0 : index
    %c0_89 = arith.constant 0 : index
    %c0_90 = arith.constant 0 : index
    %155 = vector.load %arg12[%c0_88, %c0_89, %c0_90] : memref<3x1x128xf32, #tpu.memory_space<vmem>>, vector<1x1x128xf32>
    %156 = vector.shape_cast %155 : vector<1x1x128xf32> to vector<1x128xf32>
    %c1_i32_91 = arith.constant 1 : i32
    %157 = tpu.dynamic_rotate %148 by %c1_i32_91 dim 0 : vector<16x128xf32>, i32 -> vector<16x128xf32>
    %cst_92 = arith.constant 0.000000e+00 : f32
    %158 = vector.shape_cast %112 : vector<16x1xi1> to vector<16x1xi1>
    %159 = vector.broadcast %158 : vector<16x1xi1> to vector<16x128xi1>
    %160 = vector.broadcast %cst_92 : f32 to vector<16x128xf32>
    %161 = arith.select %159, %157, %160 : vector<16x128xi1>, vector<16x128xf32>
    %c15_i32_93 = arith.constant 15 : i32
    %162 = tpu.dynamic_rotate %148 by %c15_i32_93 dim 0 : vector<16x128xf32>, i32 -> vector<16x128xf32>
    %cst_94 = arith.constant 0.000000e+00 : f32
    %163 = vector.shape_cast %114 : vector<16x1xi1> to vector<16x1xi1>
    %164 = vector.broadcast %163 : vector<16x1xi1> to vector<16x128xi1>
    %165 = vector.broadcast %cst_94 : f32 to vector<16x128xf32>
    %166 = arith.select %164, %162, %165 : vector<16x128xi1>, vector<16x128xf32>
    %167 = arith.truncf %161 : vector<16x128xf32> to vector<16x128xbf16>
    %cst_95 = arith.constant dense<0.000000e+00> : vector<16x128xf32>
    %168 = tpu.matmul %167, %150, %cst_95 {dimension_numbers = #tpu.dot_dimension_numbers<[1], [0], [0], [1], [0, 0, 1, 1], [], []>} : vector<16x128xbf16>, vector<128x128xbf16>, vector<16x128xf32> -> vector<16x128xf32>
    %169 = arith.truncf %148 : vector<16x128xf32> to vector<16x128xbf16>
    %cst_96 = arith.constant dense<0.000000e+00> : vector<16x128xf32>
    %170 = tpu.matmul %169, %152, %cst_96 {dimension_numbers = #tpu.dot_dimension_numbers<[1], [0], [0], [1], [0, 0, 1, 1], [], []>} : vector<16x128xbf16>, vector<128x128xbf16>, vector<16x128xf32> -> vector<16x128xf32>
    %171 = arith.addf %168, %170 : vector<16x128xf32>
    %172 = arith.truncf %166 : vector<16x128xf32> to vector<16x128xbf16>
    %cst_97 = arith.constant dense<0.000000e+00> : vector<16x128xf32>
    %173 = tpu.matmul %172, %154, %cst_97 {dimension_numbers = #tpu.dot_dimension_numbers<[1], [0], [0], [1], [0, 0, 1, 1], [], []>} : vector<16x128xbf16>, vector<128x128xbf16>, vector<16x128xf32> -> vector<16x128xf32>
    %174 = arith.addf %171, %173 : vector<16x128xf32>
    %175 = vector.broadcast %156 : vector<1x128xf32> to vector<16x128xf32>
    %176 = arith.addf %174, %175 : vector<16x128xf32>
    %177 = arith.truncf %93 : vector<16x128xf32> to vector<16x128xbf16>
    %c0_98 = arith.constant 0 : index
    %c0_99 = arith.constant 0 : index
    %c0_100 = arith.constant 0 : index
    %178 = vector.load %arg13[%c0_98, %c0_99, %c0_100] : memref<3x128x128xbf16, #tpu.memory_space<vmem>>, vector<1x128x128xbf16>
    %179 = vector.shape_cast %178 : vector<1x128x128xbf16> to vector<128x128xbf16>
    %cst_101 = arith.constant dense<0.000000e+00> : vector<16x128xf32>
    %180 = tpu.matmul %177, %179, %cst_101 {dimension_numbers = #tpu.dot_dimension_numbers<[1], [0], [0], [1], [0, 0, 1, 1], [], []>} : vector<16x128xbf16>, vector<128x128xbf16>, vector<16x128xf32> -> vector<16x128xf32>
    %c0_102 = arith.constant 0 : index
    %c0_103 = arith.constant 0 : index
    %c0_104 = arith.constant 0 : index
    %181 = vector.load %arg14[%c0_102, %c0_103, %c0_104] : memref<3x1x128xf32, #tpu.memory_space<vmem>>, vector<1x1x128xf32>
    %182 = vector.shape_cast %181 : vector<1x1x128xf32> to vector<1x128xf32>
    %183 = vector.broadcast %182 : vector<1x128xf32> to vector<16x128xf32>
    %184 = arith.addf %180, %183 : vector<16x128xf32>
    %185 = arith.addf %176, %184 : vector<16x128xf32>
    %c0_105 = arith.constant 0 : index
    %c0_106 = arith.constant 0 : index
    %186 = vector.load %arg18[%c0_105, %c0_106] : memref<32x128xf32, #tpu.memory_space<vmem>>, vector<16x128xf32>
    tpu.vector_store %arg18[%c0_105, %c0_106], %185 {strides = array<i32>} : memref<32x128xf32, #tpu.memory_space<vmem>>, vector<16x128xf32>,
    %c0_107 = arith.constant 0 : index
    %c0_108 = arith.constant 0 : index
    %187 = tpu.strided_load %arg18[%c0_107, %c0_108] {strides = array<i32: 2, 1>} : memref<32x128xf32, #tpu.memory_space<vmem>>, vector<8x128xf32>
    %c1_109 = arith.constant 1 : index
    %c0_110 = arith.constant 0 : index
    %188 = tpu.strided_load %arg18[%c1_109, %c0_110] {strides = array<i32: 2, 1>} : memref<32x128xf32, #tpu.memory_space<vmem>>, vector<8x128xf32>
    %189 = arith.addf %187, %188 : vector<8x128xf32>
    %cst_111 = arith.constant 5.000000e-01 : f32
    %190 = vector.broadcast %cst_111 : f32 to vector<8x128xf32>
    %191 = arith.mulf %189, %190 : vector<8x128xf32>
    %192 = tpu.iota {dimensions = array<i32: 0>} : vector<8x1xi32>
    %c8_i32 = arith.constant 8 : i32
    %c0_i32_112 = arith.constant 0 : i32
    %193 = arith.cmpi eq, %c8_i32, %c0_i32_112 : i32
    %c1_i32_113 = arith.constant 1 : i32
    %194 = arith.select %193, %c1_i32_113, %c8_i32 : i32
    %195 = vector.broadcast %194 : i32 to vector<8x1xi32>
    %196 = arith.remsi %192, %195 : vector<8x1xi32>
    %c0_i32_114 = arith.constant 0 : i32
    %197 = vector.broadcast %c0_i32_114 : i32 to vector<8x1xi32>
    %198 = arith.cmpi ne, %196, %197 : vector<8x1xi32>
    %c0_i32_115 = arith.constant 0 : i32
    %199 = vector.broadcast %c0_i32_115 : i32 to vector<8x1xi32>
    %200 = arith.cmpi slt, %196, %199 : vector<8x1xi32>
    %c0_i32_116 = arith.constant 0 : i32
    %201 = arith.cmpi slt, %194, %c0_i32_116 : i32
    %202 = vector.broadcast %201 : i1 to vector<8x1xi1>
    %203 = vector.broadcast %202 : vector<8x1xi1> to vector<8x1xi1>
    %204 = arith.xori %200, %203 : vector<8x1xi1>
    %205 = arith.andi %204, %198 : vector<8x1xi1>
    %206 = vector.broadcast %194 : i32 to vector<8x1xi32>
    %207 = arith.addi %196, %206 : vector<8x1xi32>
    %208 = arith.select %205, %207, %196 : vector<8x1xi1>, vector<8x1xi32>
    %c0_i32_117 = arith.constant 0 : i32
    %209 = vector.broadcast %c0_i32_117 : i32 to vector<8x1xi32>
    %210 = arith.cmpi ne, %208, %209 : vector<8x1xi32>
    %c7_i32 = arith.constant 7 : i32
    %211 = vector.broadcast %c7_i32 : i32 to vector<8x1xi32>
    %212 = arith.cmpi ne, %208, %211 : vector<8x1xi32>
    %cst_118 = arith.constant 1.000000e-01 : f32
    %213 = vector.broadcast %cst_118 : f32 to vector<8x128xf32>
    %214 = arith.mulf %213, %191 : vector<8x128xf32>
    %215 = arith.maximumf %191, %214 : vector<8x128xf32>
    %c3 = arith.constant 3 : index
    %c0_119 = arith.constant 0 : index
    %c0_120 = arith.constant 0 : index
    %216 = vector.load %arg9[%c3, %c0_119, %c0_120] : memref<9x128x128xbf16, #tpu.memory_space<vmem>>, vector<1x128x128xbf16>
    %217 = vector.shape_cast %216 : vector<1x128x128xbf16> to vector<128x128xbf16>
    %c4 = arith.constant 4 : index
    %c0_121 = arith.constant 0 : index
    %c0_122 = arith.constant 0 : index
    %218 = vector.load %arg9[%c4, %c0_121, %c0_122] : memref<9x128x128xbf16, #tpu.memory_space<vmem>>, vector<1x128x128xbf16>
    %219 = vector.shape_cast %218 : vector<1x128x128xbf16> to vector<128x128xbf16>
    %c5 = arith.constant 5 : index
    %c0_123 = arith.constant 0 : index
    %c0_124 = arith.constant 0 : index
    %220 = vector.load %arg9[%c5, %c0_123, %c0_124] : memref<9x128x128xbf16, #tpu.memory_space<vmem>>, vector<1x128x128xbf16>
    %221 = vector.shape_cast %220 : vector<1x128x128xbf16> to vector<128x128xbf16>
    %c1_125 = arith.constant 1 : index
    %c0_126 = arith.constant 0 : index
    %c0_127 = arith.constant 0 : index
    %222 = vector.load %arg10[%c1_125, %c0_126, %c0_127] : memref<3x1x128xf32, #tpu.memory_space<vmem>>, vector<1x1x128xf32>
    %223 = vector.shape_cast %222 : vector<1x1x128xf32> to vector<1x128xf32>
    %c1_i32_128 = arith.constant 1 : i32
    %224 = tpu.dynamic_rotate %215 by %c1_i32_128 dim 0 : vector<8x128xf32>, i32 -> vector<8x128xf32>
    %cst_129 = arith.constant 0.000000e+00 : f32
    %225 = vector.shape_cast %210 : vector<8x1xi1> to vector<8x1xi1>
    %226 = vector.broadcast %225 : vector<8x1xi1> to vector<8x128xi1>
    %227 = vector.broadcast %cst_129 : f32 to vector<8x128xf32>
    %228 = arith.select %226, %224, %227 : vector<8x128xi1>, vector<8x128xf32>
    %c7_i32_130 = arith.constant 7 : i32
    %229 = tpu.dynamic_rotate %215 by %c7_i32_130 dim 0 : vector<8x128xf32>, i32 -> vector<8x128xf32>
    %cst_131 = arith.constant 0.000000e+00 : f32
    %230 = vector.shape_cast %212 : vector<8x1xi1> to vector<8x1xi1>
    %231 = vector.broadcast %230 : vector<8x1xi1> to vector<8x128xi1>
    %232 = vector.broadcast %cst_131 : f32 to vector<8x128xf32>
    %233 = arith.select %231, %229, %232 : vector<8x128xi1>, vector<8x128xf32>
    %234 = arith.truncf %228 : vector<8x128xf32> to vector<8x128xbf16>
    %cst_132 = arith.constant dense<0.000000e+00> : vector<8x128xf32>
    %235 = tpu.matmul %234, %217, %cst_132 {dimension_numbers = #tpu.dot_dimension_numbers<[1], [0], [0], [1], [0, 0, 1, 1], [], []>} : vector<8x128xbf16>, vector<128x128xbf16>, vector<8x128xf32> -> vector<8x128xf32>
    %236 = arith.truncf %215 : vector<8x128xf32> to vector<8x128xbf16>
    %cst_133 = arith.constant dense<0.000000e+00> : vector<8x128xf32>
    %237 = tpu.matmul %236, %219, %cst_133 {dimension_numbers = #tpu.dot_dimension_numbers<[1], [0], [0], [1], [0, 0, 1, 1], [], []>} : vector<8x128xbf16>, vector<128x128xbf16>, vector<8x128xf32> -> vector<8x128xf32>
    %238 = arith.addf %235, %237 : vector<8x128xf32>
    %239 = arith.truncf %233 : vector<8x128xf32> to vector<8x128xbf16>
    %cst_134 = arith.constant dense<0.000000e+00> : vector<8x128xf32>
    %240 = tpu.matmul %239, %221, %cst_134 {dimension_numbers = #tpu.dot_dimension_numbers<[1], [0], [0], [1], [0, 0, 1, 1], [], []>} : vector<8x128xbf16>, vector<128x128xbf16>, vector<8x128xf32> -> vector<8x128xf32>
    %241 = arith.addf %238, %240 : vector<8x128xf32>
    %242 = vector.broadcast %223 : vector<1x128xf32> to vector<8x128xf32>
    %243 = arith.addf %241, %242 : vector<8x128xf32>
    %cst_135 = arith.constant 1.000000e-01 : f32
    %244 = vector.broadcast %cst_135 : f32 to vector<8x128xf32>
    %245 = arith.mulf %244, %243 : vector<8x128xf32>
    %246 = arith.maximumf %243, %245 : vector<8x128xf32>
    %c3_136 = arith.constant 3 : index
    %c0_137 = arith.constant 0 : index
    %c0_138 = arith.constant 0 : index
    %247 = vector.load %arg11[%c3_136, %c0_137, %c0_138] : memref<9x128x128xbf16, #tpu.memory_space<vmem>>, vector<1x128x128xbf16>
    %248 = vector.shape_cast %247 : vector<1x128x128xbf16> to vector<128x128xbf16>
    %c4_139 = arith.constant 4 : index
    %c0_140 = arith.constant 0 : index
    %c0_141 = arith.constant 0 : index
    %249 = vector.load %arg11[%c4_139, %c0_140, %c0_141] : memref<9x128x128xbf16, #tpu.memory_space<vmem>>, vector<1x128x128xbf16>
    %250 = vector.shape_cast %249 : vector<1x128x128xbf16> to vector<128x128xbf16>
    %c5_142 = arith.constant 5 : index
    %c0_143 = arith.constant 0 : index
    %c0_144 = arith.constant 0 : index
    %251 = vector.load %arg11[%c5_142, %c0_143, %c0_144] : memref<9x128x128xbf16, #tpu.memory_space<vmem>>, vector<1x128x128xbf16>
    %252 = vector.shape_cast %251 : vector<1x128x128xbf16> to vector<128x128xbf16>
    %c1_145 = arith.constant 1 : index
    %c0_146 = arith.constant 0 : index
    %c0_147 = arith.constant 0 : index
    %253 = vector.load %arg12[%c1_145, %c0_146, %c0_147] : memref<3x1x128xf32, #tpu.memory_space<vmem>>, vector<1x1x128xf32>
    %254 = vector.shape_cast %253 : vector<1x1x128xf32> to vector<1x128xf32>
    %c1_i32_148 = arith.constant 1 : i32
    %255 = tpu.dynamic_rotate %246 by %c1_i32_148 dim 0 : vector<8x128xf32>, i32 -> vector<8x128xf32>
    %cst_149 = arith.constant 0.000000e+00 : f32
    %256 = vector.shape_cast %210 : vector<8x1xi1> to vector<8x1xi1>
    %257 = vector.broadcast %256 : vector<8x1xi1> to vector<8x128xi1>
    %258 = vector.broadcast %cst_149 : f32 to vector<8x128xf32>
    %259 = arith.select %257, %255, %258 : vector<8x128xi1>, vector<8x128xf32>
    %c7_i32_150 = arith.constant 7 : i32
    %260 = tpu.dynamic_rotate %246 by %c7_i32_150 dim 0 : vector<8x128xf32>, i32 -> vector<8x128xf32>
    %cst_151 = arith.constant 0.000000e+00 : f32
    %261 = vector.shape_cast %212 : vector<8x1xi1> to vector<8x1xi1>
    %262 = vector.broadcast %261 : vector<8x1xi1> to vector<8x128xi1>
    %263 = vector.broadcast %cst_151 : f32 to vector<8x128xf32>
    %264 = arith.select %262, %260, %263 : vector<8x128xi1>, vector<8x128xf32>
    %265 = arith.truncf %259 : vector<8x128xf32> to vector<8x128xbf16>
    %cst_152 = arith.constant dense<0.000000e+00> : vector<8x128xf32>
    %266 = tpu.matmul %265, %248, %cst_152 {dimension_numbers = #tpu.dot_dimension_numbers<[1], [0], [0], [1], [0, 0, 1, 1], [], []>} : vector<8x128xbf16>, vector<128x128xbf16>, vector<8x128xf32> -> vector<8x128xf32>
    %267 = arith.truncf %246 : vector<8x128xf32> to vector<8x128xbf16>
    %cst_153 = arith.constant dense<0.000000e+00> : vector<8x128xf32>
    %268 = tpu.matmul %267, %250, %cst_153 {dimension_numbers = #tpu.dot_dimension_numbers<[1], [0], [0], [1], [0, 0, 1, 1], [], []>} : vector<8x128xbf16>, vector<128x128xbf16>, vector<8x128xf32> -> vector<8x128xf32>
    %269 = arith.addf %266, %268 : vector<8x128xf32>
    %270 = arith.truncf %264 : vector<8x128xf32> to vector<8x128xbf16>
    %cst_154 = arith.constant dense<0.000000e+00> : vector<8x128xf32>
    %271 = tpu.matmul %270, %252, %cst_154 {dimension_numbers = #tpu.dot_dimension_numbers<[1], [0], [0], [1], [0, 0, 1, 1], [], []>} : vector<8x128xbf16>, vector<128x128xbf16>, vector<8x128xf32> -> vector<8x128xf32>
    %272 = arith.addf %269, %271 : vector<8x128xf32>
    %273 = vector.broadcast %254 : vector<1x128xf32> to vector<8x128xf32>
    %274 = arith.addf %272, %273 : vector<8x128xf32>
    %275 = arith.truncf %191 : vector<8x128xf32> to vector<8x128xbf16>
    %c1_155 = arith.constant 1 : index
    %c0_156 = arith.constant 0 : index
    %c0_157 = arith.constant 0 : index
    %276 = vector.load %arg13[%c1_155, %c0_156, %c0_157] : memref<3x128x128xbf16, #tpu.memory_space<vmem>>, vector<1x128x128xbf16>
    %277 = vector.shape_cast %276 : vector<1x128x128xbf16> to vector<128x128xbf16>
    %cst_158 = arith.constant dense<0.000000e+00> : vector<8x128xf32>
    %278 = tpu.matmul %275, %277, %cst_158 {dimension_numbers = #tpu.dot_dimension_numbers<[1], [0], [0], [1], [0, 0, 1, 1], [], []>} : vector<8x128xbf16>, vector<128x128xbf16>, vector<8x128xf32> -> vector<8x128xf32>
    %c1_159 = arith.constant 1 : index
    %c0_160 = arith.constant 0 : index
    %c0_161 = arith.constant 0 : index
    %279 = vector.load %arg14[%c1_159, %c0_160, %c0_161] : memref<3x1x128xf32, #tpu.memory_space<vmem>>, vector<1x1x128xf32>
    %280 = vector.shape_cast %279 : vector<1x1x128xf32> to vector<1x128xf32>
    %281 = vector.broadcast %280 : vector<1x128xf32> to vector<8x128xf32>
    %282 = arith.addf %278, %281 : vector<8x128xf32>
    %283 = arith.addf %274, %282 : vector<8x128xf32>
    %c0_162 = arith.constant 0 : index
    %c0_163 = arith.constant 0 : index
    %284 = vector.load %arg18[%c0_162, %c0_163] : memref<32x128xf32, #tpu.memory_space<vmem>>, vector<8x128xf32>
    tpu.vector_store %arg18[%c0_162, %c0_163], %283 {strides = array<i32>} : memref<32x128xf32, #tpu.memory_space<vmem>>, vector<8x128xf32>,
    %c0_164 = arith.constant 0 : index
    %c0_165 = arith.constant 0 : index
    %285 = tpu.strided_load %arg18[%c0_164, %c0_165] {strides = array<i32: 2, 1>} : memref<32x128xf32, #tpu.memory_space<vmem>>, vector<4x128xf32>
    %c1_166 = arith.constant 1 : index
    %c0_167 = arith.constant 0 : index
    %286 = tpu.strided_load %arg18[%c1_166, %c0_167] {strides = array<i32: 2, 1>} : memref<32x128xf32, #tpu.memory_space<vmem>>, vector<4x128xf32>
    %287 = arith.addf %285, %286 : vector<4x128xf32>
    %cst_168 = arith.constant 5.000000e-01 : f32
    %288 = vector.broadcast %cst_168 : f32 to vector<4x128xf32>
    %289 = arith.mulf %287, %288 : vector<4x128xf32>
    %290 = tpu.iota {dimensions = array<i32: 0>} : vector<4x1xi32>
    %c4_i32 = arith.constant 4 : i32
    %c0_i32_169 = arith.constant 0 : i32
    %291 = arith.cmpi eq, %c4_i32, %c0_i32_169 : i32
    %c1_i32_170 = arith.constant 1 : i32
    %292 = arith.select %291, %c1_i32_170, %c4_i32 : i32
    %293 = vector.broadcast %292 : i32 to vector<4x1xi32>
    %294 = arith.remsi %290, %293 : vector<4x1xi32>
    %c0_i32_171 = arith.constant 0 : i32
    %295 = vector.broadcast %c0_i32_171 : i32 to vector<4x1xi32>
    %296 = arith.cmpi ne, %294, %295 : vector<4x1xi32>
    %c0_i32_172 = arith.constant 0 : i32
    %297 = vector.broadcast %c0_i32_172 : i32 to vector<4x1xi32>
    %298 = arith.cmpi slt, %294, %297 : vector<4x1xi32>
    %c0_i32_173 = arith.constant 0 : i32
    %299 = arith.cmpi slt, %292, %c0_i32_173 : i32
    %300 = vector.broadcast %299 : i1 to vector<4x1xi1>
    %301 = vector.broadcast %300 : vector<4x1xi1> to vector<4x1xi1>
    %302 = arith.xori %298, %301 : vector<4x1xi1>
    %303 = arith.andi %302, %296 : vector<4x1xi1>
    %304 = vector.broadcast %292 : i32 to vector<4x1xi32>
    %305 = arith.addi %294, %304 : vector<4x1xi32>
    %306 = arith.select %303, %305, %294 : vector<4x1xi1>, vector<4x1xi32>
    %c0_i32_174 = arith.constant 0 : i32
    %307 = vector.broadcast %c0_i32_174 : i32 to vector<4x1xi32>
    %308 = arith.cmpi ne, %306, %307 : vector<4x1xi32>
    %c3_i32 = arith.constant 3 : i32
    %309 = vector.broadcast %c3_i32 : i32 to vector<4x1xi32>
    %310 = arith.cmpi ne, %306, %309 : vector<4x1xi32>
    %cst_175 = arith.constant 1.000000e-01 : f32
    %311 = vector.broadcast %cst_175 : f32 to vector<4x128xf32>
    %312 = arith.mulf %311, %289 : vector<4x128xf32>
    %313 = arith.maximumf %289, %312 : vector<4x128xf32>
    %c6 = arith.constant 6 : index
    %c0_176 = arith.constant 0 : index
    %c0_177 = arith.constant 0 : index
    %314 = vector.load %arg9[%c6, %c0_176, %c0_177] : memref<9x128x128xbf16, #tpu.memory_space<vmem>>, vector<1x128x128xbf16>
    %315 = vector.shape_cast %314 : vector<1x128x128xbf16> to vector<128x128xbf16>
    %c7 = arith.constant 7 : index
    %c0_178 = arith.constant 0 : index
    %c0_179 = arith.constant 0 : index
    %316 = vector.load %arg9[%c7, %c0_178, %c0_179] : memref<9x128x128xbf16, #tpu.memory_space<vmem>>, vector<1x128x128xbf16>
    %317 = vector.shape_cast %316 : vector<1x128x128xbf16> to vector<128x128xbf16>
    %c8 = arith.constant 8 : index
    %c0_180 = arith.constant 0 : index
    %c0_181 = arith.constant 0 : index
    %318 = vector.load %arg9[%c8, %c0_180, %c0_181] : memref<9x128x128xbf16, #tpu.memory_space<vmem>>, vector<1x128x128xbf16>
    %319 = vector.shape_cast %318 : vector<1x128x128xbf16> to vector<128x128xbf16>
    %c2_182 = arith.constant 2 : index
    %c0_183 = arith.constant 0 : index
    %c0_184 = arith.constant 0 : index
    %320 = vector.load %arg10[%c2_182, %c0_183, %c0_184] : memref<3x1x128xf32, #tpu.memory_space<vmem>>, vector<1x1x128xf32>
    %321 = vector.shape_cast %320 : vector<1x1x128xf32> to vector<1x128xf32>
    %c1_i32_185 = arith.constant 1 : i32
    %322 = tpu.dynamic_rotate %313 by %c1_i32_185 dim 0 : vector<4x128xf32>, i32 -> vector<4x128xf32>
    %cst_186 = arith.constant 0.000000e+00 : f32
    %323 = vector.shape_cast %308 : vector<4x1xi1> to vector<4x1xi1>
    %324 = vector.broadcast %323 : vector<4x1xi1> to vector<4x128xi1>
    %325 = vector.broadcast %cst_186 : f32 to vector<4x128xf32>
    %326 = arith.select %324, %322, %325 : vector<4x128xi1>, vector<4x128xf32>
    %c3_i32_187 = arith.constant 3 : i32
    %327 = tpu.dynamic_rotate %313 by %c3_i32_187 dim 0 : vector<4x128xf32>, i32 -> vector<4x128xf32>
    %cst_188 = arith.constant 0.000000e+00 : f32
    %328 = vector.shape_cast %310 : vector<4x1xi1> to vector<4x1xi1>
    %329 = vector.broadcast %328 : vector<4x1xi1> to vector<4x128xi1>
    %330 = vector.broadcast %cst_188 : f32 to vector<4x128xf32>
    %331 = arith.select %329, %327, %330 : vector<4x128xi1>, vector<4x128xf32>
    %332 = arith.truncf %326 : vector<4x128xf32> to vector<4x128xbf16>
    %cst_189 = arith.constant dense<0.000000e+00> : vector<4x128xf32>
    %333 = tpu.matmul %332, %315, %cst_189 {dimension_numbers = #tpu.dot_dimension_numbers<[1], [0], [0], [1], [0, 0, 1, 1], [], []>} : vector<4x128xbf16>, vector<128x128xbf16>, vector<4x128xf32> -> vector<4x128xf32>
    %334 = arith.truncf %313 : vector<4x128xf32> to vector<4x128xbf16>
    %cst_190 = arith.constant dense<0.000000e+00> : vector<4x128xf32>
    %335 = tpu.matmul %334, %317, %cst_190 {dimension_numbers = #tpu.dot_dimension_numbers<[1], [0], [0], [1], [0, 0, 1, 1], [], []>} : vector<4x128xbf16>, vector<128x128xbf16>, vector<4x128xf32> -> vector<4x128xf32>
    %336 = arith.addf %333, %335 : vector<4x128xf32>
    %337 = arith.truncf %331 : vector<4x128xf32> to vector<4x128xbf16>
    %cst_191 = arith.constant dense<0.000000e+00> : vector<4x128xf32>
    %338 = tpu.matmul %337, %319, %cst_191 {dimension_numbers = #tpu.dot_dimension_numbers<[1], [0], [0], [1], [0, 0, 1, 1], [], []>} : vector<4x128xbf16>, vector<128x128xbf16>, vector<4x128xf32> -> vector<4x128xf32>
    %339 = arith.addf %336, %338 : vector<4x128xf32>
    %340 = vector.broadcast %321 : vector<1x128xf32> to vector<4x128xf32>
    %341 = arith.addf %339, %340 : vector<4x128xf32>
    %cst_192 = arith.constant 1.000000e-01 : f32
    %342 = vector.broadcast %cst_192 : f32 to vector<4x128xf32>
    %343 = arith.mulf %342, %341 : vector<4x128xf32>
    %344 = arith.maximumf %341, %343 : vector<4x128xf32>
    %c6_193 = arith.constant 6 : index
    %c0_194 = arith.constant 0 : index
    %c0_195 = arith.constant 0 : index
    %345 = vector.load %arg11[%c6_193, %c0_194, %c0_195] : memref<9x128x128xbf16, #tpu.memory_space<vmem>>, vector<1x128x128xbf16>
    %346 = vector.shape_cast %345 : vector<1x128x128xbf16> to vector<128x128xbf16>
    %c7_196 = arith.constant 7 : index
    %c0_197 = arith.constant 0 : index
    %c0_198 = arith.constant 0 : index
    %347 = vector.load %arg11[%c7_196, %c0_197, %c0_198] : memref<9x128x128xbf16, #tpu.memory_space<vmem>>, vector<1x128x128xbf16>
    %348 = vector.shape_cast %347 : vector<1x128x128xbf16> to vector<128x128xbf16>
    %c8_199 = arith.constant 8 : index
    %c0_200 = arith.constant 0 : index
    %c0_201 = arith.constant 0 : index
    %349 = vector.load %arg11[%c8_199, %c0_200, %c0_201] : memref<9x128x128xbf16, #tpu.memory_space<vmem>>, vector<1x128x128xbf16>
    %350 = vector.shape_cast %349 : vector<1x128x128xbf16> to vector<128x128xbf16>
    %c2_202 = arith.constant 2 : index
    %c0_203 = arith.constant 0 : index
    %c0_204 = arith.constant 0 : index
    %351 = vector.load %arg12[%c2_202, %c0_203, %c0_204] : memref<3x1x128xf32, #tpu.memory_space<vmem>>, vector<1x1x128xf32>
    %352 = vector.shape_cast %351 : vector<1x1x128xf32> to vector<1x128xf32>
    %c1_i32_205 = arith.constant 1 : i32
    %353 = tpu.dynamic_rotate %344 by %c1_i32_205 dim 0 : vector<4x128xf32>, i32 -> vector<4x128xf32>
    %cst_206 = arith.constant 0.000000e+00 : f32
    %354 = vector.shape_cast %308 : vector<4x1xi1> to vector<4x1xi1>
    %355 = vector.broadcast %354 : vector<4x1xi1> to vector<4x128xi1>
    %356 = vector.broadcast %cst_206 : f32 to vector<4x128xf32>
    %357 = arith.select %355, %353, %356 : vector<4x128xi1>, vector<4x128xf32>
    %c3_i32_207 = arith.constant 3 : i32
    %358 = tpu.dynamic_rotate %344 by %c3_i32_207 dim 0 : vector<4x128xf32>, i32 -> vector<4x128xf32>
    %cst_208 = arith.constant 0.000000e+00 : f32
    %359 = vector.shape_cast %310 : vector<4x1xi1> to vector<4x1xi1>
    %360 = vector.broadcast %359 : vector<4x1xi1> to vector<4x128xi1>
    %361 = vector.broadcast %cst_208 : f32 to vector<4x128xf32>
    %362 = arith.select %360, %358, %361 : vector<4x128xi1>, vector<4x128xf32>
    %363 = arith.truncf %357 : vector<4x128xf32> to vector<4x128xbf16>
    %cst_209 = arith.constant dense<0.000000e+00> : vector<4x128xf32>
    %364 = tpu.matmul %363, %346, %cst_209 {dimension_numbers = #tpu.dot_dimension_numbers<[1], [0], [0], [1], [0, 0, 1, 1], [], []>} : vector<4x128xbf16>, vector<128x128xbf16>, vector<4x128xf32> -> vector<4x128xf32>
    %365 = arith.truncf %344 : vector<4x128xf32> to vector<4x128xbf16>
    %cst_210 = arith.constant dense<0.000000e+00> : vector<4x128xf32>
    %366 = tpu.matmul %365, %348, %cst_210 {dimension_numbers = #tpu.dot_dimension_numbers<[1], [0], [0], [1], [0, 0, 1, 1], [], []>} : vector<4x128xbf16>, vector<128x128xbf16>, vector<4x128xf32> -> vector<4x128xf32>
    %367 = arith.addf %364, %366 : vector<4x128xf32>
    %368 = arith.truncf %362 : vector<4x128xf32> to vector<4x128xbf16>
    %cst_211 = arith.constant dense<0.000000e+00> : vector<4x128xf32>
    %369 = tpu.matmul %368, %350, %cst_211 {dimension_numbers = #tpu.dot_dimension_numbers<[1], [0], [0], [1], [0, 0, 1, 1], [], []>} : vector<4x128xbf16>, vector<128x128xbf16>, vector<4x128xf32> -> vector<4x128xf32>
    %370 = arith.addf %367, %369 : vector<4x128xf32>
    %371 = vector.broadcast %352 : vector<1x128xf32> to vector<4x128xf32>
    %372 = arith.addf %370, %371 : vector<4x128xf32>
    %373 = arith.truncf %289 : vector<4x128xf32> to vector<4x128xbf16>
    %c2_212 = arith.constant 2 : index
    %c0_213 = arith.constant 0 : index
    %c0_214 = arith.constant 0 : index
    %374 = vector.load %arg13[%c2_212, %c0_213, %c0_214] : memref<3x128x128xbf16, #tpu.memory_space<vmem>>, vector<1x128x128xbf16>
    %375 = vector.shape_cast %374 : vector<1x128x128xbf16> to vector<128x128xbf16>
    %cst_215 = arith.constant dense<0.000000e+00> : vector<4x128xf32>
    %376 = tpu.matmul %373, %375, %cst_215 {dimension_numbers = #tpu.dot_dimension_numbers<[1], [0], [0], [1], [0, 0, 1, 1], [], []>} : vector<4x128xbf16>, vector<128x128xbf16>, vector<4x128xf32> -> vector<4x128xf32>
    %c2_216 = arith.constant 2 : index
    %c0_217 = arith.constant 0 : index
    %c0_218 = arith.constant 0 : index
    %377 = vector.load %arg14[%c2_216, %c0_217, %c0_218] : memref<3x1x128xf32, #tpu.memory_space<vmem>>, vector<1x1x128xf32>
    %378 = vector.shape_cast %377 : vector<1x1x128xf32> to vector<1x128xf32>
    %379 = vector.broadcast %378 : vector<1x128xf32> to vector<4x128xf32>
    %380 = arith.addf %376, %379 : vector<4x128xf32>
    %381 = arith.addf %372, %380 : vector<4x128xf32>
    %c0_219 = arith.constant 0 : index
    %c0_220 = arith.constant 0 : index
    %382 = vector.load %arg18[%c0_219, %c0_220] : memref<32x128xf32, #tpu.memory_space<vmem>>, vector<4x128xf32>
    tpu.vector_store %arg18[%c0_219, %c0_220], %381 {strides = array<i32>} : memref<32x128xf32, #tpu.memory_space<vmem>>, vector<4x128xf32>,
    %c0_221 = arith.constant 0 : index
    %c0_222 = arith.constant 0 : index
    %383 = tpu.strided_load %arg18[%c0_221, %c0_222] {strides = array<i32: 2, 1>} : memref<32x128xf32, #tpu.memory_space<vmem>>, vector<2x128xf32>
    %c1_223 = arith.constant 1 : index
    %c0_224 = arith.constant 0 : index
    %384 = tpu.strided_load %arg18[%c1_223, %c0_224] {strides = array<i32: 2, 1>} : memref<32x128xf32, #tpu.memory_space<vmem>>, vector<2x128xf32>
    %385 = arith.addf %383, %384 : vector<2x128xf32>
    %cst_225 = arith.constant 5.000000e-01 : f32
    %386 = vector.broadcast %cst_225 : f32 to vector<2x128xf32>
    %387 = arith.mulf %385, %386 : vector<2x128xf32>
    %cst_226 = arith.constant 1.000000e-01 : f32
    %388 = vector.broadcast %cst_226 : f32 to vector<2x128xf32>
    %389 = arith.mulf %388, %387 : vector<2x128xf32>
    %390 = arith.maximumf %387, %389 : vector<2x128xf32>
    %c0_227 = arith.constant 0 : index
    %c0_228 = arith.constant 0 : index
    %391 = vector.load %arg2[%c0_227, %c0_228] : memref<1x2xf32, #tpu.memory_space<vmem>>, vector<1x2xf32>
    %cst_229 = arith.constant dense<0.000000e+00> : vector<1x128xf32>
    %392 = tpu.matmul %391, %390, %cst_229 {dimension_numbers = #tpu.dot_dimension_numbers<[1], [0], [0], [1], [0, 0, 1, 1], [], []>} : vector<1x2xf32>, vector<2x128xf32>, vector<1x128xf32> -> vector<1x128xf32>
    %c0_230 = arith.constant 0 : index
    %c0_231 = arith.constant 0 : index
    %393 = vector.load %arg15[%c0_230, %c0_231] : memref<128x128xf32, #tpu.memory_space<vmem>>, vector<128x128xf32>
    %cst_232 = arith.constant dense<0.000000e+00> : vector<1x128xf32>
    %394 = tpu.matmul %392, %393, %cst_232 {dimension_numbers = #tpu.dot_dimension_numbers<[1], [0], [0], [1], [0, 0, 1, 1], [], []>} : vector<1x128xf32>, vector<128x128xf32>, vector<1x128xf32> -> vector<1x128xf32>
    %c0_233 = arith.constant 0 : index
    %c0_234 = arith.constant 0 : index
    %395 = vector.load %arg16[%c0_233, %c0_234] : memref<1x128xf32, #tpu.memory_space<vmem>>, vector<1x128xf32>
    %396 = arith.addf %394, %395 : vector<1x128xf32>
    %c0_235 = arith.constant 0 : index
    %c0_236 = arith.constant 0 : index
    %c0_237 = arith.constant 0 : index
    %397 = vector.load %arg17[%c0_235, %c0_236, %c0_237] : memref<1x1x128xf32, #tpu.memory_space<vmem>>, vector<1x1x128xf32>
    %398 = vector.shape_cast %397 : vector<1x1x128xf32> to vector<1x128xf32>
    %399 = vector.shape_cast %396 : vector<1x128xf32> to vector<1x1x128xf32>
    tpu.vector_store %arg17[%c0_235, %c0_236, %c0_237], %399 {strides = array<i32>} : memref<1x1x128xf32, #tpu.memory_space<vmem>>, vector<1x1x128xf32>,
    return
  }
  func.func @transform_0(%arg0: i32) -> (i32, i32, i32) {
    %c0_i32 = arith.constant 0 : i32
    %c0_i32_0 = arith.constant 0 : i32
    %c0_i32_1 = arith.constant 0 : i32
    return %arg0, %c0_i32, %c0_i32_0 : i32, i32, i32
  }
  func.func @transform_1(%arg0: i32) -> (i32, i32) {
    %c0_i32 = arith.constant 0 : i32
    %c0_i32_0 = arith.constant 0 : i32
    %c0_i32_1 = arith.constant 0 : i32
    return %c0_i32, %c0_i32_0 : i32, i32
  }
  func.func @transform_2(%arg0: i32) -> (i32, i32, i32) {
    %c0_i32 = arith.constant 0 : i32
    %c0_i32_0 = arith.constant 0 : i32
    %c0_i32_1 = arith.constant 0 : i32
    %c0_i32_2 = arith.constant 0 : i32
    return %c0_i32, %c0_i32_0, %c0_i32_1 : i32, i32, i32
  }
  func.func @transform_3(%arg0: i32) -> (i32, i32) {
    %c0_i32 = arith.constant 0 : i32
    %c0_i32_0 = arith.constant 0 : i32
    %c0_i32_1 = arith.constant 0 : i32
    return %c0_i32, %c0_i32_0 : i32, i32
  }
  func.func @transform_4(%arg0: i32) -> (i32, i32, i32) {
    %c0_i32 = arith.constant 0 : i32
    %c0_i32_0 = arith.constant 0 : i32
    %c0_i32_1 = arith.constant 0 : i32
    %c0_i32_2 = arith.constant 0 : i32
    return %c0_i32, %c0_i32_0, %c0_i32_1 : i32, i32, i32
  }
  func.func @transform_5(%arg0: i32) -> (i32, i32) {
    %c0_i32 = arith.constant 0 : i32
    %c0_i32_0 = arith.constant 0 : i32
    %c0_i32_1 = arith.constant 0 : i32
    return %c0_i32, %c0_i32_0 : i32, i32
  }
  func.func @transform_6(%arg0: i32) -> (i32, i32) {
    %c0_i32 = arith.constant 0 : i32
    %c0_i32_0 = arith.constant 0 : i32
    %c0_i32_1 = arith.constant 0 : i32
    return %c0_i32, %c0_i32_0 : i32, i32
  }
  func.func @transform_7(%arg0: i32) -> (i32, i32) {
    %c0_i32 = arith.constant 0 : i32
    %c0_i32_0 = arith.constant 0 : i32
    %c0_i32_1 = arith.constant 0 : i32
    return %c0_i32, %c0_i32_0 : i32, i32
  }
  func.func @transform_8(%arg0: i32) -> (i32, i32, i32) {
    %c0_i32 = arith.constant 0 : i32
    %c0_i32_0 = arith.constant 0 : i32
    %c0_i32_1 = arith.constant 0 : i32
    %c0_i32_2 = arith.constant 0 : i32
    return %c0_i32, %c0_i32_0, %c0_i32_1 : i32, i32, i32
  }
  func.func @transform_9(%arg0: i32) -> (i32, i32, i32) {
    %c0_i32 = arith.constant 0 : i32
    %c0_i32_0 = arith.constant 0 : i32
    %c0_i32_1 = arith.constant 0 : i32
    %c0_i32_2 = arith.constant 0 : i32
    return %c0_i32, %c0_i32_0, %c0_i32_1 : i32, i32, i32
  }
  func.func @transform_10(%arg0: i32) -> (i32, i32, i32) {
    %c0_i32 = arith.constant 0 : i32
    %c0_i32_0 = arith.constant 0 : i32
    %c0_i32_1 = arith.constant 0 : i32
    %c0_i32_2 = arith.constant 0 : i32
    return %c0_i32, %c0_i32_0, %c0_i32_1 : i32, i32, i32
  }
  func.func @transform_11(%arg0: i32) -> (i32, i32, i32) {
    %c0_i32 = arith.constant 0 : i32
    %c0_i32_0 = arith.constant 0 : i32
    %c0_i32_1 = arith.constant 0 : i32
    %c0_i32_2 = arith.constant 0 : i32
    return %c0_i32, %c0_i32_0, %c0_i32_1 : i32, i32, i32
  }
  func.func @transform_12(%arg0: i32) -> (i32, i32, i32) {
    %c0_i32 = arith.constant 0 : i32
    %c0_i32_0 = arith.constant 0 : i32
    %c0_i32_1 = arith.constant 0 : i32
    %c0_i32_2 = arith.constant 0 : i32
    return %c0_i32, %c0_i32_0, %c0_i32_1 : i32, i32, i32
  }
  func.func @transform_13(%arg0: i32) -> (i32, i32, i32) {
    %c0_i32 = arith.constant 0 : i32
    %c0_i32_0 = arith.constant 0 : i32
    %c0_i32_1 = arith.constant 0 : i32
    %c0_i32_2 = arith.constant 0 : i32
    return %c0_i32, %c0_i32_0, %c0_i32_1 : i32, i32, i32
  }
  func.func @transform_14(%arg0: i32) -> (i32, i32) {
    %c0_i32 = arith.constant 0 : i32
    %c0_i32_0 = arith.constant 0 : i32
    %c0_i32_1 = arith.constant 0 : i32
    return %c0_i32, %c0_i32_0 : i32, i32
  }
  func.func @transform_15(%arg0: i32) -> (i32, i32) {
    %c0_i32 = arith.constant 0 : i32
    %c0_i32_0 = arith.constant 0 : i32
    %c0_i32_1 = arith.constant 0 : i32
    return %c0_i32, %c0_i32_0 : i32, i32
  }
  func.func @transform_16(%arg0: i32) -> (i32, i32, i32) {
    %c0_i32 = arith.constant 0 : i32
    %c0_i32_0 = arith.constant 0 : i32
    %c0_i32_1 = arith.constant 0 : i32
    return %arg0, %c0_i32, %c0_i32_0 : i32, i32, i32
  }
}

</mosaic_0001>

<llo_original>
// kernel: tpu_custom_call.1
$region0: #{tpu_custom_call.1}
  #allocation0 [shape = 'u32[]', space=smem, size = 0x4, offset = 0x4, fixed_abs, tag = 'smem constant byte address 0x4 - core index']
  #allocation1 [shape = 'u32[144,128]{1,0:T(1,128)}', space=vmem, size = 0x12000, scoped, tag = 'internal scratch']
  #allocation2 [shape = 'f32[32,128]{1,0:T(8,128)}', space=vmem, size = 0x4000, scoped, tag = 'scratch operand']
  %s0 = inlined_call_operand.hbm [shape: bf16[2,32,128], index: 0, kind: input, shape index: {}]
  %s1 = inlined_call_operand.vmem [shape: f32[1,2], index: 1, kind: input, shape index: {}]
  %s2 = inlined_call_operand.hbm [shape: bf16[3,128,128], index: 2, kind: input, shape index: {}]
  %s3 = inlined_call_operand.vmem [shape: f32[1,128], index: 3, kind: input, shape index: {}]
  %s4 = inlined_call_operand.hbm [shape: bf16[3,128,128], index: 4, kind: input, shape index: {}]
  %s5 = inlined_call_operand.vmem [shape: f32[1,128], index: 5, kind: input, shape index: {}]
  %s6 = inlined_call_operand.hbm [shape: bf16[128,128], index: 6, kind: input, shape index: {}]
  %s7 = inlined_call_operand.vmem [shape: f32[1,128], index: 7, kind: input, shape index: {}]
  %s8 = inlined_call_operand.hbm [shape: bf16[9,128,128], index: 8, kind: input, shape index: {}]
  %s9 = inlined_call_operand.vmem [shape: f32[3,1,128], index: 9, kind: input, shape index: {}]
  %s10 = inlined_call_operand.hbm [shape: bf16[9,128,128], index: 10, kind: input, shape index: {}]
  %s11 = inlined_call_operand.vmem [shape: f32[3,1,128], index: 11, kind: input, shape index: {}]
  %s12 = inlined_call_operand.hbm [shape: bf16[3,128,128], index: 12, kind: input, shape index: {}]
  %s13 = inlined_call_operand.vmem [shape: f32[3,1,128], index: 13, kind: input, shape index: {}]
  %s14 = inlined_call_operand.hbm [shape: f32[128,128], index: 14, kind: input, shape index: {}]
  %s15 = inlined_call_operand.vmem [shape: f32[1,128], index: 15, kind: input, shape index: {}]
  %s16 = inlined_call_operand.hbm [shape: f32[2,1,128], index: 16, kind: output, shape index: {}]
  %s17 = sld [smem:[#allocation0]]
  $region129: #{tpu_custom_call.1} parent=0
    _
  %s19 = ssub.s32 1, %s17
  %s20 = scalar_select 0, %s19, %s17
  $region1: #{tpu_custom_call.1} parent=0
    #allocation3 [shape = 'u8[16384]{0}', space=vmem, size = 0x4000, scoped, tag = 'input window, operand 0']
    #allocation4 [shape = 's32[2]{0}', space=sflag, size = 0x8, scoped, tag = 'scoped memory for tpu_custom_call.1']
    #allocation5 [shape = 's32[2]{0}', space=sflag, size = 0x8, scoped, tag = 'scoped memory for tpu_custom_call.1']
    #allocation6 [shape = 'u8[98304]{0}', space=vmem, size = 0x18000, scoped, tag = 'input window, operand 2, single buffered']
    #allocation7 [shape = 's32[1]{0}', space=sflag, size = 0x4, scoped, tag = 'scoped memory for tpu_custom_call.1']
    #allocation8 [shape = 'u8[98304]{0}', space=vmem, size = 0x18000, scoped, tag = 'input window, operand 4, single buffered']
    #allocation9 [shape = 'u8[32768]{0}', space=vmem, size = 0x8000, scoped, tag = 'input window, operand 6, single buffered']
    #allocation10 [shape = 's32[1]{0}', space=sflag, size = 0x4, scoped, tag = 'scoped memory for tpu_custom_call.1']
    #allocation11 [shape = 'u8[294912]{0}', space=vmem, size = 0x48000, scoped, tag = 'input window, operand 8, single buffered']
    #allocation12 [shape = 'u8[294912]{0}', space=vmem, size = 0x48000, scoped, tag = 'input window, operand 10, single buffered']
    #allocation13 [shape = 's32[1]{0}', space=sflag, size = 0x4, scoped, tag = 'scoped memory for tpu_custom_call.1']
    #allocation14 [shape = 'u8[98304]{0}', space=vmem, size = 0x18000, scoped, tag = 'input window, operand 12, single buffered']
    #allocation15 [shape = 'u8[65536]{0}', space=vmem, size = 0x10000, scoped, tag = 'input window, operand 14, single buffered']
    #allocation16 [shape = 's32[1]{0}', space=sflag, size = 0x4, scoped, tag = 'scoped memory for tpu_custom_call.1']
    #allocation17 [shape = 'u8[1024]{0}', space=vmem, size = 0x400, scoped, tag = 'output window, operand 0']
    %21 = vsyncpa [#allocation4], 0
    %s22 = scalar_lea.sflag [#allocation4], 1
    %23 = vsyncpa %s22, 0
    %24 = vsyncpa [#allocation7], 0
    %25 = vsyncpa [#allocation10], 0
    %26 = vsyncpa [#allocation13], 0
    %27 = vsyncpa [#allocation16], 0
    %28 = vsyncpa [#allocation5], 0
    %s29 = scalar_lea.sflag [#allocation5], 1
    %30 = vsyncpa %s29, 0
    loop: start=0, step=1, limit=4
    $region2: #{tpu_custom_call.1} parent=1 // loop_pre_header
      _
    $region3: #{tpu_custom_call.1} parent=1 // loop_header
      %s32 = sphi 0, %s36
      %p33 = scmp.ge.s32.totalorder %s32, 4
      %s42 = sphi 0, %s44
      %s45 = sphi 0, %s42
      %s46 = sphi 0, %s45
      %s62 = sphi 0, %s46
      %s66 = sphi 0, %s66
      %s68 = sphi 0, %s66
      %s69 = sphi 0, %s68
      %s83 = sphi 0, %s69
      %s87 = sphi 0, %s87
      %s89 = sphi 0, %s87
      %s90 = sphi 0, %s89
      %s104 = sphi 0, %s90
      %s108 = sphi 0, %s108
      %s110 = sphi 0, %s108
      %s111 = sphi 0, %s110
      %s125 = sphi 0, %s111
      %s129 = sphi 0, %s129
      %s131 = sphi 0, %s129
      %s132 = sphi 0, %s131
      %s146 = sphi 0, %s132
      %s150 = sphi 0, %s150
      %s152 = sphi 0, %s150
      %s153 = sphi 0, %s152
      %s167 = sphi 0, %s153
      %s171 = sphi 0, %s171
      %s173 = sphi 0, %s171
      %s174 = sphi 0, %s173
      %s188 = sphi 0, %s174
      %s192 = sphi 0, %s192
      %s194 = sphi 0, %s192
      %s195 = sphi 0, %s194
      %s209 = sphi 0, %s195
      %s213 = sphi 0, %s213
      %s215 = sphi 0, %s213
      %s216 = sphi 0, %s215
      %s230 = sphi 0, %s216
      %s234 = sphi 0, %s234
      %s236 = sphi 0, %s234
      %s237 = sphi 0, %s236
      %s251 = sphi 0, %s237
      %s255 = sphi 0, %s255
      %s257 = sphi 0, %s255
      %s258 = sphi 0, %s257
      %s272 = sphi 0, %s258
      %s276 = sphi 0, %s276
      %s278 = sphi 0, %s276
      %s279 = sphi 0, %s278
      %s293 = sphi 0, %s279
      %s297 = sphi 0, %s297
      %s299 = sphi 0, %s297
      %s300 = sphi 0, %s299
      %s314 = sphi 0, %s300
      %s318 = sphi 0, %s318
      %s320 = sphi 0, %s318
      %s321 = sphi 0, %s320
      %s335 = sphi 0, %s321
      %s339 = sphi 0, %s339
      %s341 = sphi 0, %s339
      %s342 = sphi 0, %s341
      %s356 = sphi 0, %s342
      %s360 = sphi 0, %s360
      %s362 = sphi 0, %s360
      %s363 = sphi 0, %s362
      %s377 = sphi 0, %s363
      %s383 = sphi 0, %s385
      %s386 = sphi 0, %s383
      %s387 = sphi 0, %s386
      %s403 = sphi 0, %s387
    $region4: #{tpu_custom_call.1} parent=1 // loop_header_branch
      %35 = sbr.rel (%p33) target = $region8
    $region5: #{tpu_custom_call.1} parent=1 // loop_body
      %s37 = ssub.s32 %s32, 1
      %s38 = ssub.s32 %s32, 2
      %s39 = sadd.s32 %s32, 1
      %s40 = ssub.s32 %s32, %s39
      %p41 = scmp.eq.s32.totalorder %s40, 0
      %s43 = sadd.s32 %s42, 1
      %s44 = scalar_select %p41, %s42, %s43
      %p47 = pneg %p41
      %p48 = scmp.eq.s32.totalorder %s32, 1
      %p49 = por %p47, %p48
      %p50 = scmp.ne.s32.totalorder %s42, %s45
      %p51 = scmp.eq.s32.totalorder %s32, 0
      %p52 = por %p50, %p51
      %p53 = scmp.ne.s32.totalorder %s42, %s45
      %p54 = scmp.eq.s32.totalorder %s37, 1
      %p55 = por %p53, %p54
      %p56 = scmp.ne.s32.totalorder %s45, %s46
      %p57 = scmp.eq.s32.totalorder %s37, 0
      %p58 = por %p56, %p57
      %p59 = scmp.ne.s32.totalorder %s45, %s46
      %p60 = scmp.eq.s32.totalorder %s38, 1
      %p61 = por %p59, %p60
      %p63 = scmp.ne.s32.totalorder %s46, %s62
      %p64 = scmp.eq.s32.totalorder %s38, 0
      %p65 = por %p63, %p64
      %s67 = sadd.s32 %s66, 1
      %p70 = scmp.eq.s32.totalorder %s32, 1
      %p71 = scmp.ne.s32.totalorder %s66, %s68
      %p72 = scmp.eq.s32.totalorder %s32, 0
      %p73 = por %p71, %p72
      %p74 = scmp.ne.s32.totalorder %s66, %s68
      %p75 = scmp.eq.s32.totalorder %s37, 1
      %p76 = por %p74, %p75
      %p77 = scmp.ne.s32.totalorder %s68, %s69
      %p78 = scmp.eq.s32.totalorder %s37, 0
      %p79 = por %p77, %p78
      %p80 = scmp.ne.s32.totalorder %s68, %s69
      %p81 = scmp.eq.s32.totalorder %s38, 1
      %p82 = por %p80, %p81
      %p84 = scmp.ne.s32.totalorder %s69, %s83
      %p85 = scmp.eq.s32.totalorder %s38, 0
      %p86 = por %p84, %p85
      %s88 = sadd.s32 %s87, 1
      %p91 = scmp.eq.s32.totalorder %s32, 1
      %p92 = scmp.ne.s32.totalorder %s87, %s89
      %p93 = scmp.eq.s32.totalorder %s32, 0
      %p94 = por %p92, %p93
      %p95 = scmp.ne.s32.totalorder %s87, %s89
      %p96 = scmp.eq.s32.totalorder %s37, 1
      %p97 = por %p95, %p96
      %p98 = scmp.ne.s32.totalorder %s89, %s90
      %p99 = scmp.eq.s32.totalorder %s37, 0
      %p100 = por %p98, %p99
      %p101 = scmp.ne.s32.totalorder %s89, %s90
      %p102 = scmp.eq.s32.totalorder %s38, 1
      %p103 = por %p101, %p102
      %p105 = scmp.ne.s32.totalorder %s90, %s104
      %p106 = scmp.eq.s32.totalorder %s38, 0
      %p107 = por %p105, %p106
      %s109 = sadd.s32 %s108, 1
      %p112 = scmp.eq.s32.totalorder %s32, 1
      %p113 = scmp.ne.s32.totalorder %s108, %s110
      %p114 = scmp.eq.s32.totalorder %s32, 0
      %p115 = por %p113, %p114
      %p116 = scmp.ne.s32.totalorder %s108, %s110
      %p117 = scmp.eq.s32.totalorder %s37, 1
      %p118 = por %p116, %p117
      %p119 = scmp.ne.s32.totalorder %s110, %s111
      %p120 = scmp.eq.s32.totalorder %s37, 0
      %p121 = por %p119, %p120
      %p122 = scmp.ne.s32.totalorder %s110, %s111
      %p123 = scmp.eq.s32.totalorder %s38, 1
      %p124 = por %p122, %p123
      %p126 = scmp.ne.s32.totalorder %s111, %s125
      %p127 = scmp.eq.s32.totalorder %s38, 0
      %p128 = por %p126, %p127
      %s130 = sadd.s32 %s129, 1
      %p133 = scmp.eq.s32.totalorder %s32, 1
      %p134 = scmp.ne.s32.totalorder %s129, %s131
      %p135 = scmp.eq.s32.totalorder %s32, 0
      %p136 = por %p134, %p135
      %p137 = scmp.ne.s32.totalorder %s129, %s131
      %p138 = scmp.eq.s32.totalorder %s37, 1
      %p139 = por %p137, %p138
      %p140 = scmp.ne.s32.totalorder %s131, %s132
      %p141 = scmp.eq.s32.totalorder %s37, 0
      %p142 = por %p140, %p141
      %p143 = scmp.ne.s32.totalorder %s131, %s132
      %p144 = scmp.eq.s32.totalorder %s38, 1
      %p145 = por %p143, %p144
      %p147 = scmp.ne.s32.totalorder %s132, %s146
      %p148 = scmp.eq.s32.totalorder %s38, 0
      %p149 = por %p147, %p148
      %s151 = sadd.s32 %s150, 1
      %p154 = scmp.eq.s32.totalorder %s32, 1
      %p155 = scmp.ne.s32.totalorder %s150, %s152
      %p156 = scmp.eq.s32.totalorder %s32, 0
      %p157 = por %p155, %p156
      %p158 = scmp.ne.s32.totalorder %s150, %s152
      %p159 = scmp.eq.s32.totalorder %s37, 1
      %p160 = por %p158, %p159
      %p161 = scmp.ne.s32.totalorder %s152, %s153
      %p162 = scmp.eq.s32.totalorder %s37, 0
      %p163 = por %p161, %p162
      %p164 = scmp.ne.s32.totalorder %s152, %s153
      %p165 = scmp.eq.s32.totalorder %s38, 1
      %p166 = por %p164, %p165
      %p168 = scmp.ne.s32.totalorder %s153, %s167
      %p169 = scmp.eq.s32.totalorder %s38, 0
      %p170 = por %p168, %p169
      %s172 = sadd.s32 %s171, 1
      %p175 = scmp.eq.s32.totalorder %s32, 1
      %p176 = scmp.ne.s32.totalorder %s171, %s173
      %p177 = scmp.eq.s32.totalorder %s32, 0
      %p178 = por %p176, %p177
      %p179 = scmp.ne.s32.totalorder %s171, %s173
      %p180 = scmp.eq.s32.totalorder %s37, 1
      %p181 = por %p179, %p180
      %p182 = scmp.ne.s32.totalorder %s173, %s174
      %p183 = scmp.eq.s32.totalorder %s37, 0
      %p184 = por %p182, %p183
      %p185 = scmp.ne.s32.totalorder %s173, %s174
      %p186 = scmp.eq.s32.totalorder %s38, 1
      %p187 = por %p185, %p186
      %p189 = scmp.ne.s32.totalorder %s174, %s188
      %p190 = scmp.eq.s32.totalorder %s38, 0
      %p191 = por %p189, %p190
      %s193 = sadd.s32 %s192, 1
      %p196 = scmp.eq.s32.totalorder %s32, 1
      %p197 = scmp.ne.s32.totalorder %s192, %s194
      %p198 = scmp.eq.s32.totalorder %s32, 0
      %p199 = por %p197, %p198
      %p200 = scmp.ne.s32.totalorder %s192, %s194
      %p201 = scmp.eq.s32.totalorder %s37, 1
      %p202 = por %p200, %p201
      %p203 = scmp.ne.s32.totalorder %s194, %s195
      %p204 = scmp.eq.s32.totalorder %s37, 0
      %p205 = por %p203, %p204
      %p206 = scmp.ne.s32.totalorder %s194, %s195
      %p207 = scmp.eq.s32.totalorder %s38, 1
      %p208 = por %p206, %p207
      %p210 = scmp.ne.s32.totalorder %s195, %s209
      %p211 = scmp.eq.s32.totalorder %s38, 0
      %p212 = por %p210, %p211
      %s214 = sadd.s32 %s213, 1
      %p217 = scmp.eq.s32.totalorder %s32, 1
      %p218 = scmp.ne.s32.totalorder %s213, %s215
      %p219 = scmp.eq.s32.totalorder %s32, 0
      %p220 = por %p218, %p219
      %p221 = scmp.ne.s32.totalorder %s213, %s215
      %p222 = scmp.eq.s32.totalorder %s37, 1
      %p223 = por %p221, %p222
      %p224 = scmp.ne.s32.totalorder %s215, %s216
      %p225 = scmp.eq.s32.totalorder %s37, 0
      %p226 = por %p224, %p225
      %p227 = scmp.ne.s32.totalorder %s215, %s216
      %p228 = scmp.eq.s32.totalorder %s38, 1
      %p229 = por %p227, %p228
      %p231 = scmp.ne.s32.totalorder %s216, %s230
      %p232 = scmp.eq.s32.totalorder %s38, 0
      %p233 = por %p231, %p232
      %s235 = sadd.s32 %s234, 1
      %p238 = scmp.eq.s32.totalorder %s32, 1
      %p239 = scmp.ne.s32.totalorder %s234, %s236
      %p240 = scmp.eq.s32.totalorder %s32, 0
      %p241 = por %p239, %p240
      %p242 = scmp.ne.s32.totalorder %s234, %s236
      %p243 = scmp.eq.s32.totalorder %s37, 1
      %p244 = por %p242, %p243
      %p245 = scmp.ne.s32.totalorder %s236, %s237
      %p246 = scmp.eq.s32.totalorder %s37, 0
      %p247 = por %p245, %p246
      %p248 = scmp.ne.s32.totalorder %s236, %s237
      %p249 = scmp.eq.s32.totalorder %s38, 1
      %p250 = por %p248, %p249
      %p252 = scmp.ne.s32.totalorder %s237, %s251
      %p253 = scmp.eq.s32.totalorder %s38, 0
      %p254 = por %p252, %p253
      %s256 = sadd.s32 %s255, 1
      %p259 = scmp.eq.s32.totalorder %s32, 1
      %p260 = scmp.ne.s32.totalorder %s255, %s257
      %p261 = scmp.eq.s32.totalorder %s32, 0
      %p262 = por %p260, %p261
      %p263 = scmp.ne.s32.totalorder %s255, %s257
      %p264 = scmp.eq.s32.totalorder %s37, 1
      %p265 = por %p263, %p264
      %p266 = scmp.ne.s32.totalorder %s257, %s258
      %p267 = scmp.eq.s32.totalorder %s37, 0
      %p268 = por %p266, %p267
      %p269 = scmp.ne.s32.totalorder %s257, %s258
      %p270 = scmp.eq.s32.totalorder %s38, 1
      %p271 = por %p269, %p270
      %p273 = scmp.ne.s32.totalorder %s258, %s272
      %p274 = scmp.eq.s32.totalorder %s38, 0
      %p275 = por %p273, %p274
      %s277 = sadd.s32 %s276, 1
      %p280 = scmp.eq.s32.totalorder %s32, 1
      %p281 = scmp.ne.s32.totalorder %s276, %s278
      %p282 = scmp.eq.s32.totalorder %s32, 0
      %p283 = por %p281, %p282
      %p284 = scmp.ne.s32.totalorder %s276, %s278
      %p285 = scmp.eq.s32.totalorder %s37, 1
      %p286 = por %p284, %p285
      %p287 = scmp.ne.s32.totalorder %s278, %s279
      %p288 = scmp.eq.s32.totalorder %s37, 0
      %p289 = por %p287, %p288
      %p290 = scmp.ne.s32.totalorder %s278, %s279
      %p291 = scmp.eq.s32.totalorder %s38, 1
      %p292 = por %p290, %p291
      %p294 = scmp.ne.s32.totalorder %s279, %s293
      %p295 = scmp.eq.s32.totalorder %s38, 0
      %p296 = por %p294, %p295
      %s298 = sadd.s32 %s297, 1
      %p301 = scmp.eq.s32.totalorder %s32, 1
      %p302 = scmp.ne.s32.totalorder %s297, %s299
      %p303 = scmp.eq.s32.totalorder %s32, 0
      %p304 = por %p302, %p303
      %p305 = scmp.ne.s32.totalorder %s297, %s299
      %p306 = scmp.eq.s32.totalorder %s37, 1
      %p307 = por %p305, %p306
      %p308 = scmp.ne.s32.totalorder %s299, %s300
      %p309 = scmp.eq.s32.totalorder %s37, 0
      %p310 = por %p308, %p309
      %p311 = scmp.ne.s32.totalorder %s299, %s300
      %p312 = scmp.eq.s32.totalorder %s38, 1
      %p313 = por %p311, %p312
      %p315 = scmp.ne.s32.totalorder %s300, %s314
      %p316 = scmp.eq.s32.totalorder %s38, 0
      %p317 = por %p315, %p316
      %s319 = sadd.s32 %s318, 1
      %p322 = scmp.eq.s32.totalorder %s32, 1
      %p323 = scmp.ne.s32.totalorder %s318, %s320
      %p324 = scmp.eq.s32.totalorder %s32, 0
      %p325 = por %p323, %p324
      %p326 = scmp.ne.s32.totalorder %s318, %s320
      %p327 = scmp.eq.s32.totalorder %s37, 1
      %p328 = por %p326, %p327
      %p329 = scmp.ne.s32.totalorder %s320, %s321
      %p330 = scmp.eq.s32.totalorder %s37, 0
      %p331 = por %p329, %p330
      %p332 = scmp.ne.s32.totalorder %s320, %s321
      %p333 = scmp.eq.s32.totalorder %s38, 1
      %p334 = por %p332, %p333
      %p336 = scmp.ne.s32.totalorder %s321, %s335
      %p337 = scmp.eq.s32.totalorder %s38, 0
      %p338 = por %p336, %p337
      %s340 = sadd.s32 %s339, 1
      %p343 = scmp.eq.s32.totalorder %s32, 1
      %p344 = scmp.ne.s32.totalorder %s339, %s341
      %p345 = scmp.eq.s32.totalorder %s32, 0
      %p346 = por %p344, %p345
      %p347 = scmp.ne.s32.totalorder %s339, %s341
      %p348 = scmp.eq.s32.totalorder %s37, 1
      %p349 = por %p347, %p348
      %p350 = scmp.ne.s32.totalorder %s341, %s342
      %p351 = scmp.eq.s32.totalorder %s37, 0
      %p352 = por %p350, %p351
      %p353 = scmp.ne.s32.totalorder %s341, %s342
      %p354 = scmp.eq.s32.totalorder %s38, 1
      %p355 = por %p353, %p354
      %p357 = scmp.ne.s32.totalorder %s342, %s356
      %p358 = scmp.eq.s32.totalorder %s38, 0
      %p359 = por %p357, %p358
      %s361 = sadd.s32 %s360, 1
      %p364 = scmp.eq.s32.totalorder %s32, 1
      %p365 = scmp.ne.s32.totalorder %s360, %s362
      %p366 = scmp.eq.s32.totalorder %s32, 0
      %p367 = por %p365, %p366
      %p368 = scmp.ne.s32.totalorder %s360, %s362
      %p369 = scmp.eq.s32.totalorder %s37, 1
      %p370 = por %p368, %p369
      %p371 = scmp.ne.s32.totalorder %s362, %s363
      %p372 = scmp.eq.s32.totalorder %s37, 0
      %p373 = por %p371, %p372
      %p374 = scmp.ne.s32.totalorder %s362, %s363
      %p375 = scmp.eq.s32.totalorder %s38, 1
      %p376 = por %p374, %p375
      %p378 = scmp.ne.s32.totalorder %s363, %s377
      %p379 = scmp.eq.s32.totalorder %s38, 0
      %p380 = por %p378, %p379
      %s381 = ssub.s32 %s32, %s39
      %p382 = scmp.eq.s32.totalorder %s381, 0
      %s384 = sadd.s32 %s383, 1
      %s385 = scalar_select %p382, %s383, %s384
      %p388 = pneg %p382
      %p389 = scmp.eq.s32.totalorder %s32, 1
      %p390 = por %p388, %p389
      %p391 = scmp.ne.s32.totalorder %s383, %s386
      %p392 = scmp.eq.s32.totalorder %s32, 0
      %p393 = por %p391, %p392
      %p394 = scmp.ne.s32.totalorder %s383, %s386
      %p395 = scmp.eq.s32.totalorder %s37, 1
      %p396 = por %p394, %p395
      %p397 = scmp.ne.s32.totalorder %s386, %s387
      %p398 = scmp.eq.s32.totalorder %s37, 0
      %p399 = por %p397, %p398
      %p400 = scmp.ne.s32.totalorder %s386, %s387
      %p401 = scmp.eq.s32.totalorder %s38, 1
      %p402 = por %p400, %p401
      %p404 = scmp.ne.s32.totalorder %s387, %s403
      %p405 = scmp.eq.s32.totalorder %s38, 0
      %p406 = por %p404, %p405
      %p407 = scmp.le.s32.totalorder 1, %s32
      %p408 = scmp.lt.s32.totalorder %s32, 3
      %p409 = pnand %p407, %p408
      %p410 = pneg %p409
      // Predicated region
      $region9: #{tpu_custom_call.1} parent=5 // pred_check
        _
      $region10: #{tpu_custom_call.1} parent=5 // pred_check_branch
        %412 = sbr.rel (%p409) target = $region12
      $region11: #{tpu_custom_call.1} parent=5 // pred_region
        %s413 = ssub.s32 %s32, 1
        // Predicated region
        $region13: #{tpu_custom_call.1} parent=11 // pred_check
          %p414 = pneg %p79
        $region14: #{tpu_custom_call.1} parent=11 // pred_check_branch
          %416 = sbr.rel (%p414) target = $region16
        $region15: #{tpu_custom_call.1} parent=11 // pred_region
          _
        $region16: #{tpu_custom_call.1} parent=11 // pred_fallthru
          _
        // Predicated region
        $region17: #{tpu_custom_call.1} parent=11 // pred_check
          %p417 = pneg %p100
        $region18: #{tpu_custom_call.1} parent=11 // pred_check_branch
          %419 = sbr.rel (%p417) target = $region20
        $region19: #{tpu_custom_call.1} parent=11 // pred_region
          %s421 = ssub.s32 3072, 3072
          %422 = vsyncadd [#allocation7], %s421
          %s423 = sshll.u32 [#allocation6], 4
          %s424 = int_to_ptr.vmem [resolvable:$true] %s423
          %429 = dma.hbm_to_vmem [thread:$0]  %s2, 3072, %s424, [#allocation7], 64, 64, 4
        $region20: #{tpu_custom_call.1} parent=11 // pred_fallthru
          _
        // Predicated region
        $region21: #{tpu_custom_call.1} parent=11 // pred_check
          %p430 = pneg %p121
        $region22: #{tpu_custom_call.1} parent=11 // pred_check_branch
          %432 = sbr.rel (%p430) target = $region24
        $region23: #{tpu_custom_call.1} parent=11 // pred_region
          _
        $region24: #{tpu_custom_call.1} parent=11 // pred_fallthru
          _
        // Predicated region
        $region25: #{tpu_custom_call.1} parent=11 // pred_check
          %p433 = pneg %p142
        $region26: #{tpu_custom_call.1} parent=11 // pred_check_branch
          %435 = sbr.rel (%p433) target = $region28
        $region27: #{tpu_custom_call.1} parent=11 // pred_region
          %s437 = ssub.s32 3072, 3072
          %438 = vsyncadd [#allocation7], %s437
          %s439 = sshll.u32 [#allocation8], 4
          %s440 = int_to_ptr.vmem [resolvable:$true] %s439
          %445 = dma.hbm_to_vmem [thread:$0]  %s4, 3072, %s440, [#allocation7], 64, 64, 4
        $region28: #{tpu_custom_call.1} parent=11 // pred_fallthru
          _
        // Predicated region
        $region29: #{tpu_custom_call.1} parent=11 // pred_check
          %p446 = pneg %p163
        $region30: #{tpu_custom_call.1} parent=11 // pred_check_branch
          %448 = sbr.rel (%p446) target = $region32
        $region31: #{tpu_custom_call.1} parent=11 // pred_region
          _
        $region32: #{tpu_custom_call.1} parent=11 // pred_fallthru
          _
        // Predicated region
        $region33: #{tpu_custom_call.1} parent=11 // pred_check
          %p449 = pneg %p184
        $region34: #{tpu_custom_call.1} parent=11 // pred_check_branch
          %451 = sbr.rel (%p449) target = $region36
        $region35: #{tpu_custom_call.1} parent=11 // pred_region
          %s453 = ssub.s32 1024, 1024
          %454 = vsyncadd [#allocation10], %s453
          %s455 = sshll.u32 [#allocation9], 4
          %s456 = int_to_ptr.vmem [resolvable:$true] %s455
          %461 = dma.hbm_to_vmem [thread:$0]  %s6, 1024, %s456, [#allocation10], 64, 64, 4
        $region36: #{tpu_custom_call.1} parent=11 // pred_fallthru
          _
        // Predicated region
        $region37: #{tpu_custom_call.1} parent=11 // pred_check
          %p462 = pneg %p205
        $region38: #{tpu_custom_call.1} parent=11 // pred_check_branch
          %464 = sbr.rel (%p462) target = $region40
        $region39: #{tpu_custom_call.1} parent=11 // pred_region
          _
        $region40: #{tpu_custom_call.1} parent=11 // pred_fallthru
          _
        // Predicated region
        $region41: #{tpu_custom_call.1} parent=11 // pred_check
          %p465 = pneg %p226
        $region42: #{tpu_custom_call.1} parent=11 // pred_check_branch
          %467 = sbr.rel (%p465) target = $region44
        $region43: #{tpu_custom_call.1} parent=11 // pred_region
          %s469 = ssub.s32 9216, 9216
          %470 = vsyncadd [#allocation10], %s469
          %s471 = sshll.u32 [#allocation11], 4
          %s472 = int_to_ptr.vmem [resolvable:$true] %s471
          %477 = dma.hbm_to_vmem [thread:$0]  %s8, 9216, %s472, [#allocation10], 64, 64, 4
        $region44: #{tpu_custom_call.1} parent=11 // pred_fallthru
          _
        // Predicated region
        $region45: #{tpu_custom_call.1} parent=11 // pred_check
          %p478 = pneg %p247
        $region46: #{tpu_custom_call.1} parent=11 // pred_check_branch
          %480 = sbr.rel (%p478) target = $region48
        $region47: #{tpu_custom_call.1} parent=11 // pred_region
          _
        $region48: #{tpu_custom_call.1} parent=11 // pred_fallthru
          _
        // Predicated region
        $region49: #{tpu_custom_call.1} parent=11 // pred_check
          %p481 = pneg %p268
        $region50: #{tpu_custom_call.1} parent=11 // pred_check_branch
          %483 = sbr.rel (%p481) target = $region52
        $region51: #{tpu_custom_call.1} parent=11 // pred_region
          %s485 = ssub.s32 9216, 9216
          %486 = vsyncadd [#allocation13], %s485
          %s487 = sshll.u32 [#allocation12], 4
          %s488 = int_to_ptr.vmem [resolvable:$true] %s487
          %493 = dma.hbm_to_vmem [thread:$0]  %s10, 9216, %s488, [#allocation13], 64, 64, 4
        $region52: #{tpu_custom_call.1} parent=11 // pred_fallthru
          _
        // Predicated region
        $region53: #{tpu_custom_call.1} parent=11 // pred_check
          %p494 = pneg %p289
        $region54: #{tpu_custom_call.1} parent=11 // pred_check_branch
          %496 = sbr.rel (%p494) target = $region56
        $region55: #{tpu_custom_call.1} parent=11 // pred_region
          _
        $region56: #{tpu_custom_call.1} parent=11 // pred_fallthru
          _
        // Predicated region
        $region57: #{tpu_custom_call.1} parent=11 // pred_check
          %p497 = pneg %p310
        $region58: #{tpu_custom_call.1} parent=11 // pred_check_branch
          %499 = sbr.rel (%p497) target = $region60
        $region59: #{tpu_custom_call.1} parent=11 // pred_region
          %s501 = ssub.s32 3072, 3072
          %502 = vsyncadd [#allocation13], %s501
          %s503 = sshll.u32 [#allocation14], 4
          %s504 = int_to_ptr.vmem [resolvable:$true] %s503
          %509 = dma.hbm_to_vmem [thread:$0]  %s12, 3072, %s504, [#allocation13], 64, 64, 4
        $region60: #{tpu_custom_call.1} parent=11 // pred_fallthru
          _
        // Predicated region
        $region61: #{tpu_custom_call.1} parent=11 // pred_check
          %p510 = pneg %p331
        $region62: #{tpu_custom_call.1} parent=11 // pred_check_branch
          %512 = sbr.rel (%p510) target = $region64
        $region63: #{tpu_custom_call.1} parent=11 // pred_region
          _
        $region64: #{tpu_custom_call.1} parent=11 // pred_fallthru
          _
        // Predicated region
        $region65: #{tpu_custom_call.1} parent=11 // pred_check
          %p513 = pneg %p352
        $region66: #{tpu_custom_call.1} parent=11 // pred_check_branch
          %515 = sbr.rel (%p513) target = $region68
        $region67: #{tpu_custom_call.1} parent=11 // pred_region
          %s517 = ssub.s32 2048, 2048
          %518 = vsyncadd [#allocation16], %s517
          %s519 = sshll.u32 [#allocation15], 4
          %s520 = int_to_ptr.vmem [resolvable:$true] %s519
          %525 = dma.hbm_to_vmem [thread:$0]  %s14, 2048, %s520, [#allocation16], 128, 128, 8
        $region68: #{tpu_custom_call.1} parent=11 // pred_fallthru
          _
        // Predicated region
        $region69: #{tpu_custom_call.1} parent=11 // pred_check
          %p526 = pneg %p373
        $region70: #{tpu_custom_call.1} parent=11 // pred_check_branch
          %528 = sbr.rel (%p526) target = $region72
        $region71: #{tpu_custom_call.1} parent=11 // pred_region
          _
        $region72: #{tpu_custom_call.1} parent=11 // pred_fallthru
          _
      $region12: #{tpu_custom_call.1} parent=5 // pred_fallthru
        _
      %p529 = scmp.lt.s32.totalorder %s32, 2
      // Predicated region
      $region73: #{tpu_custom_call.1} parent=5 // pred_check
        %p530 = pneg %p529
      $region74: #{tpu_custom_call.1} parent=5 // pred_check_branch
        %532 = sbr.rel (%p530) target = $region76
      $region75: #{tpu_custom_call.1} parent=5 // pred_region
        // Predicated region
        $region77: #{tpu_custom_call.1} parent=75 // pred_check
          %p533 = pneg %p52
        $region78: #{tpu_custom_call.1} parent=75 // pred_check_branch
          %535 = sbr.rel (%p533) target = $region80
        $region79: #{tpu_custom_call.1} parent=75 // pred_region
          %s536 = sand.u32 %s42, 1
          %s537 = scalar_lea.sflag [#allocation4], %s536
          %s538 = sand.u32 %s42, 1
          %s539 = smul.addr %s538, 16
          %s540 = scalar_lea.vmem [#allocation3], %s539
          %s542 = ssub.s32 256, 256
          %543 = vsyncadd %s537, %s542
          %s544 = smul.addr %s32, 4
          %s545 = smul.addr %s544, 64
          %s546 = scalar_lea.hbm %s0, %s545
          %s547 = sshll.u32 %s540, 4
          %s548 = int_to_ptr.vmem [resolvable:$true] %s547
          %553 = dma.hbm_to_vmem [thread:$0]  %s546, 256, %s548, %s537, 64, 64, 4
        $region80: #{tpu_custom_call.1} parent=75 // pred_fallthru
          _
      $region76: #{tpu_custom_call.1} parent=5 // pred_fallthru
        _
      %p554 = scmp.le.s32.totalorder 1, %s32
      %p555 = scmp.lt.s32.totalorder %s32, 3
      %p556 = pnand %p554, %p555
      %p557 = pneg %p556
      // Predicated region
      $region81: #{tpu_custom_call.1} parent=5 // pred_check
        _
      $region82: #{tpu_custom_call.1} parent=5 // pred_check_branch
        %559 = sbr.rel (%p556) target = $region84
      $region83: #{tpu_custom_call.1} parent=5 // pred_region
        %s560 = ssub.s32 %s32, 1
        %s561 = sand.u32 %s45, 1
        %s562 = scalar_lea.sflag [#allocation4], %s561
        %s563 = sand.u32 %s45, 1
        %s564 = smul.addr %s563, 16
        %s565 = scalar_lea.vmem [#allocation3], %s564
        // Predicated region
        $region85: #{tpu_custom_call.1} parent=83 // pred_check
          %p566 = pneg %p58
        $region86: #{tpu_custom_call.1} parent=83 // pred_check_branch
          %568 = sbr.rel (%p566) target = $region88
        $region87: #{tpu_custom_call.1} parent=83 // pred_region
          %569 = dma.done %s562, 256
        $region88: #{tpu_custom_call.1} parent=83 // pred_fallthru
          _
        // Predicated region
        $region89: #{tpu_custom_call.1} parent=83 // pred_check
          %p570 = pneg %p100
        $region90: #{tpu_custom_call.1} parent=83 // pred_check_branch
          %572 = sbr.rel (%p570) target = $region92
        $region91: #{tpu_custom_call.1} parent=83 // pred_region
          %573 = dma.done [#allocation7], 3072
        $region92: #{tpu_custom_call.1} parent=83 // pred_fallthru
          _
        // Predicated region
        $region93: #{tpu_custom_call.1} parent=83 // pred_check
          %p574 = pneg %p142
        $region94: #{tpu_custom_call.1} parent=83 // pred_check_branch
          %576 = sbr.rel (%p574) target = $region96
        $region95: #{tpu_custom_call.1} parent=83 // pred_region
          %577 = dma.done [#allocation7], 3072
        $region96: #{tpu_custom_call.1} parent=83 // pred_fallthru
          _
        // Predicated region
        $region97: #{tpu_custom_call.1} parent=83 // pred_check
          %p578 = pneg %p184
        $region98: #{tpu_custom_call.1} parent=83 // pred_check_branch
          %580 = sbr.rel (%p578) target = $region100
        $region99: #{tpu_custom_call.1} parent=83 // pred_region
          %581 = dma.done [#allocation10], 1024
        $region100: #{tpu_custom_call.1} parent=83 // pred_fallthru
          _
        // Predicated region
        $region101: #{tpu_custom_call.1} parent=83 // pred_check
          %p582 = pneg %p226
        $region102: #{tpu_custom_call.1} parent=83 // pred_check_branch
          %584 = sbr.rel (%p582) target = $region104
        $region103: #{tpu_custom_call.1} parent=83 // pred_region
          %585 = dma.done [#allocation10], 9216
        $region104: #{tpu_custom_call.1} parent=83 // pred_fallthru
          _
        // Predicated region
        $region105: #{tpu_custom_call.1} parent=83 // pred_check
          %p586 = pneg %p268
        $region106: #{tpu_custom_call.1} parent=83 // pred_check_branch
          %588 = sbr.rel (%p586) target = $region108
        $region107: #{tpu_custom_call.1} parent=83 // pred_region
          %589 = dma.done [#allocation13], 9216
        $region108: #{tpu_custom_call.1} parent=83 // pred_fallthru
          _
        // Predicated region
        $region109: #{tpu_custom_call.1} parent=83 // pred_check
          %p590 = pneg %p310
        $region110: #{tpu_custom_call.1} parent=83 // pred_check_branch
          %592 = sbr.rel (%p590) target = $region112
        $region111: #{tpu_custom_call.1} parent=83 // pred_region
          %593 = dma.done [#allocation13], 3072
        $region112: #{tpu_custom_call.1} parent=83 // pred_fallthru
          _
        // Predicated region
        $region113: #{tpu_custom_call.1} parent=83 // pred_check
          %p594 = pneg %p352
        $region114: #{tpu_custom_call.1} parent=83 // pred_check_branch
          %596 = sbr.rel (%p594) target = $region116
        $region115: #{tpu_custom_call.1} parent=83 // pred_region
          %597 = dma.done [#allocation16], 2048
        $region116: #{tpu_custom_call.1} parent=83 // pred_fallthru
          _
        %s598 = sand.u32 %s45, 1
        %s599 = scalar_lea.sflag [#allocation4], %s598
        %s600 = sand.u32 %s45, 1
        %s601 = smul.addr %s600, 16
        %s602 = scalar_lea.vmem [#allocation3], %s601
        %p603 = pneg %p58
        %p604 = pneg %p55
        %p605 = pneg %p79
        %p606 = pneg %p76
        %p607 = pneg %p100
        %p608 = pneg %p97
        %p609 = pneg %p121
        %p610 = pneg %p118
        %p611 = pneg %p142
        %p612 = pneg %p139
        %p613 = pneg %p163
        %p614 = pneg %p160
        %p615 = pneg %p184
        %p616 = pneg %p181
        %p617 = pneg %p205
        %p618 = pneg %p202
        %p619 = pneg %p226
        %p620 = pneg %p223
        %p621 = pneg %p247
        %p622 = pneg %p244
        %p623 = pneg %p268
        %p624 = pneg %p265
        %p625 = pneg %p289
        %p626 = pneg %p286
        %p627 = pneg %p310
        %p628 = pneg %p307
        %p629 = pneg %p331
        %p630 = pneg %p328
        %p631 = pneg %p352
        %p632 = pneg %p349
        %p633 = pneg %p373
        %p634 = pneg %p370
        %p635 = pneg %p399
        %p636 = pneg %p396
        %s637 = sand.u32 %s386, 1
        %s638 = scalar_lea.sflag [#allocation5], %s637
        %s639 = sand.u32 %s386, 1
        %s640 = scalar_lea.vmem [#allocation17], %s639
        %v642 = vld [vmem:[%s565] sm:$0xf]
        %v643 = vld [vmem:[%s565 + $0x4] sm:$0xf]
        %v644 = vld [vmem:[%s565 + $0x8] sm:$0xf]
        %v645 = vld [vmem:[%s565 + $0xc] sm:$0xf]
        %v646 = vunpack.c.l.bf16 %v642
        %v647 = vunpack.c.l.bf16 %v643
        %v648 = vunpack.c.l.bf16 %v644
        %v649 = vunpack.c.l.bf16 %v645
        %v650 = vlaneseq
        %v651 = vshrl.u32 %v650, 7
        %v652 = vadd.s32 %v651, 8
        %v653 = vadd.s32 %v651, 16
        %v654 = vadd.s32 %v651, 24
        %vm655 = vcmp.lt.s32.totalorder %v651, 0
        %v656 = vsub.s32 0, %v651
        %v657 = vsel %vm655, %v656, %v651
        %v658 = vshrl.u32 %v657, 5
        %v659 = vand.u32 %v657, 31
        %v660 = vsub.s32 0, %v659
        %v661 = vsel %vm655, %v660, %v659
        %vm662 = vcmp.lt.s32.totalorder %v652, 0
        %v663 = vsub.s32 0, %v652
        %v664 = vsel %vm662, %v663, %v652
        %v665 = vshrl.u32 %v664, 5
        %v666 = vand.u32 %v664, 31
        %v667 = vsub.s32 0, %v666
        %v668 = vsel %vm662, %v667, %v666
        %vm669 = vcmp.lt.s32.totalorder %v653, 0
        %v670 = vsub.s32 0, %v653
        %v671 = vsel %vm669, %v670, %v653
        %v672 = vshrl.u32 %v671, 5
        %v673 = vand.u32 %v671, 31
        %v674 = vsub.s32 0, %v673
        %v675 = vsel %vm669, %v674, %v673
        %vm676 = vcmp.lt.s32.totalorder %v654, 0
        %v677 = vsub.s32 0, %v654
        %v678 = vsel %vm676, %v677, %v654
        %v679 = vshrl.u32 %v678, 5
        %v680 = vand.u32 %v678, 31
        %v681 = vsub.s32 0, %v680
        %v682 = vsel %vm676, %v681, %v680
        %vm683 = vcmp.ne.s32.totalorder %v661, 0
        %vm684 = vcmp.ne.s32.totalorder %v668, 0
        %vm685 = vcmp.ne.s32.totalorder %v675, 0
        %vm686 = vcmp.ne.s32.totalorder %v682, 0
        %vm687 = vcmp.lt.s32.totalorder %v661, 0
        %vm688 = vcmp.lt.s32.totalorder %v668, 0
        %vm689 = vcmp.lt.s32.totalorder %v675, 0
        %vm690 = vcmp.lt.s32.totalorder %v682, 0
        %vm691 = vmand %vm687, %vm683
        %vm692 = vmand %vm688, %vm684
        %vm693 = vmand %vm689, %vm685
        %vm694 = vmand %vm690, %vm686
        %v695 = vadd.s32 %v661, 32
        %v696 = vadd.s32 %v668, 32
        %v697 = vadd.s32 %v675, 32
        %v698 = vadd.s32 %v682, 32
        %v699 = vsel %vm691, %v695, %v661
        %v700 = vsel %vm692, %v696, %v668
        %v701 = vsel %vm693, %v697, %v675
        %v702 = vsel %vm694, %v698, %v682
        %vm703 = vcmp.ne.s32.totalorder %v699, 0
        %vm704 = vcmp.ne.s32.totalorder %v700, 0
        %vm705 = vcmp.ne.s32.totalorder %v701, 0
        %vm706 = vcmp.ne.s32.totalorder %v702, 0
        %vm707 = vcmp.ne.s32.totalorder %v699, 31
        %vm708 = vcmp.ne.s32.totalorder %v700, 31
        %vm709 = vcmp.ne.s32.totalorder %v701, 31
        %vm710 = vcmp.ne.s32.totalorder %v702, 31
        %v711 = vld [vmem:[#allocation6] sm:$0xf]
        %v712 = vld [vmem:[#allocation6 + $0x4] sm:$0xf]
        %v713 = vld [vmem:[#allocation6 + $0x8] sm:$0xf]
        %v714 = vld [vmem:[#allocation6 + $0xc] sm:$0xf]
        %v715 = vld [vmem:[#allocation6 + $0x10] sm:$0xf]
        %v716 = vld [vmem:[#allocation6 + $0x14] sm:$0xf]
        %v717 = vld [vmem:[#allocation6 + $0x18] sm:$0xf]
        %v718 = vld [vmem:[#allocation6 + $0x1c] sm:$0xf]
        %v719 = vld [vmem:[#allocation6 + $0x20] sm:$0xf]
        %v720 = vld [vmem:[#allocation6 + $0x24] sm:$0xf]
        %v721 = vld [vmem:[#allocation6 + $0x28] sm:$0xf]
        %v722 = vld [vmem:[#allocation6 + $0x2c] sm:$0xf]
        %v723 = vld [vmem:[#allocation6 + $0x30] sm:$0xf]
        %v724 = vld [vmem:[#allocation6 + $0x34] sm:$0xf]
        %v725 = vld [vmem:[#allocation6 + $0x38] sm:$0xf]
        %v726 = vld [vmem:[#allocation6 + $0x3c] sm:$0xf]
        %s727 = scalar_lea.vmem [#allocation6], 64
        %v728 = vld [vmem:[%s727] sm:$0xf]
        %v729 = vld [vmem:[%s727 + $0x4] sm:$0xf]
        %v730 = vld [vmem:[%s727 + $0x8] sm:$0xf]
        %v731 = vld [vmem:[%s727 + $0xc] sm:$0xf]
        %v732 = vld [vmem:[%s727 + $0x10] sm:$0xf]
        %v733 = vld [vmem:[%s727 + $0x14] sm:$0xf]
        %v734 = vld [vmem:[%s727 + $0x18] sm:$0xf]
        %v735 = vld [vmem:[%s727 + $0x1c] sm:$0xf]
        %v736 = vld [vmem:[%s727 + $0x20] sm:$0xf]
        %v737 = vld [vmem:[%s727 + $0x24] sm:$0xf]
        %v738 = vld [vmem:[%s727 + $0x28] sm:$0xf]
        %v739 = vld [vmem:[%s727 + $0x2c] sm:$0xf]
        %v740 = vld [vmem:[%s727 + $0x30] sm:$0xf]
        %v741 = vld [vmem:[%s727 + $0x34] sm:$0xf]
        %v742 = vld [vmem:[%s727 + $0x38] sm:$0xf]
        %v743 = vld [vmem:[%s727 + $0x3c] sm:$0xf]
        %s744 = scalar_lea.vmem [#allocation6], 128
        %v745 = vld [vmem:[%s744] sm:$0xf]
        %v746 = vld [vmem:[%s744 + $0x4] sm:$0xf]
        %v747 = vld [vmem:[%s744 + $0x8] sm:$0xf]
        %v748 = vld [vmem:[%s744 + $0xc] sm:$0xf]
        %v749 = vld [vmem:[%s744 + $0x10] sm:$0xf]
        %v750 = vld [vmem:[%s744 + $0x14] sm:$0xf]
        %v751 = vld [vmem:[%s744 + $0x18] sm:$0xf]
        %v752 = vld [vmem:[%s744 + $0x1c] sm:$0xf]
        %v753 = vld [vmem:[%s744 + $0x20] sm:$0xf]
        %v754 = vld [vmem:[%s744 + $0x24] sm:$0xf]
        %v755 = vld [vmem:[%s744 + $0x28] sm:$0xf]
        %v756 = vld [vmem:[%s744 + $0x2c] sm:$0xf]
        %v757 = vld [vmem:[%s744 + $0x30] sm:$0xf]
        %v758 = vld [vmem:[%s744 + $0x34] sm:$0xf]
        %v759 = vld [vmem:[%s744 + $0x38] sm:$0xf]
        %v760 = vld [vmem:[%s744 + $0x3c] sm:$0xf]
        %v761 = vld [vmem:[%s3] sm:$0x1]
        %v762 = vrot.slane %v646, 7
        %v763 = vrot.slane %v647, 7
        %v764 = vrot.slane %v648, 7
        %v765 = vrot.slane %v649, 7
        %vm766 = vcmp.lt.s32.totalorder %v651, 1
        %v767 = vsel %vm766, %v764, %v765
        %v768 = vsel %vm766, %v763, %v764
        %v769 = vsel %vm766, %v762, %v763
        %v770 = vsel %vm766, %v765, %v762
        %v771 = vsel %vm703, 1, 0
        %v772 = vsel %vm704, 1, 0
        %v773 = vsel %vm705, 1, 0
        %v774 = vsel %vm706, 1, 0
        %vm775 = vcmp.eq.s32.totalorder %v771, 1
        %vm776 = vcmp.eq.s32.totalorder %v772, 1
        %vm777 = vcmp.eq.s32.totalorder %v773, 1
        %vm778 = vcmp.eq.s32.totalorder %v774, 1
        %v779 = vsel %vm775, %v770, 0.0
        %v780 = vsel %vm776, %v769, 0.0
        %v781 = vsel %vm777, %v768, 0.0
        %v782 = vsel %vm778, %v767, 0.0
        %v783 = vrot.slane %v646, 1
        %v784 = vrot.slane %v647, 1
        %v785 = vrot.slane %v648, 1
        %v786 = vrot.slane %v649, 1
        %vm787 = vcmp.lt.s32.totalorder %v651, 7
        %v788 = vsel %vm787, %v785, %v786
        %v789 = vsel %vm787, %v784, %v785
        %v790 = vsel %vm787, %v783, %v784
        %v791 = vsel %vm787, %v786, %v783
        %v792 = vsel %vm707, 1, 0
        %v793 = vsel %vm708, 1, 0
        %v794 = vsel %vm709, 1, 0
        %v795 = vsel %vm710, 1, 0
        %vm796 = vcmp.eq.s32.totalorder %v792, 1
        %vm797 = vcmp.eq.s32.totalorder %v793, 1
        %vm798 = vcmp.eq.s32.totalorder %v794, 1
        %vm799 = vcmp.eq.s32.totalorder %v795, 1
        %v800 = vsel %vm796, %v790, 0.0
        %v801 = vsel %vm797, %v789, 0.0
        %v802 = vsel %vm798, %v788, 0.0
        %v803 = vsel %vm799, %v791, 0.0
        %v804 = vpack.c.bf16 %v780, %v779
        %v805 = vpack.c.bf16 %v782, %v781
        %v810 = vunpack.c.l.b16 %v642
        %v811 = vunpack.c.l.b16 %v643
        %v812 = vunpack.c.l.b16 %v644
        %v813 = vunpack.c.l.b16 %v645
        %v814 = vpack.c.b16 %v811, %v810
        %v815 = vpack.c.b16 %v813, %v812
        %v834 = vunpack.c.l.b16 %v728
        %v835 = vunpack.c.l.b16 %v729
        %v836 = vunpack.c.l.b16 %v730
        %v837 = vunpack.c.l.b16 %v731
        %v838 = vunpack.c.l.b16 %v732
        %v839 = vunpack.c.l.b16 %v733
        %v840 = vunpack.c.l.b16 %v734
        %v841 = vunpack.c.l.b16 %v735
        %v842 = vunpack.c.l.b16 %v736
        %v843 = vunpack.c.l.b16 %v737
        %v844 = vunpack.c.l.b16 %v738
        %v845 = vunpack.c.l.b16 %v739
        %v846 = vunpack.c.l.b16 %v740
        %v847 = vunpack.c.l.b16 %v741
        %v848 = vunpack.c.l.b16 %v742
        %v849 = vunpack.c.l.b16 %v743
        %v850 = vpack.c.b16 %v835, %v834
        %v851 = vpack.c.b16 %v837, %v836
        %v852 = vpack.c.b16 %v839, %v838
        %v853 = vpack.c.b16 %v841, %v840
        %v854 = vpack.c.b16 %v843, %v842
        %v855 = vpack.c.b16 %v845, %v844
        %v856 = vpack.c.b16 %v847, %v846
        %v857 = vpack.c.b16 %v849, %v848
        %866 = vmatprep.subr.bf16.mxu0 0
        %867 = vmatpush1.bf16.msra.mxu0 %v850
        %868 = vmatprep.subr.bf16.mxu0 0
        %869 = vmatpush1.bf16.msra.mxu0 %v851
        %870 = vmatprep.subr.bf16.mxu0 0
        %871 = vmatpush1.bf16.msra.mxu0 %v852
        %872 = vmatprep.subr.bf16.mxu0 0
        %873 = vmatpush1.bf16.msra.mxu0 %v853
        %874 = vmatprep.subr.bf16.mxu0 0
        %875 = vmatpush1.bf16.msra.mxu0 %v854
        %876 = vmatprep.subr.bf16.mxu0 0
        %877 = vmatpush1.bf16.msra.mxu0 %v855
        %878 = vmatprep.subr.bf16.mxu0 0
        %879 = vmatpush1.bf16.msra.mxu0 %v856
        %880 = vmatprep.subr.bf16.mxu0 0
        %881 = vmatpush1.bf16.msra.mxu0 %v857
        %882 = vmatprep.subr.bf16.mxu0 0
        %883 = vmatpush1.bf16.msra.mxu0 0
        %884 = vmatprep.subr.bf16.mxu0 0
        %885 = vmatpush1.bf16.msra.mxu0 0
        %886 = vmatprep.subr.bf16.mxu0 0
        %887 = vmatpush1.bf16.msra.mxu0 0
        %888 = vmatprep.subr.bf16.mxu0 0
        %889 = vmatpush1.bf16.msra.mxu0 0
        %890 = vmatprep.subr.bf16.mxu0 0
        %891 = vmatpush1.bf16.msra.mxu0 0
        %892 = vmatprep.subr.bf16.mxu0 0
        %893 = vmatpush1.bf16.msra.mxu0 0
        %894 = vmatprep.subr.bf16.mxu0 0
        %895 = vmatpush1.bf16.msra.mxu0 0
        %896 = vmatprep.subr.bf16.mxu0 0
        %897 = vmatpush1.bf16.msra.mxu0 0
        %898 = vmatprep.mubr.bf16.mxu0 0
        %899 = vmatmul.mubr.bf16.gmra.mrb[0].mxu0 %v814
        %v900 = vpop.f32.mrb[0].mxu0
        %v901 = vadd.f32 0.0, %v900
        %v902 = vpop.f32.mrb[0].mxu0
        %v903 = vpop.f32.mrb[0].mxu0
        %v904 = vadd.f32 0.0, %v903
        %v905 = vpop.f32.mrb[0].mxu0
        %906 = vmatprep.mubr.bf16.mxu0 0
        %907 = vmatmul.mubr.bf16.gmra.mrb[0].mxu0 %v815
        %v908 = vpop.f32.mrb[0].mxu0
        %v909 = vadd.f32 0.0, %v908
        %v910 = vpop.f32.mrb[0].mxu0
        %v911 = vpop.f32.mrb[0].mxu0
        %v912 = vadd.f32 0.0, %v911
        %v913 = vpop.f32.mrb[0].mxu0
        %914 = vdwg.mxu0
        %v931 = vunpack.c.l.b16 %v711
        %v932 = vunpack.c.l.b16 %v712
        %v933 = vunpack.c.l.b16 %v713
        %v934 = vunpack.c.l.b16 %v714
        %v935 = vunpack.c.l.b16 %v715
        %v936 = vunpack.c.l.b16 %v716
        %v937 = vunpack.c.l.b16 %v717
        %v938 = vunpack.c.l.b16 %v718
        %v939 = vunpack.c.l.b16 %v719
        %v940 = vunpack.c.l.b16 %v720
        %v941 = vunpack.c.l.b16 %v721
        %v942 = vunpack.c.l.b16 %v722
        %v943 = vunpack.c.l.b16 %v723
        %v944 = vunpack.c.l.b16 %v724
        %v945 = vunpack.c.l.b16 %v725
        %v946 = vunpack.c.l.b16 %v726
        %v947 = vpack.c.b16 %v932, %v931
        %v948 = vpack.c.b16 %v934, %v933
        %v949 = vpack.c.b16 %v936, %v935
        %v950 = vpack.c.b16 %v938, %v937
        %v951 = vpack.c.b16 %v940, %v939
        %v952 = vpack.c.b16 %v942, %v941
        %v953 = vpack.c.b16 %v944, %v943
        %v954 = vpack.c.b16 %v946, %v945
        %963 = vmatprep.subr.bf16.mxu0 0
        %964 = vmatpush1.bf16.msra.mxu0 %v947
        %965 = vmatprep.subr.bf16.mxu0 0
        %966 = vmatpush1.bf16.msra.mxu0 %v948
        %967 = vmatprep.subr.bf16.mxu0 0
        %968 = vmatpush1.bf16.msra.mxu0 %v949
        %969 = vmatprep.subr.bf16.mxu0 0
        %970 = vmatpush1.bf16.msra.mxu0 %v950
        %971 = vmatprep.subr.bf16.mxu0 0
        %972 = vmatpush1.bf16.msra.mxu0 %v951
        %973 = vmatprep.subr.bf16.mxu0 0
        %974 = vmatpush1.bf16.msra.mxu0 %v952
        %975 = vmatprep.subr.bf16.mxu0 0
        %976 = vmatpush1.bf16.msra.mxu0 %v953
        %977 = vmatprep.subr.bf16.mxu0 0
        %978 = vmatpush1.bf16.msra.mxu0 %v954
        %979 = vmatprep.subr.bf16.mxu0 0
        %980 = vmatpush1.bf16.msra.mxu0 0
        %981 = vmatprep.subr.bf16.mxu0 0
        %982 = vmatpush1.bf16.msra.mxu0 0
        %983 = vmatprep.subr.bf16.mxu0 0
        %984 = vmatpush1.bf16.msra.mxu0 0
        %985 = vmatprep.subr.bf16.mxu0 0
        %986 = vmatpush1.bf16.msra.mxu0 0
        %987 = vmatprep.subr.bf16.mxu0 0
        %988 = vmatpush1.bf16.msra.mxu0 0
        %989 = vmatprep.subr.bf16.mxu0 0
        %990 = vmatpush1.bf16.msra.mxu0 0
        %991 = vmatprep.subr.bf16.mxu0 0
        %992 = vmatpush1.bf16.msra.mxu0 0
        %993 = vmatprep.subr.bf16.mxu0 0
        %994 = vmatpush1.bf16.msra.mxu0 0
        %995 = vmatprep.mubr.bf16.mxu0 0
        %996 = vmatmul.mubr.bf16.gmra.mrb[0].mxu0 %v804
        %v997 = vpop.f32.mrb[0].mxu0
        %v998 = vadd.f32 %v901, %v997
        %v999 = vpop.f32.mrb[0].mxu0
        %v1000 = vpop.f32.mrb[0].mxu0
        %v1001 = vadd.f32 %v904, %v1000
        %v1002 = vpop.f32.mrb[0].mxu0
        %1003 = vmatprep.mubr.bf16.mxu0 0
        %1004 = vmatmul.mubr.bf16.gmra.mrb[0].mxu0 %v805
        %v1005 = vpop.f32.mrb[0].mxu0
        %v1006 = vadd.f32 %v909, %v1005
        %v1007 = vpop.f32.mrb[0].mxu0
        %v1008 = vpop.f32.mrb[0].mxu0
        %v1009 = vadd.f32 %v912, %v1008
        %v1010 = vpop.f32.mrb[0].mxu0
        %1011 = vdwg.mxu0
        %v1012 = vpack.c.bf16 %v801, %v800
        %v1013 = vpack.c.bf16 %v803, %v802
        %v1030 = vunpack.c.l.b16 %v745
        %v1031 = vunpack.c.l.b16 %v746
        %v1032 = vunpack.c.l.b16 %v747
        %v1033 = vunpack.c.l.b16 %v748
        %v1034 = vunpack.c.l.b16 %v749
        %v1035 = vunpack.c.l.b16 %v750
        %v1036 = vunpack.c.l.b16 %v751
        %v1037 = vunpack.c.l.b16 %v752
        %v1038 = vunpack.c.l.b16 %v753
        %v1039 = vunpack.c.l.b16 %v754
        %v1040 = vunpack.c.l.b16 %v755
        %v1041 = vunpack.c.l.b16 %v756
        %v1042 = vunpack.c.l.b16 %v757
        %v1043 = vunpack.c.l.b16 %v758
        %v1044 = vunpack.c.l.b16 %v759
        %v1045 = vunpack.c.l.b16 %v760
        %v1046 = vpack.c.b16 %v1031, %v1030
        %v1047 = vpack.c.b16 %v1033, %v1032
        %v1048 = vpack.c.b16 %v1035, %v1034
        %v1049 = vpack.c.b16 %v1037, %v1036
        %v1050 = vpack.c.b16 %v1039, %v1038
        %v1051 = vpack.c.b16 %v1041, %v1040
        %v1052 = vpack.c.b16 %v1043, %v1042
        %v1053 = vpack.c.b16 %v1045, %v1044
        %1062 = vmatprep.subr.bf16.mxu0 0
        %1063 = vmatpush1.bf16.msra.mxu0 %v1046
        %1064 = vmatprep.subr.bf16.mxu0 0
        %1065 = vmatpush1.bf16.msra.mxu0 %v1047
        %1066 = vmatprep.subr.bf16.mxu0 0
        %1067 = vmatpush1.bf16.msra.mxu0 %v1048
        %1068 = vmatprep.subr.bf16.mxu0 0
        %1069 = vmatpush1.bf16.msra.mxu0 %v1049
        %1070 = vmatprep.subr.bf16.mxu0 0
        %1071 = vmatpush1.bf16.msra.mxu0 %v1050
        %1072 = vmatprep.subr.bf16.mxu0 0
        %1073 = vmatpush1.bf16.msra.mxu0 %v1051
        %1074 = vmatprep.subr.bf16.mxu0 0
        %1075 = vmatpush1.bf16.msra.mxu0 %v1052
        %1076 = vmatprep.subr.bf16.mxu0 0
        %1077 = vmatpush1.bf16.msra.mxu0 %v1053
        %1078 = vmatprep.subr.bf16.mxu0 0
        %1079 = vmatpush1.bf16.msra.mxu0 0
        %1080 = vmatprep.subr.bf16.mxu0 0
        %1081 = vmatpush1.bf16.msra.mxu0 0
        %1082 = vmatprep.subr.bf16.mxu0 0
        %1083 = vmatpush1.bf16.msra.mxu0 0
        %1084 = vmatprep.subr.bf16.mxu0 0
        %1085 = vmatpush1.bf16.msra.mxu0 0
        %1086 = vmatprep.subr.bf16.mxu0 0
        %1087 = vmatpush1.bf16.msra.mxu0 0
        %1088 = vmatprep.subr.bf16.mxu0 0
        %1089 = vmatpush1.bf16.msra.mxu0 0
        %1090 = vmatprep.subr.bf16.mxu0 0
        %1091 = vmatpush1.bf16.msra.mxu0 0
        %1092 = vmatprep.subr.bf16.mxu0 0
        %1093 = vmatpush1.bf16.msra.mxu0 0
        %1094 = vmatprep.mubr.bf16.mxu0 0
        %1095 = vmatmul.mubr.bf16.gmra.mrb[0].mxu0 %v1012
        %v1096 = vpop.f32.mrb[0].mxu0
        %v1097 = vadd.f32 0.0, %v1096
        %v1098 = vpop.f32.mrb[0].mxu0
        %v1099 = vpop.f32.mrb[0].mxu0
        %v1100 = vadd.f32 0.0, %v1099
        %v1101 = vpop.f32.mrb[0].mxu0
        %1102 = vmatprep.mubr.bf16.mxu0 0
        %1103 = vmatmul.mubr.bf16.gmra.mrb[0].mxu0 %v1013
        %v1104 = vpop.f32.mrb[0].mxu0
        %v1105 = vadd.f32 0.0, %v1104
        %v1106 = vpop.f32.mrb[0].mxu0
        %v1107 = vpop.f32.mrb[0].mxu0
        %v1108 = vadd.f32 0.0, %v1107
        %v1109 = vpop.f32.mrb[0].mxu0
        %1110 = vdwg.mxu0
        %v1111 = vadd.f32 %v998, %v1097
        %v1112 = vadd.f32 %v1001, %v1100
        %v1113 = vadd.f32 %v1006, %v1105
        %v1114 = vadd.f32 %v1009, %v1108
        %v1116 = vlaneseq
        %v1117 = vshrl.u32 %v1116, 7
        %v1118 = vsub.s32 0, %v1117
        %v1119 = vrot.slane %v761, %v1118
        %v1121 = vadd.f32 %v1111, %v1119
        %v1122 = vadd.f32 %v1112, %v1119
        %v1123 = vadd.f32 %v1113, %v1119
        %v1124 = vadd.f32 %v1114, %v1119
        %v1125 = vmul.f32 %v1121, 0.1
        %v1126 = vmul.f32 %v1122, 0.1
        %v1127 = vmul.f32 %v1123, 0.1
        %v1128 = vmul.f32 %v1124, 0.1
        %v1129 = vmax.f32 %v1121, %v1125
        %v1130 = vmax.f32 %v1122, %v1126
        %v1131 = vmax.f32 %v1123, %v1127
        %v1132 = vmax.f32 %v1124, %v1128
        %v1133 = vld [vmem:[#allocation8] sm:$0xf]
        %v1134 = vld [vmem:[#allocation8 + $0x4] sm:$0xf]
        %v1135 = vld [vmem:[#allocation8 + $0x8] sm:$0xf]
        %v1136 = vld [vmem:[#allocation8 + $0xc] sm:$0xf]
        %v1137 = vld [vmem:[#allocation8 + $0x10] sm:$0xf]
        %v1138 = vld [vmem:[#allocation8 + $0x14] sm:$0xf]
        %v1139 = vld [vmem:[#allocation8 + $0x18] sm:$0xf]
        %v1140 = vld [vmem:[#allocation8 + $0x1c] sm:$0xf]
        %v1141 = vld [vmem:[#allocation8 + $0x20] sm:$0xf]
        %v1142 = vld [vmem:[#allocation8 + $0x24] sm:$0xf]
        %v1143 = vld [vmem:[#allocation8 + $0x28] sm:$0xf]
        %v1144 = vld [vmem:[#allocation8 + $0x2c] sm:$0xf]
        %v1145 = vld [vmem:[#allocation8 + $0x30] sm:$0xf]
        %v1146 = vld [vmem:[#allocation8 + $0x34] sm:$0xf]
        %v1147 = vld [vmem:[#allocation8 + $0x38] sm:$0xf]
        %v1148 = vld [vmem:[#allocation8 + $0x3c] sm:$0xf]
        %s1149 = scalar_lea.vmem [#allocation8], 64
        %v1150 = vld [vmem:[%s1149] sm:$0xf]
        %v1151 = vld [vmem:[%s1149 + $0x4] sm:$0xf]
        %v1152 = vld [vmem:[%s1149 + $0x8] sm:$0xf]
        %v1153 = vld [vmem:[%s1149 + $0xc] sm:$0xf]
        %v1154 = vld [vmem:[%s1149 + $0x10] sm:$0xf]
        %v1155 = vld [vmem:[%s1149 + $0x14] sm:$0xf]
        %v1156 = vld [vmem:[%s1149 + $0x18] sm:$0xf]
        %v1157 = vld [vmem:[%s1149 + $0x1c] sm:$0xf]
        %v1158 = vld [vmem:[%s1149 + $0x20] sm:$0xf]
        %v1159 = vld [vmem:[%s1149 + $0x24] sm:$0xf]
        %v1160 = vld [vmem:[%s1149 + $0x28] sm:$0xf]
        %v1161 = vld [vmem:[%s1149 + $0x2c] sm:$0xf]
        %v1162 = vld [vmem:[%s1149 + $0x30] sm:$0xf]
        %v1163 = vld [vmem:[%s1149 + $0x34] sm:$0xf]
        %v1164 = vld [vmem:[%s1149 + $0x38] sm:$0xf]
        %v1165 = vld [vmem:[%s1149 + $0x3c] sm:$0xf]
        %s1166 = scalar_lea.vmem [#allocation8], 128
        %v1167 = vld [vmem:[%s1166] sm:$0xf]
        %v1168 = vld [vmem:[%s1166 + $0x4] sm:$0xf]
        %v1169 = vld [vmem:[%s1166 + $0x8] sm:$0xf]
        %v1170 = vld [vmem:[%s1166 + $0xc] sm:$0xf]
        %v1171 = vld [vmem:[%s1166 + $0x10] sm:$0xf]
        %v1172 = vld [vmem:[%s1166 + $0x14] sm:$0xf]
        %v1173 = vld [vmem:[%s1166 + $0x18] sm:$0xf]
        %v1174 = vld [vmem:[%s1166 + $0x1c] sm:$0xf]
        %v1175 = vld [vmem:[%s1166 + $0x20] sm:$0xf]
        %v1176 = vld [vmem:[%s1166 + $0x24] sm:$0xf]
        %v1177 = vld [vmem:[%s1166 + $0x28] sm:$0xf]
        %v1178 = vld [vmem:[%s1166 + $0x2c] sm:$0xf]
        %v1179 = vld [vmem:[%s1166 + $0x30] sm:$0xf]
        %v1180 = vld [vmem:[%s1166 + $0x34] sm:$0xf]
        %v1181 = vld [vmem:[%s1166 + $0x38] sm:$0xf]
        %v1182 = vld [vmem:[%s1166 + $0x3c] sm:$0xf]
        %v1183 = vld [vmem:[%s5] sm:$0x1]
        %v1184 = vrot.slane %v1129, 7
        %v1185 = vrot.slane %v1130, 7
        %v1186 = vrot.slane %v1131, 7
        %v1187 = vrot.slane %v1132, 7
        %v1188 = vsel %vm766, %v1186, %v1187
        %v1189 = vsel %vm766, %v1185, %v1186
        %v1190 = vsel %vm766, %v1184, %v1185
        %v1191 = vsel %vm766, %v1187, %v1184
        %v1192 = vsel %vm775, %v1191, 0.0
        %v1193 = vsel %vm776, %v1190, 0.0
        %v1194 = vsel %vm777, %v1189, 0.0
        %v1195 = vsel %vm778, %v1188, 0.0
        %v1196 = vrot.slane %v1129, 1
        %v1197 = vrot.slane %v1130, 1
        %v1198 = vrot.slane %v1131, 1
        %v1199 = vrot.slane %v1132, 1
        %v1200 = vsel %vm787, %v1198, %v1199
        %v1201 = vsel %vm787, %v1197, %v1198
        %v1202 = vsel %vm787, %v1196, %v1197
        %v1203 = vsel %vm787, %v1199, %v1196
        %v1204 = vsel %vm796, %v1202, 0.0
        %v1205 = vsel %vm797, %v1201, 0.0
        %v1206 = vsel %vm798, %v1200, 0.0
        %v1207 = vsel %vm799, %v1203, 0.0
        %v1208 = vpack.c.bf16 %v1193, %v1192
        %v1209 = vpack.c.bf16 %v1195, %v1194
        %v1210 = vpack.c.bf16 %v1130, %v1129
        %v1211 = vpack.c.bf16 %v1132, %v1131
        %v1228 = vunpack.c.l.b16 %v1150
        %v1229 = vunpack.c.l.b16 %v1151
        %v1230 = vunpack.c.l.b16 %v1152
        %v1231 = vunpack.c.l.b16 %v1153
        %v1232 = vunpack.c.l.b16 %v1154
        %v1233 = vunpack.c.l.b16 %v1155
        %v1234 = vunpack.c.l.b16 %v1156
        %v1235 = vunpack.c.l.b16 %v1157
        %v1236 = vunpack.c.l.b16 %v1158
        %v1237 = vunpack.c.l.b16 %v1159
        %v1238 = vunpack.c.l.b16 %v1160
        %v1239 = vunpack.c.l.b16 %v1161
        %v1240 = vunpack.c.l.b16 %v1162
        %v1241 = vunpack.c.l.b16 %v1163
        %v1242 = vunpack.c.l.b16 %v1164
        %v1243 = vunpack.c.l.b16 %v1165
        %v1244 = vpack.c.b16 %v1229, %v1228
        %v1245 = vpack.c.b16 %v1231, %v1230
        %v1246 = vpack.c.b16 %v1233, %v1232
        %v1247 = vpack.c.b16 %v1235, %v1234
        %v1248 = vpack.c.b16 %v1237, %v1236
        %v1249 = vpack.c.b16 %v1239, %v1238
        %v1250 = vpack.c.b16 %v1241, %v1240
        %v1251 = vpack.c.b16 %v1243, %v1242
        %1260 = vmatprep.subr.bf16.mxu0 0
        %1261 = vmatpush1.bf16.msra.mxu0 %v1244
        %1262 = vmatprep.subr.bf16.mxu0 0
        %1263 = vmatpush1.bf16.msra.mxu0 %v1245
        %1264 = vmatprep.subr.bf16.mxu0 0
        %1265 = vmatpush1.bf16.msra.mxu0 %v1246
        %1266 = vmatprep.subr.bf16.mxu0 0
        %1267 = vmatpush1.bf16.msra.mxu0 %v1247
        %1268 = vmatprep.subr.bf16.mxu0 0
        %1269 = vmatpush1.bf16.msra.mxu0 %v1248
        %1270 = vmatprep.subr.bf16.mxu0 0
        %1271 = vmatpush1.bf16.msra.mxu0 %v1249
        %1272 = vmatprep.subr.bf16.mxu0 0
        %1273 = vmatpush1.bf16.msra.mxu0 %v1250
        %1274 = vmatprep.subr.bf16.mxu0 0
        %1275 = vmatpush1.bf16.msra.mxu0 %v1251
        %1276 = vmatprep.subr.bf16.mxu0 0
        %1277 = vmatpush1.bf16.msra.mxu0 0
        %1278 = vmatprep.subr.bf16.mxu0 0
        %1279 = vmatpush1.bf16.msra.mxu0 0
        %1280 = vmatprep.subr.bf16.mxu0 0
        %1281 = vmatpush1.bf16.msra.mxu0 0
        %1282 = vmatprep.subr.bf16.mxu0 0
        %1283 = vmatpush1.bf16.msra.mxu0 0
        %1284 = vmatprep.subr.bf16.mxu0 0
        %1285 = vmatpush1.bf16.msra.mxu0 0
        %1286 = vmatprep.subr.bf16.mxu0 0
        %1287 = vmatpush1.bf16.msra.mxu0 0
        %1288 = vmatprep.subr.bf16.mxu0 0
        %1289 = vmatpush1.bf16.msra.mxu0 0
        %1290 = vmatprep.subr.bf16.mxu0 0
        %1291 = vmatpush1.bf16.msra.mxu0 0
        %1292 = vmatprep.mubr.bf16.mxu0 0
        %1293 = vmatmul.mubr.bf16.gmra.mrb[0].mxu0 %v1210
        %v1294 = vpop.f32.mrb[0].mxu0
        %v1295 = vadd.f32 0.0, %v1294
        %v1296 = vpop.f32.mrb[0].mxu0
        %v1297 = vpop.f32.mrb[0].mxu0
        %v1298 = vadd.f32 0.0, %v1297
        %v1299 = vpop.f32.mrb[0].mxu0
        %1300 = vmatprep.mubr.bf16.mxu0 0
        %1301 = vmatmul.mubr.bf16.gmra.mrb[0].mxu0 %v1211
        %v1302 = vpop.f32.mrb[0].mxu0
        %v1303 = vadd.f32 0.0, %v1302
        %v1304 = vpop.f32.mrb[0].mxu0
        %v1305 = vpop.f32.mrb[0].mxu0
        %v1306 = vadd.f32 0.0, %v1305
        %v1307 = vpop.f32.mrb[0].mxu0
        %1308 = vdwg.mxu0
        %v1325 = vunpack.c.l.b16 %v1133
        %v1326 = vunpack.c.l.b16 %v1134
        %v1327 = vunpack.c.l.b16 %v1135
        %v1328 = vunpack.c.l.b16 %v1136
        %v1329 = vunpack.c.l.b16 %v1137
        %v1330 = vunpack.c.l.b16 %v1138
        %v1331 = vunpack.c.l.b16 %v1139
        %v1332 = vunpack.c.l.b16 %v1140
        %v1333 = vunpack.c.l.b16 %v1141
        %v1334 = vunpack.c.l.b16 %v1142
        %v1335 = vunpack.c.l.b16 %v1143
        %v1336 = vunpack.c.l.b16 %v1144
        %v1337 = vunpack.c.l.b16 %v1145
        %v1338 = vunpack.c.l.b16 %v1146
        %v1339 = vunpack.c.l.b16 %v1147
        %v1340 = vunpack.c.l.b16 %v1148
        %v1341 = vpack.c.b16 %v1326, %v1325
        %v1342 = vpack.c.b16 %v1328, %v1327
        %v1343 = vpack.c.b16 %v1330, %v1329
        %v1344 = vpack.c.b16 %v1332, %v1331
        %v1345 = vpack.c.b16 %v1334, %v1333
        %v1346 = vpack.c.b16 %v1336, %v1335
        %v1347 = vpack.c.b16 %v1338, %v1337
        %v1348 = vpack.c.b16 %v1340, %v1339
        %1357 = vmatprep.subr.bf16.mxu0 0
        %1358 = vmatpush1.bf16.msra.mxu0 %v1341
        %1359 = vmatprep.subr.bf16.mxu0 0
        %1360 = vmatpush1.bf16.msra.mxu0 %v1342
        %1361 = vmatprep.subr.bf16.mxu0 0
        %1362 = vmatpush1.bf16.msra.mxu0 %v1343
        %1363 = vmatprep.subr.bf16.mxu0 0
        %1364 = vmatpush1.bf16.msra.mxu0 %v1344
        %1365 = vmatprep.subr.bf16.mxu0 0
        %1366 = vmatpush1.bf16.msra.mxu0 %v1345
        %1367 = vmatprep.subr.bf16.mxu0 0
        %1368 = vmatpush1.bf16.msra.mxu0 %v1346
        %1369 = vmatprep.subr.bf16.mxu0 0
        %1370 = vmatpush1.bf16.msra.mxu0 %v1347
        %1371 = vmatprep.subr.bf16.mxu0 0
        %1372 = vmatpush1.bf16.msra.mxu0 %v1348
        %1373 = vmatprep.subr.bf16.mxu0 0
        %1374 = vmatpush1.bf16.msra.mxu0 0
        %1375 = vmatprep.subr.bf16.mxu0 0
        %1376 = vmatpush1.bf16.msra.mxu0 0
        %1377 = vmatprep.subr.bf16.mxu0 0
        %1378 = vmatpush1.bf16.msra.mxu0 0
        %1379 = vmatprep.subr.bf16.mxu0 0
        %1380 = vmatpush1.bf16.msra.mxu0 0
        %1381 = vmatprep.subr.bf16.mxu0 0
        %1382 = vmatpush1.bf16.msra.mxu0 0
        %1383 = vmatprep.subr.bf16.mxu0 0
        %1384 = vmatpush1.bf16.msra.mxu0 0
        %1385 = vmatprep.subr.bf16.mxu0 0
        %1386 = vmatpush1.bf16.msra.mxu0 0
        %1387 = vmatprep.subr.bf16.mxu0 0
        %1388 = vmatpush1.bf16.msra.mxu0 0
        %1389 = vmatprep.mubr.bf16.mxu0 0
        %1390 = vmatmul.mubr.bf16.gmra.mrb[0].mxu0 %v1208
        %v1391 = vpop.f32.mrb[0].mxu0
        %v1392 = vadd.f32 %v1295, %v1391
        %v1393 = vpop.f32.mrb[0].mxu0
        %v1394 = vpop.f32.mrb[0].mxu0
        %v1395 = vadd.f32 %v1298, %v1394
        %v1396 = vpop.f32.mrb[0].mxu0
        %1397 = vmatprep.mubr.bf16.mxu0 0
        %1398 = vmatmul.mubr.bf16.gmra.mrb[0].mxu0 %v1209
        %v1399 = vpop.f32.mrb[0].mxu0
        %v1400 = vadd.f32 %v1303, %v1399
        %v1401 = vpop.f32.mrb[0].mxu0
        %v1402 = vpop.f32.mrb[0].mxu0
        %v1403 = vadd.f32 %v1306, %v1402
        %v1404 = vpop.f32.mrb[0].mxu0
        %1405 = vdwg.mxu0
        %v1406 = vpack.c.bf16 %v1205, %v1204
        %v1407 = vpack.c.bf16 %v1207, %v1206
        %v1424 = vunpack.c.l.b16 %v1167
        %v1425 = vunpack.c.l.b16 %v1168
        %v1426 = vunpack.c.l.b16 %v1169
        %v1427 = vunpack.c.l.b16 %v1170
        %v1428 = vunpack.c.l.b16 %v1171
        %v1429 = vunpack.c.l.b16 %v1172
        %v1430 = vunpack.c.l.b16 %v1173
        %v1431 = vunpack.c.l.b16 %v1174
        %v1432 = vunpack.c.l.b16 %v1175
        %v1433 = vunpack.c.l.b16 %v1176
        %v1434 = vunpack.c.l.b16 %v1177
        %v1435 = vunpack.c.l.b16 %v1178
        %v1436 = vunpack.c.l.b16 %v1179
        %v1437 = vunpack.c.l.b16 %v1180
        %v1438 = vunpack.c.l.b16 %v1181
        %v1439 = vunpack.c.l.b16 %v1182
        %v1440 = vpack.c.b16 %v1425, %v1424
        %v1441 = vpack.c.b16 %v1427, %v1426
        %v1442 = vpack.c.b16 %v1429, %v1428
        %v1443 = vpack.c.b16 %v1431, %v1430
        %v1444 = vpack.c.b16 %v1433, %v1432
        %v1445 = vpack.c.b16 %v1435, %v1434
        %v1446 = vpack.c.b16 %v1437, %v1436
        %v1447 = vpack.c.b16 %v1439, %v1438
        %1456 = vmatprep.subr.bf16.mxu0 0
        %1457 = vmatpush1.bf16.msra.mxu0 %v1440
        %1458 = vmatprep.subr.bf16.mxu0 0
        %1459 = vmatpush1.bf16.msra.mxu0 %v1441
        %1460 = vmatprep.subr.bf16.mxu0 0
        %1461 = vmatpush1.bf16.msra.mxu0 %v1442
        %1462 = vmatprep.subr.bf16.mxu0 0
        %1463 = vmatpush1.bf16.msra.mxu0 %v1443
        %1464 = vmatprep.subr.bf16.mxu0 0
        %1465 = vmatpush1.bf16.msra.mxu0 %v1444
        %1466 = vmatprep.subr.bf16.mxu0 0
        %1467 = vmatpush1.bf16.msra.mxu0 %v1445
        %1468 = vmatprep.subr.bf16.mxu0 0
        %1469 = vmatpush1.bf16.msra.mxu0 %v1446
        %1470 = vmatprep.subr.bf16.mxu0 0
        %1471 = vmatpush1.bf16.msra.mxu0 %v1447
        %1472 = vmatprep.subr.bf16.mxu0 0
        %1473 = vmatpush1.bf16.msra.mxu0 0
        %1474 = vmatprep.subr.bf16.mxu0 0
        %1475 = vmatpush1.bf16.msra.mxu0 0
        %1476 = vmatprep.subr.bf16.mxu0 0
        %1477 = vmatpush1.bf16.msra.mxu0 0
        %1478 = vmatprep.subr.bf16.mxu0 0
        %1479 = vmatpush1.bf16.msra.mxu0 0
        %1480 = vmatprep.subr.bf16.mxu0 0
        %1481 = vmatpush1.bf16.msra.mxu0 0
        %1482 = vmatprep.subr.bf16.mxu0 0
        %1483 = vmatpush1.bf16.msra.mxu0 0
        %1484 = vmatprep.subr.bf16.mxu0 0
        %1485 = vmatpush1.bf16.msra.mxu0 0
        %1486 = vmatprep.subr.bf16.mxu0 0
        %1487 = vmatpush1.bf16.msra.mxu0 0
        %1488 = vmatprep.mubr.bf16.mxu0 0
        %1489 = vmatmul.mubr.bf16.gmra.mrb[0].mxu0 %v1406
        %v1490 = vpop.f32.mrb[0].mxu0
        %v1491 = vadd.f32 0.0, %v1490
        %v1492 = vpop.f32.mrb[0].mxu0
        %v1493 = vpop.f32.mrb[0].mxu0
        %v1494 = vadd.f32 0.0, %v1493
        %v1495 = vpop.f32.mrb[0].mxu0
        %1496 = vmatprep.mubr.bf16.mxu0 0
        %1497 = vmatmul.mubr.bf16.gmra.mrb[0].mxu0 %v1407
        %v1498 = vpop.f32.mrb[0].mxu0
        %v1499 = vadd.f32 0.0, %v1498
        %v1500 = vpop.f32.mrb[0].mxu0
        %v1501 = vpop.f32.mrb[0].mxu0
        %v1502 = vadd.f32 0.0, %v1501
        %v1503 = vpop.f32.mrb[0].mxu0
        %1504 = vdwg.mxu0
        %v1505 = vadd.f32 %v1392, %v1491
        %v1506 = vadd.f32 %v1395, %v1494
        %v1507 = vadd.f32 %v1400, %v1499
        %v1508 = vadd.f32 %v1403, %v1502
        %v1510 = vlaneseq
        %v1511 = vshrl.u32 %v1510, 7
        %v1512 = vsub.s32 0, %v1511
        %v1513 = vrot.slane %v1183, %v1512
        %v1515 = vadd.f32 %v1505, %v1513
        %v1516 = vadd.f32 %v1506, %v1513
        %v1517 = vadd.f32 %v1507, %v1513
        %v1518 = vadd.f32 %v1508, %v1513
        %v1519 = vld [vmem:[#allocation9] sm:$0xf]
        %v1520 = vld [vmem:[#allocation9 + $0x4] sm:$0xf]
        %v1521 = vld [vmem:[#allocation9 + $0x8] sm:$0xf]
        %v1522 = vld [vmem:[#allocation9 + $0xc] sm:$0xf]
        %v1523 = vld [vmem:[#allocation9 + $0x10] sm:$0xf]
        %v1524 = vld [vmem:[#allocation9 + $0x14] sm:$0xf]
        %v1525 = vld [vmem:[#allocation9 + $0x18] sm:$0xf]
        %v1526 = vld [vmem:[#allocation9 + $0x1c] sm:$0xf]
        %v1527 = vld [vmem:[#allocation9 + $0x20] sm:$0xf]
        %v1528 = vld [vmem:[#allocation9 + $0x24] sm:$0xf]
        %v1529 = vld [vmem:[#allocation9 + $0x28] sm:$0xf]
        %v1530 = vld [vmem:[#allocation9 + $0x2c] sm:$0xf]
        %v1531 = vld [vmem:[#allocation9 + $0x30] sm:$0xf]
        %v1532 = vld [vmem:[#allocation9 + $0x34] sm:$0xf]
        %v1533 = vld [vmem:[#allocation9 + $0x38] sm:$0xf]
        %v1534 = vld [vmem:[#allocation9 + $0x3c] sm:$0xf]
        %v1535 = vld [vmem:[%s7] sm:$0x1]
        %v1537 = vlaneseq
        %v1538 = vshrl.u32 %v1537, 7
        %v1539 = vsub.s32 0, %v1538
        %v1540 = vrot.slane %v1535, %v1539
        %v1558 = vunpack.c.l.b16 %v1519
        %v1559 = vunpack.c.l.b16 %v1520
        %v1560 = vunpack.c.l.b16 %v1521
        %v1561 = vunpack.c.l.b16 %v1522
        %v1562 = vunpack.c.l.b16 %v1523
        %v1563 = vunpack.c.l.b16 %v1524
        %v1564 = vunpack.c.l.b16 %v1525
        %v1565 = vunpack.c.l.b16 %v1526
        %v1566 = vunpack.c.l.b16 %v1527
        %v1567 = vunpack.c.l.b16 %v1528
        %v1568 = vunpack.c.l.b16 %v1529
        %v1569 = vunpack.c.l.b16 %v1530
        %v1570 = vunpack.c.l.b16 %v1531
        %v1571 = vunpack.c.l.b16 %v1532
        %v1572 = vunpack.c.l.b16 %v1533
        %v1573 = vunpack.c.l.b16 %v1534
        %v1574 = vpack.c.b16 %v1559, %v1558
        %v1575 = vpack.c.b16 %v1561, %v1560
        %v1576 = vpack.c.b16 %v1563, %v1562
        %v1577 = vpack.c.b16 %v1565, %v1564
        %v1578 = vpack.c.b16 %v1567, %v1566
        %v1579 = vpack.c.b16 %v1569, %v1568
        %v1580 = vpack.c.b16 %v1571, %v1570
        %v1581 = vpack.c.b16 %v1573, %v1572
        %1590 = vmatprep.subr.bf16.mxu0 0
        %1591 = vmatpush1.bf16.msra.mxu0 %v1574
        %1592 = vmatprep.subr.bf16.mxu0 0
        %1593 = vmatpush1.bf16.msra.mxu0 %v1575
        %1594 = vmatprep.subr.bf16.mxu0 0
        %1595 = vmatpush1.bf16.msra.mxu0 %v1576
        %1596 = vmatprep.subr.bf16.mxu0 0
        %1597 = vmatpush1.bf16.msra.mxu0 %v1577
        %1598 = vmatprep.subr.bf16.mxu0 0
        %1599 = vmatpush1.bf16.msra.mxu0 %v1578
        %1600 = vmatprep.subr.bf16.mxu0 0
        %1601 = vmatpush1.bf16.msra.mxu0 %v1579
        %1602 = vmatprep.subr.bf16.mxu0 0
        %1603 = vmatpush1.bf16.msra.mxu0 %v1580
        %1604 = vmatprep.subr.bf16.mxu0 0
        %1605 = vmatpush1.bf16.msra.mxu0 %v1581
        %1606 = vmatprep.subr.bf16.mxu0 0
        %1607 = vmatpush1.bf16.msra.mxu0 0
        %1608 = vmatprep.subr.bf16.mxu0 0
        %1609 = vmatpush1.bf16.msra.mxu0 0
        %1610 = vmatprep.subr.bf16.mxu0 0
        %1611 = vmatpush1.bf16.msra.mxu0 0
        %1612 = vmatprep.subr.bf16.mxu0 0
        %1613 = vmatpush1.bf16.msra.mxu0 0
        %1614 = vmatprep.subr.bf16.mxu0 0
        %1615 = vmatpush1.bf16.msra.mxu0 0
        %1616 = vmatprep.subr.bf16.mxu0 0
        %1617 = vmatpush1.bf16.msra.mxu0 0
        %1618 = vmatprep.subr.bf16.mxu0 0
        %1619 = vmatpush1.bf16.msra.mxu0 0
        %1620 = vmatprep.subr.bf16.mxu0 0
        %1621 = vmatpush1.bf16.msra.mxu0 0
        %1622 = vmatprep.mubr.bf16.mxu0 0
        %1623 = vmatmul.mubr.bf16.gmra.mrb[0].mxu0 %v814
        %v1624 = vpop.f32.mrb[0].mxu0
        %v1625 = vadd.f32 %v1540, %v1624
        %v1626 = vpop.f32.mrb[0].mxu0
        %v1627 = vpop.f32.mrb[0].mxu0
        %v1628 = vadd.f32 %v1540, %v1627
        %v1629 = vpop.f32.mrb[0].mxu0
        %1630 = vmatprep.mubr.bf16.mxu0 0
        %1631 = vmatmul.mubr.bf16.gmra.mrb[0].mxu0 %v815
        %v1632 = vpop.f32.mrb[0].mxu0
        %v1633 = vadd.f32 %v1540, %v1632
        %v1634 = vpop.f32.mrb[0].mxu0
        %v1635 = vpop.f32.mrb[0].mxu0
        %v1636 = vadd.f32 %v1540, %v1635
        %v1637 = vpop.f32.mrb[0].mxu0
        %1638 = vdwg.mxu0
        %v1639 = vadd.f32 %v1515, %v1625
        %v1640 = vadd.f32 %v1516, %v1628
        %v1641 = vadd.f32 %v1517, %v1633
        %v1642 = vadd.f32 %v1518, %v1636
        %1643 = vst [vmem:[#allocation2] sm:$0xff] %v1639
        %1644 = vst [vmem:[#allocation2 + $0x8] sm:$0xff] %v1640
        %1645 = vst [vmem:[#allocation2 + $0x10] sm:$0xff] %v1641
        %1646 = vst [vmem:[#allocation2 + $0x18] sm:$0xff] %v1642
        %v1647 = vld [vmem:[#allocation2] ss:$2 sm:$0xff]
        %s1648 = scalar_lea.vmem [#allocation2], 16
        %v1649 = vld [vmem:[%s1648] ss:$2 sm:$0xff]
        %s1650 = scalar_lea.vmem [#allocation2], 1
        %v1651 = vld [vmem:[%s1650] ss:$2 sm:$0xff]
        %s1652 = scalar_lea.vmem [#allocation2], 17
        %v1653 = vld [vmem:[%s1652] ss:$2 sm:$0xff]
        %v1654 = vadd.f32 %v1647, %v1651
        %v1655 = vadd.f32 %v1649, %v1653
        %v1656 = vmul.f32 %v1654, 0.5
        %v1657 = vmul.f32 %v1655, 0.5
        %vm1658 = vcmp.lt.s32.totalorder %v651, 0
        %v1659 = vsub.s32 0, %v651
        %v1660 = vsel %vm1658, %v1659, %v651
        %v1661 = vshrl.u32 %v1660, 4
        %v1662 = vand.u32 %v1660, 15
        %v1663 = vsub.s32 0, %v1662
        %v1664 = vsel %vm1658, %v1663, %v1662
        %vm1665 = vcmp.lt.s32.totalorder %v652, 0
        %v1666 = vsub.s32 0, %v652
        %v1667 = vsel %vm1665, %v1666, %v652
        %v1668 = vshrl.u32 %v1667, 4
        %v1669 = vand.u32 %v1667, 15
        %v1670 = vsub.s32 0, %v1669
        %v1671 = vsel %vm1665, %v1670, %v1669
        %vm1672 = vcmp.ne.s32.totalorder %v1664, 0
        %vm1673 = vcmp.ne.s32.totalorder %v1671, 0
        %vm1674 = vcmp.lt.s32.totalorder %v1664, 0
        %vm1675 = vcmp.lt.s32.totalorder %v1671, 0
        %vm1676 = vmand %vm1674, %vm1672
        %vm1677 = vmand %vm1675, %vm1673
        %v1678 = vadd.s32 %v1664, 16
        %v1679 = vadd.s32 %v1671, 16
        %v1680 = vsel %vm1676, %v1678, %v1664
        %v1681 = vsel %vm1677, %v1679, %v1671
        %vm1682 = vcmp.ne.s32.totalorder %v1680, 0
        %vm1683 = vcmp.ne.s32.totalorder %v1681, 0
        %vm1684 = vcmp.ne.s32.totalorder %v1680, 15
        %vm1685 = vcmp.ne.s32.totalorder %v1681, 15
        %v1686 = vmul.f32 %v1656, 0.1
        %v1687 = vmul.f32 %v1657, 0.1
        %v1688 = vmax.f32 %v1656, %v1686
        %v1689 = vmax.f32 %v1657, %v1687
        %v1690 = vld [vmem:[#allocation11] sm:$0xf]
        %v1691 = vld [vmem:[#allocation11 + $0x4] sm:$0xf]
        %v1692 = vld [vmem:[#allocation11 + $0x8] sm:$0xf]
        %v1693 = vld [vmem:[#allocation11 + $0xc] sm:$0xf]
        %v1694 = vld [vmem:[#allocation11 + $0x10] sm:$0xf]
        %v1695 = vld [vmem:[#allocation11 + $0x14] sm:$0xf]
        %v1696 = vld [vmem:[#allocation11 + $0x18] sm:$0xf]
        %v1697 = vld [vmem:[#allocation11 + $0x1c] sm:$0xf]
        %v1698 = vld [vmem:[#allocation11 + $0x20] sm:$0xf]
        %v1699 = vld [vmem:[#allocation11 + $0x24] sm:$0xf]
        %v1700 = vld [vmem:[#allocation11 + $0x28] sm:$0xf]
        %v1701 = vld [vmem:[#allocation11 + $0x2c] sm:$0xf]
        %v1702 = vld [vmem:[#allocation11 + $0x30] sm:$0xf]
        %v1703 = vld [vmem:[#allocation11 + $0x34] sm:$0xf]
        %v1704 = vld [vmem:[#allocation11 + $0x38] sm:$0xf]
        %v1705 = vld [vmem:[#allocation11 + $0x3c] sm:$0xf]
        %s1706 = scalar_lea.vmem [#allocation11], 64
        %v1707 = vld [vmem:[%s1706] sm:$0xf]
        %v1708 = vld [vmem:[%s1706 + $0x4] sm:$0xf]
        %v1709 = vld [vmem:[%s1706 + $0x8] sm:$0xf]
        %v1710 = vld [vmem:[%s1706 + $0xc] sm:$0xf]
        %v1711 = vld [vmem:[%s1706 + $0x10] sm:$0xf]
        %v1712 = vld [vmem:[%s1706 + $0x14] sm:$0xf]
        %v1713 = vld [vmem:[%s1706 + $0x18] sm:$0xf]
        %v1714 = vld [vmem:[%s1706 + $0x1c] sm:$0xf]
        %v1715 = vld [vmem:[%s1706 + $0x20] sm:$0xf]
        %v1716 = vld [vmem:[%s1706 + $0x24] sm:$0xf]
        %v1717 = vld [vmem:[%s1706 + $0x28] sm:$0xf]
        %v1718 = vld [vmem:[%s1706 + $0x2c] sm:$0xf]
        %v1719 = vld [vmem:[%s1706 + $0x30] sm:$0xf]
        %v1720 = vld [vmem:[%s1706 + $0x34] sm:$0xf]
        %v1721 = vld [vmem:[%s1706 + $0x38] sm:$0xf]
        %v1722 = vld [vmem:[%s1706 + $0x3c] sm:$0xf]
        %s1723 = scalar_lea.vmem [#allocation11], 128
        %v1724 = vld [vmem:[%s1723] sm:$0xf]
        %v1725 = vld [vmem:[%s1723 + $0x4] sm:$0xf]
        %v1726 = vld [vmem:[%s1723 + $0x8] sm:$0xf]
        %v1727 = vld [vmem:[%s1723 + $0xc] sm:$0xf]
        %v1728 = vld [vmem:[%s1723 + $0x10] sm:$0xf]
        %v1729 = vld [vmem:[%s1723 + $0x14] sm:$0xf]
        %v1730 = vld [vmem:[%s1723 + $0x18] sm:$0xf]
        %v1731 = vld [vmem:[%s1723 + $0x1c] sm:$0xf]
        %v1732 = vld [vmem:[%s1723 + $0x20] sm:$0xf]
        %v1733 = vld [vmem:[%s1723 + $0x24] sm:$0xf]
        %v1734 = vld [vmem:[%s1723 + $0x28] sm:$0xf]
        %v1735 = vld [vmem:[%s1723 + $0x2c] sm:$0xf]
        %v1736 = vld [vmem:[%s1723 + $0x30] sm:$0xf]
        %v1737 = vld [vmem:[%s1723 + $0x34] sm:$0xf]
        %v1738 = vld [vmem:[%s1723 + $0x38] sm:$0xf]
        %v1739 = vld [vmem:[%s1723 + $0x3c] sm:$0xf]
        %v1740 = vld [vmem:[%s9] sm:$0x1]
        %v1741 = vrot.slane %v1688, 7
        %v1742 = vrot.slane %v1689, 7
        %v1743 = vsel %vm766, %v1741, %v1742
        %v1744 = vsel %vm766, %v1742, %v1741
        %v1745 = vsel %vm1682, 1, 0
        %v1746 = vsel %vm1683, 1, 0
        %vm1747 = vcmp.eq.s32.totalorder %v1745, 1
        %vm1748 = vcmp.eq.s32.totalorder %v1746, 1
        %v1749 = vsel %vm1747, %v1744, 0.0
        %v1750 = vsel %vm1748, %v1743, 0.0
        %v1751 = vrot.slane %v1688, 1
        %v1752 = vrot.slane %v1689, 1
        %v1753 = vsel %vm787, %v1751, %v1752
        %v1754 = vsel %vm787, %v1752, %v1751
        %v1755 = vsel %vm1684, 1, 0
        %v1756 = vsel %vm1685, 1, 0
        %vm1757 = vcmp.eq.s32.totalorder %v1755, 1
        %vm1758 = vcmp.eq.s32.totalorder %v1756, 1
        %v1759 = vsel %vm1757, %v1753, 0.0
        %v1760 = vsel %vm1758, %v1754, 0.0
        %v1761 = vpack.c.bf16 %v1750, %v1749
        %v1762 = vpack.c.bf16 %v1689, %v1688
        %v1779 = vunpack.c.l.b16 %v1707
        %v1780 = vunpack.c.l.b16 %v1708
        %v1781 = vunpack.c.l.b16 %v1709
        %v1782 = vunpack.c.l.b16 %v1710
        %v1783 = vunpack.c.l.b16 %v1711
        %v1784 = vunpack.c.l.b16 %v1712
        %v1785 = vunpack.c.l.b16 %v1713
        %v1786 = vunpack.c.l.b16 %v1714
        %v1787 = vunpack.c.l.b16 %v1715
        %v1788 = vunpack.c.l.b16 %v1716
        %v1789 = vunpack.c.l.b16 %v1717
        %v1790 = vunpack.c.l.b16 %v1718
        %v1791 = vunpack.c.l.b16 %v1719
        %v1792 = vunpack.c.l.b16 %v1720
        %v1793 = vunpack.c.l.b16 %v1721
        %v1794 = vunpack.c.l.b16 %v1722
        %v1795 = vpack.c.b16 %v1780, %v1779
        %v1796 = vpack.c.b16 %v1782, %v1781
        %v1797 = vpack.c.b16 %v1784, %v1783
        %v1798 = vpack.c.b16 %v1786, %v1785
        %v1799 = vpack.c.b16 %v1788, %v1787
        %v1800 = vpack.c.b16 %v1790, %v1789
        %v1801 = vpack.c.b16 %v1792, %v1791
        %v1802 = vpack.c.b16 %v1794, %v1793
        %1811 = vmatprep.subr.bf16.mxu0 0
        %1812 = vmatpush1.bf16.msra.mxu0 %v1795
        %1813 = vmatprep.subr.bf16.mxu0 0
        %1814 = vmatpush1.bf16.msra.mxu0 %v1796
        %1815 = vmatprep.subr.bf16.mxu0 0
        %1816 = vmatpush1.bf16.msra.mxu0 %v1797
        %1817 = vmatprep.subr.bf16.mxu0 0
        %1818 = vmatpush1.bf16.msra.mxu0 %v1798
        %1819 = vmatprep.subr.bf16.mxu0 0
        %1820 = vmatpush1.bf16.msra.mxu0 %v1799
        %1821 = vmatprep.subr.bf16.mxu0 0
        %1822 = vmatpush1.bf16.msra.mxu0 %v1800
        %1823 = vmatprep.subr.bf16.mxu0 0
        %1824 = vmatpush1.bf16.msra.mxu0 %v1801
        %1825 = vmatprep.subr.bf16.mxu0 0
        %1826 = vmatpush1.bf16.msra.mxu0 %v1802
        %1827 = vmatprep.subr.bf16.mxu0 0
        %1828 = vmatpush1.bf16.msra.mxu0 0
        %1829 = vmatprep.subr.bf16.mxu0 0
        %1830 = vmatpush1.bf16.msra.mxu0 0
        %1831 = vmatprep.subr.bf16.mxu0 0
        %1832 = vmatpush1.bf16.msra.mxu0 0
        %1833 = vmatprep.subr.bf16.mxu0 0
        %1834 = vmatpush1.bf16.msra.mxu0 0
        %1835 = vmatprep.subr.bf16.mxu0 0
        %1836 = vmatpush1.bf16.msra.mxu0 0
        %1837 = vmatprep.subr.bf16.mxu0 0
        %1838 = vmatpush1.bf16.msra.mxu0 0
        %1839 = vmatprep.subr.bf16.mxu0 0
        %1840 = vmatpush1.bf16.msra.mxu0 0
        %1841 = vmatprep.subr.bf16.mxu0 0
        %1842 = vmatpush1.bf16.msra.mxu0 0
        %1843 = vmatprep.mubr.bf16.mxu0 0
        %1844 = vmatmul.mubr.bf16.gmra.mrb[0].mxu0 %v1762
        %v1845 = vpop.f32.mrb[0].mxu0
        %v1846 = vadd.f32 0.0, %v1845
        %v1847 = vpop.f32.mrb[0].mxu0
        %v1848 = vpop.f32.mrb[0].mxu0
        %v1849 = vadd.f32 0.0, %v1848
        %v1850 = vpop.f32.mrb[0].mxu0
        %1851 = vdwg.mxu0
        %v1868 = vunpack.c.l.b16 %v1690
        %v1869 = vunpack.c.l.b16 %v1691
        %v1870 = vunpack.c.l.b16 %v1692
        %v1871 = vunpack.c.l.b16 %v1693
        %v1872 = vunpack.c.l.b16 %v1694
        %v1873 = vunpack.c.l.b16 %v1695
        %v1874 = vunpack.c.l.b16 %v1696
        %v1875 = vunpack.c.l.b16 %v1697
        %v1876 = vunpack.c.l.b16 %v1698
        %v1877 = vunpack.c.l.b16 %v1699
        %v1878 = vunpack.c.l.b16 %v1700
        %v1879 = vunpack.c.l.b16 %v1701
        %v1880 = vunpack.c.l.b16 %v1702
        %v1881 = vunpack.c.l.b16 %v1703
        %v1882 = vunpack.c.l.b16 %v1704
        %v1883 = vunpack.c.l.b16 %v1705
        %v1884 = vpack.c.b16 %v1869, %v1868
        %v1885 = vpack.c.b16 %v1871, %v1870
        %v1886 = vpack.c.b16 %v1873, %v1872
        %v1887 = vpack.c.b16 %v1875, %v1874
        %v1888 = vpack.c.b16 %v1877, %v1876
        %v1889 = vpack.c.b16 %v1879, %v1878
        %v1890 = vpack.c.b16 %v1881, %v1880
        %v1891 = vpack.c.b16 %v1883, %v1882
        %1900 = vmatprep.subr.bf16.mxu0 0
        %1901 = vmatpush1.bf16.msra.mxu0 %v1884
        %1902 = vmatprep.subr.bf16.mxu0 0
        %1903 = vmatpush1.bf16.msra.mxu0 %v1885
        %1904 = vmatprep.subr.bf16.mxu0 0
        %1905 = vmatpush1.bf16.msra.mxu0 %v1886
        %1906 = vmatprep.subr.bf16.mxu0 0
        %1907 = vmatpush1.bf16.msra.mxu0 %v1887
        %1908 = vmatprep.subr.bf16.mxu0 0
        %1909 = vmatpush1.bf16.msra.mxu0 %v1888
        %1910 = vmatprep.subr.bf16.mxu0 0
        %1911 = vmatpush1.bf16.msra.mxu0 %v1889
        %1912 = vmatprep.subr.bf16.mxu0 0
        %1913 = vmatpush1.bf16.msra.mxu0 %v1890
        %1914 = vmatprep.subr.bf16.mxu0 0
        %1915 = vmatpush1.bf16.msra.mxu0 %v1891
        %1916 = vmatprep.subr.bf16.mxu0 0
        %1917 = vmatpush1.bf16.msra.mxu0 0
        %1918 = vmatprep.subr.bf16.mxu0 0
        %1919 = vmatpush1.bf16.msra.mxu0 0
        %1920 = vmatprep.subr.bf16.mxu0 0
        %1921 = vmatpush1.bf16.msra.mxu0 0
        %1922 = vmatprep.subr.bf16.mxu0 0
        %1923 = vmatpush1.bf16.msra.mxu0 0
        %1924 = vmatprep.subr.bf16.mxu0 0
        %1925 = vmatpush1.bf16.msra.mxu0 0
        %1926 = vmatprep.subr.bf16.mxu0 0
        %1927 = vmatpush1.bf16.msra.mxu0 0
        %1928 = vmatprep.subr.bf16.mxu0 0
        %1929 = vmatpush1.bf16.msra.mxu0 0
        %1930 = vmatprep.subr.bf16.mxu0 0
        %1931 = vmatpush1.bf16.msra.mxu0 0
        %1932 = vmatprep.mubr.bf16.mxu0 0
        %1933 = vmatmul.mubr.bf16.gmra.mrb[0].mxu0 %v1761
        %v1934 = vpop.f32.mrb[0].mxu0
        %v1935 = vadd.f32 %v1846, %v1934
        %v1936 = vpop.f32.mrb[0].mxu0
        %v1937 = vpop.f32.mrb[0].mxu0
        %v1938 = vadd.f32 %v1849, %v1937
        %v1939 = vpop.f32.mrb[0].mxu0
        %1940 = vdwg.mxu0
        %v1941 = vpack.c.bf16 %v1760, %v1759
        %v1958 = vunpack.c.l.b16 %v1724
        %v1959 = vunpack.c.l.b16 %v1725
        %v1960 = vunpack.c.l.b16 %v1726
        %v1961 = vunpack.c.l.b16 %v1727
        %v1962 = vunpack.c.l.b16 %v1728
        %v1963 = vunpack.c.l.b16 %v1729
        %v1964 = vunpack.c.l.b16 %v1730
        %v1965 = vunpack.c.l.b16 %v1731
        %v1966 = vunpack.c.l.b16 %v1732
        %v1967 = vunpack.c.l.b16 %v1733
        %v1968 = vunpack.c.l.b16 %v1734
        %v1969 = vunpack.c.l.b16 %v1735
        %v1970 = vunpack.c.l.b16 %v1736
        %v1971 = vunpack.c.l.b16 %v1737
        %v1972 = vunpack.c.l.b16 %v1738
        %v1973 = vunpack.c.l.b16 %v1739
        %v1974 = vpack.c.b16 %v1959, %v1958
        %v1975 = vpack.c.b16 %v1961, %v1960
        %v1976 = vpack.c.b16 %v1963, %v1962
        %v1977 = vpack.c.b16 %v1965, %v1964
        %v1978 = vpack.c.b16 %v1967, %v1966
        %v1979 = vpack.c.b16 %v1969, %v1968
        %v1980 = vpack.c.b16 %v1971, %v1970
        %v1981 = vpack.c.b16 %v1973, %v1972
        %1990 = vmatprep.subr.bf16.mxu0 0
        %1991 = vmatpush1.bf16.msra.mxu0 %v1974
        %1992 = vmatprep.subr.bf16.mxu0 0
        %1993 = vmatpush1.bf16.msra.mxu0 %v1975
        %1994 = vmatprep.subr.bf16.mxu0 0
        %1995 = vmatpush1.bf16.msra.mxu0 %v1976
        %1996 = vmatprep.subr.bf16.mxu0 0
        %1997 = vmatpush1.bf16.msra.mxu0 %v1977
        %1998 = vmatprep.subr.bf16.mxu0 0
        %1999 = vmatpush1.bf16.msra.mxu0 %v1978
        %2000 = vmatprep.subr.bf16.mxu0 0
        %2001 = vmatpush1.bf16.msra.mxu0 %v1979
        %2002 = vmatprep.subr.bf16.mxu0 0
        %2003 = vmatpush1.bf16.msra.mxu0 %v1980
        %2004 = vmatprep.subr.bf16.mxu0 0
        %2005 = vmatpush1.bf16.msra.mxu0 %v1981
        %2006 = vmatprep.subr.bf16.mxu0 0
        %2007 = vmatpush1.bf16.msra.mxu0 0
        %2008 = vmatprep.subr.bf16.mxu0 0
        %2009 = vmatpush1.bf16.msra.mxu0 0
        %2010 = vmatprep.subr.bf16.mxu0 0
        %2011 = vmatpush1.bf16.msra.mxu0 0
        %2012 = vmatprep.subr.bf16.mxu0 0
        %2013 = vmatpush1.bf16.msra.mxu0 0
        %2014 = vmatprep.subr.bf16.mxu0 0
        %2015 = vmatpush1.bf16.msra.mxu0 0
        %2016 = vmatprep.subr.bf16.mxu0 0
        %2017 = vmatpush1.bf16.msra.mxu0 0
        %2018 = vmatprep.subr.bf16.mxu0 0
        %2019 = vmatpush1.bf16.msra.mxu0 0
        %2020 = vmatprep.subr.bf16.mxu0 0
        %2021 = vmatpush1.bf16.msra.mxu0 0
        %2022 = vmatprep.mubr.bf16.mxu0 0
        %2023 = vmatmul.mubr.bf16.gmra.mrb[0].mxu0 %v1941
        %v2024 = vpop.f32.mrb[0].mxu0
        %v2025 = vadd.f32 0.0, %v2024
        %v2026 = vpop.f32.mrb[0].mxu0
        %v2027 = vpop.f32.mrb[0].mxu0
        %v2028 = vadd.f32 0.0, %v2027
        %v2029 = vpop.f32.mrb[0].mxu0
        %2030 = vdwg.mxu0
        %v2031 = vadd.f32 %v1935, %v2025
        %v2032 = vadd.f32 %v1938, %v2028
        %v2034 = vlaneseq
        %v2035 = vshrl.u32 %v2034, 7
        %v2036 = vsub.s32 0, %v2035
        %v2037 = vrot.slane %v1740, %v2036
        %v2039 = vadd.f32 %v2031, %v2037
        %v2040 = vadd.f32 %v2032, %v2037
        %v2041 = vmul.f32 %v2039, 0.1
        %v2042 = vmul.f32 %v2040, 0.1
        %v2043 = vmax.f32 %v2039, %v2041
        %v2044 = vmax.f32 %v2040, %v2042
        %v2045 = vld [vmem:[#allocation12] sm:$0xf]
        %v2046 = vld [vmem:[#allocation12 + $0x4] sm:$0xf]
        %v2047 = vld [vmem:[#allocation12 + $0x8] sm:$0xf]
        %v2048 = vld [vmem:[#allocation12 + $0xc] sm:$0xf]
        %v2049 = vld [vmem:[#allocation12 + $0x10] sm:$0xf]
        %v2050 = vld [vmem:[#allocation12 + $0x14] sm:$0xf]
        %v2051 = vld [vmem:[#allocation12 + $0x18] sm:$0xf]
        %v2052 = vld [vmem:[#allocation12 + $0x1c] sm:$0xf]
        %v2053 = vld [vmem:[#allocation12 + $0x20] sm:$0xf]
        %v2054 = vld [vmem:[#allocation12 + $0x24] sm:$0xf]
        %v2055 = vld [vmem:[#allocation12 + $0x28] sm:$0xf]
        %v2056 = vld [vmem:[#allocation12 + $0x2c] sm:$0xf]
        %v2057 = vld [vmem:[#allocation12 + $0x30] sm:$0xf]
        %v2058 = vld [vmem:[#allocation12 + $0x34] sm:$0xf]
        %v2059 = vld [vmem:[#allocation12 + $0x38] sm:$0xf]
        %v2060 = vld [vmem:[#allocation12 + $0x3c] sm:$0xf]
        %s2061 = scalar_lea.vmem [#allocation12], 64
        %v2062 = vld [vmem:[%s2061] sm:$0xf]
        %v2063 = vld [vmem:[%s2061 + $0x4] sm:$0xf]
        %v2064 = vld [vmem:[%s2061 + $0x8] sm:$0xf]
        %v2065 = vld [vmem:[%s2061 + $0xc] sm:$0xf]
        %v2066 = vld [vmem:[%s2061 + $0x10] sm:$0xf]
        %v2067 = vld [vmem:[%s2061 + $0x14] sm:$0xf]
        %v2068 = vld [vmem:[%s2061 + $0x18] sm:$0xf]
        %v2069 = vld [vmem:[%s2061 + $0x1c] sm:$0xf]
        %v2070 = vld [vmem:[%s2061 + $0x20] sm:$0xf]
        %v2071 = vld [vmem:[%s2061 + $0x24] sm:$0xf]
        %v2072 = vld [vmem:[%s2061 + $0x28] sm:$0xf]
        %v2073 = vld [vmem:[%s2061 + $0x2c] sm:$0xf]
        %v2074 = vld [vmem:[%s2061 + $0x30] sm:$0xf]
        %v2075 = vld [vmem:[%s2061 + $0x34] sm:$0xf]
        %v2076 = vld [vmem:[%s2061 + $0x38] sm:$0xf]
        %v2077 = vld [vmem:[%s2061 + $0x3c] sm:$0xf]
        %s2078 = scalar_lea.vmem [#allocation12], 128
        %v2079 = vld [vmem:[%s2078] sm:$0xf]
        %v2080 = vld [vmem:[%s2078 + $0x4] sm:$0xf]
        %v2081 = vld [vmem:[%s2078 + $0x8] sm:$0xf]
        %v2082 = vld [vmem:[%s2078 + $0xc] sm:$0xf]
        %v2083 = vld [vmem:[%s2078 + $0x10] sm:$0xf]
        %v2084 = vld [vmem:[%s2078 + $0x14] sm:$0xf]
        %v2085 = vld [vmem:[%s2078 + $0x18] sm:$0xf]
        %v2086 = vld [vmem:[%s2078 + $0x1c] sm:$0xf]
        %v2087 = vld [vmem:[%s2078 + $0x20] sm:$0xf]
        %v2088 = vld [vmem:[%s2078 + $0x24] sm:$0xf]
        %v2089 = vld [vmem:[%s2078 + $0x28] sm:$0xf]
        %v2090 = vld [vmem:[%s2078 + $0x2c] sm:$0xf]
        %v2091 = vld [vmem:[%s2078 + $0x30] sm:$0xf]
        %v2092 = vld [vmem:[%s2078 + $0x34] sm:$0xf]
        %v2093 = vld [vmem:[%s2078 + $0x38] sm:$0xf]
        %v2094 = vld [vmem:[%s2078 + $0x3c] sm:$0xf]
        %v2095 = vld [vmem:[%s11] sm:$0x1]
        %v2096 = vrot.slane %v2043, 7
        %v2097 = vrot.slane %v2044, 7
        %v2098 = vsel %vm766, %v2096, %v2097
        %v2099 = vsel %vm766, %v2097, %v2096
        %v2100 = vsel %vm1747, %v2099, 0.0
        %v2101 = vsel %vm1748, %v2098, 0.0
        %v2102 = vrot.slane %v2043, 1
        %v2103 = vrot.slane %v2044, 1
        %v2104 = vsel %vm787, %v2102, %v2103
        %v2105 = vsel %vm787, %v2103, %v2102
        %v2106 = vsel %vm1757, %v2104, 0.0
        %v2107 = vsel %vm1758, %v2105, 0.0
        %v2108 = vpack.c.bf16 %v2101, %v2100
        %v2109 = vpack.c.bf16 %v2044, %v2043
        %v2126 = vunpack.c.l.b16 %v2062
        %v2127 = vunpack.c.l.b16 %v2063
        %v2128 = vunpack.c.l.b16 %v2064
        %v2129 = vunpack.c.l.b16 %v2065
        %v2130 = vunpack.c.l.b16 %v2066
        %v2131 = vunpack.c.l.b16 %v2067
        %v2132 = vunpack.c.l.b16 %v2068
        %v2133 = vunpack.c.l.b16 %v2069
        %v2134 = vunpack.c.l.b16 %v2070
        %v2135 = vunpack.c.l.b16 %v2071
        %v2136 = vunpack.c.l.b16 %v2072
        %v2137 = vunpack.c.l.b16 %v2073
        %v2138 = vunpack.c.l.b16 %v2074
        %v2139 = vunpack.c.l.b16 %v2075
        %v2140 = vunpack.c.l.b16 %v2076
        %v2141 = vunpack.c.l.b16 %v2077
        %v2142 = vpack.c.b16 %v2127, %v2126
        %v2143 = vpack.c.b16 %v2129, %v2128
        %v2144 = vpack.c.b16 %v2131, %v2130
        %v2145 = vpack.c.b16 %v2133, %v2132
        %v2146 = vpack.c.b16 %v2135, %v2134
        %v2147 = vpack.c.b16 %v2137, %v2136
        %v2148 = vpack.c.b16 %v2139, %v2138
        %v2149 = vpack.c.b16 %v2141, %v2140
        %2158 = vmatprep.subr.bf16.mxu0 0
        %2159 = vmatpush1.bf16.msra.mxu0 %v2142
        %2160 = vmatprep.subr.bf16.mxu0 0
        %2161 = vmatpush1.bf16.msra.mxu0 %v2143
        %2162 = vmatprep.subr.bf16.mxu0 0
        %2163 = vmatpush1.bf16.msra.mxu0 %v2144
        %2164 = vmatprep.subr.bf16.mxu0 0
        %2165 = vmatpush1.bf16.msra.mxu0 %v2145
        %2166 = vmatprep.subr.bf16.mxu0 0
        %2167 = vmatpush1.bf16.msra.mxu0 %v2146
        %2168 = vmatprep.subr.bf16.mxu0 0
        %2169 = vmatpush1.bf16.msra.mxu0 %v2147
        %2170 = vmatprep.subr.bf16.mxu0 0
        %2171 = vmatpush1.bf16.msra.mxu0 %v2148
        %2172 = vmatprep.subr.bf16.mxu0 0
        %2173 = vmatpush1.bf16.msra.mxu0 %v2149
        %2174 = vmatprep.subr.bf16.mxu0 0
        %2175 = vmatpush1.bf16.msra.mxu0 0
        %2176 = vmatprep.subr.bf16.mxu0 0
        %2177 = vmatpush1.bf16.msra.mxu0 0
        %2178 = vmatprep.subr.bf16.mxu0 0
        %2179 = vmatpush1.bf16.msra.mxu0 0
        %2180 = vmatprep.subr.bf16.mxu0 0
        %2181 = vmatpush1.bf16.msra.mxu0 0
        %2182 = vmatprep.subr.bf16.mxu0 0
        %2183 = vmatpush1.bf16.msra.mxu0 0
        %2184 = vmatprep.subr.bf16.mxu0 0
        %2185 = vmatpush1.bf16.msra.mxu0 0
        %2186 = vmatprep.subr.bf16.mxu0 0
        %2187 = vmatpush1.bf16.msra.mxu0 0
        %2188 = vmatprep.subr.bf16.mxu0 0
        %2189 = vmatpush1.bf16.msra.mxu0 0
        %2190 = vmatprep.mubr.bf16.mxu0 0
        %2191 = vmatmul.mubr.bf16.gmra.mrb[0].mxu0 %v2109
        %v2192 = vpop.f32.mrb[0].mxu0
        %v2193 = vadd.f32 0.0, %v2192
        %v2194 = vpop.f32.mrb[0].mxu0
        %v2195 = vpop.f32.mrb[0].mxu0
        %v2196 = vadd.f32 0.0, %v2195
        %v2197 = vpop.f32.mrb[0].mxu0
        %2198 = vdwg.mxu0
        %v2215 = vunpack.c.l.b16 %v2045
        %v2216 = vunpack.c.l.b16 %v2046
        %v2217 = vunpack.c.l.b16 %v2047
        %v2218 = vunpack.c.l.b16 %v2048
        %v2219 = vunpack.c.l.b16 %v2049
        %v2220 = vunpack.c.l.b16 %v2050
        %v2221 = vunpack.c.l.b16 %v2051
        %v2222 = vunpack.c.l.b16 %v2052
        %v2223 = vunpack.c.l.b16 %v2053
        %v2224 = vunpack.c.l.b16 %v2054
        %v2225 = vunpack.c.l.b16 %v2055
        %v2226 = vunpack.c.l.b16 %v2056
        %v2227 = vunpack.c.l.b16 %v2057
        %v2228 = vunpack.c.l.b16 %v2058
        %v2229 = vunpack.c.l.b16 %v2059
        %v2230 = vunpack.c.l.b16 %v2060
        %v2231 = vpack.c.b16 %v2216, %v2215
        %v2232 = vpack.c.b16 %v2218, %v2217
        %v2233 = vpack.c.b16 %v2220, %v2219
        %v2234 = vpack.c.b16 %v2222, %v2221
        %v2235 = vpack.c.b16 %v2224, %v2223
        %v2236 = vpack.c.b16 %v2226, %v2225
        %v2237 = vpack.c.b16 %v2228, %v2227
        %v2238 = vpack.c.b16 %v2230, %v2229
        %2247 = vmatprep.subr.bf16.mxu0 0
        %2248 = vmatpush1.bf16.msra.mxu0 %v2231
        %2249 = vmatprep.subr.bf16.mxu0 0
        %2250 = vmatpush1.bf16.msra.mxu0 %v2232
        %2251 = vmatprep.subr.bf16.mxu0 0
        %2252 = vmatpush1.bf16.msra.mxu0 %v2233
        %2253 = vmatprep.subr.bf16.mxu0 0
        %2254 = vmatpush1.bf16.msra.mxu0 %v2234
        %2255 = vmatprep.subr.bf16.mxu0 0
        %2256 = vmatpush1.bf16.msra.mxu0 %v2235
        %2257 = vmatprep.subr.bf16.mxu0 0
        %2258 = vmatpush1.bf16.msra.mxu0 %v2236
        %2259 = vmatprep.subr.bf16.mxu0 0
        %2260 = vmatpush1.bf16.msra.mxu0 %v2237
        %2261 = vmatprep.subr.bf16.mxu0 0
        %2262 = vmatpush1.bf16.msra.mxu0 %v2238
        %2263 = vmatprep.subr.bf16.mxu0 0
        %2264 = vmatpush1.bf16.msra.mxu0 0
        %2265 = vmatprep.subr.bf16.mxu0 0
        %2266 = vmatpush1.bf16.msra.mxu0 0
        %2267 = vmatprep.subr.bf16.mxu0 0
        %2268 = vmatpush1.bf16.msra.mxu0 0
        %2269 = vmatprep.subr.bf16.mxu0 0
        %2270 = vmatpush1.bf16.msra.mxu0 0
        %2271 = vmatprep.subr.bf16.mxu0 0
        %2272 = vmatpush1.bf16.msra.mxu0 0
        %2273 = vmatprep.subr.bf16.mxu0 0
        %2274 = vmatpush1.bf16.msra.mxu0 0
        %2275 = vmatprep.subr.bf16.mxu0 0
        %2276 = vmatpush1.bf16.msra.mxu0 0
        %2277 = vmatprep.subr.bf16.mxu0 0
        %2278 = vmatpush1.bf16.msra.mxu0 0
        %2279 = vmatprep.mubr.bf16.mxu0 0
        %2280 = vmatmul.mubr.bf16.gmra.mrb[0].mxu0 %v2108
        %v2281 = vpop.f32.mrb[0].mxu0
        %v2282 = vadd.f32 %v2193, %v2281
        %v2283 = vpop.f32.mrb[0].mxu0
        %v2284 = vpop.f32.mrb[0].mxu0
        %v2285 = vadd.f32 %v2196, %v2284
        %v2286 = vpop.f32.mrb[0].mxu0
        %2287 = vdwg.mxu0
        %v2288 = vpack.c.bf16 %v2107, %v2106
        %v2305 = vunpack.c.l.b16 %v2079
        %v2306 = vunpack.c.l.b16 %v2080
        %v2307 = vunpack.c.l.b16 %v2081
        %v2308 = vunpack.c.l.b16 %v2082
        %v2309 = vunpack.c.l.b16 %v2083
        %v2310 = vunpack.c.l.b16 %v2084
        %v2311 = vunpack.c.l.b16 %v2085
        %v2312 = vunpack.c.l.b16 %v2086
        %v2313 = vunpack.c.l.b16 %v2087
        %v2314 = vunpack.c.l.b16 %v2088
        %v2315 = vunpack.c.l.b16 %v2089
        %v2316 = vunpack.c.l.b16 %v2090
        %v2317 = vunpack.c.l.b16 %v2091
        %v2318 = vunpack.c.l.b16 %v2092
        %v2319 = vunpack.c.l.b16 %v2093
        %v2320 = vunpack.c.l.b16 %v2094
        %v2321 = vpack.c.b16 %v2306, %v2305
        %v2322 = vpack.c.b16 %v2308, %v2307
        %v2323 = vpack.c.b16 %v2310, %v2309
        %v2324 = vpack.c.b16 %v2312, %v2311
        %v2325 = vpack.c.b16 %v2314, %v2313
        %v2326 = vpack.c.b16 %v2316, %v2315
        %v2327 = vpack.c.b16 %v2318, %v2317
        %v2328 = vpack.c.b16 %v2320, %v2319
        %2337 = vmatprep.subr.bf16.mxu0 0
        %2338 = vmatpush1.bf16.msra.mxu0 %v2321
        %2339 = vmatprep.subr.bf16.mxu0 0
        %2340 = vmatpush1.bf16.msra.mxu0 %v2322
        %2341 = vmatprep.subr.bf16.mxu0 0
        %2342 = vmatpush1.bf16.msra.mxu0 %v2323
        %2343 = vmatprep.subr.bf16.mxu0 0
        %2344 = vmatpush1.bf16.msra.mxu0 %v2324
        %2345 = vmatprep.subr.bf16.mxu0 0
        %2346 = vmatpush1.bf16.msra.mxu0 %v2325
        %2347 = vmatprep.subr.bf16.mxu0 0
        %2348 = vmatpush1.bf16.msra.mxu0 %v2326
        %2349 = vmatprep.subr.bf16.mxu0 0
        %2350 = vmatpush1.bf16.msra.mxu0 %v2327
        %2351 = vmatprep.subr.bf16.mxu0 0
        %2352 = vmatpush1.bf16.msra.mxu0 %v2328
        %2353 = vmatprep.subr.bf16.mxu0 0
        %2354 = vmatpush1.bf16.msra.mxu0 0
        %2355 = vmatprep.subr.bf16.mxu0 0
        %2356 = vmatpush1.bf16.msra.mxu0 0
        %2357 = vmatprep.subr.bf16.mxu0 0
        %2358 = vmatpush1.bf16.msra.mxu0 0
        %2359 = vmatprep.subr.bf16.mxu0 0
        %2360 = vmatpush1.bf16.msra.mxu0 0
        %2361 = vmatprep.subr.bf16.mxu0 0
        %2362 = vmatpush1.bf16.msra.mxu0 0
        %2363 = vmatprep.subr.bf16.mxu0 0
        %2364 = vmatpush1.bf16.msra.mxu0 0
        %2365 = vmatprep.subr.bf16.mxu0 0
        %2366 = vmatpush1.bf16.msra.mxu0 0
        %2367 = vmatprep.subr.bf16.mxu0 0
        %2368 = vmatpush1.bf16.msra.mxu0 0
        %2369 = vmatprep.mubr.bf16.mxu0 0
        %2370 = vmatmul.mubr.bf16.gmra.mrb[0].mxu0 %v2288
        %v2371 = vpop.f32.mrb[0].mxu0
        %v2372 = vadd.f32 0.0, %v2371
        %v2373 = vpop.f32.mrb[0].mxu0
        %v2374 = vpop.f32.mrb[0].mxu0
        %v2375 = vadd.f32 0.0, %v2374
        %v2376 = vpop.f32.mrb[0].mxu0
        %2377 = vdwg.mxu0
        %v2378 = vadd.f32 %v2282, %v2372
        %v2379 = vadd.f32 %v2285, %v2375
        %v2381 = vlaneseq
        %v2382 = vshrl.u32 %v2381, 7
        %v2383 = vsub.s32 0, %v2382
        %v2384 = vrot.slane %v2095, %v2383
        %v2386 = vadd.f32 %v2378, %v2384
        %v2387 = vadd.f32 %v2379, %v2384
        %v2388 = vpack.c.bf16 %v1657, %v1656
        %v2389 = vld [vmem:[#allocation14] sm:$0xf]
        %v2390 = vld [vmem:[#allocation14 + $0x4] sm:$0xf]
        %v2391 = vld [vmem:[#allocation14 + $0x8] sm:$0xf]
        %v2392 = vld [vmem:[#allocation14 + $0xc] sm:$0xf]
        %v2393 = vld [vmem:[#allocation14 + $0x10] sm:$0xf]
        %v2394 = vld [vmem:[#allocation14 + $0x14] sm:$0xf]
        %v2395 = vld [vmem:[#allocation14 + $0x18] sm:$0xf]
        %v2396 = vld [vmem:[#allocation14 + $0x1c] sm:$0xf]
        %v2397 = vld [vmem:[#allocation14 + $0x20] sm:$0xf]
        %v2398 = vld [vmem:[#allocation14 + $0x24] sm:$0xf]
        %v2399 = vld [vmem:[#allocation14 + $0x28] sm:$0xf]
        %v2400 = vld [vmem:[#allocation14 + $0x2c] sm:$0xf]
        %v2401 = vld [vmem:[#allocation14 + $0x30] sm:$0xf]
        %v2402 = vld [vmem:[#allocation14 + $0x34] sm:$0xf]
        %v2403 = vld [vmem:[#allocation14 + $0x38] sm:$0xf]
        %v2404 = vld [vmem:[#allocation14 + $0x3c] sm:$0xf]
        %v2405 = vld [vmem:[%s13] sm:$0x1]
        %v2407 = vlaneseq
        %v2408 = vshrl.u32 %v2407, 7
        %v2409 = vsub.s32 0, %v2408
        %v2410 = vrot.slane %v2405, %v2409
        %v2428 = vunpack.c.l.b16 %v2389
        %v2429 = vunpack.c.l.b16 %v2390
        %v2430 = vunpack.c.l.b16 %v2391
        %v2431 = vunpack.c.l.b16 %v2392
        %v2432 = vunpack.c.l.b16 %v2393
        %v2433 = vunpack.c.l.b16 %v2394
        %v2434 = vunpack.c.l.b16 %v2395
        %v2435 = vunpack.c.l.b16 %v2396
        %v2436 = vunpack.c.l.b16 %v2397
        %v2437 = vunpack.c.l.b16 %v2398
        %v2438 = vunpack.c.l.b16 %v2399
        %v2439 = vunpack.c.l.b16 %v2400
        %v2440 = vunpack.c.l.b16 %v2401
        %v2441 = vunpack.c.l.b16 %v2402
        %v2442 = vunpack.c.l.b16 %v2403
        %v2443 = vunpack.c.l.b16 %v2404
        %v2444 = vpack.c.b16 %v2429, %v2428
        %v2445 = vpack.c.b16 %v2431, %v2430
        %v2446 = vpack.c.b16 %v2433, %v2432
        %v2447 = vpack.c.b16 %v2435, %v2434
        %v2448 = vpack.c.b16 %v2437, %v2436
        %v2449 = vpack.c.b16 %v2439, %v2438
        %v2450 = vpack.c.b16 %v2441, %v2440
        %v2451 = vpack.c.b16 %v2443, %v2442
        %2460 = vmatprep.subr.bf16.mxu0 0
        %2461 = vmatpush1.bf16.msra.mxu0 %v2444
        %2462 = vmatprep.subr.bf16.mxu0 0
        %2463 = vmatpush1.bf16.msra.mxu0 %v2445
        %2464 = vmatprep.subr.bf16.mxu0 0
        %2465 = vmatpush1.bf16.msra.mxu0 %v2446
        %2466 = vmatprep.subr.bf16.mxu0 0
        %2467 = vmatpush1.bf16.msra.mxu0 %v2447
        %2468 = vmatprep.subr.bf16.mxu0 0
        %2469 = vmatpush1.bf16.msra.mxu0 %v2448
        %2470 = vmatprep.subr.bf16.mxu0 0
        %2471 = vmatpush1.bf16.msra.mxu0 %v2449
        %2472 = vmatprep.subr.bf16.mxu0 0
        %2473 = vmatpush1.bf16.msra.mxu0 %v2450
        %2474 = vmatprep.subr.bf16.mxu0 0
        %2475 = vmatpush1.bf16.msra.mxu0 %v2451
        %2476 = vmatprep.subr.bf16.mxu0 0
        %2477 = vmatpush1.bf16.msra.mxu0 0
        %2478 = vmatprep.subr.bf16.mxu0 0
        %2479 = vmatpush1.bf16.msra.mxu0 0
        %2480 = vmatprep.subr.bf16.mxu0 0
        %2481 = vmatpush1.bf16.msra.mxu0 0
        %2482 = vmatprep.subr.bf16.mxu0 0
        %2483 = vmatpush1.bf16.msra.mxu0 0
        %2484 = vmatprep.subr.bf16.mxu0 0
        %2485 = vmatpush1.bf16.msra.mxu0 0
        %2486 = vmatprep.subr.bf16.mxu0 0
        %2487 = vmatpush1.bf16.msra.mxu0 0
        %2488 = vmatprep.subr.bf16.mxu0 0
        %2489 = vmatpush1.bf16.msra.mxu0 0
        %2490 = vmatprep.subr.bf16.mxu0 0
        %2491 = vmatpush1.bf16.msra.mxu0 0
        %2492 = vmatprep.mubr.bf16.mxu0 0
        %2493 = vmatmul.mubr.bf16.gmra.mrb[0].mxu0 %v2388
        %v2494 = vpop.f32.mrb[0].mxu0
        %v2495 = vadd.f32 %v2410, %v2494
        %v2496 = vpop.f32.mrb[0].mxu0
        %v2497 = vpop.f32.mrb[0].mxu0
        %v2498 = vadd.f32 %v2410, %v2497
        %v2499 = vpop.f32.mrb[0].mxu0
        %2500 = vdwg.mxu0
        %v2501 = vadd.f32 %v2386, %v2495
        %v2502 = vadd.f32 %v2387, %v2498
        %2503 = vst [vmem:[#allocation2] sm:$0xff] %v2501
        %2504 = vst [vmem:[#allocation2 + $0x8] sm:$0xff] %v2502
        %v2505 = vld [vmem:[#allocation2] ss:$2 sm:$0xff]
        %v2506 = vld [vmem:[%s1650] ss:$2 sm:$0xff]
        %v2507 = vadd.f32 %v2505, %v2506
        %v2508 = vmul.f32 %v2507, 0.5
        %vm2509 = vcmp.lt.s32.totalorder %v651, 0
        %v2510 = vsub.s32 0, %v651
        %v2511 = vsel %vm2509, %v2510, %v651
        %v2512 = vshrl.u32 %v2511, 3
        %v2513 = vand.u32 %v2511, 7
        %v2514 = vsub.s32 0, %v2513
        %v2515 = vsel %vm2509, %v2514, %v2513
        %vm2516 = vcmp.ne.s32.totalorder %v2515, 0
        %vm2517 = vcmp.lt.s32.totalorder %v2515, 0
        %vm2518 = vmand %vm2517, %vm2516
        %v2519 = vadd.s32 %v2515, 8
        %v2520 = vsel %vm2518, %v2519, %v2515
        %vm2521 = vcmp.ne.s32.totalorder %v2520, 0
        %vm2522 = vcmp.ne.s32.totalorder %v2520, 7
        %v2523 = vmul.f32 %v2508, 0.1
        %v2524 = vmax.f32 %v2508, %v2523
        %s2525 = scalar_lea.vmem [#allocation11], 192
        %v2526 = vld [vmem:[%s2525] sm:$0xf]
        %v2527 = vld [vmem:[%s2525 + $0x4] sm:$0xf]
        %v2528 = vld [vmem:[%s2525 + $0x8] sm:$0xf]
        %v2529 = vld [vmem:[%s2525 + $0xc] sm:$0xf]
        %v2530 = vld [vmem:[%s2525 + $0x10] sm:$0xf]
        %v2531 = vld [vmem:[%s2525 + $0x14] sm:$0xf]
        %v2532 = vld [vmem:[%s2525 + $0x18] sm:$0xf]
        %v2533 = vld [vmem:[%s2525 + $0x1c] sm:$0xf]
        %v2534 = vld [vmem:[%s2525 + $0x20] sm:$0xf]
        %v2535 = vld [vmem:[%s2525 + $0x24] sm:$0xf]
        %v2536 = vld [vmem:[%s2525 + $0x28] sm:$0xf]
        %v2537 = vld [vmem:[%s2525 + $0x2c] sm:$0xf]
        %v2538 = vld [vmem:[%s2525 + $0x30] sm:$0xf]
        %v2539 = vld [vmem:[%s2525 + $0x34] sm:$0xf]
        %v2540 = vld [vmem:[%s2525 + $0x38] sm:$0xf]
        %v2541 = vld [vmem:[%s2525 + $0x3c] sm:$0xf]
        %s2542 = scalar_lea.vmem [#allocation11], 256
        %v2543 = vld [vmem:[%s2542] sm:$0xf]
        %v2544 = vld [vmem:[%s2542 + $0x4] sm:$0xf]
        %v2545 = vld [vmem:[%s2542 + $0x8] sm:$0xf]
        %v2546 = vld [vmem:[%s2542 + $0xc] sm:$0xf]
        %v2547 = vld [vmem:[%s2542 + $0x10] sm:$0xf]
        %v2548 = vld [vmem:[%s2542 + $0x14] sm:$0xf]
        %v2549 = vld [vmem:[%s2542 + $0x18] sm:$0xf]
        %v2550 = vld [vmem:[%s2542 + $0x1c] sm:$0xf]
        %v2551 = vld [vmem:[%s2542 + $0x20] sm:$0xf]
        %v2552 = vld [vmem:[%s2542 + $0x24] sm:$0xf]
        %v2553 = vld [vmem:[%s2542 + $0x28] sm:$0xf]
        %v2554 = vld [vmem:[%s2542 + $0x2c] sm:$0xf]
        %v2555 = vld [vmem:[%s2542 + $0x30] sm:$0xf]
        %v2556 = vld [vmem:[%s2542 + $0x34] sm:$0xf]
        %v2557 = vld [vmem:[%s2542 + $0x38] sm:$0xf]
        %v2558 = vld [vmem:[%s2542 + $0x3c] sm:$0xf]
        %s2559 = scalar_lea.vmem [#allocation11], 320
        %v2560 = vld [vmem:[%s2559] sm:$0xf]
        %v2561 = vld [vmem:[%s2559 + $0x4] sm:$0xf]
        %v2562 = vld [vmem:[%s2559 + $0x8] sm:$0xf]
        %v2563 = vld [vmem:[%s2559 + $0xc] sm:$0xf]
        %v2564 = vld [vmem:[%s2559 + $0x10] sm:$0xf]
        %v2565 = vld [vmem:[%s2559 + $0x14] sm:$0xf]
        %v2566 = vld [vmem:[%s2559 + $0x18] sm:$0xf]
        %v2567 = vld [vmem:[%s2559 + $0x1c] sm:$0xf]
        %v2568 = vld [vmem:[%s2559 + $0x20] sm:$0xf]
        %v2569 = vld [vmem:[%s2559 + $0x24] sm:$0xf]
        %v2570 = vld [vmem:[%s2559 + $0x28] sm:$0xf]
        %v2571 = vld [vmem:[%s2559 + $0x2c] sm:$0xf]
        %v2572 = vld [vmem:[%s2559 + $0x30] sm:$0xf]
        %v2573 = vld [vmem:[%s2559 + $0x34] sm:$0xf]
        %v2574 = vld [vmem:[%s2559 + $0x38] sm:$0xf]
        %v2575 = vld [vmem:[%s2559 + $0x3c] sm:$0xf]
        %s2576 = scalar_lea.vmem %s9, 1
        %v2577 = vld [vmem:[%s2576] sm:$0x1]
        %v2578 = vrot.slane %v2524, 7
        %v2579 = vsel %vm2521, 1, 0
        %vm2580 = vcmp.eq.s32.totalorder %v2579, 1
        %v2581 = vsel %vm2580, %v2578, 0.0
        %v2582 = vrot.slane %v2524, 1
        %v2583 = vsel %vm2522, 1, 0
        %vm2584 = vcmp.eq.s32.totalorder %v2583, 1
        %v2585 = vsel %vm2584, %v2582, 0.0
        %v2586 = vpack.c.bf16 %v2581, %v2581
        %v2587 = vpack.c.bf16 %v2524, %v2524
        %v2604 = vunpack.c.l.b16 %v2543
        %v2605 = vunpack.c.l.b16 %v2544
        %v2606 = vunpack.c.l.b16 %v2545
        %v2607 = vunpack.c.l.b16 %v2546
        %v2608 = vunpack.c.l.b16 %v2547
        %v2609 = vunpack.c.l.b16 %v2548
        %v2610 = vunpack.c.l.b16 %v2549
        %v2611 = vunpack.c.l.b16 %v2550
        %v2612 = vunpack.c.l.b16 %v2551
        %v2613 = vunpack.c.l.b16 %v2552
        %v2614 = vunpack.c.l.b16 %v2553
        %v2615 = vunpack.c.l.b16 %v2554
        %v2616 = vunpack.c.l.b16 %v2555
        %v2617 = vunpack.c.l.b16 %v2556
        %v2618 = vunpack.c.l.b16 %v2557
        %v2619 = vunpack.c.l.b16 %v2558
        %v2620 = vpack.c.b16 %v2605, %v2604
        %v2621 = vpack.c.b16 %v2607, %v2606
        %v2622 = vpack.c.b16 %v2609, %v2608
        %v2623 = vpack.c.b16 %v2611, %v2610
        %v2624 = vpack.c.b16 %v2613, %v2612
        %v2625 = vpack.c.b16 %v2615, %v2614
        %v2626 = vpack.c.b16 %v2617, %v2616
        %v2627 = vpack.c.b16 %v2619, %v2618
        %2636 = vmatprep.subr.bf16.mxu0 0
        %2637 = vmatpush1.bf16.msra.mxu0 %v2620
        %2638 = vmatprep.subr.bf16.mxu0 0
        %2639 = vmatpush1.bf16.msra.mxu0 %v2621
        %2640 = vmatprep.subr.bf16.mxu0 0
        %2641 = vmatpush1.bf16.msra.mxu0 %v2622
        %2642 = vmatprep.subr.bf16.mxu0 0
        %2643 = vmatpush1.bf16.msra.mxu0 %v2623
        %2644 = vmatprep.subr.bf16.mxu0 0
        %2645 = vmatpush1.bf16.msra.mxu0 %v2624
        %2646 = vmatprep.subr.bf16.mxu0 0
        %2647 = vmatpush1.bf16.msra.mxu0 %v2625
        %2648 = vmatprep.subr.bf16.mxu0 0
        %2649 = vmatpush1.bf16.msra.mxu0 %v2626
        %2650 = vmatprep.subr.bf16.mxu0 0
        %2651 = vmatpush1.bf16.msra.mxu0 %v2627
        %2652 = vmatprep.subr.bf16.mxu0 0
        %2653 = vmatpush1.bf16.msra.mxu0 0
        %2654 = vmatprep.subr.bf16.mxu0 0
        %2655 = vmatpush1.bf16.msra.mxu0 0
        %2656 = vmatprep.subr.bf16.mxu0 0
        %2657 = vmatpush1.bf16.msra.mxu0 0
        %2658 = vmatprep.subr.bf16.mxu0 0
        %2659 = vmatpush1.bf16.msra.mxu0 0
        %2660 = vmatprep.subr.bf16.mxu0 0
        %2661 = vmatpush1.bf16.msra.mxu0 0
        %2662 = vmatprep.subr.bf16.mxu0 0
        %2663 = vmatpush1.bf16.msra.mxu0 0
        %2664 = vmatprep.subr.bf16.mxu0 0
        %2665 = vmatpush1.bf16.msra.mxu0 0
        %2666 = vmatprep.subr.bf16.mxu0 0
        %2667 = vmatpush1.bf16.msra.mxu0 0
        %2668 = vmatprep.mubr.bf16.mxu0 0
        %2669 = vmatmul.mubr.bf16.gmra.mrb[0].mxu0 %v2587
        %v2670 = vpop.f32.mrb[0].mxu0
        %v2671 = vadd.f32 0.0, %v2670
        %v2672 = vpop.f32.mrb[0].mxu0
        %v2673 = vpop.f32.mrb[0].mxu0
        %v2674 = vpop.f32.mrb[0].mxu0
        %2675 = vdwg.mxu0
        %v2692 = vunpack.c.l.b16 %v2526
        %v2693 = vunpack.c.l.b16 %v2527
        %v2694 = vunpack.c.l.b16 %v2528
        %v2695 = vunpack.c.l.b16 %v2529
        %v2696 = vunpack.c.l.b16 %v2530
        %v2697 = vunpack.c.l.b16 %v2531
        %v2698 = vunpack.c.l.b16 %v2532
        %v2699 = vunpack.c.l.b16 %v2533
        %v2700 = vunpack.c.l.b16 %v2534
        %v2701 = vunpack.c.l.b16 %v2535
        %v2702 = vunpack.c.l.b16 %v2536
        %v2703 = vunpack.c.l.b16 %v2537
        %v2704 = vunpack.c.l.b16 %v2538
        %v2705 = vunpack.c.l.b16 %v2539
        %v2706 = vunpack.c.l.b16 %v2540
        %v2707 = vunpack.c.l.b16 %v2541
        %v2708 = vpack.c.b16 %v2693, %v2692
        %v2709 = vpack.c.b16 %v2695, %v2694
        %v2710 = vpack.c.b16 %v2697, %v2696
        %v2711 = vpack.c.b16 %v2699, %v2698
        %v2712 = vpack.c.b16 %v2701, %v2700
        %v2713 = vpack.c.b16 %v2703, %v2702
        %v2714 = vpack.c.b16 %v2705, %v2704
        %v2715 = vpack.c.b16 %v2707, %v2706
        %2724 = vmatprep.subr.bf16.mxu0 0
        %2725 = vmatpush1.bf16.msra.mxu0 %v2708
        %2726 = vmatprep.subr.bf16.mxu0 0
        %2727 = vmatpush1.bf16.msra.mxu0 %v2709
        %2728 = vmatprep.subr.bf16.mxu0 0
        %2729 = vmatpush1.bf16.msra.mxu0 %v2710
        %2730 = vmatprep.subr.bf16.mxu0 0
        %2731 = vmatpush1.bf16.msra.mxu0 %v2711
        %2732 = vmatprep.subr.bf16.mxu0 0
        %2733 = vmatpush1.bf16.msra.mxu0 %v2712
        %2734 = vmatprep.subr.bf16.mxu0 0
        %2735 = vmatpush1.bf16.msra.mxu0 %v2713
        %2736 = vmatprep.subr.bf16.mxu0 0
        %2737 = vmatpush1.bf16.msra.mxu0 %v2714
        %2738 = vmatprep.subr.bf16.mxu0 0
        %2739 = vmatpush1.bf16.msra.mxu0 %v2715
        %2740 = vmatprep.subr.bf16.mxu0 0
        %2741 = vmatpush1.bf16.msra.mxu0 0
        %2742 = vmatprep.subr.bf16.mxu0 0
        %2743 = vmatpush1.bf16.msra.mxu0 0
        %2744 = vmatprep.subr.bf16.mxu0 0
        %2745 = vmatpush1.bf16.msra.mxu0 0
        %2746 = vmatprep.subr.bf16.mxu0 0
        %2747 = vmatpush1.bf16.msra.mxu0 0
        %2748 = vmatprep.subr.bf16.mxu0 0
        %2749 = vmatpush1.bf16.msra.mxu0 0
        %2750 = vmatprep.subr.bf16.mxu0 0
        %2751 = vmatpush1.bf16.msra.mxu0 0
        %2752 = vmatprep.subr.bf16.mxu0 0
        %2753 = vmatpush1.bf16.msra.mxu0 0
        %2754 = vmatprep.subr.bf16.mxu0 0
        %2755 = vmatpush1.bf16.msra.mxu0 0
        %2756 = vmatprep.mubr.bf16.mxu0 0
        %2757 = vmatmul.mubr.bf16.gmra.mrb[0].mxu0 %v2586
        %v2758 = vpop.f32.mrb[0].mxu0
        %v2759 = vadd.f32 %v2671, %v2758
        %v2760 = vpop.f32.mrb[0].mxu0
        %v2761 = vpop.f32.mrb[0].mxu0
        %v2762 = vpop.f32.mrb[0].mxu0
        %2763 = vdwg.mxu0
        %v2764 = vpack.c.bf16 %v2585, %v2585
        %v2781 = vunpack.c.l.b16 %v2560
        %v2782 = vunpack.c.l.b16 %v2561
        %v2783 = vunpack.c.l.b16 %v2562
        %v2784 = vunpack.c.l.b16 %v2563
        %v2785 = vunpack.c.l.b16 %v2564
        %v2786 = vunpack.c.l.b16 %v2565
        %v2787 = vunpack.c.l.b16 %v2566
        %v2788 = vunpack.c.l.b16 %v2567
        %v2789 = vunpack.c.l.b16 %v2568
        %v2790 = vunpack.c.l.b16 %v2569
        %v2791 = vunpack.c.l.b16 %v2570
        %v2792 = vunpack.c.l.b16 %v2571
        %v2793 = vunpack.c.l.b16 %v2572
        %v2794 = vunpack.c.l.b16 %v2573
        %v2795 = vunpack.c.l.b16 %v2574
        %v2796 = vunpack.c.l.b16 %v2575
        %v2797 = vpack.c.b16 %v2782, %v2781
        %v2798 = vpack.c.b16 %v2784, %v2783
        %v2799 = vpack.c.b16 %v2786, %v2785
        %v2800 = vpack.c.b16 %v2788, %v2787
        %v2801 = vpack.c.b16 %v2790, %v2789
        %v2802 = vpack.c.b16 %v2792, %v2791
        %v2803 = vpack.c.b16 %v2794, %v2793
        %v2804 = vpack.c.b16 %v2796, %v2795
        %2813 = vmatprep.subr.bf16.mxu0 0
        %2814 = vmatpush1.bf16.msra.mxu0 %v2797
        %2815 = vmatprep.subr.bf16.mxu0 0
        %2816 = vmatpush1.bf16.msra.mxu0 %v2798
        %2817 = vmatprep.subr.bf16.mxu0 0
        %2818 = vmatpush1.bf16.msra.mxu0 %v2799
        %2819 = vmatprep.subr.bf16.mxu0 0
        %2820 = vmatpush1.bf16.msra.mxu0 %v2800
        %2821 = vmatprep.subr.bf16.mxu0 0
        %2822 = vmatpush1.bf16.msra.mxu0 %v2801
        %2823 = vmatprep.subr.bf16.mxu0 0
        %2824 = vmatpush1.bf16.msra.mxu0 %v2802
        %2825 = vmatprep.subr.bf16.mxu0 0
        %2826 = vmatpush1.bf16.msra.mxu0 %v2803
        %2827 = vmatprep.subr.bf16.mxu0 0
        %2828 = vmatpush1.bf16.msra.mxu0 %v2804
        %2829 = vmatprep.subr.bf16.mxu0 0
        %2830 = vmatpush1.bf16.msra.mxu0 0
        %2831 = vmatprep.subr.bf16.mxu0 0
        %2832 = vmatpush1.bf16.msra.mxu0 0
        %2833 = vmatprep.subr.bf16.mxu0 0
        %2834 = vmatpush1.bf16.msra.mxu0 0
        %2835 = vmatprep.subr.bf16.mxu0 0
        %2836 = vmatpush1.bf16.msra.mxu0 0
        %2837 = vmatprep.subr.bf16.mxu0 0
        %2838 = vmatpush1.bf16.msra.mxu0 0
        %2839 = vmatprep.subr.bf16.mxu0 0
        %2840 = vmatpush1.bf16.msra.mxu0 0
        %2841 = vmatprep.subr.bf16.mxu0 0
        %2842 = vmatpush1.bf16.msra.mxu0 0
        %2843 = vmatprep.subr.bf16.mxu0 0
        %2844 = vmatpush1.bf16.msra.mxu0 0
        %2845 = vmatprep.mubr.bf16.mxu0 0
        %2846 = vmatmul.mubr.bf16.gmra.mrb[0].mxu0 %v2764
        %v2847 = vpop.f32.mrb[0].mxu0
        %v2848 = vadd.f32 0.0, %v2847
        %v2849 = vpop.f32.mrb[0].mxu0
        %v2850 = vpop.f32.mrb[0].mxu0
        %v2851 = vpop.f32.mrb[0].mxu0
        %2852 = vdwg.mxu0
        %v2853 = vadd.f32 %v2759, %v2848
        %v2855 = vlaneseq
        %v2856 = vshrl.u32 %v2855, 7
        %v2857 = vsub.s32 0, %v2856
        %v2858 = vrot.slane %v2577, %v2857
        %v2860 = vadd.f32 %v2853, %v2858
        %v2861 = vmul.f32 %v2860, 0.1
        %v2862 = vmax.f32 %v2860, %v2861
        %s2863 = scalar_lea.vmem [#allocation12], 192
        %v2864 = vld [vmem:[%s2863] sm:$0xf]
        %v2865 = vld [vmem:[%s2863 + $0x4] sm:$0xf]
        %v2866 = vld [vmem:[%s2863 + $0x8] sm:$0xf]
        %v2867 = vld [vmem:[%s2863 + $0xc] sm:$0xf]
        %v2868 = vld [vmem:[%s2863 + $0x10] sm:$0xf]
        %v2869 = vld [vmem:[%s2863 + $0x14] sm:$0xf]
        %v2870 = vld [vmem:[%s2863 + $0x18] sm:$0xf]
        %v2871 = vld [vmem:[%s2863 + $0x1c] sm:$0xf]
        %v2872 = vld [vmem:[%s2863 + $0x20] sm:$0xf]
        %v2873 = vld [vmem:[%s2863 + $0x24] sm:$0xf]
        %v2874 = vld [vmem:[%s2863 + $0x28] sm:$0xf]
        %v2875 = vld [vmem:[%s2863 + $0x2c] sm:$0xf]
        %v2876 = vld [vmem:[%s2863 + $0x30] sm:$0xf]
        %v2877 = vld [vmem:[%s2863 + $0x34] sm:$0xf]
        %v2878 = vld [vmem:[%s2863 + $0x38] sm:$0xf]
        %v2879 = vld [vmem:[%s2863 + $0x3c] sm:$0xf]
        %s2880 = scalar_lea.vmem [#allocation12], 256
        %v2881 = vld [vmem:[%s2880] sm:$0xf]
        %v2882 = vld [vmem:[%s2880 + $0x4] sm:$0xf]
        %v2883 = vld [vmem:[%s2880 + $0x8] sm:$0xf]
        %v2884 = vld [vmem:[%s2880 + $0xc] sm:$0xf]
        %v2885 = vld [vmem:[%s2880 + $0x10] sm:$0xf]
        %v2886 = vld [vmem:[%s2880 + $0x14] sm:$0xf]
        %v2887 = vld [vmem:[%s2880 + $0x18] sm:$0xf]
        %v2888 = vld [vmem:[%s2880 + $0x1c] sm:$0xf]
        %v2889 = vld [vmem:[%s2880 + $0x20] sm:$0xf]
        %v2890 = vld [vmem:[%s2880 + $0x24] sm:$0xf]
        %v2891 = vld [vmem:[%s2880 + $0x28] sm:$0xf]
        %v2892 = vld [vmem:[%s2880 + $0x2c] sm:$0xf]
        %v2893 = vld [vmem:[%s2880 + $0x30] sm:$0xf]
        %v2894 = vld [vmem:[%s2880 + $0x34] sm:$0xf]
        %v2895 = vld [vmem:[%s2880 + $0x38] sm:$0xf]
        %v2896 = vld [vmem:[%s2880 + $0x3c] sm:$0xf]
        %s2897 = scalar_lea.vmem [#allocation12], 320
        %v2898 = vld [vmem:[%s2897] sm:$0xf]
        %v2899 = vld [vmem:[%s2897 + $0x4] sm:$0xf]
        %v2900 = vld [vmem:[%s2897 + $0x8] sm:$0xf]
        %v2901 = vld [vmem:[%s2897 + $0xc] sm:$0xf]
        %v2902 = vld [vmem:[%s2897 + $0x10] sm:$0xf]
        %v2903 = vld [vmem:[%s2897 + $0x14] sm:$0xf]
        %v2904 = vld [vmem:[%s2897 + $0x18] sm:$0xf]
        %v2905 = vld [vmem:[%s2897 + $0x1c] sm:$0xf]
        %v2906 = vld [vmem:[%s2897 + $0x20] sm:$0xf]
        %v2907 = vld [vmem:[%s2897 + $0x24] sm:$0xf]
        %v2908 = vld [vmem:[%s2897 + $0x28] sm:$0xf]
        %v2909 = vld [vmem:[%s2897 + $0x2c] sm:$0xf]
        %v2910 = vld [vmem:[%s2897 + $0x30] sm:$0xf]
        %v2911 = vld [vmem:[%s2897 + $0x34] sm:$0xf]
        %v2912 = vld [vmem:[%s2897 + $0x38] sm:$0xf]
        %v2913 = vld [vmem:[%s2897 + $0x3c] sm:$0xf]
        %s2914 = scalar_lea.vmem %s11, 1
        %v2915 = vld [vmem:[%s2914] sm:$0x1]
        %v2916 = vrot.slane %v2862, 7
        %v2917 = vsel %vm2580, %v2916, 0.0
        %v2918 = vrot.slane %v2862, 1
        %v2919 = vsel %vm2584, %v2918, 0.0
        %v2920 = vpack.c.bf16 %v2917, %v2917
        %v2921 = vpack.c.bf16 %v2862, %v2862
        %v2938 = vunpack.c.l.b16 %v2881
        %v2939 = vunpack.c.l.b16 %v2882
        %v2940 = vunpack.c.l.b16 %v2883
        %v2941 = vunpack.c.l.b16 %v2884
        %v2942 = vunpack.c.l.b16 %v2885
        %v2943 = vunpack.c.l.b16 %v2886
        %v2944 = vunpack.c.l.b16 %v2887
        %v2945 = vunpack.c.l.b16 %v2888
        %v2946 = vunpack.c.l.b16 %v2889
        %v2947 = vunpack.c.l.b16 %v2890
        %v2948 = vunpack.c.l.b16 %v2891
        %v2949 = vunpack.c.l.b16 %v2892
        %v2950 = vunpack.c.l.b16 %v2893
        %v2951 = vunpack.c.l.b16 %v2894
        %v2952 = vunpack.c.l.b16 %v2895
        %v2953 = vunpack.c.l.b16 %v2896
        %v2954 = vpack.c.b16 %v2939, %v2938
        %v2955 = vpack.c.b16 %v2941, %v2940
        %v2956 = vpack.c.b16 %v2943, %v2942
        %v2957 = vpack.c.b16 %v2945, %v2944
        %v2958 = vpack.c.b16 %v2947, %v2946
        %v2959 = vpack.c.b16 %v2949, %v2948
        %v2960 = vpack.c.b16 %v2951, %v2950
        %v2961 = vpack.c.b16 %v2953, %v2952
        %2970 = vmatprep.subr.bf16.mxu0 0
        %2971 = vmatpush1.bf16.msra.mxu0 %v2954
        %2972 = vmatprep.subr.bf16.mxu0 0
        %2973 = vmatpush1.bf16.msra.mxu0 %v2955
        %2974 = vmatprep.subr.bf16.mxu0 0
        %2975 = vmatpush1.bf16.msra.mxu0 %v2956
        %2976 = vmatprep.subr.bf16.mxu0 0
        %2977 = vmatpush1.bf16.msra.mxu0 %v2957
        %2978 = vmatprep.subr.bf16.mxu0 0
        %2979 = vmatpush1.bf16.msra.mxu0 %v2958
        %2980 = vmatprep.subr.bf16.mxu0 0
        %2981 = vmatpush1.bf16.msra.mxu0 %v2959
        %2982 = vmatprep.subr.bf16.mxu0 0
        %2983 = vmatpush1.bf16.msra.mxu0 %v2960
        %2984 = vmatprep.subr.bf16.mxu0 0
        %2985 = vmatpush1.bf16.msra.mxu0 %v2961
        %2986 = vmatprep.subr.bf16.mxu0 0
        %2987 = vmatpush1.bf16.msra.mxu0 0
        %2988 = vmatprep.subr.bf16.mxu0 0
        %2989 = vmatpush1.bf16.msra.mxu0 0
        %2990 = vmatprep.subr.bf16.mxu0 0
        %2991 = vmatpush1.bf16.msra.mxu0 0
        %2992 = vmatprep.subr.bf16.mxu0 0
        %2993 = vmatpush1.bf16.msra.mxu0 0
        %2994 = vmatprep.subr.bf16.mxu0 0
        %2995 = vmatpush1.bf16.msra.mxu0 0
        %2996 = vmatprep.subr.bf16.mxu0 0
        %2997 = vmatpush1.bf16.msra.mxu0 0
        %2998 = vmatprep.subr.bf16.mxu0 0
        %2999 = vmatpush1.bf16.msra.mxu0 0
        %3000 = vmatprep.subr.bf16.mxu0 0
        %3001 = vmatpush1.bf16.msra.mxu0 0
        %3002 = vmatprep.mubr.bf16.mxu0 0
        %3003 = vmatmul.mubr.bf16.gmra.mrb[0].mxu0 %v2921
        %v3004 = vpop.f32.mrb[0].mxu0
        %v3005 = vadd.f32 0.0, %v3004
        %v3006 = vpop.f32.mrb[0].mxu0
        %v3007 = vpop.f32.mrb[0].mxu0
        %v3008 = vpop.f32.mrb[0].mxu0
        %3009 = vdwg.mxu0
        %v3026 = vunpack.c.l.b16 %v2864
        %v3027 = vunpack.c.l.b16 %v2865
        %v3028 = vunpack.c.l.b16 %v2866
        %v3029 = vunpack.c.l.b16 %v2867
        %v3030 = vunpack.c.l.b16 %v2868
        %v3031 = vunpack.c.l.b16 %v2869
        %v3032 = vunpack.c.l.b16 %v2870
        %v3033 = vunpack.c.l.b16 %v2871
        %v3034 = vunpack.c.l.b16 %v2872
        %v3035 = vunpack.c.l.b16 %v2873
        %v3036 = vunpack.c.l.b16 %v2874
        %v3037 = vunpack.c.l.b16 %v2875
        %v3038 = vunpack.c.l.b16 %v2876
        %v3039 = vunpack.c.l.b16 %v2877
        %v3040 = vunpack.c.l.b16 %v2878
        %v3041 = vunpack.c.l.b16 %v2879
        %v3042 = vpack.c.b16 %v3027, %v3026
        %v3043 = vpack.c.b16 %v3029, %v3028
        %v3044 = vpack.c.b16 %v3031, %v3030
        %v3045 = vpack.c.b16 %v3033, %v3032
        %v3046 = vpack.c.b16 %v3035, %v3034
        %v3047 = vpack.c.b16 %v3037, %v3036
        %v3048 = vpack.c.b16 %v3039, %v3038
        %v3049 = vpack.c.b16 %v3041, %v3040
        %3058 = vmatprep.subr.bf16.mxu0 0
        %3059 = vmatpush1.bf16.msra.mxu0 %v3042
        %3060 = vmatprep.subr.bf16.mxu0 0
        %3061 = vmatpush1.bf16.msra.mxu0 %v3043
        %3062 = vmatprep.subr.bf16.mxu0 0
        %3063 = vmatpush1.bf16.msra.mxu0 %v3044
        %3064 = vmatprep.subr.bf16.mxu0 0
        %3065 = vmatpush1.bf16.msra.mxu0 %v3045
        %3066 = vmatprep.subr.bf16.mxu0 0
        %3067 = vmatpush1.bf16.msra.mxu0 %v3046
        %3068 = vmatprep.subr.bf16.mxu0 0
        %3069 = vmatpush1.bf16.msra.mxu0 %v3047
        %3070 = vmatprep.subr.bf16.mxu0 0
        %3071 = vmatpush1.bf16.msra.mxu0 %v3048
        %3072 = vmatprep.subr.bf16.mxu0 0
        %3073 = vmatpush1.bf16.msra.mxu0 %v3049
        %3074 = vmatprep.subr.bf16.mxu0 0
        %3075 = vmatpush1.bf16.msra.mxu0 0
        %3076 = vmatprep.subr.bf16.mxu0 0
        %3077 = vmatpush1.bf16.msra.mxu0 0
        %3078 = vmatprep.subr.bf16.mxu0 0
        %3079 = vmatpush1.bf16.msra.mxu0 0
        %3080 = vmatprep.subr.bf16.mxu0 0
        %3081 = vmatpush1.bf16.msra.mxu0 0
        %3082 = vmatprep.subr.bf16.mxu0 0
        %3083 = vmatpush1.bf16.msra.mxu0 0
        %3084 = vmatprep.subr.bf16.mxu0 0
        %3085 = vmatpush1.bf16.msra.mxu0 0
        %3086 = vmatprep.subr.bf16.mxu0 0
        %3087 = vmatpush1.bf16.msra.mxu0 0
        %3088 = vmatprep.subr.bf16.mxu0 0
        %3089 = vmatpush1.bf16.msra.mxu0 0
        %3090 = vmatprep.mubr.bf16.mxu0 0
        %3091 = vmatmul.mubr.bf16.gmra.mrb[0].mxu0 %v2920
        %v3092 = vpop.f32.mrb[0].mxu0
        %v3093 = vadd.f32 %v3005, %v3092
        %v3094 = vpop.f32.mrb[0].mxu0
        %v3095 = vpop.f32.mrb[0].mxu0
        %v3096 = vpop.f32.mrb[0].mxu0
        %3097 = vdwg.mxu0
        %v3098 = vpack.c.bf16 %v2919, %v2919
        %v3115 = vunpack.c.l.b16 %v2898
        %v3116 = vunpack.c.l.b16 %v2899
        %v3117 = vunpack.c.l.b16 %v2900
        %v3118 = vunpack.c.l.b16 %v2901
        %v3119 = vunpack.c.l.b16 %v2902
        %v3120 = vunpack.c.l.b16 %v2903
        %v3121 = vunpack.c.l.b16 %v2904
        %v3122 = vunpack.c.l.b16 %v2905
        %v3123 = vunpack.c.l.b16 %v2906
        %v3124 = vunpack.c.l.b16 %v2907
        %v3125 = vunpack.c.l.b16 %v2908
        %v3126 = vunpack.c.l.b16 %v2909
        %v3127 = vunpack.c.l.b16 %v2910
        %v3128 = vunpack.c.l.b16 %v2911
        %v3129 = vunpack.c.l.b16 %v2912
        %v3130 = vunpack.c.l.b16 %v2913
        %v3131 = vpack.c.b16 %v3116, %v3115
        %v3132 = vpack.c.b16 %v3118, %v3117
        %v3133 = vpack.c.b16 %v3120, %v3119
        %v3134 = vpack.c.b16 %v3122, %v3121
        %v3135 = vpack.c.b16 %v3124, %v3123
        %v3136 = vpack.c.b16 %v3126, %v3125
        %v3137 = vpack.c.b16 %v3128, %v3127
        %v3138 = vpack.c.b16 %v3130, %v3129
        %3147 = vmatprep.subr.bf16.mxu0 0
        %3148 = vmatpush1.bf16.msra.mxu0 %v3131
        %3149 = vmatprep.subr.bf16.mxu0 0
        %3150 = vmatpush1.bf16.msra.mxu0 %v3132
        %3151 = vmatprep.subr.bf16.mxu0 0
        %3152 = vmatpush1.bf16.msra.mxu0 %v3133
        %3153 = vmatprep.subr.bf16.mxu0 0
        %3154 = vmatpush1.bf16.msra.mxu0 %v3134
        %3155 = vmatprep.subr.bf16.mxu0 0
        %3156 = vmatpush1.bf16.msra.mxu0 %v3135
        %3157 = vmatprep.subr.bf16.mxu0 0
        %3158 = vmatpush1.bf16.msra.mxu0 %v3136
        %3159 = vmatprep.subr.bf16.mxu0 0
        %3160 = vmatpush1.bf16.msra.mxu0 %v3137
        %3161 = vmatprep.subr.bf16.mxu0 0
        %3162 = vmatpush1.bf16.msra.mxu0 %v3138
        %3163 = vmatprep.subr.bf16.mxu0 0
        %3164 = vmatpush1.bf16.msra.mxu0 0
        %3165 = vmatprep.subr.bf16.mxu0 0
        %3166 = vmatpush1.bf16.msra.mxu0 0
        %3167 = vmatprep.subr.bf16.mxu0 0
        %3168 = vmatpush1.bf16.msra.mxu0 0
        %3169 = vmatprep.subr.bf16.mxu0 0
        %3170 = vmatpush1.bf16.msra.mxu0 0
        %3171 = vmatprep.subr.bf16.mxu0 0
        %3172 = vmatpush1.bf16.msra.mxu0 0
        %3173 = vmatprep.subr.bf16.mxu0 0
        %3174 = vmatpush1.bf16.msra.mxu0 0
        %3175 = vmatprep.subr.bf16.mxu0 0
        %3176 = vmatpush1.bf16.msra.mxu0 0
        %3177 = vmatprep.subr.bf16.mxu0 0
        %3178 = vmatpush1.bf16.msra.mxu0 0
        %3179 = vmatprep.mubr.bf16.mxu0 0
        %3180 = vmatmul.mubr.bf16.gmra.mrb[0].mxu0 %v3098
        %v3181 = vpop.f32.mrb[0].mxu0
        %v3182 = vadd.f32 0.0, %v3181
        %v3183 = vpop.f32.mrb[0].mxu0
        %v3184 = vpop.f32.mrb[0].mxu0
        %v3185 = vpop.f32.mrb[0].mxu0
        %3186 = vdwg.mxu0
        %v3187 = vadd.f32 %v3093, %v3182
        %v3189 = vlaneseq
        %v3190 = vshrl.u32 %v3189, 7
        %v3191 = vsub.s32 0, %v3190
        %v3192 = vrot.slane %v2915, %v3191
        %v3194 = vadd.f32 %v3187, %v3192
        %v3195 = vpack.c.bf16 %v2508, %v2508
        %s3196 = scalar_lea.vmem [#allocation14], 64
        %v3197 = vld [vmem:[%s3196] sm:$0xf]
        %v3198 = vld [vmem:[%s3196 + $0x4] sm:$0xf]
        %v3199 = vld [vmem:[%s3196 + $0x8] sm:$0xf]
        %v3200 = vld [vmem:[%s3196 + $0xc] sm:$0xf]
        %v3201 = vld [vmem:[%s3196 + $0x10] sm:$0xf]
        %v3202 = vld [vmem:[%s3196 + $0x14] sm:$0xf]
        %v3203 = vld [vmem:[%s3196 + $0x18] sm:$0xf]
        %v3204 = vld [vmem:[%s3196 + $0x1c] sm:$0xf]
        %v3205 = vld [vmem:[%s3196 + $0x20] sm:$0xf]
        %v3206 = vld [vmem:[%s3196 + $0x24] sm:$0xf]
        %v3207 = vld [vmem:[%s3196 + $0x28] sm:$0xf]
        %v3208 = vld [vmem:[%s3196 + $0x2c] sm:$0xf]
        %v3209 = vld [vmem:[%s3196 + $0x30] sm:$0xf]
        %v3210 = vld [vmem:[%s3196 + $0x34] sm:$0xf]
        %v3211 = vld [vmem:[%s3196 + $0x38] sm:$0xf]
        %v3212 = vld [vmem:[%s3196 + $0x3c] sm:$0xf]
        %s3213 = scalar_lea.vmem %s13, 1
        %v3214 = vld [vmem:[%s3213] sm:$0x1]
        %v3216 = vlaneseq
        %v3217 = vshrl.u32 %v3216, 7
        %v3218 = vsub.s32 0, %v3217
        %v3219 = vrot.slane %v3214, %v3218
        %v3237 = vunpack.c.l.b16 %v3197
        %v3238 = vunpack.c.l.b16 %v3198
        %v3239 = vunpack.c.l.b16 %v3199
        %v3240 = vunpack.c.l.b16 %v3200
        %v3241 = vunpack.c.l.b16 %v3201
        %v3242 = vunpack.c.l.b16 %v3202
        %v3243 = vunpack.c.l.b16 %v3203
        %v3244 = vunpack.c.l.b16 %v3204
        %v3245 = vunpack.c.l.b16 %v3205
        %v3246 = vunpack.c.l.b16 %v3206
        %v3247 = vunpack.c.l.b16 %v3207
        %v3248 = vunpack.c.l.b16 %v3208
        %v3249 = vunpack.c.l.b16 %v3209
        %v3250 = vunpack.c.l.b16 %v3210
        %v3251 = vunpack.c.l.b16 %v3211
        %v3252 = vunpack.c.l.b16 %v3212
        %v3253 = vpack.c.b16 %v3238, %v3237
        %v3254 = vpack.c.b16 %v3240, %v3239
        %v3255 = vpack.c.b16 %v3242, %v3241
        %v3256 = vpack.c.b16 %v3244, %v3243
        %v3257 = vpack.c.b16 %v3246, %v3245
        %v3258 = vpack.c.b16 %v3248, %v3247
        %v3259 = vpack.c.b16 %v3250, %v3249
        %v3260 = vpack.c.b16 %v3252, %v3251
        %3269 = vmatprep.subr.bf16.mxu0 0
        %3270 = vmatpush1.bf16.msra.mxu0 %v3253
        %3271 = vmatprep.subr.bf16.mxu0 0
        %3272 = vmatpush1.bf16.msra.mxu0 %v3254
        %3273 = vmatprep.subr.bf16.mxu0 0
        %3274 = vmatpush1.bf16.msra.mxu0 %v3255
        %3275 = vmatprep.subr.bf16.mxu0 0
        %3276 = vmatpush1.bf16.msra.mxu0 %v3256
        %3277 = vmatprep.subr.bf16.mxu0 0
        %3278 = vmatpush1.bf16.msra.mxu0 %v3257
        %3279 = vmatprep.subr.bf16.mxu0 0
        %3280 = vmatpush1.bf16.msra.mxu0 %v3258
        %3281 = vmatprep.subr.bf16.mxu0 0
        %3282 = vmatpush1.bf16.msra.mxu0 %v3259
        %3283 = vmatprep.subr.bf16.mxu0 0
        %3284 = vmatpush1.bf16.msra.mxu0 %v3260
        %3285 = vmatprep.subr.bf16.mxu0 0
        %3286 = vmatpush1.bf16.msra.mxu0 0
        %3287 = vmatprep.subr.bf16.mxu0 0
        %3288 = vmatpush1.bf16.msra.mxu0 0
        %3289 = vmatprep.subr.bf16.mxu0 0
        %3290 = vmatpush1.bf16.msra.mxu0 0
        %3291 = vmatprep.subr.bf16.mxu0 0
        %3292 = vmatpush1.bf16.msra.mxu0 0
        %3293 = vmatprep.subr.bf16.mxu0 0
        %3294 = vmatpush1.bf16.msra.mxu0 0
        %3295 = vmatprep.subr.bf16.mxu0 0
        %3296 = vmatpush1.bf16.msra.mxu0 0
        %3297 = vmatprep.subr.bf16.mxu0 0
        %3298 = vmatpush1.bf16.msra.mxu0 0
        %3299 = vmatprep.subr.bf16.mxu0 0
        %3300 = vmatpush1.bf16.msra.mxu0 0
        %3301 = vmatprep.mubr.bf16.mxu0 0
        %3302 = vmatmul.mubr.bf16.gmra.mrb[0].mxu0 %v3195
        %v3303 = vpop.f32.mrb[0].mxu0
        %v3304 = vadd.f32 %v3219, %v3303
        %v3305 = vpop.f32.mrb[0].mxu0
        %v3306 = vpop.f32.mrb[0].mxu0
        %v3307 = vpop.f32.mrb[0].mxu0
        %3308 = vdwg.mxu0
        %v3309 = vadd.f32 %v3194, %v3304
        %3310 = vst [vmem:[#allocation2] sm:$0xff] %v3309
        %v3311 = vld [vmem:[#allocation2] ss:$2 sm:$0xf]
        %v3312 = vld [vmem:[%s1650] ss:$2 sm:$0xf]
        %v3313 = vadd.f32 %v3311, %v3312
        %v3314 = vmul.f32 %v3313, 0.5
        %vm3315 = vcmp.lt.s32.totalorder %v651, 0
        %v3316 = vsub.s32 0, %v651
        %v3317 = vsel %vm3315, %v3316, %v651
        %v3318 = vshrl.u32 %v3317, 2
        %v3319 = vand.u32 %v3317, 3
        %v3320 = vsub.s32 0, %v3319
        %v3321 = vsel %vm3315, %v3320, %v3319
        %vm3322 = vcmp.ne.s32.totalorder %v3321, 0
        %vm3323 = vcmp.lt.s32.totalorder %v3321, 0
        %vm3324 = vmand %vm3323, %vm3322
        %v3325 = vadd.s32 %v3321, 4
        %v3326 = vsel %vm3324, %v3325, %v3321
        %vm3327 = vcmp.ne.s32.totalorder %v3326, 0
        %vm3328 = vcmp.ne.s32.totalorder %v3326, 3
        %v3329 = vmul.f32 %v3314, 0.1
        %v3330 = vmax.f32 %v3314, %v3329
        %s3331 = scalar_lea.vmem [#allocation11], 384
        %v3332 = vld [vmem:[%s3331] sm:$0xf]
        %v3333 = vld [vmem:[%s3331 + $0x4] sm:$0xf]
        %v3334 = vld [vmem:[%s3331 + $0x8] sm:$0xf]
        %v3335 = vld [vmem:[%s3331 + $0xc] sm:$0xf]
        %v3336 = vld [vmem:[%s3331 + $0x10] sm:$0xf]
        %v3337 = vld [vmem:[%s3331 + $0x14] sm:$0xf]
        %v3338 = vld [vmem:[%s3331 + $0x18] sm:$0xf]
        %v3339 = vld [vmem:[%s3331 + $0x1c] sm:$0xf]
        %v3340 = vld [vmem:[%s3331 + $0x20] sm:$0xf]
        %v3341 = vld [vmem:[%s3331 + $0x24] sm:$0xf]
        %v3342 = vld [vmem:[%s3331 + $0x28] sm:$0xf]
        %v3343 = vld [vmem:[%s3331 + $0x2c] sm:$0xf]
        %v3344 = vld [vmem:[%s3331 + $0x30] sm:$0xf]
        %v3345 = vld [vmem:[%s3331 + $0x34] sm:$0xf]
        %v3346 = vld [vmem:[%s3331 + $0x38] sm:$0xf]
        %v3347 = vld [vmem:[%s3331 + $0x3c] sm:$0xf]
        %s3348 = scalar_lea.vmem [#allocation11], 448
        %v3349 = vld [vmem:[%s3348] sm:$0xf]
        %v3350 = vld [vmem:[%s3348 + $0x4] sm:$0xf]
        %v3351 = vld [vmem:[%s3348 + $0x8] sm:$0xf]
        %v3352 = vld [vmem:[%s3348 + $0xc] sm:$0xf]
        %v3353 = vld [vmem:[%s3348 + $0x10] sm:$0xf]
        %v3354 = vld [vmem:[%s3348 + $0x14] sm:$0xf]
        %v3355 = vld [vmem:[%s3348 + $0x18] sm:$0xf]
        %v3356 = vld [vmem:[%s3348 + $0x1c] sm:$0xf]
        %v3357 = vld [vmem:[%s3348 + $0x20] sm:$0xf]
        %v3358 = vld [vmem:[%s3348 + $0x24] sm:$0xf]
        %v3359 = vld [vmem:[%s3348 + $0x28] sm:$0xf]
        %v3360 = vld [vmem:[%s3348 + $0x2c] sm:$0xf]
        %v3361 = vld [vmem:[%s3348 + $0x30] sm:$0xf]
        %v3362 = vld [vmem:[%s3348 + $0x34] sm:$0xf]
        %v3363 = vld [vmem:[%s3348 + $0x38] sm:$0xf]
        %v3364 = vld [vmem:[%s3348 + $0x3c] sm:$0xf]
        %s3365 = scalar_lea.vmem [#allocation11], 512
        %v3366 = vld [vmem:[%s3365] sm:$0xf]
        %v3367 = vld [vmem:[%s3365 + $0x4] sm:$0xf]
        %v3368 = vld [vmem:[%s3365 + $0x8] sm:$0xf]
        %v3369 = vld [vmem:[%s3365 + $0xc] sm:$0xf]
        %v3370 = vld [vmem:[%s3365 + $0x10] sm:$0xf]
        %v3371 = vld [vmem:[%s3365 + $0x14] sm:$0xf]
        %v3372 = vld [vmem:[%s3365 + $0x18] sm:$0xf]
        %v3373 = vld [vmem:[%s3365 + $0x1c] sm:$0xf]
        %v3374 = vld [vmem:[%s3365 + $0x20] sm:$0xf]
        %v3375 = vld [vmem:[%s3365 + $0x24] sm:$0xf]
        %v3376 = vld [vmem:[%s3365 + $0x28] sm:$0xf]
        %v3377 = vld [vmem:[%s3365 + $0x2c] sm:$0xf]
        %v3378 = vld [vmem:[%s3365 + $0x30] sm:$0xf]
        %v3379 = vld [vmem:[%s3365 + $0x34] sm:$0xf]
        %v3380 = vld [vmem:[%s3365 + $0x38] sm:$0xf]
        %v3381 = vld [vmem:[%s3365 + $0x3c] sm:$0xf]
        %s3382 = scalar_lea.vmem %s9, 2
        %v3383 = vld [vmem:[%s3382] sm:$0x1]
        %vm3384 = vcmask 1047556
        %v3385 = vrot.slane %v3330, 4
        %v3386 = vsel %vm3384, %v3385, %v3330
        %v3387 = vrot.slane %v3386, 4
        %v3388 = vsel %vm3384, %v3387, %v3330
        %v3389 = vsel %vm3327, 1, 0
        %vm3390 = vcmp.eq.s32.totalorder %v3389, 1
        %v3392 = vrot.slane %v3388, 3
        %v3394 = vsel %vm3390, %v3392, 0.0
        %v3395 = vsel %vm3328, 1, 0
        %vm3396 = vcmp.eq.s32.totalorder %v3395, 1
        %v3397 = vrot.slane %v3388, 1
        %v3399 = vsel %vm3396, %v3397, 0.0
        %v3400 = vpack.c.bf16 %v3394, %v3394
        %v3401 = vpack.c.bf16 %v3330, %v3330
        %v3418 = vunpack.c.l.b16 %v3349
        %v3419 = vunpack.c.l.b16 %v3350
        %v3420 = vunpack.c.l.b16 %v3351
        %v3421 = vunpack.c.l.b16 %v3352
        %v3422 = vunpack.c.l.b16 %v3353
        %v3423 = vunpack.c.l.b16 %v3354
        %v3424 = vunpack.c.l.b16 %v3355
        %v3425 = vunpack.c.l.b16 %v3356
        %v3426 = vunpack.c.l.b16 %v3357
        %v3427 = vunpack.c.l.b16 %v3358
        %v3428 = vunpack.c.l.b16 %v3359
        %v3429 = vunpack.c.l.b16 %v3360
        %v3430 = vunpack.c.l.b16 %v3361
        %v3431 = vunpack.c.l.b16 %v3362
        %v3432 = vunpack.c.l.b16 %v3363
        %v3433 = vunpack.c.l.b16 %v3364
        %v3434 = vpack.c.b16 %v3419, %v3418
        %v3435 = vpack.c.b16 %v3421, %v3420
        %v3436 = vpack.c.b16 %v3423, %v3422
        %v3437 = vpack.c.b16 %v3425, %v3424
        %v3438 = vpack.c.b16 %v3427, %v3426
        %v3439 = vpack.c.b16 %v3429, %v3428
        %v3440 = vpack.c.b16 %v3431, %v3430
        %v3441 = vpack.c.b16 %v3433, %v3432
        %3450 = vmatprep.subr.bf16.mxu0 0
        %3451 = vmatpush1.bf16.msra.mxu0 %v3434
        %3452 = vmatprep.subr.bf16.mxu0 0
        %3453 = vmatpush1.bf16.msra.mxu0 %v3435
        %3454 = vmatprep.subr.bf16.mxu0 0
        %3455 = vmatpush1.bf16.msra.mxu0 %v3436
        %3456 = vmatprep.subr.bf16.mxu0 0
        %3457 = vmatpush1.bf16.msra.mxu0 %v3437
        %3458 = vmatprep.subr.bf16.mxu0 0
        %3459 = vmatpush1.bf16.msra.mxu0 %v3438
        %3460 = vmatprep.subr.bf16.mxu0 0
        %3461 = vmatpush1.bf16.msra.mxu0 %v3439
        %3462 = vmatprep.subr.bf16.mxu0 0
        %3463 = vmatpush1.bf16.msra.mxu0 %v3440
        %3464 = vmatprep.subr.bf16.mxu0 0
        %3465 = vmatpush1.bf16.msra.mxu0 %v3441
        %3466 = vmatprep.subr.bf16.mxu0 0
        %3467 = vmatpush1.bf16.msra.mxu0 0
        %3468 = vmatprep.subr.bf16.mxu0 0
        %3469 = vmatpush1.bf16.msra.mxu0 0
        %3470 = vmatprep.subr.bf16.mxu0 0
        %3471 = vmatpush1.bf16.msra.mxu0 0
        %3472 = vmatprep.subr.bf16.mxu0 0
        %3473 = vmatpush1.bf16.msra.mxu0 0
        %3474 = vmatprep.subr.bf16.mxu0 0
        %3475 = vmatpush1.bf16.msra.mxu0 0
        %3476 = vmatprep.subr.bf16.mxu0 0
        %3477 = vmatpush1.bf16.msra.mxu0 0
        %3478 = vmatprep.subr.bf16.mxu0 0
        %3479 = vmatpush1.bf16.msra.mxu0 0
        %3480 = vmatprep.subr.bf16.mxu0 0
        %3481 = vmatpush1.bf16.msra.mxu0 0
        %3482 = vmatprep.mubr.bf16.mxu0 0
        %3483 = vmatmul.mubr.bf16.gmra.mrb[0].mxu0 %v3401
        %v3484 = vpop.f32.mrb[0].mxu0
        %v3485 = vadd.f32 0.0, %v3484
        %v3486 = vpop.f32.mrb[0].mxu0
        %v3487 = vpop.f32.mrb[0].mxu0
        %v3488 = vpop.f32.mrb[0].mxu0
        %3489 = vdwg.mxu0
        %v3506 = vunpack.c.l.b16 %v3332
        %v3507 = vunpack.c.l.b16 %v3333
        %v3508 = vunpack.c.l.b16 %v3334
        %v3509 = vunpack.c.l.b16 %v3335
        %v3510 = vunpack.c.l.b16 %v3336
        %v3511 = vunpack.c.l.b16 %v3337
        %v3512 = vunpack.c.l.b16 %v3338
        %v3513 = vunpack.c.l.b16 %v3339
        %v3514 = vunpack.c.l.b16 %v3340
        %v3515 = vunpack.c.l.b16 %v3341
        %v3516 = vunpack.c.l.b16 %v3342
        %v3517 = vunpack.c.l.b16 %v3343
        %v3518 = vunpack.c.l.b16 %v3344
        %v3519 = vunpack.c.l.b16 %v3345
        %v3520 = vunpack.c.l.b16 %v3346
        %v3521 = vunpack.c.l.b16 %v3347
        %v3522 = vpack.c.b16 %v3507, %v3506
        %v3523 = vpack.c.b16 %v3509, %v3508
        %v3524 = vpack.c.b16 %v3511, %v3510
        %v3525 = vpack.c.b16 %v3513, %v3512
        %v3526 = vpack.c.b16 %v3515, %v3514
        %v3527 = vpack.c.b16 %v3517, %v3516
        %v3528 = vpack.c.b16 %v3519, %v3518
        %v3529 = vpack.c.b16 %v3521, %v3520
        %3538 = vmatprep.subr.bf16.mxu0 0
        %3539 = vmatpush1.bf16.msra.mxu0 %v3522
        %3540 = vmatprep.subr.bf16.mxu0 0
        %3541 = vmatpush1.bf16.msra.mxu0 %v3523
        %3542 = vmatprep.subr.bf16.mxu0 0
        %3543 = vmatpush1.bf16.msra.mxu0 %v3524
        %3544 = vmatprep.subr.bf16.mxu0 0
        %3545 = vmatpush1.bf16.msra.mxu0 %v3525
        %3546 = vmatprep.subr.bf16.mxu0 0
        %3547 = vmatpush1.bf16.msra.mxu0 %v3526
        %3548 = vmatprep.subr.bf16.mxu0 0
        %3549 = vmatpush1.bf16.msra.mxu0 %v3527
        %3550 = vmatprep.subr.bf16.mxu0 0
        %3551 = vmatpush1.bf16.msra.mxu0 %v3528
        %3552 = vmatprep.subr.bf16.mxu0 0
        %3553 = vmatpush1.bf16.msra.mxu0 %v3529
        %3554 = vmatprep.subr.bf16.mxu0 0
        %3555 = vmatpush1.bf16.msra.mxu0 0
        %3556 = vmatprep.subr.bf16.mxu0 0
        %3557 = vmatpush1.bf16.msra.mxu0 0
        %3558 = vmatprep.subr.bf16.mxu0 0
        %3559 = vmatpush1.bf16.msra.mxu0 0
        %3560 = vmatprep.subr.bf16.mxu0 0
        %3561 = vmatpush1.bf16.msra.mxu0 0
        %3562 = vmatprep.subr.bf16.mxu0 0
        %3563 = vmatpush1.bf16.msra.mxu0 0
        %3564 = vmatprep.subr.bf16.mxu0 0
        %3565 = vmatpush1.bf16.msra.mxu0 0
        %3566 = vmatprep.subr.bf16.mxu0 0
        %3567 = vmatpush1.bf16.msra.mxu0 0
        %3568 = vmatprep.subr.bf16.mxu0 0
        %3569 = vmatpush1.bf16.msra.mxu0 0
        %3570 = vmatprep.mubr.bf16.mxu0 0
        %3571 = vmatmul.mubr.bf16.gmra.mrb[0].mxu0 %v3400
        %v3572 = vpop.f32.mrb[0].mxu0
        %v3573 = vadd.f32 %v3485, %v3572
        %v3574 = vpop.f32.mrb[0].mxu0
        %v3575 = vpop.f32.mrb[0].mxu0
        %v3576 = vpop.f32.mrb[0].mxu0
        %3577 = vdwg.mxu0
        %v3578 = vpack.c.bf16 %v3399, %v3399
        %v3595 = vunpack.c.l.b16 %v3366
        %v3596 = vunpack.c.l.b16 %v3367
        %v3597 = vunpack.c.l.b16 %v3368
        %v3598 = vunpack.c.l.b16 %v3369
        %v3599 = vunpack.c.l.b16 %v3370
        %v3600 = vunpack.c.l.b16 %v3371
        %v3601 = vunpack.c.l.b16 %v3372
        %v3602 = vunpack.c.l.b16 %v3373
        %v3603 = vunpack.c.l.b16 %v3374
        %v3604 = vunpack.c.l.b16 %v3375
        %v3605 = vunpack.c.l.b16 %v3376
        %v3606 = vunpack.c.l.b16 %v3377
        %v3607 = vunpack.c.l.b16 %v3378
        %v3608 = vunpack.c.l.b16 %v3379
        %v3609 = vunpack.c.l.b16 %v3380
        %v3610 = vunpack.c.l.b16 %v3381
        %v3611 = vpack.c.b16 %v3596, %v3595
        %v3612 = vpack.c.b16 %v3598, %v3597
        %v3613 = vpack.c.b16 %v3600, %v3599
        %v3614 = vpack.c.b16 %v3602, %v3601
        %v3615 = vpack.c.b16 %v3604, %v3603
        %v3616 = vpack.c.b16 %v3606, %v3605
        %v3617 = vpack.c.b16 %v3608, %v3607
        %v3618 = vpack.c.b16 %v3610, %v3609
        %3627 = vmatprep.subr.bf16.mxu0 0
        %3628 = vmatpush1.bf16.msra.mxu0 %v3611
        %3629 = vmatprep.subr.bf16.mxu0 0
        %3630 = vmatpush1.bf16.msra.mxu0 %v3612
        %3631 = vmatprep.subr.bf16.mxu0 0
        %3632 = vmatpush1.bf16.msra.mxu0 %v3613
        %3633 = vmatprep.subr.bf16.mxu0 0
        %3634 = vmatpush1.bf16.msra.mxu0 %v3614
        %3635 = vmatprep.subr.bf16.mxu0 0
        %3636 = vmatpush1.bf16.msra.mxu0 %v3615
        %3637 = vmatprep.subr.bf16.mxu0 0
        %3638 = vmatpush1.bf16.msra.mxu0 %v3616
        %3639 = vmatprep.subr.bf16.mxu0 0
        %3640 = vmatpush1.bf16.msra.mxu0 %v3617
        %3641 = vmatprep.subr.bf16.mxu0 0
        %3642 = vmatpush1.bf16.msra.mxu0 %v3618
        %3643 = vmatprep.subr.bf16.mxu0 0
        %3644 = vmatpush1.bf16.msra.mxu0 0
        %3645 = vmatprep.subr.bf16.mxu0 0
        %3646 = vmatpush1.bf16.msra.mxu0 0
        %3647 = vmatprep.subr.bf16.mxu0 0
        %3648 = vmatpush1.bf16.msra.mxu0 0
        %3649 = vmatprep.subr.bf16.mxu0 0
        %3650 = vmatpush1.bf16.msra.mxu0 0
        %3651 = vmatprep.subr.bf16.mxu0 0
        %3652 = vmatpush1.bf16.msra.mxu0 0
        %3653 = vmatprep.subr.bf16.mxu0 0
        %3654 = vmatpush1.bf16.msra.mxu0 0
        %3655 = vmatprep.subr.bf16.mxu0 0
        %3656 = vmatpush1.bf16.msra.mxu0 0
        %3657 = vmatprep.subr.bf16.mxu0 0
        %3658 = vmatpush1.bf16.msra.mxu0 0
        %3659 = vmatprep.mubr.bf16.mxu0 0
        %3660 = vmatmul.mubr.bf16.gmra.mrb[0].mxu0 %v3578
        %v3661 = vpop.f32.mrb[0].mxu0
        %v3662 = vadd.f32 0.0, %v3661
        %v3663 = vpop.f32.mrb[0].mxu0
        %v3664 = vpop.f32.mrb[0].mxu0
        %v3665 = vpop.f32.mrb[0].mxu0
        %3666 = vdwg.mxu0
        %v3667 = vadd.f32 %v3573, %v3662
        %v3669 = vlaneseq
        %v3670 = vshrl.u32 %v3669, 7
        %v3671 = vsub.s32 0, %v3670
        %v3672 = vrot.slane %v3383, %v3671
        %v3674 = vadd.f32 %v3667, %v3672
        %v3675 = vmul.f32 %v3674, 0.1
        %v3676 = vmax.f32 %v3674, %v3675
        %s3677 = scalar_lea.vmem [#allocation12], 384
        %v3678 = vld [vmem:[%s3677] sm:$0xf]
        %v3679 = vld [vmem:[%s3677 + $0x4] sm:$0xf]
        %v3680 = vld [vmem:[%s3677 + $0x8] sm:$0xf]
        %v3681 = vld [vmem:[%s3677 + $0xc] sm:$0xf]
        %v3682 = vld [vmem:[%s3677 + $0x10] sm:$0xf]
        %v3683 = vld [vmem:[%s3677 + $0x14] sm:$0xf]
        %v3684 = vld [vmem:[%s3677 + $0x18] sm:$0xf]
        %v3685 = vld [vmem:[%s3677 + $0x1c] sm:$0xf]
        %v3686 = vld [vmem:[%s3677 + $0x20] sm:$0xf]
        %v3687 = vld [vmem:[%s3677 + $0x24] sm:$0xf]
        %v3688 = vld [vmem:[%s3677 + $0x28] sm:$0xf]
        %v3689 = vld [vmem:[%s3677 + $0x2c] sm:$0xf]
        %v3690 = vld [vmem:[%s3677 + $0x30] sm:$0xf]
        %v3691 = vld [vmem:[%s3677 + $0x34] sm:$0xf]
        %v3692 = vld [vmem:[%s3677 + $0x38] sm:$0xf]
        %v3693 = vld [vmem:[%s3677 + $0x3c] sm:$0xf]
        %s3694 = scalar_lea.vmem [#allocation12], 448
        %v3695 = vld [vmem:[%s3694] sm:$0xf]
        %v3696 = vld [vmem:[%s3694 + $0x4] sm:$0xf]
        %v3697 = vld [vmem:[%s3694 + $0x8] sm:$0xf]
        %v3698 = vld [vmem:[%s3694 + $0xc] sm:$0xf]
        %v3699 = vld [vmem:[%s3694 + $0x10] sm:$0xf]
        %v3700 = vld [vmem:[%s3694 + $0x14] sm:$0xf]
        %v3701 = vld [vmem:[%s3694 + $0x18] sm:$0xf]
        %v3702 = vld [vmem:[%s3694 + $0x1c] sm:$0xf]
        %v3703 = vld [vmem:[%s3694 + $0x20] sm:$0xf]
        %v3704 = vld [vmem:[%s3694 + $0x24] sm:$0xf]
        %v3705 = vld [vmem:[%s3694 + $0x28] sm:$0xf]
        %v3706 = vld [vmem:[%s3694 + $0x2c] sm:$0xf]
        %v3707 = vld [vmem:[%s3694 + $0x30] sm:$0xf]
        %v3708 = vld [vmem:[%s3694 + $0x34] sm:$0xf]
        %v3709 = vld [vmem:[%s3694 + $0x38] sm:$0xf]
        %v3710 = vld [vmem:[%s3694 + $0x3c] sm:$0xf]
        %s3711 = scalar_lea.vmem [#allocation12], 512
        %v3712 = vld [vmem:[%s3711] sm:$0xf]
        %v3713 = vld [vmem:[%s3711 + $0x4] sm:$0xf]
        %v3714 = vld [vmem:[%s3711 + $0x8] sm:$0xf]
        %v3715 = vld [vmem:[%s3711 + $0xc] sm:$0xf]
        %v3716 = vld [vmem:[%s3711 + $0x10] sm:$0xf]
        %v3717 = vld [vmem:[%s3711 + $0x14] sm:$0xf]
        %v3718 = vld [vmem:[%s3711 + $0x18] sm:$0xf]
        %v3719 = vld [vmem:[%s3711 + $0x1c] sm:$0xf]
        %v3720 = vld [vmem:[%s3711 + $0x20] sm:$0xf]
        %v3721 = vld [vmem:[%s3711 + $0x24] sm:$0xf]
        %v3722 = vld [vmem:[%s3711 + $0x28] sm:$0xf]
        %v3723 = vld [vmem:[%s3711 + $0x2c] sm:$0xf]
        %v3724 = vld [vmem:[%s3711 + $0x30] sm:$0xf]
        %v3725 = vld [vmem:[%s3711 + $0x34] sm:$0xf]
        %v3726 = vld [vmem:[%s3711 + $0x38] sm:$0xf]
        %v3727 = vld [vmem:[%s3711 + $0x3c] sm:$0xf]
        %s3728 = scalar_lea.vmem %s11, 2
        %v3729 = vld [vmem:[%s3728] sm:$0x1]
        %v3730 = vrot.slane %v3676, 4
        %v3731 = vsel %vm3384, %v3730, %v3676
        %v3732 = vrot.slane %v3731, 4
        %v3733 = vsel %vm3384, %v3732, %v3676
        %v3735 = vrot.slane %v3733, 3
        %v3737 = vsel %vm3390, %v3735, 0.0
        %v3738 = vrot.slane %v3733, 1
        %v3740 = vsel %vm3396, %v3738, 0.0
        %v3741 = vpack.c.bf16 %v3737, %v3737
        %v3742 = vpack.c.bf16 %v3676, %v3676
        %v3759 = vunpack.c.l.b16 %v3695
        %v3760 = vunpack.c.l.b16 %v3696
        %v3761 = vunpack.c.l.b16 %v3697
        %v3762 = vunpack.c.l.b16 %v3698
        %v3763 = vunpack.c.l.b16 %v3699
        %v3764 = vunpack.c.l.b16 %v3700
        %v3765 = vunpack.c.l.b16 %v3701
        %v3766 = vunpack.c.l.b16 %v3702
        %v3767 = vunpack.c.l.b16 %v3703
        %v3768 = vunpack.c.l.b16 %v3704
        %v3769 = vunpack.c.l.b16 %v3705
        %v3770 = vunpack.c.l.b16 %v3706
        %v3771 = vunpack.c.l.b16 %v3707
        %v3772 = vunpack.c.l.b16 %v3708
        %v3773 = vunpack.c.l.b16 %v3709
        %v3774 = vunpack.c.l.b16 %v3710
        %v3775 = vpack.c.b16 %v3760, %v3759
        %v3776 = vpack.c.b16 %v3762, %v3761
        %v3777 = vpack.c.b16 %v3764, %v3763
        %v3778 = vpack.c.b16 %v3766, %v3765
        %v3779 = vpack.c.b16 %v3768, %v3767
        %v3780 = vpack.c.b16 %v3770, %v3769
        %v3781 = vpack.c.b16 %v3772, %v3771
        %v3782 = vpack.c.b16 %v3774, %v3773
        %3791 = vmatprep.subr.bf16.mxu0 0
        %3792 = vmatpush1.bf16.msra.mxu0 %v3775
        %3793 = vmatprep.subr.bf16.mxu0 0
        %3794 = vmatpush1.bf16.msra.mxu0 %v3776
        %3795 = vmatprep.subr.bf16.mxu0 0
        %3796 = vmatpush1.bf16.msra.mxu0 %v3777
        %3797 = vmatprep.subr.bf16.mxu0 0
        %3798 = vmatpush1.bf16.msra.mxu0 %v3778
        %3799 = vmatprep.subr.bf16.mxu0 0
        %3800 = vmatpush1.bf16.msra.mxu0 %v3779
        %3801 = vmatprep.subr.bf16.mxu0 0
        %3802 = vmatpush1.bf16.msra.mxu0 %v3780
        %3803 = vmatprep.subr.bf16.mxu0 0
        %3804 = vmatpush1.bf16.msra.mxu0 %v3781
        %3805 = vmatprep.subr.bf16.mxu0 0
        %3806 = vmatpush1.bf16.msra.mxu0 %v3782
        %3807 = vmatprep.subr.bf16.mxu0 0
        %3808 = vmatpush1.bf16.msra.mxu0 0
        %3809 = vmatprep.subr.bf16.mxu0 0
        %3810 = vmatpush1.bf16.msra.mxu0 0
        %3811 = vmatprep.subr.bf16.mxu0 0
        %3812 = vmatpush1.bf16.msra.mxu0 0
        %3813 = vmatprep.subr.bf16.mxu0 0
        %3814 = vmatpush1.bf16.msra.mxu0 0
        %3815 = vmatprep.subr.bf16.mxu0 0
        %3816 = vmatpush1.bf16.msra.mxu0 0
        %3817 = vmatprep.subr.bf16.mxu0 0
        %3818 = vmatpush1.bf16.msra.mxu0 0
        %3819 = vmatprep.subr.bf16.mxu0 0
        %3820 = vmatpush1.bf16.msra.mxu0 0
        %3821 = vmatprep.subr.bf16.mxu0 0
        %3822 = vmatpush1.bf16.msra.mxu0 0
        %3823 = vmatprep.mubr.bf16.mxu0 0
        %3824 = vmatmul.mubr.bf16.gmra.mrb[0].mxu0 %v3742
        %v3825 = vpop.f32.mrb[0].mxu0
        %v3826 = vadd.f32 0.0, %v3825
        %v3827 = vpop.f32.mrb[0].mxu0
        %v3828 = vpop.f32.mrb[0].mxu0
        %v3829 = vpop.f32.mrb[0].mxu0
        %3830 = vdwg.mxu0
        %v3847 = vunpack.c.l.b16 %v3678
        %v3848 = vunpack.c.l.b16 %v3679
        %v3849 = vunpack.c.l.b16 %v3680
        %v3850 = vunpack.c.l.b16 %v3681
        %v3851 = vunpack.c.l.b16 %v3682
        %v3852 = vunpack.c.l.b16 %v3683
        %v3853 = vunpack.c.l.b16 %v3684
        %v3854 = vunpack.c.l.b16 %v3685
        %v3855 = vunpack.c.l.b16 %v3686
        %v3856 = vunpack.c.l.b16 %v3687
        %v3857 = vunpack.c.l.b16 %v3688
        %v3858 = vunpack.c.l.b16 %v3689
        %v3859 = vunpack.c.l.b16 %v3690
        %v3860 = vunpack.c.l.b16 %v3691
        %v3861 = vunpack.c.l.b16 %v3692
        %v3862 = vunpack.c.l.b16 %v3693
        %v3863 = vpack.c.b16 %v3848, %v3847
        %v3864 = vpack.c.b16 %v3850, %v3849
        %v3865 = vpack.c.b16 %v3852, %v3851
        %v3866 = vpack.c.b16 %v3854, %v3853
        %v3867 = vpack.c.b16 %v3856, %v3855
        %v3868 = vpack.c.b16 %v3858, %v3857
        %v3869 = vpack.c.b16 %v3860, %v3859
        %v3870 = vpack.c.b16 %v3862, %v3861
        %3879 = vmatprep.subr.bf16.mxu0 0
        %3880 = vmatpush1.bf16.msra.mxu0 %v3863
        %3881 = vmatprep.subr.bf16.mxu0 0
        %3882 = vmatpush1.bf16.msra.mxu0 %v3864
        %3883 = vmatprep.subr.bf16.mxu0 0
        %3884 = vmatpush1.bf16.msra.mxu0 %v3865
        %3885 = vmatprep.subr.bf16.mxu0 0
        %3886 = vmatpush1.bf16.msra.mxu0 %v3866
        %3887 = vmatprep.subr.bf16.mxu0 0
        %3888 = vmatpush1.bf16.msra.mxu0 %v3867
        %3889 = vmatprep.subr.bf16.mxu0 0
        %3890 = vmatpush1.bf16.msra.mxu0 %v3868
        %3891 = vmatprep.subr.bf16.mxu0 0
        %3892 = vmatpush1.bf16.msra.mxu0 %v3869
        %3893 = vmatprep.subr.bf16.mxu0 0
        %3894 = vmatpush1.bf16.msra.mxu0 %v3870
        %3895 = vmatprep.subr.bf16.mxu0 0
        %3896 = vmatpush1.bf16.msra.mxu0 0
        %3897 = vmatprep.subr.bf16.mxu0 0
        %3898 = vmatpush1.bf16.msra.mxu0 0
        %3899 = vmatprep.subr.bf16.mxu0 0
        %3900 = vmatpush1.bf16.msra.mxu0 0
        %3901 = vmatprep.subr.bf16.mxu0 0
        %3902 = vmatpush1.bf16.msra.mxu0 0
        %3903 = vmatprep.subr.bf16.mxu0 0
        %3904 = vmatpush1.bf16.msra.mxu0 0
        %3905 = vmatprep.subr.bf16.mxu0 0
        %3906 = vmatpush1.bf16.msra.mxu0 0
        %3907 = vmatprep.subr.bf16.mxu0 0
        %3908 = vmatpush1.bf16.msra.mxu0 0
        %3909 = vmatprep.subr.bf16.mxu0 0
        %3910 = vmatpush1.bf16.msra.mxu0 0
        %3911 = vmatprep.mubr.bf16.mxu0 0
        %3912 = vmatmul.mubr.bf16.gmra.mrb[0].mxu0 %v3741
        %v3913 = vpop.f32.mrb[0].mxu0
        %v3914 = vadd.f32 %v3826, %v3913
        %v3915 = vpop.f32.mrb[0].mxu0
        %v3916 = vpop.f32.mrb[0].mxu0
        %v3917 = vpop.f32.mrb[0].mxu0
        %3918 = vdwg.mxu0
        %v3919 = vpack.c.bf16 %v3740, %v3740
        %v3936 = vunpack.c.l.b16 %v3712
        %v3937 = vunpack.c.l.b16 %v3713
        %v3938 = vunpack.c.l.b16 %v3714
        %v3939 = vunpack.c.l.b16 %v3715
        %v3940 = vunpack.c.l.b16 %v3716
        %v3941 = vunpack.c.l.b16 %v3717
        %v3942 = vunpack.c.l.b16 %v3718
        %v3943 = vunpack.c.l.b16 %v3719
        %v3944 = vunpack.c.l.b16 %v3720
        %v3945 = vunpack.c.l.b16 %v3721
        %v3946 = vunpack.c.l.b16 %v3722
        %v3947 = vunpack.c.l.b16 %v3723
        %v3948 = vunpack.c.l.b16 %v3724
        %v3949 = vunpack.c.l.b16 %v3725
        %v3950 = vunpack.c.l.b16 %v3726
        %v3951 = vunpack.c.l.b16 %v3727
        %v3952 = vpack.c.b16 %v3937, %v3936
        %v3953 = vpack.c.b16 %v3939, %v3938
        %v3954 = vpack.c.b16 %v3941, %v3940
        %v3955 = vpack.c.b16 %v3943, %v3942
        %v3956 = vpack.c.b16 %v3945, %v3944
        %v3957 = vpack.c.b16 %v3947, %v3946
        %v3958 = vpack.c.b16 %v3949, %v3948
        %v3959 = vpack.c.b16 %v3951, %v3950
        %3968 = vmatprep.subr.bf16.mxu0 0
        %3969 = vmatpush1.bf16.msra.mxu0 %v3952
        %3970 = vmatprep.subr.bf16.mxu0 0
        %3971 = vmatpush1.bf16.msra.mxu0 %v3953
        %3972 = vmatprep.subr.bf16.mxu0 0
        %3973 = vmatpush1.bf16.msra.mxu0 %v3954
        %3974 = vmatprep.subr.bf16.mxu0 0
        %3975 = vmatpush1.bf16.msra.mxu0 %v3955
        %3976 = vmatprep.subr.bf16.mxu0 0
        %3977 = vmatpush1.bf16.msra.mxu0 %v3956
        %3978 = vmatprep.subr.bf16.mxu0 0
        %3979 = vmatpush1.bf16.msra.mxu0 %v3957
        %3980 = vmatprep.subr.bf16.mxu0 0
        %3981 = vmatpush1.bf16.msra.mxu0 %v3958
        %3982 = vmatprep.subr.bf16.mxu0 0
        %3983 = vmatpush1.bf16.msra.mxu0 %v3959
        %3984 = vmatprep.subr.bf16.mxu0 0
        %3985 = vmatpush1.bf16.msra.mxu0 0
        %3986 = vmatprep.subr.bf16.mxu0 0
        %3987 = vmatpush1.bf16.msra.mxu0 0
        %3988 = vmatprep.subr.bf16.mxu0 0
        %3989 = vmatpush1.bf16.msra.mxu0 0
        %3990 = vmatprep.subr.bf16.mxu0 0
        %3991 = vmatpush1.bf16.msra.mxu0 0
        %3992 = vmatprep.subr.bf16.mxu0 0
        %3993 = vmatpush1.bf16.msra.mxu0 0
        %3994 = vmatprep.subr.bf16.mxu0 0
        %3995 = vmatpush1.bf16.msra.mxu0 0
        %3996 = vmatprep.subr.bf16.mxu0 0
        %3997 = vmatpush1.bf16.msra.mxu0 0
        %3998 = vmatprep.subr.bf16.mxu0 0
        %3999 = vmatpush1.bf16.msra.mxu0 0
        %4000 = vmatprep.mubr.bf16.mxu0 0
        %4001 = vmatmul.mubr.bf16.gmra.mrb[0].mxu0 %v3919
        %v4002 = vpop.f32.mrb[0].mxu0
        %v4003 = vadd.f32 0.0, %v4002
        %v4004 = vpop.f32.mrb[0].mxu0
        %v4005 = vpop.f32.mrb[0].mxu0
        %v4006 = vpop.f32.mrb[0].mxu0
        %4007 = vdwg.mxu0
        %v4008 = vadd.f32 %v3914, %v4003
        %v4010 = vlaneseq
        %v4011 = vshrl.u32 %v4010, 7
        %v4012 = vsub.s32 0, %v4011
        %v4013 = vrot.slane %v3729, %v4012
        %v4015 = vadd.f32 %v4008, %v4013
        %v4016 = vpack.c.bf16 %v3314, %v3314
        %s4017 = scalar_lea.vmem [#allocation14], 128
        %v4018 = vld [vmem:[%s4017] sm:$0xf]
        %v4019 = vld [vmem:[%s4017 + $0x4] sm:$0xf]
        %v4020 = vld [vmem:[%s4017 + $0x8] sm:$0xf]
        %v4021 = vld [vmem:[%s4017 + $0xc] sm:$0xf]
        %v4022 = vld [vmem:[%s4017 + $0x10] sm:$0xf]
        %v4023 = vld [vmem:[%s4017 + $0x14] sm:$0xf]
        %v4024 = vld [vmem:[%s4017 + $0x18] sm:$0xf]
        %v4025 = vld [vmem:[%s4017 + $0x1c] sm:$0xf]
        %v4026 = vld [vmem:[%s4017 + $0x20] sm:$0xf]
        %v4027 = vld [vmem:[%s4017 + $0x24] sm:$0xf]
        %v4028 = vld [vmem:[%s4017 + $0x28] sm:$0xf]
        %v4029 = vld [vmem:[%s4017 + $0x2c] sm:$0xf]
        %v4030 = vld [vmem:[%s4017 + $0x30] sm:$0xf]
        %v4031 = vld [vmem:[%s4017 + $0x34] sm:$0xf]
        %v4032 = vld [vmem:[%s4017 + $0x38] sm:$0xf]
        %v4033 = vld [vmem:[%s4017 + $0x3c] sm:$0xf]
        %s4034 = scalar_lea.vmem %s13, 2
        %v4035 = vld [vmem:[%s4034] sm:$0x1]
        %v4037 = vlaneseq
        %v4038 = vshrl.u32 %v4037, 7
        %v4039 = vsub.s32 0, %v4038
        %v4040 = vrot.slane %v4035, %v4039
        %v4058 = vunpack.c.l.b16 %v4018
        %v4059 = vunpack.c.l.b16 %v4019
        %v4060 = vunpack.c.l.b16 %v4020
        %v4061 = vunpack.c.l.b16 %v4021
        %v4062 = vunpack.c.l.b16 %v4022
        %v4063 = vunpack.c.l.b16 %v4023
        %v4064 = vunpack.c.l.b16 %v4024
        %v4065 = vunpack.c.l.b16 %v4025
        %v4066 = vunpack.c.l.b16 %v4026
        %v4067 = vunpack.c.l.b16 %v4027
        %v4068 = vunpack.c.l.b16 %v4028
        %v4069 = vunpack.c.l.b16 %v4029
        %v4070 = vunpack.c.l.b16 %v4030
        %v4071 = vunpack.c.l.b16 %v4031
        %v4072 = vunpack.c.l.b16 %v4032
        %v4073 = vunpack.c.l.b16 %v4033
        %v4074 = vpack.c.b16 %v4059, %v4058
        %v4075 = vpack.c.b16 %v4061, %v4060
        %v4076 = vpack.c.b16 %v4063, %v4062
        %v4077 = vpack.c.b16 %v4065, %v4064
        %v4078 = vpack.c.b16 %v4067, %v4066
        %v4079 = vpack.c.b16 %v4069, %v4068
        %v4080 = vpack.c.b16 %v4071, %v4070
        %v4081 = vpack.c.b16 %v4073, %v4072
        %4090 = vmatprep.subr.bf16.mxu0 0
        %4091 = vmatpush1.bf16.msra.mxu0 %v4074
        %4092 = vmatprep.subr.bf16.mxu0 0
        %4093 = vmatpush1.bf16.msra.mxu0 %v4075
        %4094 = vmatprep.subr.bf16.mxu0 0
        %4095 = vmatpush1.bf16.msra.mxu0 %v4076
        %4096 = vmatprep.subr.bf16.mxu0 0
        %4097 = vmatpush1.bf16.msra.mxu0 %v4077
        %4098 = vmatprep.subr.bf16.mxu0 0
        %4099 = vmatpush1.bf16.msra.mxu0 %v4078
        %4100 = vmatprep.subr.bf16.mxu0 0
        %4101 = vmatpush1.bf16.msra.mxu0 %v4079
        %4102 = vmatprep.subr.bf16.mxu0 0
        %4103 = vmatpush1.bf16.msra.mxu0 %v4080
        %4104 = vmatprep.subr.bf16.mxu0 0
        %4105 = vmatpush1.bf16.msra.mxu0 %v4081
        %4106 = vmatprep.subr.bf16.mxu0 0
        %4107 = vmatpush1.bf16.msra.mxu0 0
        %4108 = vmatprep.subr.bf16.mxu0 0
        %4109 = vmatpush1.bf16.msra.mxu0 0
        %4110 = vmatprep.subr.bf16.mxu0 0
        %4111 = vmatpush1.bf16.msra.mxu0 0
        %4112 = vmatprep.subr.bf16.mxu0 0
        %4113 = vmatpush1.bf16.msra.mxu0 0
        %4114 = vmatprep.subr.bf16.mxu0 0
        %4115 = vmatpush1.bf16.msra.mxu0 0
        %4116 = vmatprep.subr.bf16.mxu0 0
        %4117 = vmatpush1.bf16.msra.mxu0 0
        %4118 = vmatprep.subr.bf16.mxu0 0
        %4119 = vmatpush1.bf16.msra.mxu0 0
        %4120 = vmatprep.subr.bf16.mxu0 0
        %4121 = vmatpush1.bf16.msra.mxu0 0
        %4122 = vmatprep.mubr.bf16.mxu0 0
        %4123 = vmatmul.mubr.bf16.gmra.mrb[0].mxu0 %v4016
        %v4124 = vpop.f32.mrb[0].mxu0
        %v4125 = vadd.f32 %v4040, %v4124
        %v4126 = vpop.f32.mrb[0].mxu0
        %v4127 = vpop.f32.mrb[0].mxu0
        %v4128 = vpop.f32.mrb[0].mxu0
        %4129 = vdwg.mxu0
        %v4130 = vadd.f32 %v4015, %v4125
        %4131 = vst [vmem:[#allocation2] sm:$0xf] %v4130
        %v4132 = vld [vmem:[#allocation2] ss:$2 sm:$0x3]
        %v4133 = vld [vmem:[%s1650] ss:$2 sm:$0x3]
        %v4134 = vadd.f32 %v4132, %v4133
        %v4135 = vmul.f32 %v4134, 0.5
        %v4136 = vmul.f32 %v4135, 0.1
        %v4137 = vmax.f32 %v4135, %v4136
        %v4138 = vld [vmem:[%s1] sm:$0x1]
        %vm4139 = vcmask 15360
        %v4141 = vsel %vm4139, %v4138, 0
        %vm4143 = vcmask 1041408
        %v4145 = vsel %vm4143, %v4137, 0
        %4147 = vmatprep.subr.mxu0 0.0
        %4148 = vmatpush1.msra.mxu0 %v4145
        %4149 = vmatprep.subr.mxu0 0.0
        %4150 = vmatpush1.msra.mxu0 0.0
        %4151 = vmatprep.subr.mxu0 0.0
        %4152 = vmatpush1.msra.mxu0 0.0
        %4153 = vmatprep.subr.mxu0 0.0
        %4154 = vmatpush1.msra.mxu0 0.0
        %4155 = vmatprep.subr.mxu0 0.0
        %4156 = vmatpush1.msra.mxu0 0.0
        %4157 = vmatprep.subr.mxu0 0.0
        %4158 = vmatpush1.msra.mxu0 0.0
        %4159 = vmatprep.subr.mxu0 0.0
        %4160 = vmatpush1.msra.mxu0 0.0
        %4161 = vmatprep.subr.mxu0 0.0
        %4162 = vmatpush1.msra.mxu0 0.0
        %4163 = vmatprep.subr.mxu0 0.0
        %4164 = vmatpush1.msra.mxu0 0.0
        %4165 = vmatprep.subr.mxu0 0.0
        %4166 = vmatpush1.msra.mxu0 0.0
        %4167 = vmatprep.subr.mxu0 0.0
        %4168 = vmatpush1.msra.mxu0 0.0
        %4169 = vmatprep.subr.mxu0 0.0
        %4170 = vmatpush1.msra.mxu0 0.0
        %4171 = vmatprep.subr.mxu0 0.0
        %4172 = vmatpush1.msra.mxu0 0.0
        %4173 = vmatprep.subr.mxu0 0.0
        %4174 = vmatpush1.msra.mxu0 0.0
        %4175 = vmatprep.subr.mxu0 0.0
        %4176 = vmatpush1.msra.mxu0 0.0
        %4177 = vmatprep.subr.mxu0 0.0
        %4178 = vmatpush1.msra.mxu0 0.0
        %4179 = vmatprep.subr.mxu0 0.0
        %4180 = vmatpush1.msra.mxu0 0.0
        %4181 = vmatprep.subr.mxu0 0.0
        %4182 = vmatpush1.msra.mxu0 0.0
        %4183 = vmatprep.subr.mxu0 0.0
        %4184 = vmatpush1.msra.mxu0 0.0
        %4185 = vmatprep.subr.mxu0 0.0
        %4186 = vmatpush1.msra.mxu0 0.0
        %4187 = vmatprep.subr.mxu0 0.0
        %4188 = vmatpush1.msra.mxu0 0.0
        %4189 = vmatprep.subr.mxu0 0.0
        %4190 = vmatpush1.msra.mxu0 0.0
        %4191 = vmatprep.subr.mxu0 0.0
        %4192 = vmatpush1.msra.mxu0 0.0
        %4193 = vmatprep.subr.mxu0 0.0
        %4194 = vmatpush1.msra.mxu0 0.0
        %4195 = vmatprep.subr.mxu0 0.0
        %4196 = vmatpush1.msra.mxu0 0.0
        %4197 = vmatprep.subr.mxu0 0.0
        %4198 = vmatpush1.msra.mxu0 0.0
        %4199 = vmatprep.subr.mxu0 0.0
        %4200 = vmatpush1.msra.mxu0 0.0
        %4201 = vmatprep.subr.mxu0 0.0
        %4202 = vmatpush1.msra.mxu0 0.0
        %4203 = vmatprep.subr.mxu0 0.0
        %4204 = vmatpush1.msra.mxu0 0.0
        %4205 = vmatprep.subr.mxu0 0.0
        %4206 = vmatpush1.msra.mxu0 0.0
        %4207 = vmatprep.subr.mxu0 0.0
        %4208 = vmatpush1.msra.mxu0 0.0
        %4209 = vmatprep.subr.mxu0 0.0
        %4210 = vmatpush1.msra.mxu0 0.0
        %4211 = vmatprep.mubr.f32.mxu0 0.0
        %4212 = vmatmul.mubr.f32.gmra.mrb[0].mxu0 %v4141
        %v4213 = vpop.f32.mrb[0].mxu0
        %v4214 = vadd.f32 0.0, %v4213
        %v4215 = vpop.f32.mrb[0].mxu0
        %4216 = vdwg.mxu0
        %v4217 = vld [vmem:[#allocation15] sm:$0xff]
        %v4218 = vld [vmem:[#allocation15 + $0x8] sm:$0xff]
        %v4219 = vld [vmem:[#allocation15 + $0x10] sm:$0xff]
        %v4220 = vld [vmem:[#allocation15 + $0x18] sm:$0xff]
        %v4221 = vld [vmem:[#allocation15 + $0x20] sm:$0xff]
        %v4222 = vld [vmem:[#allocation15 + $0x28] sm:$0xff]
        %v4223 = vld [vmem:[#allocation15 + $0x30] sm:$0xff]
        %v4224 = vld [vmem:[#allocation15 + $0x38] sm:$0xff]
        %v4225 = vld [vmem:[#allocation15 + $0x40] sm:$0xff]
        %v4226 = vld [vmem:[#allocation15 + $0x48] sm:$0xff]
        %v4227 = vld [vmem:[#allocation15 + $0x50] sm:$0xff]
        %v4228 = vld [vmem:[#allocation15 + $0x58] sm:$0xff]
        %v4229 = vld [vmem:[#allocation15 + $0x60] sm:$0xff]
        %v4230 = vld [vmem:[#allocation15 + $0x68] sm:$0xff]
        %v4231 = vld [vmem:[#allocation15 + $0x70] sm:$0xff]
        %v4232 = vld [vmem:[#allocation15 + $0x78] sm:$0xff]
        %v4233 = vld [vmem:[%s15] sm:$0x1]
        %4234 = vmatprep.subr.mxu0 0.0
        %4235 = vmatpush1.msra.mxu0 %v4217
        %4236 = vmatprep.subr.mxu0 0.0
        %4237 = vmatpush1.msra.mxu0 %v4218
        %4238 = vmatprep.subr.mxu0 0.0
        %4239 = vmatpush1.msra.mxu0 %v4219
        %4240 = vmatprep.subr.mxu0 0.0
        %4241 = vmatpush1.msra.mxu0 %v4220
        %4242 = vmatprep.subr.mxu0 0.0
        %4243 = vmatpush1.msra.mxu0 %v4221
        %4244 = vmatprep.subr.mxu0 0.0
        %4245 = vmatpush1.msra.mxu0 %v4222
        %4246 = vmatprep.subr.mxu0 0.0
        %4247 = vmatpush1.msra.mxu0 %v4223
        %4248 = vmatprep.subr.mxu0 0.0
        %4249 = vmatpush1.msra.mxu0 %v4224
        %4250 = vmatprep.subr.mxu0 0.0
        %4251 = vmatpush1.msra.mxu0 %v4225
        %4252 = vmatprep.subr.mxu0 0.0
        %4253 = vmatpush1.msra.mxu0 %v4226
        %4254 = vmatprep.subr.mxu0 0.0
        %4255 = vmatpush1.msra.mxu0 %v4227
        %4256 = vmatprep.subr.mxu0 0.0
        %4257 = vmatpush1.msra.mxu0 %v4228
        %4258 = vmatprep.subr.mxu0 0.0
        %4259 = vmatpush1.msra.mxu0 %v4229
        %4260 = vmatprep.subr.mxu0 0.0
        %4261 = vmatpush1.msra.mxu0 %v4230
        %4262 = vmatprep.subr.mxu0 0.0
        %4263 = vmatpush1.msra.mxu0 %v4231
        %4264 = vmatprep.subr.mxu0 0.0
        %4265 = vmatpush1.msra.mxu0 %v4232
        %4266 = vmatprep.subr.mxu0 0.0
        %4267 = vmatpush1.msra.mxu0 0.0
        %4268 = vmatprep.subr.mxu0 0.0
        %4269 = vmatpush1.msra.mxu0 0.0
        %4270 = vmatprep.subr.mxu0 0.0
        %4271 = vmatpush1.msra.mxu0 0.0
        %4272 = vmatprep.subr.mxu0 0.0
        %4273 = vmatpush1.msra.mxu0 0.0
        %4274 = vmatprep.subr.mxu0 0.0
        %4275 = vmatpush1.msra.mxu0 0.0
        %4276 = vmatprep.subr.mxu0 0.0
        %4277 = vmatpush1.msra.mxu0 0.0
        %4278 = vmatprep.subr.mxu0 0.0
        %4279 = vmatpush1.msra.mxu0 0.0
        %4280 = vmatprep.subr.mxu0 0.0
        %4281 = vmatpush1.msra.mxu0 0.0
        %4282 = vmatprep.subr.mxu0 0.0
        %4283 = vmatpush1.msra.mxu0 0.0
        %4284 = vmatprep.subr.mxu0 0.0
        %4285 = vmatpush1.msra.mxu0 0.0
        %4286 = vmatprep.subr.mxu0 0.0
        %4287 = vmatpush1.msra.mxu0 0.0
        %4288 = vmatprep.subr.mxu0 0.0
        %4289 = vmatpush1.msra.mxu0 0.0
        %4290 = vmatprep.subr.mxu0 0.0
        %4291 = vmatpush1.msra.mxu0 0.0
        %4292 = vmatprep.subr.mxu0 0.0
        %4293 = vmatpush1.msra.mxu0 0.0
        %4294 = vmatprep.subr.mxu0 0.0
        %4295 = vmatpush1.msra.mxu0 0.0
        %4296 = vmatprep.subr.mxu0 0.0
        %4297 = vmatpush1.msra.mxu0 0.0
        %4298 = vmatprep.mubr.f32.mxu0 0.0
        %4299 = vmatmul.mubr.f32.gmra.mrb[0].mxu0 %v4214
        %v4300 = vpop.f32.mrb[0].mxu0
        %v4301 = vadd.f32 %v4233, %v4300
        %v4302 = vpop.f32.mrb[0].mxu0
        %4303 = vdwg.mxu0
        %4304 = vst [vmem:[%s640] sm:$0x1] %v4301
        %s4305 = sand.u32 %s386, 1
        %s4306 = scalar_lea.sflag [#allocation5], %s4305
        %s4307 = sand.u32 %s386, 1
        %s4308 = scalar_lea.vmem [#allocation17], %s4307
        // Predicated region
        $region117: #{tpu_custom_call.1} parent=83 // pred_check
          %p4309 = pneg %p396
        $region118: #{tpu_custom_call.1} parent=83 // pred_check_branch
          %4311 = sbr.rel (%p4309) target = $region120
        $region119: #{tpu_custom_call.1} parent=83 // pred_region
          %s4313 = ssub.s32 16, 16
          %4314 = vsyncadd %s4306, %s4313
          %s4315 = smul.addr %s37, 16
          %s4316 = scalar_lea.hbm %s16, %s4315
          %s4318 = sshll.u32 %s4308, 4
          %s4319 = int_to_ptr.vmem [resolvable:$true] %s4318
          %4321 = dma.vmem_to_hbm [thread:$0]  %s4319, 16, %s4316, %s4306
        $region120: #{tpu_custom_call.1} parent=83 // pred_fallthru
          _
      $region84: #{tpu_custom_call.1} parent=5 // pred_fallthru
        _
      %p4322 = scmp.le.s32.totalorder 2, %s32
      // Predicated region
      $region121: #{tpu_custom_call.1} parent=5 // pred_check
        %p4323 = pneg %p4322
      $region122: #{tpu_custom_call.1} parent=5 // pred_check_branch
        %4325 = sbr.rel (%p4323) target = $region124
      $region123: #{tpu_custom_call.1} parent=5 // pred_region
        %s4326 = ssub.s32 %s32, 2
        // Predicated region
        $region125: #{tpu_custom_call.1} parent=123 // pred_check
          %p4327 = pneg %p402
        $region126: #{tpu_custom_call.1} parent=123 // pred_check_branch
          %4329 = sbr.rel (%p4327) target = $region128
        $region127: #{tpu_custom_call.1} parent=123 // pred_region
          %s4330 = sand.u32 %s387, 1
          %s4331 = scalar_lea.sflag [#allocation5], %s4330
          %s4332 = sand.u32 %s387, 1
          %s4333 = scalar_lea.vmem [#allocation17], %s4332
          %4334 = dma.done %s4331, 16
        $region128: #{tpu_custom_call.1} parent=123 // pred_fallthru
          _
      $region124: #{tpu_custom_call.1} parent=5 // pred_fallthru
        _
    $region6: #{tpu_custom_call.1} parent=1 // loop_footer
      %s36 = sadd.s32 1, %s32
    $region7: #{tpu_custom_call.1} parent=1 // loop_footer_branch
      %31 = sbr.rel target = $region3
    $region8: #{tpu_custom_call.1} parent=1 // loop_exit
      _
    %4335 = vsyncpa [#allocation4], 1
    %s4336 = scalar_lea.sflag [#allocation4], 1
    %4337 = vsyncpa %s4336, 1
    %4338 = vsyncpa [#allocation7], 1
    %4339 = vsyncpa [#allocation10], 1
    %4340 = vsyncpa [#allocation13], 1
    %4341 = vsyncpa [#allocation16], 1
    %4342 = vsyncpa [#allocation5], 1
    %s4343 = scalar_lea.sflag [#allocation5], 1
    %4344 = vsyncpa %s4343, 1

// kernel: tpu_custom_call.1
$region0: #{tpu_custom_call.1}
  #allocation0 [shape = 'u32[]', space=smem, size = 0x4, offset = 0x4, fixed_abs, tag = 'smem constant byte address 0x4 - core index']
  #allocation1 [shape = 'u32[144,128]{1,0:T(1,128)}', space=vmem, size = 0x12000, scoped, tag = 'internal scratch']
  #allocation2 [shape = 'f32[32,128]{1,0:T(8,128)}', space=vmem, size = 0x4000, scoped, tag = 'scratch operand']
  %s0 = inlined_call_operand.hbm [shape: bf16[2,32,128], index: 0, kind: input, shape index: {}]
  %s1 = inlined_call_operand.vmem [shape: f32[1,2], index: 1, kind: input, shape index: {}]
  %s2 = inlined_call_operand.hbm [shape: bf16[3,128,128], index: 2, kind: input, shape index: {}]
  %s3 = inlined_call_operand.vmem [shape: f32[1,128], index: 3, kind: input, shape index: {}]
  %s4 = inlined_call_operand.hbm [shape: bf16[3,128,128], index: 4, kind: input, shape index: {}]
  %s5 = inlined_call_operand.vmem [shape: f32[1,128], index: 5, kind: input, shape index: {}]
  %s6 = inlined_call_operand.hbm [shape: bf16[128,128], index: 6, kind: input, shape index: {}]
  %s7 = inlined_call_operand.vmem [shape: f32[1,128], index: 7, kind: input, shape index: {}]
  %s8 = inlined_call_operand.hbm [shape: bf16[9,128,128], index: 8, kind: input, shape index: {}]
  %s9 = inlined_call_operand.vmem [shape: f32[3,1,128], index: 9, kind: input, shape index: {}]
  %s10 = inlined_call_operand.hbm [shape: bf16[9,128,128], index: 10, kind: input, shape index: {}]
  %s11 = inlined_call_operand.vmem [shape: f32[3,1,128], index: 11, kind: input, shape index: {}]
  %s12 = inlined_call_operand.hbm [shape: bf16[3,128,128], index: 12, kind: input, shape index: {}]
  %s13 = inlined_call_operand.vmem [shape: f32[3,1,128], index: 13, kind: input, shape index: {}]
  %s14 = inlined_call_operand.hbm [shape: f32[128,128], index: 14, kind: input, shape index: {}]
  %s15 = inlined_call_operand.vmem [shape: f32[1,128], index: 15, kind: input, shape index: {}]
  %s16 = inlined_call_operand.hbm [shape: f32[2,1,128], index: 16, kind: output, shape index: {}]
  %s17 = sld [smem:[#allocation0]]
  $region129: #{tpu_custom_call.1} parent=0
    _
  %s19 = ssub.s32 1, %s17
  %s20 = scalar_select 0, %s19, %s17
  $region1: #{tpu_custom_call.1} parent=0
    #allocation3 [shape = 'u8[16384]{0}', space=vmem, size = 0x4000, scoped, tag = 'input window, operand 0']
    #allocation4 [shape = 's32[2]{0}', space=sflag, size = 0x8, scoped, tag = 'scoped memory for tpu_custom_call.1']
    #allocation5 [shape = 's32[2]{0}', space=sflag, size = 0x8, scoped, tag = 'scoped memory for tpu_custom_call.1']
    #allocation6 [shape = 'u8[98304]{0}', space=vmem, size = 0x18000, scoped, tag = 'input window, operand 2, single buffered']
    #allocation7 [shape = 's32[1]{0}', space=sflag, size = 0x4, scoped, tag = 'scoped memory for tpu_custom_call.1']
    #allocation8 [shape = 'u8[98304]{0}', space=vmem, size = 0x18000, scoped, tag = 'input window, operand 4, single buffered']
    #allocation9 [shape = 'u8[32768]{0}', space=vmem, size = 0x8000, scoped, tag = 'input window, operand 6, single buffered']
    #allocation10 [shape = 's32[1]{0}', space=sflag, size = 0x4, scoped, tag = 'scoped memory for tpu_custom_call.1']
    #allocation11 [shape = 'u8[294912]{0}', space=vmem, size = 0x48000, scoped, tag = 'input window, operand 8, single buffered']
    #allocation12 [shape = 'u8[294912]{0}', space=vmem, size = 0x48000, scoped, tag = 'input window, operand 10, single buffered']
    #allocation13 [shape = 's32[1]{0}', space=sflag, size = 0x4, scoped, tag = 'scoped memory for tpu_custom_call.1']
    #allocation14 [shape = 'u8[98304]{0}', space=vmem, size = 0x18000, scoped, tag = 'input window, operand 12, single buffered']
    #allocation15 [shape = 'u8[65536]{0}', space=vmem, size = 0x10000, scoped, tag = 'input window, operand 14, single buffered']
    #allocation16 [shape = 's32[1]{0}', space=sflag, size = 0x4, scoped, tag = 'scoped memory for tpu_custom_call.1']
    #allocation17 [shape = 'u8[1024]{0}', space=vmem, size = 0x400, scoped, tag = 'output window, operand 0']
    %21 = vsyncpa [#allocation4], 0
    %s22 = scalar_lea.sflag [#allocation4], 1
    %23 = vsyncpa %s22, 0
    %24 = vsyncpa [#allocation7], 0
    %25 = vsyncpa [#allocation10], 0
    %26 = vsyncpa [#allocation13], 0
    %27 = vsyncpa [#allocation16], 0
    %28 = vsyncpa [#allocation5], 0
    %s29 = scalar_lea.sflag [#allocation5], 1
    %30 = vsyncpa %s29, 0
    loop: start=0, step=1, limit=4
    $region2: #{tpu_custom_call.1} parent=1 // loop_pre_header
      _
    $region3: #{tpu_custom_call.1} parent=1 // loop_header
      %s32 = sphi 0, %s36
      %p33 = scmp.ge.s32.totalorder %s32, 4
      %s42 = sphi 0, %s44
      %s45 = sphi 0, %s42
      %s46 = sphi 0, %s45
      %s62 = sphi 0, %s46
      %s66 = sphi 0, %s66
      %s68 = sphi 0, %s66
      %s69 = sphi 0, %s68
      %s83 = sphi 0, %s69
      %s87 = sphi 0, %s87
      %s89 = sphi 0, %s87
      %s90 = sphi 0, %s89
      %s104 = sphi 0, %s90
      %s108 = sphi 0, %s108
      %s110 = sphi 0, %s108
      %s111 = sphi 0, %s110
      %s125 = sphi 0, %s111
      %s129 = sphi 0, %s129
      %s131 = sphi 0, %s129
      %s132 = sphi 0, %s131
      %s146 = sphi 0, %s132
      %s150 = sphi 0, %s150
      %s152 = sphi 0, %s150
      %s153 = sphi 0, %s152
      %s167 = sphi 0, %s153
      %s171 = sphi 0, %s171
      %s173 = sphi 0, %s171
      %s174 = sphi 0, %s173
      %s188 = sphi 0, %s174
      %s192 = sphi 0, %s192
      %s194 = sphi 0, %s192
      %s195 = sphi 0, %s194
      %s209 = sphi 0, %s195
      %s213 = sphi 0, %s213
      %s215 = sphi 0, %s213
      %s216 = sphi 0, %s215
      %s230 = sphi 0, %s216
      %s234 = sphi 0, %s234
      %s236 = sphi 0, %s234
      %s237 = sphi 0, %s236
      %s251 = sphi 0, %s237
      %s255 = sphi 0, %s255
      %s257 = sphi 0, %s255
      %s258 = sphi 0, %s257
      %s272 = sphi 0, %s258
      %s276 = sphi 0, %s276
      %s278 = sphi 0, %s276
      %s279 = sphi 0, %s278
      %s293 = sphi 0, %s279
      %s297 = sphi 0, %s297
      %s299 = sphi 0, %s297
      %s300 = sphi 0, %s299
      %s314 = sphi 0, %s300
      %s318 = sphi 0, %s318
      %s320 = sphi 0, %s318
      %s321 = sphi 0, %s320
      %s335 = sphi 0, %s321
      %s339 = sphi 0, %s339
      %s341 = sphi 0, %s339
      %s342 = sphi 0, %s341
      %s356 = sphi 0, %s342
      %s360 = sphi 0, %s360
      %s362 = sphi 0, %s360
      %s363 = sphi 0, %s362
      %s377 = sphi 0, %s363
      %s383 = sphi 0, %s385
      %s386 = sphi 0, %s383
      %s387 = sphi 0, %s386
      %s403 = sphi 0, %s387
    $region4: #{tpu_custom_call.1} parent=1 // loop_header_branch
      %35 = sbr.rel (%p33) target = $region8
    $region5: #{tpu_custom_call.1} parent=1 // loop_body
      %s37 = ssub.s32 %s32, 1
      %s38 = ssub.s32 %s32, 2
      %s39 = sadd.s32 %s32, 1
      %s40 = ssub.s32 %s32, %s39
      %p41 = scmp.eq.s32.totalorder %s40, 0
      %s43 = sadd.s32 %s42, 1
      %s44 = scalar_select %p41, %s42, %s43
      %p47 = pneg %p41
      %p48 = scmp.eq.s32.totalorder %s32, 1
      %p49 = por %p47, %p48
      %p50 = scmp.ne.s32.totalorder %s42, %s45
      %p51 = scmp.eq.s32.totalorder %s32, 0
      %p52 = por %p50, %p51
      %p53 = scmp.ne.s32.totalorder %s42, %s45
      %p54 = scmp.eq.s32.totalorder %s37, 1
      %p55 = por %p53, %p54
      %p56 = scmp.ne.s32.totalorder %s45, %s46
      %p57 = scmp.eq.s32.totalorder %s37, 0
      %p58 = por %p56, %p57
      %p59 = scmp.ne.s32.totalorder %s45, %s46
      %p60 = scmp.eq.s32.totalorder %s38, 1
      %p61 = por %p59, %p60
      %p63 = scmp.ne.s32.totalorder %s46, %s62
      %p64 = scmp.eq.s32.totalorder %s38, 0
      %p65 = por %p63, %p64
      %s67 = sadd.s32 %s66, 1
      %p70 = scmp.eq.s32.totalorder %s32, 1
      %p71 = scmp.ne.s32.totalorder %s66, %s68
      %p72 = scmp.eq.s32.totalorder %s32, 0
      %p73 = por %p71, %p72
      %p74 = scmp.ne.s32.totalorder %s66, %s68
      %p75 = scmp.eq.s32.totalorder %s37, 1
      %p76 = por %p74, %p75
      %p77 = scmp.ne.s32.totalorder %s68, %s69
      %p78 = scmp.eq.s32.totalorder %s37, 0
      %p79 = por %p77, %p78
      %p80 = scmp.ne.s32.totalorder %s68, %s69
      %p81 = scmp.eq.s32.totalorder %s38, 1
      %p82 = por %p80, %p81
      %p84 = scmp.ne.s32.totalorder %s69, %s83
      %p85 = scmp.eq.s32.totalorder %s38, 0
      %p86 = por %p84, %p85
      %s88 = sadd.s32 %s87, 1
      %p91 = scmp.eq.s32.totalorder %s32, 1
      %p92 = scmp.ne.s32.totalorder %s87, %s89
      %p93 = scmp.eq.s32.totalorder %s32, 0
      %p94 = por %p92, %p93
      %p95 = scmp.ne.s32.totalorder %s87, %s89
      %p96 = scmp.eq.s32.totalorder %s37, 1
      %p97 = por %p95, %p96
      %p98 = scmp.ne.s32.totalorder %s89, %s90
      %p99 = scmp.eq.s32.totalorder %s37, 0
      %p100 = por %p98, %p99
      %p101 = scmp.ne.s32.totalorder %s89, %s90
      %p102 = scmp.eq.s32.totalorder %s38, 1
      %p103 = por %p101, %p102
      %p105 = scmp.ne.s32.totalorder %s90, %s104
      %p106 = scmp.eq.s32.totalorder %s38, 0
      %p107 = por %p105, %p106
      %s109 = sadd.s32 %s108, 1
      %p112 = scmp.eq.s32.totalorder %s32, 1
      %p113 = scmp.ne.s32.totalorder %s108, %s110
      %p114 = scmp.eq.s32.totalorder %s32, 0
      %p115 = por %p113, %p114
      %p116 = scmp.ne.s32.totalorder %s108, %s110
      %p117 = scmp.eq.s32.totalorder %s37, 1
      %p118 = por %p116, %p117
      %p119 = scmp.ne.s32.totalorder %s110, %s111
      %p120 = scmp.eq.s32.totalorder %s37, 0
      %p121 = por %p119, %p120
      %p122 = scmp.ne.s32.totalorder %s110, %s111
      %p123 = scmp.eq.s32.totalorder %s38, 1
      %p124 = por %p122, %p123
      %p126 = scmp.ne.s32.totalorder %s111, %s125
      %p127 = scmp.eq.s32.totalorder %s38, 0
      %p128 = por %p126, %p127
      %s130 = sadd.s32 %s129, 1
      %p133 = scmp.eq.s32.totalorder %s32, 1
      %p134 = scmp.ne.s32.totalorder %s129, %s131
      %p135 = scmp.eq.s32.totalorder %s32, 0
      %p136 = por %p134, %p135
      %p137 = scmp.ne.s32.totalorder %s129, %s131
      %p138 = scmp.eq.s32.totalorder %s37, 1
      %p139 = por %p137, %p138
      %p140 = scmp.ne.s32.totalorder %s131, %s132
      %p141 = scmp.eq.s32.totalorder %s37, 0
      %p142 = por %p140, %p141
      %p143 = scmp.ne.s32.totalorder %s131, %s132
      %p144 = scmp.eq.s32.totalorder %s38, 1
      %p145 = por %p143, %p144
      %p147 = scmp.ne.s32.totalorder %s132, %s146
      %p148 = scmp.eq.s32.totalorder %s38, 0
      %p149 = por %p147, %p148
      %s151 = sadd.s32 %s150, 1
      %p154 = scmp.eq.s32.totalorder %s32, 1
      %p155 = scmp.ne.s32.totalorder %s150, %s152
      %p156 = scmp.eq.s32.totalorder %s32, 0
      %p157 = por %p155, %p156
      %p158 = scmp.ne.s32.totalorder %s150, %s152
      %p159 = scmp.eq.s32.totalorder %s37, 1
      %p160 = por %p158, %p159
      %p161 = scmp.ne.s32.totalorder %s152, %s153
      %p162 = scmp.eq.s32.totalorder %s37, 0
      %p163 = por %p161, %p162
      %p164 = scmp.ne.s32.totalorder %s152, %s153
      %p165 = scmp.eq.s32.totalorder %s38, 1
      %p166 = por %p164, %p165
      %p168 = scmp.ne.s32.totalorder %s153, %s167
      %p169 = scmp.eq.s32.totalorder %s38, 0
      %p170 = por %p168, %p169
      %s172 = sadd.s32 %s171, 1
      %p175 = scmp.eq.s32.totalorder %s32, 1
      %p176 = scmp.ne.s32.totalorder %s171, %s173
      %p177 = scmp.eq.s32.totalorder %s32, 0
      %p178 = por %p176, %p177
      %p179 = scmp.ne.s32.totalorder %s171, %s173
      %p180 = scmp.eq.s32.totalorder %s37, 1
      %p181 = por %p179, %p180
      %p182 = scmp.ne.s32.totalorder %s173, %s174
      %p183 = scmp.eq.s32.totalorder %s37, 0
      %p184 = por %p182, %p183
      %p185 = scmp.ne.s32.totalorder %s173, %s174
      %p186 = scmp.eq.s32.totalorder %s38, 1
      %p187 = por %p185, %p186
      %p189 = scmp.ne.s32.totalorder %s174, %s188
      %p190 = scmp.eq.s32.totalorder %s38, 0
      %p191 = por %p189, %p190
      %s193 = sadd.s32 %s192, 1
      %p196 = scmp.eq.s32.totalorder %s32, 1
      %p197 = scmp.ne.s32.totalorder %s192, %s194
      %p198 = scmp.eq.s32.totalorder %s32, 0
      %p199 = por %p197, %p198
      %p200 = scmp.ne.s32.totalorder %s192, %s194
      %p201 = scmp.eq.s32.totalorder %s37, 1
      %p202 = por %p200, %p201
      %p203 = scmp.ne.s32.totalorder %s194, %s195
      %p204 = scmp.eq.s32.totalorder %s37, 0
      %p205 = por %p203, %p204
      %p206 = scmp.ne.s32.totalorder %s194, %s195
      %p207 = scmp.eq.s32.totalorder %s38, 1
      %p208 = por %p206, %p207
      %p210 = scmp.ne.s32.totalorder %s195, %s209
      %p211 = scmp.eq.s32.totalorder %s38, 0
      %p212 = por %p210, %p211
      %s214 = sadd.s32 %s213, 1
      %p217 = scmp.eq.s32.totalorder %s32, 1
      %p218 = scmp.ne.s32.totalorder %s213, %s215
      %p219 = scmp.eq.s32.totalorder %s32, 0
      %p220 = por %p218, %p219
      %p221 = scmp.ne.s32.totalorder %s213, %s215
      %p222 = scmp.eq.s32.totalorder %s37, 1
      %p223 = por %p221, %p222
      %p224 = scmp.ne.s32.totalorder %s215, %s216
      %p225 = scmp.eq.s32.totalorder %s37, 0
      %p226 = por %p224, %p225
      %p227 = scmp.ne.s32.totalorder %s215, %s216
      %p228 = scmp.eq.s32.totalorder %s38, 1
      %p229 = por %p227, %p228
      %p231 = scmp.ne.s32.totalorder %s216, %s230
      %p232 = scmp.eq.s32.totalorder %s38, 0
      %p233 = por %p231, %p232
      %s235 = sadd.s32 %s234, 1
      %p238 = scmp.eq.s32.totalorder %s32, 1
      %p239 = scmp.ne.s32.totalorder %s234, %s236
      %p240 = scmp.eq.s32.totalorder %s32, 0
      %p241 = por %p239, %p240
      %p242 = scmp.ne.s32.totalorder %s234, %s236
      %p243 = scmp.eq.s32.totalorder %s37, 1
      %p244 = por %p242, %p243
      %p245 = scmp.ne.s32.totalorder %s236, %s237
      %p246 = scmp.eq.s32.totalorder %s37, 0
      %p247 = por %p245, %p246
      %p248 = scmp.ne.s32.totalorder %s236, %s237
      %p249 = scmp.eq.s32.totalorder %s38, 1
      %p250 = por %p248, %p249
      %p252 = scmp.ne.s32.totalorder %s237, %s251
      %p253 = scmp.eq.s32.totalorder %s38, 0
      %p254 = por %p252, %p253
      %s256 = sadd.s32 %s255, 1
      %p259 = scmp.eq.s32.totalorder %s32, 1
      %p260 = scmp.ne.s32.totalorder %s255, %s257
      %p261 = scmp.eq.s32.totalorder %s32, 0
      %p262 = por %p260, %p261
      %p263 = scmp.ne.s32.totalorder %s255, %s257
      %p264 = scmp.eq.s32.totalorder %s37, 1
      %p265 = por %p263, %p264
      %p266 = scmp.ne.s32.totalorder %s257, %s258
      %p267 = scmp.eq.s32.totalorder %s37, 0
      %p268 = por %p266, %p267
      %p269 = scmp.ne.s32.totalorder %s257, %s258
      %p270 = scmp.eq.s32.totalorder %s38, 1
      %p271 = por %p269, %p270
      %p273 = scmp.ne.s32.totalorder %s258, %s272
      %p274 = scmp.eq.s32.totalorder %s38, 0
      %p275 = por %p273, %p274
      %s277 = sadd.s32 %s276, 1
      %p280 = scmp.eq.s32.totalorder %s32, 1
      %p281 = scmp.ne.s32.totalorder %s276, %s278
      %p282 = scmp.eq.s32.totalorder %s32, 0
      %p283 = por %p281, %p282
      %p284 = scmp.ne.s32.totalorder %s276, %s278
      %p285 = scmp.eq.s32.totalorder %s37, 1
      %p286 = por %p284, %p285
      %p287 = scmp.ne.s32.totalorder %s278, %s279
      %p288 = scmp.eq.s32.totalorder %s37, 0
      %p289 = por %p287, %p288
      %p290 = scmp.ne.s32.totalorder %s278, %s279
      %p291 = scmp.eq.s32.totalorder %s38, 1
      %p292 = por %p290, %p291
      %p294 = scmp.ne.s32.totalorder %s279, %s293
      %p295 = scmp.eq.s32.totalorder %s38, 0
      %p296 = por %p294, %p295
      %s298 = sadd.s32 %s297, 1
      %p301 = scmp.eq.s32.totalorder %s32, 1
      %p302 = scmp.ne.s32.totalorder %s297, %s299
      %p303 = scmp.eq.s32.totalorder %s32, 0
      %p304 = por %p302, %p303
      %p305 = scmp.ne.s32.totalorder %s297, %s299
      %p306 = scmp.eq.s32.totalorder %s37, 1
      %p307 = por %p305, %p306
      %p308 = scmp.ne.s32.totalorder %s299, %s300
      %p309 = scmp.eq.s32.totalorder %s37, 0
      %p310 = por %p308, %p309
      %p311 = scmp.ne.s32.totalorder %s299, %s300
      %p312 = scmp.eq.s32.totalorder %s38, 1
      %p313 = por %p311, %p312
      %p315 = scmp.ne.s32.totalorder %s300, %s314
      %p316 = scmp.eq.s32.totalorder %s38, 0
      %p317 = por %p315, %p316
      %s319 = sadd.s32 %s318, 1
      %p322 = scmp.eq.s32.totalorder %s32, 1
      %p323 = scmp.ne.s32.totalorder %s318, %s320
      %p324 = scmp.eq.s32.totalorder %s32, 0
      %p325 = por %p323, %p324
      %p326 = scmp.ne.s32.totalorder %s318, %s320
      %p327 = scmp.eq.s32.totalorder %s37, 1
      %p328 = por %p326, %p327
      %p329 = scmp.ne.s32.totalorder %s320, %s321
      %p330 = scmp.eq.s32.totalorder %s37, 0
      %p331 = por %p329, %p330
      %p332 = scmp.ne.s32.totalorder %s320, %s321
      %p333 = scmp.eq.s32.totalorder %s38, 1
      %p334 = por %p332, %p333
      %p336 = scmp.ne.s32.totalorder %s321, %s335
      %p337 = scmp.eq.s32.totalorder %s38, 0
      %p338 = por %p336, %p337
      %s340 = sadd.s32 %s339, 1
      %p343 = scmp.eq.s32.totalorder %s32, 1
      %p344 = scmp.ne.s32.totalorder %s339, %s341
      %p345 = scmp.eq.s32.totalorder %s32, 0
      %p346 = por %p344, %p345
      %p347 = scmp.ne.s32.totalorder %s339, %s341
      %p348 = scmp.eq.s32.totalorder %s37, 1
      %p349 = por %p347, %p348
      %p350 = scmp.ne.s32.totalorder %s341, %s342
      %p351 = scmp.eq.s32.totalorder %s37, 0
      %p352 = por %p350, %p351
      %p353 = scmp.ne.s32.totalorder %s341, %s342
      %p354 = scmp.eq.s32.totalorder %s38, 1
      %p355 = por %p353, %p354
      %p357 = scmp.ne.s32.totalorder %s342, %s356
      %p358 = scmp.eq.s32.totalorder %s38, 0
      %p359 = por %p357, %p358
      %s361 = sadd.s32 %s360, 1
      %p364 = scmp.eq.s32.totalorder %s32, 1
      %p365 = scmp.ne.s32.totalorder %s360, %s362
      %p366 = scmp.eq.s32.totalorder %s32, 0
      %p367 = por %p365, %p366
      %p368 = scmp.ne.s32.totalorder %s360, %s362
      %p369 = scmp.eq.s32.totalorder %s37, 1
      %p370 = por %p368, %p369
      %p371 = scmp.ne.s32.totalorder %s362, %s363
      %p372 = scmp.eq.s32.totalorder %s37, 0
      %p373 = por %p371, %p372
      %p374 = scmp.ne.s32.totalorder %s362, %s363
      %p375 = scmp.eq.s32.totalorder %s38, 1
      %p376 = por %p374, %p375
      %p378 = scmp.ne.s32.totalorder %s363, %s377
      %p379 = scmp.eq.s32.totalorder %s38, 0
      %p380 = por %p378, %p379
      %s381 = ssub.s32 %s32, %s39
      %p382 = scmp.eq.s32.totalorder %s381, 0
      %s384 = sadd.s32 %s383, 1
      %s385 = scalar_select %p382, %s383, %s384
      %p388 = pneg %p382
      %p389 = scmp.eq.s32.totalorder %s32, 1
      %p390 = por %p388, %p389
      %p391 = scmp.ne.s32.totalorder %s383, %s386
      %p392 = scmp.eq.s32.totalorder %s32, 0
      %p393 = por %p391, %p392
      %p394 = scmp.ne.s32.totalorder %s383, %s386
      %p395 = scmp.eq.s32.totalorder %s37, 1
      %p396 = por %p394, %p395
      %p397 = scmp.ne.s32.totalorder %s386, %s387
      %p398 = scmp.eq.s32.totalorder %s37, 0
      %p399 = por %p397, %p398
      %p400 = scmp.ne.s32.totalorder %s386, %s387
      %p401 = scmp.eq.s32.totalorder %s38, 1
      %p402 = por %p400, %p401
      %p404 = scmp.ne.s32.totalorder %s387, %s403
      %p405 = scmp.eq.s32.totalorder %s38, 0
      %p406 = por %p404, %p405
      %p407 = scmp.le.s32.totalorder 1, %s32
      %p408 = scmp.lt.s32.totalorder %s32, 3
      %p409 = pnand %p407, %p408
      %p410 = pneg %p409
      // Predicated region
      $region9: #{tpu_custom_call.1} parent=5 // pred_check
        _
      $region10: #{tpu_custom_call.1} parent=5 // pred_check_branch
        %412 = sbr.rel (%p409) target = $region12
      $region11: #{tpu_custom_call.1} parent=5 // pred_region
        %s413 = ssub.s32 %s32, 1
        // Predicated region
        $region13: #{tpu_custom_call.1} parent=11 // pred_check
          %p414 = pneg %p79
        $region14: #{tpu_custom_call.1} parent=11 // pred_check_branch
          %416 = sbr.rel (%p414) target = $region16
        $region15: #{tpu_custom_call.1} parent=11 // pred_region
          _
        $region16: #{tpu_custom_call.1} parent=11 // pred_fallthru
          _
        // Predicated region
        $region17: #{tpu_custom_call.1} parent=11 // pred_check
          %p417 = pneg %p100
        $region18: #{tpu_custom_call.1} parent=11 // pred_check_branch
          %419 = sbr.rel (%p417) target = $region20
        $region19: #{tpu_custom_call.1} parent=11 // pred_region
          %s421 = ssub.s32 3072, 3072
          %422 = vsyncadd [#allocation7], %s421
          %s423 = sshll.u32 [#allocation6], 4
          %s424 = int_to_ptr.vmem [resolvable:$true] %s423
          %429 = dma.hbm_to_vmem [thread:$0]  %s2, 3072, %s424, [#allocation7], 64, 64, 4
        $region20: #{tpu_custom_call.1} parent=11 // pred_fallthru
          _
        // Predicated region
        $region21: #{tpu_custom_call.1} parent=11 // pred_check
          %p430 = pneg %p121
        $region22: #{tpu_custom_call.1} parent=11 // pred_check_branch
          %432 = sbr.rel (%p430) target = $region24
        $region23: #{tpu_custom_call.1} parent=11 // pred_region
          _
        $region24: #{tpu_custom_call.1} parent=11 // pred_fallthru
          _
        // Predicated region
        $region25: #{tpu_custom_call.1} parent=11 // pred_check
          %p433 = pneg %p142
        $region26: #{tpu_custom_call.1} parent=11 // pred_check_branch
          %435 = sbr.rel (%p433) target = $region28
        $region27: #{tpu_custom_call.1} parent=11 // pred_region
          %s437 = ssub.s32 3072, 3072
          %438 = vsyncadd [#allocation7], %s437
          %s439 = sshll.u32 [#allocation8], 4
          %s440 = int_to_ptr.vmem [resolvable:$true] %s439
          %445 = dma.hbm_to_vmem [thread:$0]  %s4, 3072, %s440, [#allocation7], 64, 64, 4
        $region28: #{tpu_custom_call.1} parent=11 // pred_fallthru
          _
        // Predicated region
        $region29: #{tpu_custom_call.1} parent=11 // pred_check
          %p446 = pneg %p163
        $region30: #{tpu_custom_call.1} parent=11 // pred_check_branch
          %448 = sbr.rel (%p446) target = $region32
        $region31: #{tpu_custom_call.1} parent=11 // pred_region
          _
        $region32: #{tpu_custom_call.1} parent=11 // pred_fallthru
          _
        // Predicated region
        $region33: #{tpu_custom_call.1} parent=11 // pred_check
          %p449 = pneg %p184
        $region34: #{tpu_custom_call.1} parent=11 // pred_check_branch
          %451 = sbr.rel (%p449) target = $region36
        $region35: #{tpu_custom_call.1} parent=11 // pred_region
          %s453 = ssub.s32 1024, 1024
          %454 = vsyncadd [#allocation10], %s453
          %s455 = sshll.u32 [#allocation9], 4
          %s456 = int_to_ptr.vmem [resolvable:$true] %s455
          %461 = dma.hbm_to_vmem [thread:$0]  %s6, 1024, %s456, [#allocation10], 64, 64, 4
        $region36: #{tpu_custom_call.1} parent=11 // pred_fallthru
          _
        // Predicated region
        $region37: #{tpu_custom_call.1} parent=11 // pred_check
          %p462 = pneg %p205
        $region38: #{tpu_custom_call.1} parent=11 // pred_check_branch
          %464 = sbr.rel (%p462) target = $region40
        $region39: #{tpu_custom_call.1} parent=11 // pred_region
          _
        $region40: #{tpu_custom_call.1} parent=11 // pred_fallthru
          _
        // Predicated region
        $region41: #{tpu_custom_call.1} parent=11 // pred_check
          %p465 = pneg %p226
        $region42: #{tpu_custom_call.1} parent=11 // pred_check_branch
          %467 = sbr.rel (%p465) target = $region44
        $region43: #{tpu_custom_call.1} parent=11 // pred_region
          %s469 = ssub.s32 9216, 9216
          %470 = vsyncadd [#allocation10], %s469
          %s471 = sshll.u32 [#allocation11], 4
          %s472 = int_to_ptr.vmem [resolvable:$true] %s471
          %477 = dma.hbm_to_vmem [thread:$0]  %s8, 9216, %s472, [#allocation10], 64, 64, 4
        $region44: #{tpu_custom_call.1} parent=11 // pred_fallthru
          _
        // Predicated region
        $region45: #{tpu_custom_call.1} parent=11 // pred_check
          %p478 = pneg %p247
        $region46: #{tpu_custom_call.1} parent=11 // pred_check_branch
          %480 = sbr.rel (%p478) target = $region48
        $region47: #{tpu_custom_call.1} parent=11 // pred_region
          _
        $region48: #{tpu_custom_call.1} parent=11 // pred_fallthru
          _
        // Predicated region
        $region49: #{tpu_custom_call.1} parent=11 // pred_check
          %p481 = pneg %p268
        $region50: #{tpu_custom_call.1} parent=11 // pred_check_branch
          %483 = sbr.rel (%p481) target = $region52
        $region51: #{tpu_custom_call.1} parent=11 // pred_region
          %s485 = ssub.s32 9216, 9216
          %486 = vsyncadd [#allocation13], %s485
          %s487 = sshll.u32 [#allocation12], 4
          %s488 = int_to_ptr.vmem [resolvable:$true] %s487
          %493 = dma.hbm_to_vmem [thread:$0]  %s10, 9216, %s488, [#allocation13], 64, 64, 4
        $region52: #{tpu_custom_call.1} parent=11 // pred_fallthru
          _
        // Predicated region
        $region53: #{tpu_custom_call.1} parent=11 // pred_check
          %p494 = pneg %p289
        $region54: #{tpu_custom_call.1} parent=11 // pred_check_branch
          %496 = sbr.rel (%p494) target = $region56
        $region55: #{tpu_custom_call.1} parent=11 // pred_region
          _
        $region56: #{tpu_custom_call.1} parent=11 // pred_fallthru
          _
        // Predicated region
        $region57: #{tpu_custom_call.1} parent=11 // pred_check
          %p497 = pneg %p310
        $region58: #{tpu_custom_call.1} parent=11 // pred_check_branch
          %499 = sbr.rel (%p497) target = $region60
        $region59: #{tpu_custom_call.1} parent=11 // pred_region
          %s501 = ssub.s32 3072, 3072
          %502 = vsyncadd [#allocation13], %s501
          %s503 = sshll.u32 [#allocation14], 4
          %s504 = int_to_ptr.vmem [resolvable:$true] %s503
          %509 = dma.hbm_to_vmem [thread:$0]  %s12, 3072, %s504, [#allocation13], 64, 64, 4
        $region60: #{tpu_custom_call.1} parent=11 // pred_fallthru
          _
        // Predicated region
        $region61: #{tpu_custom_call.1} parent=11 // pred_check
          %p510 = pneg %p331
        $region62: #{tpu_custom_call.1} parent=11 // pred_check_branch
          %512 = sbr.rel (%p510) target = $region64
        $region63: #{tpu_custom_call.1} parent=11 // pred_region
          _
        $region64: #{tpu_custom_call.1} parent=11 // pred_fallthru
          _
        // Predicated region
        $region65: #{tpu_custom_call.1} parent=11 // pred_check
          %p513 = pneg %p352
        $region66: #{tpu_custom_call.1} parent=11 // pred_check_branch
          %515 = sbr.rel (%p513) target = $region68
        $region67: #{tpu_custom_call.1} parent=11 // pred_region
          %s517 = ssub.s32 2048, 2048
          %518 = vsyncadd [#allocation16], %s517
          %s519 = sshll.u32 [#allocation15], 4
          %s520 = int_to_ptr.vmem [resolvable:$true] %s519
          %525 = dma.hbm_to_vmem [thread:$0]  %s14, 2048, %s520, [#allocation16], 128, 128, 8
        $region68: #{tpu_custom_call.1} parent=11 // pred_fallthru
          _
        // Predicated region
        $region69: #{tpu_custom_call.1} parent=11 // pred_check
          %p526 = pneg %p373
        $region70: #{tpu_custom_call.1} parent=11 // pred_check_branch
          %528 = sbr.rel (%p526) target = $region72
        $region71: #{tpu_custom_call.1} parent=11 // pred_region
          _
        $region72: #{tpu_custom_call.1} parent=11 // pred_fallthru
          _
      $region12: #{tpu_custom_call.1} parent=5 // pred_fallthru
        _
      %p529 = scmp.lt.s32.totalorder %s32, 2
      // Predicated region
      $region73: #{tpu_custom_call.1} parent=5 // pred_check
        %p530 = pneg %p529
      $region74: #{tpu_custom_call.1} parent=5 // pred_check_branch
        %532 = sbr.rel (%p530) target = $region76
      $region75: #{tpu_custom_call.1} parent=5 // pred_region
        // Predicated region
        $region77: #{tpu_custom_call.1} parent=75 // pred_check
          %p533 = pneg %p52
        $region78: #{tpu_custom_call.1} parent=75 // pred_check_branch
          %535 = sbr.rel (%p533) target = $region80
        $region79: #{tpu_custom_call.1} parent=75 // pred_region
          %s536 = sand.u32 %s42, 1
          %s537 = scalar_lea.sflag [#allocation4], %s536
          %s538 = sand.u32 %s42, 1
          %s539 = smul.addr %s538, 16
          %s540 = scalar_lea.vmem [#allocation3], %s539
          %s542 = ssub.s32 256, 256
          %543 = vsyncadd %s537, %s542
          %s544 = smul.addr %s32, 4
          %s545 = smul.addr %s544, 64
          %s546 = scalar_lea.hbm %s0, %s545
          %s547 = sshll.u32 %s540, 4
          %s548 = int_to_ptr.vmem [resolvable:$true] %s547
          %553 = dma.hbm_to_vmem [thread:$0]  %s546, 256, %s548, %s537, 64, 64, 4
        $region80: #{tpu_custom_call.1} parent=75 // pred_fallthru
          _
      $region76: #{tpu_custom_call.1} parent=5 // pred_fallthru
        _
      %p554 = scmp.le.s32.totalorder 1, %s32
      %p555 = scmp.lt.s32.totalorder %s32, 3
      %p556 = pnand %p554, %p555
      %p557 = pneg %p556
      // Predicated region
      $region81: #{tpu_custom_call.1} parent=5 // pred_check
        _
      $region82: #{tpu_custom_call.1} parent=5 // pred_check_branch
        %559 = sbr.rel (%p556) target = $region84
      $region83: #{tpu_custom_call.1} parent=5 // pred_region
        %s560 = ssub.s32 %s32, 1
        %s561 = sand.u32 %s45, 1
        %s562 = scalar_lea.sflag [#allocation4], %s561
        %s563 = sand.u32 %s45, 1
        %s564 = smul.addr %s563, 16
        %s565 = scalar_lea.vmem [#allocation3], %s564
        // Predicated region
        $region85: #{tpu_custom_call.1} parent=83 // pred_check
          %p566 = pneg %p58
        $region86: #{tpu_custom_call.1} parent=83 // pred_check_branch
          %568 = sbr.rel (%p566) target = $region88
        $region87: #{tpu_custom_call.1} parent=83 // pred_region
          %569 = dma.done %s562, 256
        $region88: #{tpu_custom_call.1} parent=83 // pred_fallthru
          _
        // Predicated region
        $region89: #{tpu_custom_call.1} parent=83 // pred_check
          %p570 = pneg %p100
        $region90: #{tpu_custom_call.1} parent=83 // pred_check_branch
          %572 = sbr.rel (%p570) target = $region92
        $region91: #{tpu_custom_call.1} parent=83 // pred_region
          %573 = dma.done [#allocation7], 3072
        $region92: #{tpu_custom_call.1} parent=83 // pred_fallthru
          _
        // Predicated region
        $region93: #{tpu_custom_call.1} parent=83 // pred_check
          %p574 = pneg %p142
        $region94: #{tpu_custom_call.1} parent=83 // pred_check_branch
          %576 = sbr.rel (%p574) target = $region96
        $region95: #{tpu_custom_call.1} parent=83 // pred_region
          %577 = dma.done [#allocation7], 3072
        $region96: #{tpu_custom_call.1} parent=83 // pred_fallthru
          _
        // Predicated region
        $region97: #{tpu_custom_call.1} parent=83 // pred_check
          %p578 = pneg %p184
        $region98: #{tpu_custom_call.1} parent=83 // pred_check_branch
          %580 = sbr.rel (%p578) target = $region100
        $region99: #{tpu_custom_call.1} parent=83 // pred_region
          %581 = dma.done [#allocation10], 1024
        $region100: #{tpu_custom_call.1} parent=83 // pred_fallthru
          _
        // Predicated region
        $region101: #{tpu_custom_call.1} parent=83 // pred_check
          %p582 = pneg %p226
        $region102: #{tpu_custom_call.1} parent=83 // pred_check_branch
          %584 = sbr.rel (%p582) target = $region104
        $region103: #{tpu_custom_call.1} parent=83 // pred_region
          %585 = dma.done [#allocation10], 9216
        $region104: #{tpu_custom_call.1} parent=83 // pred_fallthru
          _
        // Predicated region
        $region105: #{tpu_custom_call.1} parent=83 // pred_check
          %p586 = pneg %p268
        $region106: #{tpu_custom_call.1} parent=83 // pred_check_branch
          %588 = sbr.rel (%p586) target = $region108
        $region107: #{tpu_custom_call.1} parent=83 // pred_region
          %589 = dma.done [#allocation13], 9216
        $region108: #{tpu_custom_call.1} parent=83 // pred_fallthru
          _
        // Predicated region
        $region109: #{tpu_custom_call.1} parent=83 // pred_check
          %p590 = pneg %p310
        $region110: #{tpu_custom_call.1} parent=83 // pred_check_branch
          %592 = sbr.rel (%p590) target = $region112
        $region111: #{tpu_custom_call.1} parent=83 // pred_region
          %593 = dma.done [#allocation13], 3072
        $region112: #{tpu_custom_call.1} parent=83 // pred_fallthru
          _
        // Predicated region
        $region113: #{tpu_custom_call.1} parent=83 // pred_check
          %p594 = pneg %p352
        $region114: #{tpu_custom_call.1} parent=83 // pred_check_branch
          %596 = sbr.rel (%p594) target = $region116
        $region115: #{tpu_custom_call.1} parent=83 // pred_region
          %597 = dma.done [#allocation16], 2048
        $region116: #{tpu_custom_call.1} parent=83 // pred_fallthru
          _
        %s598 = sand.u32 %s45, 1
        %s599 = scalar_lea.sflag [#allocation4], %s598
        %s600 = sand.u32 %s45, 1
        %s601 = smul.addr %s600, 16
        %s602 = scalar_lea.vmem [#allocation3], %s601
        %p603 = pneg %p58
        %p604 = pneg %p55
        %p605 = pneg %p79
        %p606 = pneg %p76
        %p607 = pneg %p100
        %p608 = pneg %p97
        %p609 = pneg %p121
        %p610 = pneg %p118
        %p611 = pneg %p142
        %p612 = pneg %p139
        %p613 = pneg %p163
        %p614 = pneg %p160
        %p615 = pneg %p184
        %p616 = pneg %p181
        %p617 = pneg %p205
        %p618 = pneg %p202
        %p619 = pneg %p226
        %p620 = pneg %p223
        %p621 = pneg %p247
        %p622 = pneg %p244
        %p623 = pneg %p268
        %p624 = pneg %p265
        %p625 = pneg %p289
        %p626 = pneg %p286
        %p627 = pneg %p310
        %p628 = pneg %p307
        %p629 = pneg %p331
        %p630 = pneg %p328
        %p631 = pneg %p352
        %p632 = pneg %p349
        %p633 = pneg %p373
        %p634 = pneg %p370
        %p635 = pneg %p399
        %p636 = pneg %p396
        %s637 = sand.u32 %s386, 1
        %s638 = scalar_lea.sflag [#allocation5], %s637
        %s639 = sand.u32 %s386, 1
        %s640 = scalar_lea.vmem [#allocation17], %s639
        %v642 = vld [vmem:[%s565] sm:$0xf]
        %v643 = vld [vmem:[%s565 + $0x4] sm:$0xf]
        %v644 = vld [vmem:[%s565 + $0x8] sm:$0xf]
        %v645 = vld [vmem:[%s565 + $0xc] sm:$0xf]
        %v646 = vunpack.c.l.bf16 %v642
        %v647 = vunpack.c.l.bf16 %v643
        %v648 = vunpack.c.l.bf16 %v644
        %v649 = vunpack.c.l.bf16 %v645
        %v650 = vlaneseq
        %v651 = vshrl.u32 %v650, 7
        %v652 = vadd.s32 %v651, 8
        %v653 = vadd.s32 %v651, 16
        %v654 = vadd.s32 %v651, 24
        %vm655 = vcmp.lt.s32.totalorder %v651, 0
        %v656 = vsub.s32 0, %v651
        %v657 = vsel %vm655, %v656, %v651
        %v658 = vshrl.u32 %v657, 5
        %v659 = vand.u32 %v657, 31
        %v660 = vsub.s32 0, %v659
        %v661 = vsel %vm655, %v660, %v659
        %vm662 = vcmp.lt.s32.totalorder %v652, 0
        %v663 = vsub.s32 0, %v652
        %v664 = vsel %vm662, %v663, %v652
        %v665 = vshrl.u32 %v664, 5
        %v666 = vand.u32 %v664, 31
        %v667 = vsub.s32 0, %v666
        %v668 = vsel %vm662, %v667, %v666
        %vm669 = vcmp.lt.s32.totalorder %v653, 0
        %v670 = vsub.s32 0, %v653
        %v671 = vsel %vm669, %v670, %v653
        %v672 = vshrl.u32 %v671, 5
        %v673 = vand.u32 %v671, 31
        %v674 = vsub.s32 0, %v673
        %v675 = vsel %vm669, %v674, %v673
        %vm676 = vcmp.lt.s32.totalorder %v654, 0
        %v677 = vsub.s32 0, %v654
        %v678 = vsel %vm676, %v677, %v654
        %v679 = vshrl.u32 %v678, 5
        %v680 = vand.u32 %v678, 31
        %v681 = vsub.s32 0, %v680
        %v682 = vsel %vm676, %v681, %v680
        %vm683 = vcmp.ne.s32.totalorder %v661, 0
        %vm684 = vcmp.ne.s32.totalorder %v668, 0
        %vm685 = vcmp.ne.s32.totalorder %v675, 0
        %vm686 = vcmp.ne.s32.totalorder %v682, 0
        %vm687 = vcmp.lt.s32.totalorder %v661, 0
        %vm688 = vcmp.lt.s32.totalorder %v668, 0
        %vm689 = vcmp.lt.s32.totalorder %v675, 0
        %vm690 = vcmp.lt.s32.totalorder %v682, 0
        %vm691 = vmand %vm687, %vm683
        %vm692 = vmand %vm688, %vm684
        %vm693 = vmand %vm689, %vm685
        %vm694 = vmand %vm690, %vm686
        %v695 = vadd.s32 %v661, 32
        %v696 = vadd.s32 %v668, 32
        %v697 = vadd.s32 %v675, 32
        %v698 = vadd.s32 %v682, 32
        %v699 = vsel %vm691, %v695, %v661
        %v700 = vsel %vm692, %v696, %v668
        %v701 = vsel %vm693, %v697, %v675
        %v702 = vsel %vm694, %v698, %v682
        %vm703 = vcmp.ne.s32.totalorder %v699, 0
        %vm704 = vcmp.ne.s32.totalorder %v700, 0
        %vm705 = vcmp.ne.s32.totalorder %v701, 0
        %vm706 = vcmp.ne.s32.totalorder %v702, 0
        %vm707 = vcmp.ne.s32.totalorder %v699, 31
        %vm708 = vcmp.ne.s32.totalorder %v700, 31
        %vm709 = vcmp.ne.s32.totalorder %v701, 31
        %vm710 = vcmp.ne.s32.totalorder %v702, 31
        %v711 = vld [vmem:[#allocation6] sm:$0xf]
        %v712 = vld [vmem:[#allocation6 + $0x4] sm:$0xf]
        %v713 = vld [vmem:[#allocation6 + $0x8] sm:$0xf]
        %v714 = vld [vmem:[#allocation6 + $0xc] sm:$0xf]
        %v715 = vld [vmem:[#allocation6 + $0x10] sm:$0xf]
        %v716 = vld [vmem:[#allocation6 + $0x14] sm:$0xf]
        %v717 = vld [vmem:[#allocation6 + $0x18] sm:$0xf]
        %v718 = vld [vmem:[#allocation6 + $0x1c] sm:$0xf]
        %v719 = vld [vmem:[#allocation6 + $0x20] sm:$0xf]
        %v720 = vld [vmem:[#allocation6 + $0x24] sm:$0xf]
        %v721 = vld [vmem:[#allocation6 + $0x28] sm:$0xf]
        %v722 = vld [vmem:[#allocation6 + $0x2c] sm:$0xf]
        %v723 = vld [vmem:[#allocation6 + $0x30] sm:$0xf]
        %v724 = vld [vmem:[#allocation6 + $0x34] sm:$0xf]
        %v725 = vld [vmem:[#allocation6 + $0x38] sm:$0xf]
        %v726 = vld [vmem:[#allocation6 + $0x3c] sm:$0xf]
        %s727 = scalar_lea.vmem [#allocation6], 64
        %v728 = vld [vmem:[%s727] sm:$0xf]
        %v729 = vld [vmem:[%s727 + $0x4] sm:$0xf]
        %v730 = vld [vmem:[%s727 + $0x8] sm:$0xf]
        %v731 = vld [vmem:[%s727 + $0xc] sm:$0xf]
        %v732 = vld [vmem:[%s727 + $0x10] sm:$0xf]
        %v733 = vld [vmem:[%s727 + $0x14] sm:$0xf]
        %v734 = vld [vmem:[%s727 + $0x18] sm:$0xf]
        %v735 = vld [vmem:[%s727 + $0x1c] sm:$0xf]
        %v736 = vld [vmem:[%s727 + $0x20] sm:$0xf]
        %v737 = vld [vmem:[%s727 + $0x24] sm:$0xf]
        %v738 = vld [vmem:[%s727 + $0x28] sm:$0xf]
        %v739 = vld [vmem:[%s727 + $0x2c] sm:$0xf]
        %v740 = vld [vmem:[%s727 + $0x30] sm:$0xf]
        %v741 = vld [vmem:[%s727 + $0x34] sm:$0xf]
        %v742 = vld [vmem:[%s727 + $0x38] sm:$0xf]
        %v743 = vld [vmem:[%s727 + $0x3c] sm:$0xf]
        %s744 = scalar_lea.vmem [#allocation6], 128
        %v745 = vld [vmem:[%s744] sm:$0xf]
        %v746 = vld [vmem:[%s744 + $0x4] sm:$0xf]
        %v747 = vld [vmem:[%s744 + $0x8] sm:$0xf]
        %v748 = vld [vmem:[%s744 + $0xc] sm:$0xf]
        %v749 = vld [vmem:[%s744 + $0x10] sm:$0xf]
        %v750 = vld [vmem:[%s744 + $0x14] sm:$0xf]
        %v751 = vld [vmem:[%s744 + $0x18] sm:$0xf]
        %v752 = vld [vmem:[%s744 + $0x1c] sm:$0xf]
        %v753 = vld [vmem:[%s744 + $0x20] sm:$0xf]
        %v754 = vld [vmem:[%s744 + $0x24] sm:$0xf]
        %v755 = vld [vmem:[%s744 + $0x28] sm:$0xf]
        %v756 = vld [vmem:[%s744 + $0x2c] sm:$0xf]
        %v757 = vld [vmem:[%s744 + $0x30] sm:$0xf]
        %v758 = vld [vmem:[%s744 + $0x34] sm:$0xf]
        %v759 = vld [vmem:[%s744 + $0x38] sm:$0xf]
        %v760 = vld [vmem:[%s744 + $0x3c] sm:$0xf]
        %v761 = vld [vmem:[%s3] sm:$0x1]
        %v762 = vrot.slane %v646, 7
        %v763 = vrot.slane %v647, 7
        %v764 = vrot.slane %v648, 7
        %v765 = vrot.slane %v649, 7
        %vm766 = vcmp.lt.s32.totalorder %v651, 1
        %v767 = vsel %vm766, %v764, %v765
        %v768 = vsel %vm766, %v763, %v764
        %v769 = vsel %vm766, %v762, %v763
        %v770 = vsel %vm766, %v765, %v762
        %v771 = vsel %vm703, 1, 0
        %v772 = vsel %vm704, 1, 0
        %v773 = vsel %vm705, 1, 0
        %v774 = vsel %vm706, 1, 0
        %vm775 = vcmp.eq.s32.totalorder %v771, 1
        %vm776 = vcmp.eq.s32.totalorder %v772, 1
        %vm777 = vcmp.eq.s32.totalorder %v773, 1
        %vm778 = vcmp.eq.s32.totalorder %v774, 1
        %v779 = vsel %vm775, %v770, 0.0
        %v780 = vsel %vm776, %v769, 0.0
        %v781 = vsel %vm777, %v768, 0.0
        %v782 = vsel %vm778, %v767, 0.0
        %v783 = vrot.slane %v646, 1
        %v784 = vrot.slane %v647, 1
        %v785 = vrot.slane %v648, 1
        %v786 = vrot.slane %v649, 1
        %vm787 = vcmp.lt.s32.totalorder %v651, 7
        %v788 = vsel %vm787, %v785, %v786
        %v789 = vsel %vm787, %v784, %v785
        %v790 = vsel %vm787, %v783, %v784
        %v791 = vsel %vm787, %v786, %v783
        %v792 = vsel %vm707, 1, 0
        %v793 = vsel %vm708, 1, 0
        %v794 = vsel %vm709, 1, 0
        %v795 = vsel %vm710, 1, 0
        %vm796 = vcmp.eq.s32.totalorder %v792, 1
        %vm797 = vcmp.eq.s32.totalorder %v793, 1
        %vm798 = vcmp.eq.s32.totalorder %v794, 1
        %vm799 = vcmp.eq.s32.totalorder %v795, 1
        %v800 = vsel %vm796, %v790, 0.0
        %v801 = vsel %vm797, %v789, 0.0
        %v802 = vsel %vm798, %v788, 0.0
        %v803 = vsel %vm799, %v791, 0.0
        %v804 = vpack.c.bf16 %v780, %v779
        %v805 = vpack.c.bf16 %v782, %v781
        %v810 = vunpack.c.l.b16 %v642
        %v811 = vunpack.c.l.b16 %v643
        %v812 = vunpack.c.l.b16 %v644
        %v813 = vunpack.c.l.b16 %v645
        %v814 = vpack.c.b16 %v811, %v810
        %v815 = vpack.c.b16 %v813, %v812
        %v834 = vunpack.c.l.b16 %v728
        %v835 = vunpack.c.l.b16 %v729
        %v836 = vunpack.c.l.b16 %v730
        %v837 = vunpack.c.l.b16 %v731
        %v838 = vunpack.c.l.b16 %v732
        %v839 = vunpack.c.l.b16 %v733
        %v840 = vunpack.c.l.b16 %v734
        %v841 = vunpack.c.l.b16 %v735
        %v842 = vunpack.c.l.b16 %v736
        %v843 = vunpack.c.l.b16 %v737
        %v844 = vunpack.c.l.b16 %v738
        %v845 = vunpack.c.l.b16 %v739
        %v846 = vunpack.c.l.b16 %v740
        %v847 = vunpack.c.l.b16 %v741
        %v848 = vunpack.c.l.b16 %v742
        %v849 = vunpack.c.l.b16 %v743
        %v850 = vpack.c.b16 %v835, %v834
        %v851 = vpack.c.b16 %v837, %v836
        %v852 = vpack.c.b16 %v839, %v838
        %v853 = vpack.c.b16 %v841, %v840
        %v854 = vpack.c.b16 %v843, %v842
        %v855 = vpack.c.b16 %v845, %v844
        %v856 = vpack.c.b16 %v847, %v846
        %v857 = vpack.c.b16 %v849, %v848
        %866 = vmatprep.subr.bf16.mxu0 0
        %867 = vmatpush1.bf16.msra.mxu0 %v850
        %868 = vmatprep.subr.bf16.mxu0 0
        %869 = vmatpush1.bf16.msra.mxu0 %v851
        %870 = vmatprep.subr.bf16.mxu0 0
        %871 = vmatpush1.bf16.msra.mxu0 %v852
        %872 = vmatprep.subr.bf16.mxu0 0
        %873 = vmatpush1.bf16.msra.mxu0 %v853
        %874 = vmatprep.subr.bf16.mxu0 0
        %875 = vmatpush1.bf16.msra.mxu0 %v854
        %876 = vmatprep.subr.bf16.mxu0 0
        %877 = vmatpush1.bf16.msra.mxu0 %v855
        %878 = vmatprep.subr.bf16.mxu0 0
        %879 = vmatpush1.bf16.msra.mxu0 %v856
        %880 = vmatprep.subr.bf16.mxu0 0
        %881 = vmatpush1.bf16.msra.mxu0 %v857
        %882 = vmatprep.subr.bf16.mxu0 0
        %883 = vmatpush1.bf16.msra.mxu0 0
        %884 = vmatprep.subr.bf16.mxu0 0
        %885 = vmatpush1.bf16.msra.mxu0 0
        %886 = vmatprep.subr.bf16.mxu0 0
        %887 = vmatpush1.bf16.msra.mxu0 0
        %888 = vmatprep.subr.bf16.mxu0 0
        %889 = vmatpush1.bf16.msra.mxu0 0
        %890 = vmatprep.subr.bf16.mxu0 0
        %891 = vmatpush1.bf16.msra.mxu0 0
        %892 = vmatprep.subr.bf16.mxu0 0
        %893 = vmatpush1.bf16.msra.mxu0 0
        %894 = vmatprep.subr.bf16.mxu0 0
        %895 = vmatpush1.bf16.msra.mxu0 0
        %896 = vmatprep.subr.bf16.mxu0 0
        %897 = vmatpush1.bf16.msra.mxu0 0
        %898 = vmatprep.mubr.bf16.mxu0 0
        %899 = vmatmul.mubr.bf16.gmra.mrb[0].mxu0 %v814
        %v900 = vpop.f32.mrb[0].mxu0
        %v901 = vadd.f32 0.0, %v900
        %v902 = vpop.f32.mrb[0].mxu0
        %v903 = vpop.f32.mrb[0].mxu0
        %v904 = vadd.f32 0.0, %v903
        %v905 = vpop.f32.mrb[0].mxu0
        %906 = vmatprep.mubr.bf16.mxu0 0
        %907 = vmatmul.mubr.bf16.gmra.mrb[0].mxu0 %v815
        %v908 = vpop.f32.mrb[0].mxu0
        %v909 = vadd.f32 0.0, %v908
        %v910 = vpop.f32.mrb[0].mxu0
        %v911 = vpop.f32.mrb[0].mxu0
        %v912 = vadd.f32 0.0, %v911
        %v913 = vpop.f32.mrb[0].mxu0
        %914 = vdwg.mxu0
        %v931 = vunpack.c.l.b16 %v711
        %v932 = vunpack.c.l.b16 %v712
        %v933 = vunpack.c.l.b16 %v713
        %v934 = vunpack.c.l.b16 %v714
        %v935 = vunpack.c.l.b16 %v715
        %v936 = vunpack.c.l.b16 %v716
        %v937 = vunpack.c.l.b16 %v717
        %v938 = vunpack.c.l.b16 %v718
        %v939 = vunpack.c.l.b16 %v719
        %v940 = vunpack.c.l.b16 %v720
        %v941 = vunpack.c.l.b16 %v721
        %v942 = vunpack.c.l.b16 %v722
        %v943 = vunpack.c.l.b16 %v723
        %v944 = vunpack.c.l.b16 %v724
        %v945 = vunpack.c.l.b16 %v725
        %v946 = vunpack.c.l.b16 %v726
        %v947 = vpack.c.b16 %v932, %v931
        %v948 = vpack.c.b16 %v934, %v933
        %v949 = vpack.c.b16 %v936, %v935
        %v950 = vpack.c.b16 %v938, %v937
        %v951 = vpack.c.b16 %v940, %v939
        %v952 = vpack.c.b16 %v942, %v941
        %v953 = vpack.c.b16 %v944, %v943
        %v954 = vpack.c.b16 %v946, %v945
        %963 = vmatprep.subr.bf16.mxu0 0
        %964 = vmatpush1.bf16.msra.mxu0 %v947
        %965 = vmatprep.subr.bf16.mxu0 0
        %966 = vmatpush1.bf16.msra.mxu0 %v948
        %967 = vmatprep.subr.bf16.mxu0 0
        %968 = vmatpush1.bf16.msra.mxu0 %v949
        %969 = vmatprep.subr.bf16.mxu0 0
        %970 = vmatpush1.bf16.msra.mxu0 %v950
        %971 = vmatprep.subr.bf16.mxu0 0
        %972 = vmatpush1.bf16.msra.mxu0 %v951
        %973 = vmatprep.subr.bf16.mxu0 0
        %974 = vmatpush1.bf16.msra.mxu0 %v952
        %975 = vmatprep.subr.bf16.mxu0 0
        %976 = vmatpush1.bf16.msra.mxu0 %v953
        %977 = vmatprep.subr.bf16.mxu0 0
        %978 = vmatpush1.bf16.msra.mxu0 %v954
        %979 = vmatprep.subr.bf16.mxu0 0
        %980 = vmatpush1.bf16.msra.mxu0 0
        %981 = vmatprep.subr.bf16.mxu0 0
        %982 = vmatpush1.bf16.msra.mxu0 0
        %983 = vmatprep.subr.bf16.mxu0 0
        %984 = vmatpush1.bf16.msra.mxu0 0
        %985 = vmatprep.subr.bf16.mxu0 0
        %986 = vmatpush1.bf16.msra.mxu0 0
        %987 = vmatprep.subr.bf16.mxu0 0
        %988 = vmatpush1.bf16.msra.mxu0 0
        %989 = vmatprep.subr.bf16.mxu0 0
        %990 = vmatpush1.bf16.msra.mxu0 0
        %991 = vmatprep.subr.bf16.mxu0 0
        %992 = vmatpush1.bf16.msra.mxu0 0
        %993 = vmatprep.subr.bf16.mxu0 0
        %994 = vmatpush1.bf16.msra.mxu0 0
        %995 = vmatprep.mubr.bf16.mxu0 0
        %996 = vmatmul.mubr.bf16.gmra.mrb[0].mxu0 %v804
        %v997 = vpop.f32.mrb[0].mxu0
        %v998 = vadd.f32 %v901, %v997
        %v999 = vpop.f32.mrb[0].mxu0
        %v1000 = vpop.f32.mrb[0].mxu0
        %v1001 = vadd.f32 %v904, %v1000
        %v1002 = vpop.f32.mrb[0].mxu0
        %1003 = vmatprep.mubr.bf16.mxu0 0
        %1004 = vmatmul.mubr.bf16.gmra.mrb[0].mxu0 %v805
        %v1005 = vpop.f32.mrb[0].mxu0
        %v1006 = vadd.f32 %v909, %v1005
        %v1007 = vpop.f32.mrb[0].mxu0
        %v1008 = vpop.f32.mrb[0].mxu0
        %v1009 = vadd.f32 %v912, %v1008
        %v1010 = vpop.f32.mrb[0].mxu0
        %1011 = vdwg.mxu0
        %v1012 = vpack.c.bf16 %v801, %v800
        %v1013 = vpack.c.bf16 %v803, %v802
        %v1030 = vunpack.c.l.b16 %v745
        %v1031 = vunpack.c.l.b16 %v746
        %v1032 = vunpack.c.l.b16 %v747
        %v1033 = vunpack.c.l.b16 %v748
        %v1034 = vunpack.c.l.b16 %v749
        %v1035 = vunpack.c.l.b16 %v750
        %v1036 = vunpack.c.l.b16 %v751
        %v1037 = vunpack.c.l.b16 %v752
        %v1038 = vunpack.c.l.b16 %v753
        %v1039 = vunpack.c.l.b16 %v754
        %v1040 = vunpack.c.l.b16 %v755
        %v1041 = vunpack.c.l.b16 %v756
        %v1042 = vunpack.c.l.b16 %v757
        %v1043 = vunpack.c.l.b16 %v758
        %v1044 = vunpack.c.l.b16 %v759
        %v1045 = vunpack.c.l.b16 %v760
        %v1046 = vpack.c.b16 %v1031, %v1030
        %v1047 = vpack.c.b16 %v1033, %v1032
        %v1048 = vpack.c.b16 %v1035, %v1034
        %v1049 = vpack.c.b16 %v1037, %v1036
        %v1050 = vpack.c.b16 %v1039, %v1038
        %v1051 = vpack.c.b16 %v1041, %v1040
        %v1052 = vpack.c.b16 %v1043, %v1042
        %v1053 = vpack.c.b16 %v1045, %v1044
        %1062 = vmatprep.subr.bf16.mxu0 0
        %1063 = vmatpush1.bf16.msra.mxu0 %v1046
        %1064 = vmatprep.subr.bf16.mxu0 0
        %1065 = vmatpush1.bf16.msra.mxu0 %v1047
        %1066 = vmatprep.subr.bf16.mxu0 0
        %1067 = vmatpush1.bf16.msra.mxu0 %v1048
        %1068 = vmatprep.subr.bf16.mxu0 0
        %1069 = vmatpush1.bf16.msra.mxu0 %v1049
        %1070 = vmatprep.subr.bf16.mxu0 0
        %1071 = vmatpush1.bf16.msra.mxu0 %v1050
        %1072 = vmatprep.subr.bf16.mxu0 0
        %1073 = vmatpush1.bf16.msra.mxu0 %v1051
        %1074 = vmatprep.subr.bf16.mxu0 0
        %1075 = vmatpush1.bf16.msra.mxu0 %v1052
        %1076 = vmatprep.subr.bf16.mxu0 0
        %1077 = vmatpush1.bf16.msra.mxu0 %v1053
        %1078 = vmatprep.subr.bf16.mxu0 0
        %1079 = vmatpush1.bf16.msra.mxu0 0
        %1080 = vmatprep.subr.bf16.mxu0 0
        %1081 = vmatpush1.bf16.msra.mxu0 0
        %1082 = vmatprep.subr.bf16.mxu0 0
        %1083 = vmatpush1.bf16.msra.mxu0 0
        %1084 = vmatprep.subr.bf16.mxu0 0
        %1085 = vmatpush1.bf16.msra.mxu0 0
        %1086 = vmatprep.subr.bf16.mxu0 0
        %1087 = vmatpush1.bf16.msra.mxu0 0
        %1088 = vmatprep.subr.bf16.mxu0 0
        %1089 = vmatpush1.bf16.msra.mxu0 0
        %1090 = vmatprep.subr.bf16.mxu0 0
        %1091 = vmatpush1.bf16.msra.mxu0 0
        %1092 = vmatprep.subr.bf16.mxu0 0
        %1093 = vmatpush1.bf16.msra.mxu0 0
        %1094 = vmatprep.mubr.bf16.mxu0 0
        %1095 = vmatmul.mubr.bf16.gmra.mrb[0].mxu0 %v1012
        %v1096 = vpop.f32.mrb[0].mxu0
        %v1097 = vadd.f32 0.0, %v1096
        %v1098 = vpop.f32.mrb[0].mxu0
        %v1099 = vpop.f32.mrb[0].mxu0
        %v1100 = vadd.f32 0.0, %v1099
        %v1101 = vpop.f32.mrb[0].mxu0
        %1102 = vmatprep.mubr.bf16.mxu0 0
        %1103 = vmatmul.mubr.bf16.gmra.mrb[0].mxu0 %v1013
        %v1104 = vpop.f32.mrb[0].mxu0
        %v1105 = vadd.f32 0.0, %v1104
        %v1106 = vpop.f32.mrb[0].mxu0
        %v1107 = vpop.f32.mrb[0].mxu0
        %v1108 = vadd.f32 0.0, %v1107
        %v1109 = vpop.f32.mrb[0].mxu0
        %1110 = vdwg.mxu0
        %v1111 = vadd.f32 %v998, %v1097
        %v1112 = vadd.f32 %v1001, %v1100
        %v1113 = vadd.f32 %v1006, %v1105
        %v1114 = vadd.f32 %v1009, %v1108
        %v1116 = vlaneseq
        %v1117 = vshrl.u32 %v1116, 7
        %v1118 = vsub.s32 0, %v1117
        %v1119 = vrot.slane %v761, %v1118
        %v1121 = vadd.f32 %v1111, %v1119
        %v1122 = vadd.f32 %v1112, %v1119
        %v1123 = vadd.f32 %v1113, %v1119
        %v1124 = vadd.f32 %v1114, %v1119
        %v1125 = vmul.f32 %v1121, 0.1
        %v1126 = vmul.f32 %v1122, 0.1
        %v1127 = vmul.f32 %v1123, 0.1
        %v1128 = vmul.f32 %v1124, 0.1
        %v1129 = vmax.f32 %v1121, %v1125
        %v1130 = vmax.f32 %v1122, %v1126
        %v1131 = vmax.f32 %v1123, %v1127
        %v1132 = vmax.f32 %v1124, %v1128
        %v1133 = vld [vmem:[#allocation8] sm:$0xf]
        %v1134 = vld [vmem:[#allocation8 + $0x4] sm:$0xf]
        %v1135 = vld [vmem:[#allocation8 + $0x8] sm:$0xf]
        %v1136 = vld [vmem:[#allocation8 + $0xc] sm:$0xf]
        %v1137 = vld [vmem:[#allocation8 + $0x10] sm:$0xf]
        %v1138 = vld [vmem:[#allocation8 + $0x14] sm:$0xf]
        %v1139 = vld [vmem:[#allocation8 + $0x18] sm:$0xf]
        %v1140 = vld [vmem:[#allocation8 + $0x1c] sm:$0xf]
        %v1141 = vld [vmem:[#allocation8 + $0x20] sm:$0xf]
        %v1142 = vld [vmem:[#allocation8 + $0x24] sm:$0xf]
        %v1143 = vld [vmem:[#allocation8 + $0x28] sm:$0xf]
        %v1144 = vld [vmem:[#allocation8 + $0x2c] sm:$0xf]
        %v1145 = vld [vmem:[#allocation8 + $0x30] sm:$0xf]
        %v1146 = vld [vmem:[#allocation8 + $0x34] sm:$0xf]
        %v1147 = vld [vmem:[#allocation8 + $0x38] sm:$0xf]
        %v1148 = vld [vmem:[#allocation8 + $0x3c] sm:$0xf]
        %s1149 = scalar_lea.vmem [#allocation8], 64
        %v1150 = vld [vmem:[%s1149] sm:$0xf]
        %v1151 = vld [vmem:[%s1149 + $0x4] sm:$0xf]
        %v1152 = vld [vmem:[%s1149 + $0x8] sm:$0xf]
        %v1153 = vld [vmem:[%s1149 + $0xc] sm:$0xf]
        %v1154 = vld [vmem:[%s1149 + $0x10] sm:$0xf]
        %v1155 = vld [vmem:[%s1149 + $0x14] sm:$0xf]
        %v1156 = vld [vmem:[%s1149 + $0x18] sm:$0xf]
        %v1157 = vld [vmem:[%s1149 + $0x1c] sm:$0xf]
        %v1158 = vld [vmem:[%s1149 + $0x20] sm:$0xf]
        %v1159 = vld [vmem:[%s1149 + $0x24] sm:$0xf]
        %v1160 = vld [vmem:[%s1149 + $0x28] sm:$0xf]
        %v1161 = vld [vmem:[%s1149 + $0x2c] sm:$0xf]
        %v1162 = vld [vmem:[%s1149 + $0x30] sm:$0xf]
        %v1163 = vld [vmem:[%s1149 + $0x34] sm:$0xf]
        %v1164 = vld [vmem:[%s1149 + $0x38] sm:$0xf]
        %v1165 = vld [vmem:[%s1149 + $0x3c] sm:$0xf]
        %s1166 = scalar_lea.vmem [#allocation8], 128
        %v1167 = vld [vmem:[%s1166] sm:$0xf]
        %v1168 = vld [vmem:[%s1166 + $0x4] sm:$0xf]
        %v1169 = vld [vmem:[%s1166 + $0x8] sm:$0xf]
        %v1170 = vld [vmem:[%s1166 + $0xc] sm:$0xf]
        %v1171 = vld [vmem:[%s1166 + $0x10] sm:$0xf]
        %v1172 = vld [vmem:[%s1166 + $0x14] sm:$0xf]
        %v1173 = vld [vmem:[%s1166 + $0x18] sm:$0xf]
        %v1174 = vld [vmem:[%s1166 + $0x1c] sm:$0xf]
        %v1175 = vld [vmem:[%s1166 + $0x20] sm:$0xf]
        %v1176 = vld [vmem:[%s1166 + $0x24] sm:$0xf]
        %v1177 = vld [vmem:[%s1166 + $0x28] sm:$0xf]
        %v1178 = vld [vmem:[%s1166 + $0x2c] sm:$0xf]
        %v1179 = vld [vmem:[%s1166 + $0x30] sm:$0xf]
        %v1180 = vld [vmem:[%s1166 + $0x34] sm:$0xf]
        %v1181 = vld [vmem:[%s1166 + $0x38] sm:$0xf]
        %v1182 = vld [vmem:[%s1166 + $0x3c] sm:$0xf]
        %v1183 = vld [vmem:[%s5] sm:$0x1]
        %v1184 = vrot.slane %v1129, 7
        %v1185 = vrot.slane %v1130, 7
        %v1186 = vrot.slane %v1131, 7
        %v1187 = vrot.slane %v1132, 7
        %v1188 = vsel %vm766, %v1186, %v1187
        %v1189 = vsel %vm766, %v1185, %v1186
        %v1190 = vsel %vm766, %v1184, %v1185
        %v1191 = vsel %vm766, %v1187, %v1184
        %v1192 = vsel %vm775, %v1191, 0.0
        %v1193 = vsel %vm776, %v1190, 0.0
        %v1194 = vsel %vm777, %v1189, 0.0
        %v1195 = vsel %vm778, %v1188, 0.0
        %v1196 = vrot.slane %v1129, 1
        %v1197 = vrot.slane %v1130, 1
        %v1198 = vrot.slane %v1131, 1
        %v1199 = vrot.slane %v1132, 1
        %v1200 = vsel %vm787, %v1198, %v1199
        %v1201 = vsel %vm787, %v1197, %v1198
        %v1202 = vsel %vm787, %v1196, %v1197
        %v1203 = vsel %vm787, %v1199, %v1196
        %v1204 = vsel %vm796, %v1202, 0.0
        %v1205 = vsel %vm797, %v1201, 0.0
        %v1206 = vsel %vm798, %v1200, 0.0
        %v1207 = vsel %vm799, %v1203, 0.0
        %v1208 = vpack.c.bf16 %v1193, %v1192
        %v1209 = vpack.c.bf16 %v1195, %v1194
        %v1210 = vpack.c.bf16 %v1130, %v1129
        %v1211 = vpack.c.bf16 %v1132, %v1131
        %v1228 = vunpack.c.l.b16 %v1150
        %v1229 = vunpack.c.l.b16 %v1151
        %v1230 = vunpack.c.l.b16 %v1152
        %v1231 = vunpack.c.l.b16 %v1153
        %v1232 = vunpack.c.l.b16 %v1154
        %v1233 = vunpack.c.l.b16 %v1155
        %v1234 = vunpack.c.l.b16 %v1156
        %v1235 = vunpack.c.l.b16 %v1157
        %v1236 = vunpack.c.l.b16 %v1158
        %v1237 = vunpack.c.l.b16 %v1159
        %v1238 = vunpack.c.l.b16 %v1160
        %v1239 = vunpack.c.l.b16 %v1161
        %v1240 = vunpack.c.l.b16 %v1162
        %v1241 = vunpack.c.l.b16 %v1163
        %v1242 = vunpack.c.l.b16 %v1164
        %v1243 = vunpack.c.l.b16 %v1165
        %v1244 = vpack.c.b16 %v1229, %v1228
        %v1245 = vpack.c.b16 %v1231, %v1230
        %v1246 = vpack.c.b16 %v1233, %v1232
        %v1247 = vpack.c.b16 %v1235, %v1234
        %v1248 = vpack.c.b16 %v1237, %v1236
        %v1249 = vpack.c.b16 %v1239, %v1238
        %v1250 = vpack.c.b16 %v1241, %v1240
        %v1251 = vpack.c.b16 %v1243, %v1242
        %1260 = vmatprep.subr.bf16.mxu0 0
        %1261 = vmatpush1.bf16.msra.mxu0 %v1244
        %1262 = vmatprep.subr.bf16.mxu0 0
        %1263 = vmatpush1.bf16.msra.mxu0 %v1245
        %1264 = vmatprep.subr.bf16.mxu0 0
        %1265 = vmatpush1.bf16.msra.mxu0 %v1246
        %1266 = vmatprep.subr.bf16.mxu0 0
        %1267 = vmatpush1.bf16.msra.mxu0 %v1247
        %1268 = vmatprep.subr.bf16.mxu0 0
        %1269 = vmatpush1.bf16.msra.mxu0 %v1248
        %1270 = vmatprep.subr.bf16.mxu0 0
        %1271 = vmatpush1.bf16.msra.mxu0 %v1249
        %1272 = vmatprep.subr.bf16.mxu0 0
        %1273 = vmatpush1.bf16.msra.mxu0 %v1250
        %1274 = vmatprep.subr.bf16.mxu0 0
        %1275 = vmatpush1.bf16.msra.mxu0 %v1251
        %1276 = vmatprep.subr.bf16.mxu0 0
        %1277 = vmatpush1.bf16.msra.mxu0 0
        %1278 = vmatprep.subr.bf16.mxu0 0
        %1279 = vmatpush1.bf16.msra.mxu0 0
        %1280 = vmatprep.subr.bf16.mxu0 0
        %1281 = vmatpush1.bf16.msra.mxu0 0
        %1282 = vmatprep.subr.bf16.mxu0 0
        %1283 = vmatpush1.bf16.msra.mxu0 0
        %1284 = vmatprep.subr.bf16.mxu0 0
        %1285 = vmatpush1.bf16.msra.mxu0 0
        %1286 = vmatprep.subr.bf16.mxu0 0
        %1287 = vmatpush1.bf16.msra.mxu0 0
        %1288 = vmatprep.subr.bf16.mxu0 0
        %1289 = vmatpush1.bf16.msra.mxu0 0
        %1290 = vmatprep.subr.bf16.mxu0 0
        %1291 = vmatpush1.bf16.msra.mxu0 0
        %1292 = vmatprep.mubr.bf16.mxu0 0
        %1293 = vmatmul.mubr.bf16.gmra.mrb[0].mxu0 %v1210
        %v1294 = vpop.f32.mrb[0].mxu0
        %v1295 = vadd.f32 0.0, %v1294
        %v1296 = vpop.f32.mrb[0].mxu0
        %v1297 = vpop.f32.mrb[0].mxu0
        %v1298 = vadd.f32 0.0, %v1297
        %v1299 = vpop.f32.mrb[0].mxu0
        %1300 = vmatprep.mubr.bf16.mxu0 0
        %1301 = vmatmul.mubr.bf16.gmra.mrb[0].mxu0 %v1211
        %v1302 = vpop.f32.mrb[0].mxu0
        %v1303 = vadd.f32 0.0, %v1302
        %v1304 = vpop.f32.mrb[0].mxu0
        %v1305 = vpop.f32.mrb[0].mxu0
        %v1306 = vadd.f32 0.0, %v1305
        %v1307 = vpop.f32.mrb[0].mxu0
        %1308 = vdwg.mxu0
        %v1325 = vunpack.c.l.b16 %v1133
        %v1326 = vunpack.c.l.b16 %v1134
        %v1327 = vunpack.c.l.b16 %v1135
        %v1328 = vunpack.c.l.b16 %v1136
        %v1329 = vunpack.c.l.b16 %v1137
        %v1330 = vunpack.c.l.b16 %v1138
        %v1331 = vunpack.c.l.b16 %v1139
        %v1332 = vunpack.c.l.b16 %v1140
        %v1333 = vunpack.c.l.b16 %v1141
        %v1334 = vunpack.c.l.b16 %v1142
        %v1335 = vunpack.c.l.b16 %v1143
        %v1336 = vunpack.c.l.b16 %v1144
        %v1337 = vunpack.c.l.b16 %v1145
        %v1338 = vunpack.c.l.b16 %v1146
        %v1339 = vunpack.c.l.b16 %v1147
        %v1340 = vunpack.c.l.b16 %v1148
        %v1341 = vpack.c.b16 %v1326, %v1325
        %v1342 = vpack.c.b16 %v1328, %v1327
        %v1343 = vpack.c.b16 %v1330, %v1329
        %v1344 = vpack.c.b16 %v1332, %v1331
        %v1345 = vpack.c.b16 %v1334, %v1333
        %v1346 = vpack.c.b16 %v1336, %v1335
        %v1347 = vpack.c.b16 %v1338, %v1337
        %v1348 = vpack.c.b16 %v1340, %v1339
        %1357 = vmatprep.subr.bf16.mxu0 0
        %1358 = vmatpush1.bf16.msra.mxu0 %v1341
        %1359 = vmatprep.subr.bf16.mxu0 0
        %1360 = vmatpush1.bf16.msra.mxu0 %v1342
        %1361 = vmatprep.subr.bf16.mxu0 0
        %1362 = vmatpush1.bf16.msra.mxu0 %v1343
        %1363 = vmatprep.subr.bf16.mxu0 0
        %1364 = vmatpush1.bf16.msra.mxu0 %v1344
        %1365 = vmatprep.subr.bf16.mxu0 0
        %1366 = vmatpush1.bf16.msra.mxu0 %v1345
        %1367 = vmatprep.subr.bf16.mxu0 0
        %1368 = vmatpush1.bf16.msra.mxu0 %v1346
        %1369 = vmatprep.subr.bf16.mxu0 0
        %1370 = vmatpush1.bf16.msra.mxu0 %v1347
        %1371 = vmatprep.subr.bf16.mxu0 0
        %1372 = vmatpush1.bf16.msra.mxu0 %v1348
        %1373 = vmatprep.subr.bf16.mxu0 0
        %1374 = vmatpush1.bf16.msra.mxu0 0
        %1375 = vmatprep.subr.bf16.mxu0 0
        %1376 = vmatpush1.bf16.msra.mxu0 0
        %1377 = vmatprep.subr.bf16.mxu0 0
        %1378 = vmatpush1.bf16.msra.mxu0 0
        %1379 = vmatprep.subr.bf16.mxu0 0
        %1380 = vmatpush1.bf16.msra.mxu0 0
        %1381 = vmatprep.subr.bf16.mxu0 0
        %1382 = vmatpush1.bf16.msra.mxu0 0
        %1383 = vmatprep.subr.bf16.mxu0 0
        %1384 = vmatpush1.bf16.msra.mxu0 0
        %1385 = vmatprep.subr.bf16.mxu0 0
        %1386 = vmatpush1.bf16.msra.mxu0 0
        %1387 = vmatprep.subr.bf16.mxu0 0
        %1388 = vmatpush1.bf16.msra.mxu0 0
        %1389 = vmatprep.mubr.bf16.mxu0 0
        %1390 = vmatmul.mubr.bf16.gmra.mrb[0].mxu0 %v1208
        %v1391 = vpop.f32.mrb[0].mxu0
        %v1392 = vadd.f32 %v1295, %v1391
        %v1393 = vpop.f32.mrb[0].mxu0
        %v1394 = vpop.f32.mrb[0].mxu0
        %v1395 = vadd.f32 %v1298, %v1394
        %v1396 = vpop.f32.mrb[0].mxu0
        %1397 = vmatprep.mubr.bf16.mxu0 0
        %1398 = vmatmul.mubr.bf16.gmra.mrb[0].mxu0 %v1209
        %v1399 = vpop.f32.mrb[0].mxu0
        %v1400 = vadd.f32 %v1303, %v1399
        %v1401 = vpop.f32.mrb[0].mxu0
        %v1402 = vpop.f32.mrb[0].mxu0
        %v1403 = vadd.f32 %v1306, %v1402
        %v1404 = vpop.f32.mrb[0].mxu0
        %1405 = vdwg.mxu0
        %v1406 = vpack.c.bf16 %v1205, %v1204
        %v1407 = vpack.c.bf16 %v1207, %v1206
        %v1424 = vunpack.c.l.b16 %v1167
        %v1425 = vunpack.c.l.b16 %v1168
        %v1426 = vunpack.c.l.b16 %v1169
        %v1427 = vunpack.c.l.b16 %v1170
        %v1428 = vunpack.c.l.b16 %v1171
        %v1429 = vunpack.c.l.b16 %v1172
        %v1430 = vunpack.c.l.b16 %v1173
        %v1431 = vunpack.c.l.b16 %v1174
        %v1432 = vunpack.c.l.b16 %v1175
        %v1433 = vunpack.c.l.b16 %v1176
        %v1434 = vunpack.c.l.b16 %v1177
        %v1435 = vunpack.c.l.b16 %v1178
        %v1436 = vunpack.c.l.b16 %v1179
        %v1437 = vunpack.c.l.b16 %v1180
        %v1438 = vunpack.c.l.b16 %v1181
        %v1439 = vunpack.c.l.b16 %v1182
        %v1440 = vpack.c.b16 %v1425, %v1424
        %v1441 = vpack.c.b16 %v1427, %v1426
        %v1442 = vpack.c.b16 %v1429, %v1428
        %v1443 = vpack.c.b16 %v1431, %v1430
        %v1444 = vpack.c.b16 %v1433, %v1432
        %v1445 = vpack.c.b16 %v1435, %v1434
        %v1446 = vpack.c.b16 %v1437, %v1436
        %v1447 = vpack.c.b16 %v1439, %v1438
        %1456 = vmatprep.subr.bf16.mxu0 0
        %1457 = vmatpush1.bf16.msra.mxu0 %v1440
        %1458 = vmatprep.subr.bf16.mxu0 0
        %1459 = vmatpush1.bf16.msra.mxu0 %v1441
        %1460 = vmatprep.subr.bf16.mxu0 0
        %1461 = vmatpush1.bf16.msra.mxu0 %v1442
        %1462 = vmatprep.subr.bf16.mxu0 0
        %1463 = vmatpush1.bf16.msra.mxu0 %v1443
        %1464 = vmatprep.subr.bf16.mxu0 0
        %1465 = vmatpush1.bf16.msra.mxu0 %v1444
        %1466 = vmatprep.subr.bf16.mxu0 0
        %1467 = vmatpush1.bf16.msra.mxu0 %v1445
        %1468 = vmatprep.subr.bf16.mxu0 0
        %1469 = vmatpush1.bf16.msra.mxu0 %v1446
        %1470 = vmatprep.subr.bf16.mxu0 0
        %1471 = vmatpush1.bf16.msra.mxu0 %v1447
        %1472 = vmatprep.subr.bf16.mxu0 0
        %1473 = vmatpush1.bf16.msra.mxu0 0
        %1474 = vmatprep.subr.bf16.mxu0 0
        %1475 = vmatpush1.bf16.msra.mxu0 0
        %1476 = vmatprep.subr.bf16.mxu0 0
        %1477 = vmatpush1.bf16.msra.mxu0 0
        %1478 = vmatprep.subr.bf16.mxu0 0
        %1479 = vmatpush1.bf16.msra.mxu0 0
        %1480 = vmatprep.subr.bf16.mxu0 0
        %1481 = vmatpush1.bf16.msra.mxu0 0
        %1482 = vmatprep.subr.bf16.mxu0 0
        %1483 = vmatpush1.bf16.msra.mxu0 0
        %1484 = vmatprep.subr.bf16.mxu0 0
        %1485 = vmatpush1.bf16.msra.mxu0 0
        %1486 = vmatprep.subr.bf16.mxu0 0
        %1487 = vmatpush1.bf16.msra.mxu0 0
        %1488 = vmatprep.mubr.bf16.mxu0 0
        %1489 = vmatmul.mubr.bf16.gmra.mrb[0].mxu0 %v1406
        %v1490 = vpop.f32.mrb[0].mxu0
        %v1491 = vadd.f32 0.0, %v1490
        %v1492 = vpop.f32.mrb[0].mxu0
        %v1493 = vpop.f32.mrb[0].mxu0
        %v1494 = vadd.f32 0.0, %v1493
        %v1495 = vpop.f32.mrb[0].mxu0
        %1496 = vmatprep.mubr.bf16.mxu0 0
        %1497 = vmatmul.mubr.bf16.gmra.mrb[0].mxu0 %v1407
        %v1498 = vpop.f32.mrb[0].mxu0
        %v1499 = vadd.f32 0.0, %v1498
        %v1500 = vpop.f32.mrb[0].mxu0
        %v1501 = vpop.f32.mrb[0].mxu0
        %v1502 = vadd.f32 0.0, %v1501
        %v1503 = vpop.f32.mrb[0].mxu0
        %1504 = vdwg.mxu0
        %v1505 = vadd.f32 %v1392, %v1491
        %v1506 = vadd.f32 %v1395, %v1494
        %v1507 = vadd.f32 %v1400, %v1499
        %v1508 = vadd.f32 %v1403, %v1502
        %v1510 = vlaneseq
        %v1511 = vshrl.u32 %v1510, 7
        %v1512 = vsub.s32 0, %v1511
        %v1513 = vrot.slane %v1183, %v1512
        %v1515 = vadd.f32 %v1505, %v1513
        %v1516 = vadd.f32 %v1506, %v1513
        %v1517 = vadd.f32 %v1507, %v1513
        %v1518 = vadd.f32 %v1508, %v1513
        %v1519 = vld [vmem:[#allocation9] sm:$0xf]
        %v1520 = vld [vmem:[#allocation9 + $0x4] sm:$0xf]
        %v1521 = vld [vmem:[#allocation9 + $0x8] sm:$0xf]
        %v1522 = vld [vmem:[#allocation9 + $0xc] sm:$0xf]
        %v1523 = vld [vmem:[#allocation9 + $0x10] sm:$0xf]
        %v1524 = vld [vmem:[#allocation9 + $0x14] sm:$0xf]
        %v1525 = vld [vmem:[#allocation9 + $0x18] sm:$0xf]
        %v1526 = vld [vmem:[#allocation9 + $0x1c] sm:$0xf]
        %v1527 = vld [vmem:[#allocation9 + $0x20] sm:$0xf]
        %v1528 = vld [vmem:[#allocation9 + $0x24] sm:$0xf]
        %v1529 = vld [vmem:[#allocation9 + $0x28] sm:$0xf]
        %v1530 = vld [vmem:[#allocation9 + $0x2c] sm:$0xf]
        %v1531 = vld [vmem:[#allocation9 + $0x30] sm:$0xf]
        %v1532 = vld [vmem:[#allocation9 + $0x34] sm:$0xf]
        %v1533 = vld [vmem:[#allocation9 + $0x38] sm:$0xf]
        %v1534 = vld [vmem:[#allocation9 + $0x3c] sm:$0xf]
        %v1535 = vld [vmem:[%s7] sm:$0x1]
        %v1537 = vlaneseq
        %v1538 = vshrl.u32 %v1537, 7
        %v1539 = vsub.s32 0, %v1538
        %v1540 = vrot.slane %v1535, %v1539
        %v1558 = vunpack.c.l.b16 %v1519
        %v1559 = vunpack.c.l.b16 %v1520
        %v1560 = vunpack.c.l.b16 %v1521
        %v1561 = vunpack.c.l.b16 %v1522
        %v1562 = vunpack.c.l.b16 %v1523
        %v1563 = vunpack.c.l.b16 %v1524
        %v1564 = vunpack.c.l.b16 %v1525
        %v1565 = vunpack.c.l.b16 %v1526
        %v1566 = vunpack.c.l.b16 %v1527
        %v1567 = vunpack.c.l.b16 %v1528
        %v1568 = vunpack.c.l.b16 %v1529
        %v1569 = vunpack.c.l.b16 %v1530
        %v1570 = vunpack.c.l.b16 %v1531
        %v1571 = vunpack.c.l.b16 %v1532
        %v1572 = vunpack.c.l.b16 %v1533
        %v1573 = vunpack.c.l.b16 %v1534
        %v1574 = vpack.c.b16 %v1559, %v1558
        %v1575 = vpack.c.b16 %v1561, %v1560
        %v1576 = vpack.c.b16 %v1563, %v1562
        %v1577 = vpack.c.b16 %v1565, %v1564
        %v1578 = vpack.c.b16 %v1567, %v1566
        %v1579 = vpack.c.b16 %v1569, %v1568
        %v1580 = vpack.c.b16 %v1571, %v1570
        %v1581 = vpack.c.b16 %v1573, %v1572
        %1590 = vmatprep.subr.bf16.mxu0 0
        %1591 = vmatpush1.bf16.msra.mxu0 %v1574
        %1592 = vmatprep.subr.bf16.mxu0 0
        %1593 = vmatpush1.bf16.msra.mxu0 %v1575
        %1594 = vmatprep.subr.bf16.mxu0 0
        %1595 = vmatpush1.bf16.msra.mxu0 %v1576
        %1596 = vmatprep.subr.bf16.mxu0 0
        %1597 = vmatpush1.bf16.msra.mxu0 %v1577
        %1598 = vmatprep.subr.bf16.mxu0 0
        %1599 = vmatpush1.bf16.msra.mxu0 %v1578
        %1600 = vmatprep.subr.bf16.mxu0 0
        %1601 = vmatpush1.bf16.msra.mxu0 %v1579
        %1602 = vmatprep.subr.bf16.mxu0 0
        %1603 = vmatpush1.bf16.msra.mxu0 %v1580
        %1604 = vmatprep.subr.bf16.mxu0 0
        %1605 = vmatpush1.bf16.msra.mxu0 %v1581
        %1606 = vmatprep.subr.bf16.mxu0 0
        %1607 = vmatpush1.bf16.msra.mxu0 0
        %1608 = vmatprep.subr.bf16.mxu0 0
        %1609 = vmatpush1.bf16.msra.mxu0 0
        %1610 = vmatprep.subr.bf16.mxu0 0
        %1611 = vmatpush1.bf16.msra.mxu0 0
        %1612 = vmatprep.subr.bf16.mxu0 0
        %1613 = vmatpush1.bf16.msra.mxu0 0
        %1614 = vmatprep.subr.bf16.mxu0 0
        %1615 = vmatpush1.bf16.msra.mxu0 0
        %1616 = vmatprep.subr.bf16.mxu0 0
        %1617 = vmatpush1.bf16.msra.mxu0 0
        %1618 = vmatprep.subr.bf16.mxu0 0
        %1619 = vmatpush1.bf16.msra.mxu0 0
        %1620 = vmatprep.subr.bf16.mxu0 0
        %1621 = vmatpush1.bf16.msra.mxu0 0
        %1622 = vmatprep.mubr.bf16.mxu0 0
        %1623 = vmatmul.mubr.bf16.gmra.mrb[0].mxu0 %v814
        %v1624 = vpop.f32.mrb[0].mxu0
        %v1625 = vadd.f32 %v1540, %v1624
        %v1626 = vpop.f32.mrb[0].mxu0
        %v1627 = vpop.f32.mrb[0].mxu0
        %v1628 = vadd.f32 %v1540, %v1627
        %v1629 = vpop.f32.mrb[0].mxu0
        %1630 = vmatprep.mubr.bf16.mxu0 0
        %1631 = vmatmul.mubr.bf16.gmra.mrb[0].mxu0 %v815
        %v1632 = vpop.f32.mrb[0].mxu0
        %v1633 = vadd.f32 %v1540, %v1632
        %v1634 = vpop.f32.mrb[0].mxu0
        %v1635 = vpop.f32.mrb[0].mxu0
        %v1636 = vadd.f32 %v1540, %v1635
        %v1637 = vpop.f32.mrb[0].mxu0
        %1638 = vdwg.mxu0
        %v1639 = vadd.f32 %v1515, %v1625
        %v1640 = vadd.f32 %v1516, %v1628
        %v1641 = vadd.f32 %v1517, %v1633
        %v1642 = vadd.f32 %v1518, %v1636
        %1643 = vst [vmem:[#allocation2] sm:$0xff] %v1639
        %1644 = vst [vmem:[#allocation2 + $0x8] sm:$0xff] %v1640
        %1645 = vst [vmem:[#allocation2 + $0x10] sm:$0xff] %v1641
        %1646 = vst [vmem:[#allocation2 + $0x18] sm:$0xff] %v1642
        %v1647 = vld [vmem:[#allocation2] ss:$2 sm:$0xff]
        %s1648 = scalar_lea.vmem [#allocation2], 16
        %v1649 = vld [vmem:[%s1648] ss:$2 sm:$0xff]
        %s1650 = scalar_lea.vmem [#allocation2], 1
        %v1651 = vld [vmem:[%s1650] ss:$2 sm:$0xff]
        %s1652 = scalar_lea.vmem [#allocation2], 17
        %v1653 = vld [vmem:[%s1652] ss:$2 sm:$0xff]
        %v1654 = vadd.f32 %v1647, %v1651
        %v1655 = vadd.f32 %v1649, %v1653
        %v1656 = vmul.f32 %v1654, 0.5
        %v1657 = vmul.f32 %v1655, 0.5
        %vm1658 = vcmp.lt.s32.totalorder %v651, 0
        %v1659 = vsub.s32 0, %v651
        %v1660 = vsel %vm1658, %v1659, %v651
        %v1661 = vshrl.u32 %v1660, 4
        %v1662 = vand.u32 %v1660, 15
        %v1663 = vsub.s32 0, %v1662
        %v1664 = vsel %vm1658, %v1663, %v1662
        %vm1665 = vcmp.lt.s32.totalorder %v652, 0
        %v1666 = vsub.s32 0, %v652
        %v1667 = vsel %vm1665, %v1666, %v652
        %v1668 = vshrl.u32 %v1667, 4
        %v1669 = vand.u32 %v1667, 15
        %v1670 = vsub.s32 0, %v1669
        %v1671 = vsel %vm1665, %v1670, %v1669
        %vm1672 = vcmp.ne.s32.totalorder %v1664, 0
        %vm1673 = vcmp.ne.s32.totalorder %v1671, 0
        %vm1674 = vcmp.lt.s32.totalorder %v1664, 0
        %vm1675 = vcmp.lt.s32.totalorder %v1671, 0
        %vm1676 = vmand %vm1674, %vm1672
        %vm1677 = vmand %vm1675, %vm1673
        %v1678 = vadd.s32 %v1664, 16
        %v1679 = vadd.s32 %v1671, 16
        %v1680 = vsel %vm1676, %v1678, %v1664
        %v1681 = vsel %vm1677, %v1679, %v1671
        %vm1682 = vcmp.ne.s32.totalorder %v1680, 0
        %vm1683 = vcmp.ne.s32.totalorder %v1681, 0
        %vm1684 = vcmp.ne.s32.totalorder %v1680, 15
        %vm1685 = vcmp.ne.s32.totalorder %v1681, 15
        %v1686 = vmul.f32 %v1656, 0.1
        %v1687 = vmul.f32 %v1657, 0.1
        %v1688 = vmax.f32 %v1656, %v1686
        %v1689 = vmax.f32 %v1657, %v1687
        %v1690 = vld [vmem:[#allocation11] sm:$0xf]
        %v1691 = vld [vmem:[#allocation11 + $0x4] sm:$0xf]
        %v1692 = vld [vmem:[#allocation11 + $0x8] sm:$0xf]
        %v1693 = vld [vmem:[#allocation11 + $0xc] sm:$0xf]
        %v1694 = vld [vmem:[#allocation11 + $0x10] sm:$0xf]
        %v1695 = vld [vmem:[#allocation11 + $0x14] sm:$0xf]
        %v1696 = vld [vmem:[#allocation11 + $0x18] sm:$0xf]
        %v1697 = vld [vmem:[#allocation11 + $0x1c] sm:$0xf]
        %v1698 = vld [vmem:[#allocation11 + $0x20] sm:$0xf]
        %v1699 = vld [vmem:[#allocation11 + $0x24] sm:$0xf]
        %v1700 = vld [vmem:[#allocation11 + $0x28] sm:$0xf]
        %v1701 = vld [vmem:[#allocation11 + $0x2c] sm:$0xf]
        %v1702 = vld [vmem:[#allocation11 + $0x30] sm:$0xf]
        %v1703 = vld [vmem:[#allocation11 + $0x34] sm:$0xf]
        %v1704 = vld [vmem:[#allocation11 + $0x38] sm:$0xf]
        %v1705 = vld [vmem:[#allocation11 + $0x3c] sm:$0xf]
        %s1706 = scalar_lea.vmem [#allocation11], 64
        %v1707 = vld [vmem:[%s1706] sm:$0xf]
        %v1708 = vld [vmem:[%s1706 + $0x4] sm:$0xf]
        %v1709 = vld [vmem:[%s1706 + $0x8] sm:$0xf]
        %v1710 = vld [vmem:[%s1706 + $0xc] sm:$0xf]
        %v1711 = vld [vmem:[%s1706 + $0x10] sm:$0xf]
        %v1712 = vld [vmem:[%s1706 + $0x14] sm:$0xf]
        %v1713 = vld [vmem:[%s1706 + $0x18] sm:$0xf]
        %v1714 = vld [vmem:[%s1706 + $0x1c] sm:$0xf]
        %v1715 = vld [vmem:[%s1706 + $0x20] sm:$0xf]
        %v1716 = vld [vmem:[%s1706 + $0x24] sm:$0xf]
        %v1717 = vld [vmem:[%s1706 + $0x28] sm:$0xf]
        %v1718 = vld [vmem:[%s1706 + $0x2c] sm:$0xf]
        %v1719 = vld [vmem:[%s1706 + $0x30] sm:$0xf]
        %v1720 = vld [vmem:[%s1706 + $0x34] sm:$0xf]
        %v1721 = vld [vmem:[%s1706 + $0x38] sm:$0xf]
        %v1722 = vld [vmem:[%s1706 + $0x3c] sm:$0xf]
        %s1723 = scalar_lea.vmem [#allocation11], 128
        %v1724 = vld [vmem:[%s1723] sm:$0xf]
        %v1725 = vld [vmem:[%s1723 + $0x4] sm:$0xf]
        %v1726 = vld [vmem:[%s1723 + $0x8] sm:$0xf]
        %v1727 = vld [vmem:[%s1723 + $0xc] sm:$0xf]
        %v1728 = vld [vmem:[%s1723 + $0x10] sm:$0xf]
        %v1729 = vld [vmem:[%s1723 + $0x14] sm:$0xf]
        %v1730 = vld [vmem:[%s1723 + $0x18] sm:$0xf]
        %v1731 = vld [vmem:[%s1723 + $0x1c] sm:$0xf]
        %v1732 = vld [vmem:[%s1723 + $0x20] sm:$0xf]
        %v1733 = vld [vmem:[%s1723 + $0x24] sm:$0xf]
        %v1734 = vld [vmem:[%s1723 + $0x28] sm:$0xf]
        %v1735 = vld [vmem:[%s1723 + $0x2c] sm:$0xf]
        %v1736 = vld [vmem:[%s1723 + $0x30] sm:$0xf]
        %v1737 = vld [vmem:[%s1723 + $0x34] sm:$0xf]
        %v1738 = vld [vmem:[%s1723 + $0x38] sm:$0xf]
        %v1739 = vld [vmem:[%s1723 + $0x3c] sm:$0xf]
        %v1740 = vld [vmem:[%s9] sm:$0x1]
        %v1741 = vrot.slane %v1688, 7
        %v1742 = vrot.slane %v1689, 7
        %v1743 = vsel %vm766, %v1741, %v1742
        %v1744 = vsel %vm766, %v1742, %v1741
        %v1745 = vsel %vm1682, 1, 0
        %v1746 = vsel %vm1683, 1, 0
        %vm1747 = vcmp.eq.s32.totalorder %v1745, 1
        %vm1748 = vcmp.eq.s32.totalorder %v1746, 1
        %v1749 = vsel %vm1747, %v1744, 0.0
        %v1750 = vsel %vm1748, %v1743, 0.0
        %v1751 = vrot.slane %v1688, 1
        %v1752 = vrot.slane %v1689, 1
        %v1753 = vsel %vm787, %v1751, %v1752
        %v1754 = vsel %vm787, %v1752, %v1751
        %v1755 = vsel %vm1684, 1, 0
        %v1756 = vsel %vm1685, 1, 0
        %vm1757 = vcmp.eq.s32.totalorder %v1755, 1
        %vm1758 = vcmp.eq.s32.totalorder %v1756, 1
        %v1759 = vsel %vm1757, %v1753, 0.0
        %v1760 = vsel %vm1758, %v1754, 0.0
        %v1761 = vpack.c.bf16 %v1750, %v1749
        %v1762 = vpack.c.bf16 %v1689, %v1688
        %v1779 = vunpack.c.l.b16 %v1707
        %v1780 = vunpack.c.l.b16 %v1708
        %v1781 = vunpack.c.l.b16 %v1709
        %v1782 = vunpack.c.l.b16 %v1710
        %v1783 = vunpack.c.l.b16 %v1711
        %v1784 = vunpack.c.l.b16 %v1712
        %v1785 = vunpack.c.l.b16 %v1713
        %v1786 = vunpack.c.l.b16 %v1714
        %v1787 = vunpack.c.l.b16 %v1715
        %v1788 = vunpack.c.l.b16 %v1716
        %v1789 = vunpack.c.l.b16 %v1717
        %v1790 = vunpack.c.l.b16 %v1718
        %v1791 = vunpack.c.l.b16 %v1719
        %v1792 = vunpack.c.l.b16 %v1720
        %v1793 = vunpack.c.l.b16 %v1721
        %v1794 = vunpack.c.l.b16 %v1722
        %v1795 = vpack.c.b16 %v1780, %v1779
        %v1796 = vpack.c.b16 %v1782, %v1781
        %v1797 = vpack.c.b16 %v1784, %v1783
        %v1798 = vpack.c.b16 %v1786, %v1785
        %v1799 = vpack.c.b16 %v1788, %v1787
        %v1800 = vpack.c.b16 %v1790, %v1789
        %v1801 = vpack.c.b16 %v1792, %v1791
        %v1802 = vpack.c.b16 %v1794, %v1793
        %1811 = vmatprep.subr.bf16.mxu0 0
        %1812 = vmatpush1.bf16.msra.mxu0 %v1795
        %1813 = vmatprep.subr.bf16.mxu0 0
        %1814 = vmatpush1.bf16.msra.mxu0 %v1796
        %1815 = vmatprep.subr.bf16.mxu0 0
        %1816 = vmatpush1.bf16.msra.mxu0 %v1797
        %1817 = vmatprep.subr.bf16.mxu0 0
        %1818 = vmatpush1.bf16.msra.mxu0 %v1798
        %1819 = vmatprep.subr.bf16.mxu0 0
        %1820 = vmatpush1.bf16.msra.mxu0 %v1799
        %1821 = vmatprep.subr.bf16.mxu0 0
        %1822 = vmatpush1.bf16.msra.mxu0 %v1800
        %1823 = vmatprep.subr.bf16.mxu0 0
        %1824 = vmatpush1.bf16.msra.mxu0 %v1801
        %1825 = vmatprep.subr.bf16.mxu0 0
        %1826 = vmatpush1.bf16.msra.mxu0 %v1802
        %1827 = vmatprep.subr.bf16.mxu0 0
        %1828 = vmatpush1.bf16.msra.mxu0 0
        %1829 = vmatprep.subr.bf16.mxu0 0
        %1830 = vmatpush1.bf16.msra.mxu0 0
        %1831 = vmatprep.subr.bf16.mxu0 0
        %1832 = vmatpush1.bf16.msra.mxu0 0
        %1833 = vmatprep.subr.bf16.mxu0 0
        %1834 = vmatpush1.bf16.msra.mxu0 0
        %1835 = vmatprep.subr.bf16.mxu0 0
        %1836 = vmatpush1.bf16.msra.mxu0 0
        %1837 = vmatprep.subr.bf16.mxu0 0
        %1838 = vmatpush1.bf16.msra.mxu0 0
        %1839 = vmatprep.subr.bf16.mxu0 0
        %1840 = vmatpush1.bf16.msra.mxu0 0
        %1841 = vmatprep.subr.bf16.mxu0 0
        %1842 = vmatpush1.bf16.msra.mxu0 0
        %1843 = vmatprep.mubr.bf16.mxu0 0
        %1844 = vmatmul.mubr.bf16.gmra.mrb[0].mxu0 %v1762
        %v1845 = vpop.f32.mrb[0].mxu0
        %v1846 = vadd.f32 0.0, %v1845
        %v1847 = vpop.f32.mrb[0].mxu0
        %v1848 = vpop.f32.mrb[0].mxu0
        %v1849 = vadd.f32 0.0, %v1848
        %v1850 = vpop.f32.mrb[0].mxu0
        %1851 = vdwg.mxu0
        %v1868 = vunpack.c.l.b16 %v1690
        %v1869 = vunpack.c.l.b16 %v1691
        %v1870 = vunpack.c.l.b16 %v1692
        %v1871 = vunpack.c.l.b16 %v1693
        %v1872 = vunpack.c.l.b16 %v1694
        %v1873 = vunpack.c.l.b16 %v1695
        %v1874 = vunpack.c.l.b16 %v1696
        %v1875 = vunpack.c.l.b16 %v1697
        %v1876 = vunpack.c.l.b16 %v1698
        %v1877 = vunpack.c.l.b16 %v1699
        %v1878 = vunpack.c.l.b16 %v1700
        %v1879 = vunpack.c.l.b16 %v1701
        %v1880 = vunpack.c.l.b16 %v1702
        %v1881 = vunpack.c.l.b16 %v1703
        %v1882 = vunpack.c.l.b16 %v1704
        %v1883 = vunpack.c.l.b16 %v1705
        %v1884 = vpack.c.b16 %v1869, %v1868
        %v1885 = vpack.c.b16 %v1871, %v1870
        %v1886 = vpack.c.b16 %v1873, %v1872
        %v1887 = vpack.c.b16 %v1875, %v1874
        %v1888 = vpack.c.b16 %v1877, %v1876
        %v1889 = vpack.c.b16 %v1879, %v1878
        %v1890 = vpack.c.b16 %v1881, %v1880
        %v1891 = vpack.c.b16 %v1883, %v1882
        %1900 = vmatprep.subr.bf16.mxu0 0
        %1901 = vmatpush1.bf16.msra.mxu0 %v1884
        %1902 = vmatprep.subr.bf16.mxu0 0
        %1903 = vmatpush1.bf16.msra.mxu0 %v1885
        %1904 = vmatprep.subr.bf16.mxu0 0
        %1905 = vmatpush1.bf16.msra.mxu0 %v1886
        %1906 = vmatprep.subr.bf16.mxu0 0
        %1907 = vmatpush1.bf16.msra.mxu0 %v1887
        %1908 = vmatprep.subr.bf16.mxu0 0
        %1909 = vmatpush1.bf16.msra.mxu0 %v1888
        %1910 = vmatprep.subr.bf16.mxu0 0
        %1911 = vmatpush1.bf16.msra.mxu0 %v1889
        %1912 = vmatprep.subr.bf16.mxu0 0
        %1913 = vmatpush1.bf16.msra.mxu0 %v1890
        %1914 = vmatprep.subr.bf16.mxu0 0
        %1915 = vmatpush1.bf16.msra.mxu0 %v1891
        %1916 = vmatprep.subr.bf16.mxu0 0
        %1917 = vmatpush1.bf16.msra.mxu0 0
        %1918 = vmatprep.subr.bf16.mxu0 0
        %1919 = vmatpush1.bf16.msra.mxu0 0
        %1920 = vmatprep.subr.bf16.mxu0 0
        %1921 = vmatpush1.bf16.msra.mxu0 0
        %1922 = vmatprep.subr.bf16.mxu0 0
        %1923 = vmatpush1.bf16.msra.mxu0 0
        %1924 = vmatprep.subr.bf16.mxu0 0
        %1925 = vmatpush1.bf16.msra.mxu0 0
        %1926 = vmatprep.subr.bf16.mxu0 0
        %1927 = vmatpush1.bf16.msra.mxu0 0
        %1928 = vmatprep.subr.bf16.mxu0 0
        %1929 = vmatpush1.bf16.msra.mxu0 0
        %1930 = vmatprep.subr.bf16.mxu0 0
        %1931 = vmatpush1.bf16.msra.mxu0 0
        %1932 = vmatprep.mubr.bf16.mxu0 0
        %1933 = vmatmul.mubr.bf16.gmra.mrb[0].mxu0 %v1761
        %v1934 = vpop.f32.mrb[0].mxu0
        %v1935 = vadd.f32 %v1846, %v1934
        %v1936 = vpop.f32.mrb[0].mxu0
        %v1937 = vpop.f32.mrb[0].mxu0
        %v1938 = vadd.f32 %v1849, %v1937
        %v1939 = vpop.f32.mrb[0].mxu0
        %1940 = vdwg.mxu0
        %v1941 = vpack.c.bf16 %v1760, %v1759
        %v1958 = vunpack.c.l.b16 %v1724
        %v1959 = vunpack.c.l.b16 %v1725
        %v1960 = vunpack.c.l.b16 %v1726
        %v1961 = vunpack.c.l.b16 %v1727
        %v1962 = vunpack.c.l.b16 %v1728
        %v1963 = vunpack.c.l.b16 %v1729
        %v1964 = vunpack.c.l.b16 %v1730
        %v1965 = vunpack.c.l.b16 %v1731
        %v1966 = vunpack.c.l.b16 %v1732
        %v1967 = vunpack.c.l.b16 %v1733
        %v1968 = vunpack.c.l.b16 %v1734
        %v1969 = vunpack.c.l.b16 %v1735
        %v1970 = vunpack.c.l.b16 %v1736
        %v1971 = vunpack.c.l.b16 %v1737
        %v1972 = vunpack.c.l.b16 %v1738
        %v1973 = vunpack.c.l.b16 %v1739
        %v1974 = vpack.c.b16 %v1959, %v1958
        %v1975 = vpack.c.b16 %v1961, %v1960
        %v1976 = vpack.c.b16 %v1963, %v1962
        %v1977 = vpack.c.b16 %v1965, %v1964
        %v1978 = vpack.c.b16 %v1967, %v1966
        %v1979 = vpack.c.b16 %v1969, %v1968
        %v1980 = vpack.c.b16 %v1971, %v1970
        %v1981 = vpack.c.b16 %v1973, %v1972
        %1990 = vmatprep.subr.bf16.mxu0 0
        %1991 = vmatpush1.bf16.msra.mxu0 %v1974
        %1992 = vmatprep.subr.bf16.mxu0 0
        %1993 = vmatpush1.bf16.msra.mxu0 %v1975
        %1994 = vmatprep.subr.bf16.mxu0 0
        %1995 = vmatpush1.bf16.msra.mxu0 %v1976
        %1996 = vmatprep.subr.bf16.mxu0 0
        %1997 = vmatpush1.bf16.msra.mxu0 %v1977
        %1998 = vmatprep.subr.bf16.mxu0 0
        %1999 = vmatpush1.bf16.msra.mxu0 %v1978
        %2000 = vmatprep.subr.bf16.mxu0 0
        %2001 = vmatpush1.bf16.msra.mxu0 %v1979
        %2002 = vmatprep.subr.bf16.mxu0 0
        %2003 = vmatpush1.bf16.msra.mxu0 %v1980
        %2004 = vmatprep.subr.bf16.mxu0 0
        %2005 = vmatpush1.bf16.msra.mxu0 %v1981
        %2006 = vmatprep.subr.bf16.mxu0 0
        %2007 = vmatpush1.bf16.msra.mxu0 0
        %2008 = vmatprep.subr.bf16.mxu0 0
        %2009 = vmatpush1.bf16.msra.mxu0 0
        %2010 = vmatprep.subr.bf16.mxu0 0
        %2011 = vmatpush1.bf16.msra.mxu0 0
        %2012 = vmatprep.subr.bf16.mxu0 0
        %2013 = vmatpush1.bf16.msra.mxu0 0
        %2014 = vmatprep.subr.bf16.mxu0 0
        %2015 = vmatpush1.bf16.msra.mxu0 0
        %2016 = vmatprep.subr.bf16.mxu0 0
        %2017 = vmatpush1.bf16.msra.mxu0 0
        %2018 = vmatprep.subr.bf16.mxu0 0
        %2019 = vmatpush1.bf16.msra.mxu0 0
        %2020 = vmatprep.subr.bf16.mxu0 0
        %2021 = vmatpush1.bf16.msra.mxu0 0
        %2022 = vmatprep.mubr.bf16.mxu0 0
        %2023 = vmatmul.mubr.bf16.gmra.mrb[0].mxu0 %v1941
        %v2024 = vpop.f32.mrb[0].mxu0
        %v2025 = vadd.f32 0.0, %v2024
        %v2026 = vpop.f32.mrb[0].mxu0
        %v2027 = vpop.f32.mrb[0].mxu0
        %v2028 = vadd.f32 0.0, %v2027
        %v2029 = vpop.f32.mrb[0].mxu0
        %2030 = vdwg.mxu0
        %v2031 = vadd.f32 %v1935, %v2025
        %v2032 = vadd.f32 %v1938, %v2028
        %v2034 = vlaneseq
        %v2035 = vshrl.u32 %v2034, 7
        %v2036 = vsub.s32 0, %v2035
        %v2037 = vrot.slane %v1740, %v2036
        %v2039 = vadd.f32 %v2031, %v2037
        %v2040 = vadd.f32 %v2032, %v2037
        %v2041 = vmul.f32 %v2039, 0.1
        %v2042 = vmul.f32 %v2040, 0.1
        %v2043 = vmax.f32 %v2039, %v2041
        %v2044 = vmax.f32 %v2040, %v2042
        %v2045 = vld [vmem:[#allocation12] sm:$0xf]
        %v2046 = vld [vmem:[#allocation12 + $0x4] sm:$0xf]
        %v2047 = vld [vmem:[#allocation12 + $0x8] sm:$0xf]
        %v2048 = vld [vmem:[#allocation12 + $0xc] sm:$0xf]
        %v2049 = vld [vmem:[#allocation12 + $0x10] sm:$0xf]
        %v2050 = vld [vmem:[#allocation12 + $0x14] sm:$0xf]
        %v2051 = vld [vmem:[#allocation12 + $0x18] sm:$0xf]
        %v2052 = vld [vmem:[#allocation12 + $0x1c] sm:$0xf]
        %v2053 = vld [vmem:[#allocation12 + $0x20] sm:$0xf]
        %v2054 = vld [vmem:[#allocation12 + $0x24] sm:$0xf]
        %v2055 = vld [vmem:[#allocation12 + $0x28] sm:$0xf]
        %v2056 = vld [vmem:[#allocation12 + $0x2c] sm:$0xf]
        %v2057 = vld [vmem:[#allocation12 + $0x30] sm:$0xf]
        %v2058 = vld [vmem:[#allocation12 + $0x34] sm:$0xf]
        %v2059 = vld [vmem:[#allocation12 + $0x38] sm:$0xf]
        %v2060 = vld [vmem:[#allocation12 + $0x3c] sm:$0xf]
        %s2061 = scalar_lea.vmem [#allocation12], 64
        %v2062 = vld [vmem:[%s2061] sm:$0xf]
        %v2063 = vld [vmem:[%s2061 + $0x4] sm:$0xf]
        %v2064 = vld [vmem:[%s2061 + $0x8] sm:$0xf]
        %v2065 = vld [vmem:[%s2061 + $0xc] sm:$0xf]
        %v2066 = vld [vmem:[%s2061 + $0x10] sm:$0xf]
        %v2067 = vld [vmem:[%s2061 + $0x14] sm:$0xf]
        %v2068 = vld [vmem:[%s2061 + $0x18] sm:$0xf]
        %v2069 = vld [vmem:[%s2061 + $0x1c] sm:$0xf]
        %v2070 = vld [vmem:[%s2061 + $0x20] sm:$0xf]
        %v2071 = vld [vmem:[%s2061 + $0x24] sm:$0xf]
        %v2072 = vld [vmem:[%s2061 + $0x28] sm:$0xf]
        %v2073 = vld [vmem:[%s2061 + $0x2c] sm:$0xf]
        %v2074 = vld [vmem:[%s2061 + $0x30] sm:$0xf]
        %v2075 = vld [vmem:[%s2061 + $0x34] sm:$0xf]
        %v2076 = vld [vmem:[%s2061 + $0x38] sm:$0xf]
        %v2077 = vld [vmem:[%s2061 + $0x3c] sm:$0xf]
        %s2078 = scalar_lea.vmem [#allocation12], 128
        %v2079 = vld [vmem:[%s2078] sm:$0xf]
        %v2080 = vld [vmem:[%s2078 + $0x4] sm:$0xf]
        %v2081 = vld [vmem:[%s2078 + $0x8] sm:$0xf]
        %v2082 = vld [vmem:[%s2078 + $0xc] sm:$0xf]
        %v2083 = vld [vmem:[%s2078 + $0x10] sm:$0xf]
        %v2084 = vld [vmem:[%s2078 + $0x14] sm:$0xf]
        %v2085 = vld [vmem:[%s2078 + $0x18] sm:$0xf]
        %v2086 = vld [vmem:[%s2078 + $0x1c] sm:$0xf]
        %v2087 = vld [vmem:[%s2078 + $0x20] sm:$0xf]
        %v2088 = vld [vmem:[%s2078 + $0x24] sm:$0xf]
        %v2089 = vld [vmem:[%s2078 + $0x28] sm:$0xf]
        %v2090 = vld [vmem:[%s2078 + $0x2c] sm:$0xf]
        %v2091 = vld [vmem:[%s2078 + $0x30] sm:$0xf]
        %v2092 = vld [vmem:[%s2078 + $0x34] sm:$0xf]
        %v2093 = vld [vmem:[%s2078 + $0x38] sm:$0xf]
        %v2094 = vld [vmem:[%s2078 + $0x3c] sm:$0xf]
        %v2095 = vld [vmem:[%s11] sm:$0x1]
        %v2096 = vrot.slane %v2043, 7
        %v2097 = vrot.slane %v2044, 7
        %v2098 = vsel %vm766, %v2096, %v2097
        %v2099 = vsel %vm766, %v2097, %v2096
        %v2100 = vsel %vm1747, %v2099, 0.0
        %v2101 = vsel %vm1748, %v2098, 0.0
        %v2102 = vrot.slane %v2043, 1
        %v2103 = vrot.slane %v2044, 1
        %v2104 = vsel %vm787, %v2102, %v2103
        %v2105 = vsel %vm787, %v2103, %v2102
        %v2106 = vsel %vm1757, %v2104, 0.0
        %v2107 = vsel %vm1758, %v2105, 0.0
        %v2108 = vpack.c.bf16 %v2101, %v2100
        %v2109 = vpack.c.bf16 %v2044, %v2043
        %v2126 = vunpack.c.l.b16 %v2062
        %v2127 = vunpack.c.l.b16 %v2063
        %v2128 = vunpack.c.l.b16 %v2064
        %v2129 = vunpack.c.l.b16 %v2065
        %v2130 = vunpack.c.l.b16 %v2066
        %v2131 = vunpack.c.l.b16 %v2067
        %v2132 = vunpack.c.l.b16 %v2068
        %v2133 = vunpack.c.l.b16 %v2069
        %v2134 = vunpack.c.l.b16 %v2070
        %v2135 = vunpack.c.l.b16 %v2071
        %v2136 = vunpack.c.l.b16 %v2072
        %v2137 = vunpack.c.l.b16 %v2073
        %v2138 = vunpack.c.l.b16 %v2074
        %v2139 = vunpack.c.l.b16 %v2075
        %v2140 = vunpack.c.l.b16 %v2076
        %v2141 = vunpack.c.l.b16 %v2077
        %v2142 = vpack.c.b16 %v2127, %v2126
        %v2143 = vpack.c.b16 %v2129, %v2128
        %v2144 = vpack.c.b16 %v2131, %v2130
        %v2145 = vpack.c.b16 %v2133, %v2132
        %v2146 = vpack.c.b16 %v2135, %v2134
        %v2147 = vpack.c.b16 %v2137, %v2136
        %v2148 = vpack.c.b16 %v2139, %v2138
        %v2149 = vpack.c.b16 %v2141, %v2140
        %2158 = vmatprep.subr.bf16.mxu0 0
        %2159 = vmatpush1.bf16.msra.mxu0 %v2142
        %2160 = vmatprep.subr.bf16.mxu0 0
        %2161 = vmatpush1.bf16.msra.mxu0 %v2143
        %2162 = vmatprep.subr.bf16.mxu0 0
        %2163 = vmatpush1.bf16.msra.mxu0 %v2144
        %2164 = vmatprep.subr.bf16.mxu0 0
        %2165 = vmatpush1.bf16.msra.mxu0 %v2145
        %2166 = vmatprep.subr.bf16.mxu0 0
        %2167 = vmatpush1.bf16.msra.mxu0 %v2146
        %2168 = vmatprep.subr.bf16.mxu0 0
        %2169 = vmatpush1.bf16.msra.mxu0 %v2147
        %2170 = vmatprep.subr.bf16.mxu0 0
        %2171 = vmatpush1.bf16.msra.mxu0 %v2148
        %2172 = vmatprep.subr.bf16.mxu0 0
        %2173 = vmatpush1.bf16.msra.mxu0 %v2149
        %2174 = vmatprep.subr.bf16.mxu0 0
        %2175 = vmatpush1.bf16.msra.mxu0 0
        %2176 = vmatprep.subr.bf16.mxu0 0
        %2177 = vmatpush1.bf16.msra.mxu0 0
        %2178 = vmatprep.subr.bf16.mxu0 0
        %2179 = vmatpush1.bf16.msra.mxu0 0
        %2180 = vmatprep.subr.bf16.mxu0 0
        %2181 = vmatpush1.bf16.msra.mxu0 0
        %2182 = vmatprep.subr.bf16.mxu0 0
        %2183 = vmatpush1.bf16.msra.mxu0 0
        %2184 = vmatprep.subr.bf16.mxu0 0
        %2185 = vmatpush1.bf16.msra.mxu0 0
        %2186 = vmatprep.subr.bf16.mxu0 0
        %2187 = vmatpush1.bf16.msra.mxu0 0
        %2188 = vmatprep.subr.bf16.mxu0 0
        %2189 = vmatpush1.bf16.msra.mxu0 0
        %2190 = vmatprep.mubr.bf16.mxu0 0
        %2191 = vmatmul.mubr.bf16.gmra.mrb[0].mxu0 %v2109
        %v2192 = vpop.f32.mrb[0].mxu0
        %v2193 = vadd.f32 0.0, %v2192
        %v2194 = vpop.f32.mrb[0].mxu0
        %v2195 = vpop.f32.mrb[0].mxu0
        %v2196 = vadd.f32 0.0, %v2195
        %v2197 = vpop.f32.mrb[0].mxu0
        %2198 = vdwg.mxu0
        %v2215 = vunpack.c.l.b16 %v2045
        %v2216 = vunpack.c.l.b16 %v2046
        %v2217 = vunpack.c.l.b16 %v2047
        %v2218 = vunpack.c.l.b16 %v2048
        %v2219 = vunpack.c.l.b16 %v2049
        %v2220 = vunpack.c.l.b16 %v2050
        %v2221 = vunpack.c.l.b16 %v2051
        %v2222 = vunpack.c.l.b16 %v2052
        %v2223 = vunpack.c.l.b16 %v2053
        %v2224 = vunpack.c.l.b16 %v2054
        %v2225 = vunpack.c.l.b16 %v2055
        %v2226 = vunpack.c.l.b16 %v2056
        %v2227 = vunpack.c.l.b16 %v2057
        %v2228 = vunpack.c.l.b16 %v2058
        %v2229 = vunpack.c.l.b16 %v2059
        %v2230 = vunpack.c.l.b16 %v2060
        %v2231 = vpack.c.b16 %v2216, %v2215
        %v2232 = vpack.c.b16 %v2218, %v2217
        %v2233 = vpack.c.b16 %v2220, %v2219
        %v2234 = vpack.c.b16 %v2222, %v2221
        %v2235 = vpack.c.b16 %v2224, %v2223
        %v2236 = vpack.c.b16 %v2226, %v2225
        %v2237 = vpack.c.b16 %v2228, %v2227
        %v2238 = vpack.c.b16 %v2230, %v2229
        %2247 = vmatprep.subr.bf16.mxu0 0
        %2248 = vmatpush1.bf16.msra.mxu0 %v2231
        %2249 = vmatprep.subr.bf16.mxu0 0
        %2250 = vmatpush1.bf16.msra.mxu0 %v2232
        %2251 = vmatprep.subr.bf16.mxu0 0
        %2252 = vmatpush1.bf16.msra.mxu0 %v2233
        %2253 = vmatprep.subr.bf16.mxu0 0
        %2254 = vmatpush1.bf16.msra.mxu0 %v2234
        %2255 = vmatprep.subr.bf16.mxu0 0
        %2256 = vmatpush1.bf16.msra.mxu0 %v2235
        %2257 = vmatprep.subr.bf16.mxu0 0
        %2258 = vmatpush1.bf16.msra.mxu0 %v2236
        %2259 = vmatprep.subr.bf16.mxu0 0
        %2260 = vmatpush1.bf16.msra.mxu0 %v2237
        %2261 = vmatprep.subr.bf16.mxu0 0
        %2262 = vmatpush1.bf16.msra.mxu0 %v2238
        %2263 = vmatprep.subr.bf16.mxu0 0
        %2264 = vmatpush1.bf16.msra.mxu0 0
        %2265 = vmatprep.subr.bf16.mxu0 0
        %2266 = vmatpush1.bf16.msra.mxu0 0
        %2267 = vmatprep.subr.bf16.mxu0 0
        %2268 = vmatpush1.bf16.msra.mxu0 0
        %2269 = vmatprep.subr.bf16.mxu0 0
        %2270 = vmatpush1.bf16.msra.mxu0 0
        %2271 = vmatprep.subr.bf16.mxu0 0
        %2272 = vmatpush1.bf16.msra.mxu0 0
        %2273 = vmatprep.subr.bf16.mxu0 0
        %2274 = vmatpush1.bf16.msra.mxu0 0
        %2275 = vmatprep.subr.bf16.mxu0 0
        %2276 = vmatpush1.bf16.msra.mxu0 0
        %2277 = vmatprep.subr.bf16.mxu0 0
        %2278 = vmatpush1.bf16.msra.mxu0 0
        %2279 = vmatprep.mubr.bf16.mxu0 0
        %2280 = vmatmul.mubr.bf16.gmra.mrb[0].mxu0 %v2108
        %v2281 = vpop.f32.mrb[0].mxu0
        %v2282 = vadd.f32 %v2193, %v2281
        %v2283 = vpop.f32.mrb[0].mxu0
        %v2284 = vpop.f32.mrb[0].mxu0
        %v2285 = vadd.f32 %v2196, %v2284
        %v2286 = vpop.f32.mrb[0].mxu0
        %2287 = vdwg.mxu0
        %v2288 = vpack.c.bf16 %v2107, %v2106
        %v2305 = vunpack.c.l.b16 %v2079
        %v2306 = vunpack.c.l.b16 %v2080
        %v2307 = vunpack.c.l.b16 %v2081
        %v2308 = vunpack.c.l.b16 %v2082
        %v2309 = vunpack.c.l.b16 %v2083
        %v2310 = vunpack.c.l.b16 %v2084
        %v2311 = vunpack.c.l.b16 %v2085
        %v2312 = vunpack.c.l.b16 %v2086
        %v2313 = vunpack.c.l.b16 %v2087
        %v2314 = vunpack.c.l.b16 %v2088
        %v2315 = vunpack.c.l.b16 %v2089
        %v2316 = vunpack.c.l.b16 %v2090
        %v2317 = vunpack.c.l.b16 %v2091
        %v2318 = vunpack.c.l.b16 %v2092
        %v2319 = vunpack.c.l.b16 %v2093
        %v2320 = vunpack.c.l.b16 %v2094
        %v2321 = vpack.c.b16 %v2306, %v2305
        %v2322 = vpack.c.b16 %v2308, %v2307
        %v2323 = vpack.c.b16 %v2310, %v2309
        %v2324 = vpack.c.b16 %v2312, %v2311
        %v2325 = vpack.c.b16 %v2314, %v2313
        %v2326 = vpack.c.b16 %v2316, %v2315
        %v2327 = vpack.c.b16 %v2318, %v2317
        %v2328 = vpack.c.b16 %v2320, %v2319
        %2337 = vmatprep.subr.bf16.mxu0 0
        %2338 = vmatpush1.bf16.msra.mxu0 %v2321
        %2339 = vmatprep.subr.bf16.mxu0 0
        %2340 = vmatpush1.bf16.msra.mxu0 %v2322
        %2341 = vmatprep.subr.bf16.mxu0 0
        %2342 = vmatpush1.bf16.msra.mxu0 %v2323
        %2343 = vmatprep.subr.bf16.mxu0 0
        %2344 = vmatpush1.bf16.msra.mxu0 %v2324
        %2345 = vmatprep.subr.bf16.mxu0 0
        %2346 = vmatpush1.bf16.msra.mxu0 %v2325
        %2347 = vmatprep.subr.bf16.mxu0 0
        %2348 = vmatpush1.bf16.msra.mxu0 %v2326
        %2349 = vmatprep.subr.bf16.mxu0 0
        %2350 = vmatpush1.bf16.msra.mxu0 %v2327
        %2351 = vmatprep.subr.bf16.mxu0 0
        %2352 = vmatpush1.bf16.msra.mxu0 %v2328
        %2353 = vmatprep.subr.bf16.mxu0 0
        %2354 = vmatpush1.bf16.msra.mxu0 0
        %2355 = vmatprep.subr.bf16.mxu0 0
        %2356 = vmatpush1.bf16.msra.mxu0 0
        %2357 = vmatprep.subr.bf16.mxu0 0
        %2358 = vmatpush1.bf16.msra.mxu0 0
        %2359 = vmatprep.subr.bf16.mxu0 0
        %2360 = vmatpush1.bf16.msra.mxu0 0
        %2361 = vmatprep.subr.bf16.mxu0 0
        %2362 = vmatpush1.bf16.msra.mxu0 0
        %2363 = vmatprep.subr.bf16.mxu0 0
        %2364 = vmatpush1.bf16.msra.mxu0 0
        %2365 = vmatprep.subr.bf16.mxu0 0
        %2366 = vmatpush1.bf16.msra.mxu0 0
        %2367 = vmatprep.subr.bf16.mxu0 0
        %2368 = vmatpush1.bf16.msra.mxu0 0
        %2369 = vmatprep.mubr.bf16.mxu0 0
        %2370 = vmatmul.mubr.bf16.gmra.mrb[0].mxu0 %v2288
        %v2371 = vpop.f32.mrb[0].mxu0
        %v2372 = vadd.f32 0.0, %v2371
        %v2373 = vpop.f32.mrb[0].mxu0
        %v2374 = vpop.f32.mrb[0].mxu0
        %v2375 = vadd.f32 0.0, %v2374
        %v2376 = vpop.f32.mrb[0].mxu0
        %2377 = vdwg.mxu0
        %v2378 = vadd.f32 %v2282, %v2372
        %v2379 = vadd.f32 %v2285, %v2375
        %v2381 = vlaneseq
        %v2382 = vshrl.u32 %v2381, 7
        %v2383 = vsub.s32 0, %v2382
        %v2384 = vrot.slane %v2095, %v2383
        %v2386 = vadd.f32 %v2378, %v2384
        %v2387 = vadd.f32 %v2379, %v2384
        %v2388 = vpack.c.bf16 %v1657, %v1656
        %v2389 = vld [vmem:[#allocation14] sm:$0xf]
        %v2390 = vld [vmem:[#allocation14 + $0x4] sm:$0xf]
        %v2391 = vld [vmem:[#allocation14 + $0x8] sm:$0xf]
        %v2392 = vld [vmem:[#allocation14 + $0xc] sm:$0xf]
        %v2393 = vld [vmem:[#allocation14 + $0x10] sm:$0xf]
        %v2394 = vld [vmem:[#allocation14 + $0x14] sm:$0xf]
        %v2395 = vld [vmem:[#allocation14 + $0x18] sm:$0xf]
        %v2396 = vld [vmem:[#allocation14 + $0x1c] sm:$0xf]
        %v2397 = vld [vmem:[#allocation14 + $0x20] sm:$0xf]
        %v2398 = vld [vmem:[#allocation14 + $0x24] sm:$0xf]
        %v2399 = vld [vmem:[#allocation14 + $0x28] sm:$0xf]
        %v2400 = vld [vmem:[#allocation14 + $0x2c] sm:$0xf]
        %v2401 = vld [vmem:[#allocation14 + $0x30] sm:$0xf]
        %v2402 = vld [vmem:[#allocation14 + $0x34] sm:$0xf]
        %v2403 = vld [vmem:[#allocation14 + $0x38] sm:$0xf]
        %v2404 = vld [vmem:[#allocation14 + $0x3c] sm:$0xf]
        %v2405 = vld [vmem:[%s13] sm:$0x1]
        %v2407 = vlaneseq
        %v2408 = vshrl.u32 %v2407, 7
        %v2409 = vsub.s32 0, %v2408
        %v2410 = vrot.slane %v2405, %v2409
        %v2428 = vunpack.c.l.b16 %v2389
        %v2429 = vunpack.c.l.b16 %v2390
        %v2430 = vunpack.c.l.b16 %v2391
        %v2431 = vunpack.c.l.b16 %v2392
        %v2432 = vunpack.c.l.b16 %v2393
        %v2433 = vunpack.c.l.b16 %v2394
        %v2434 = vunpack.c.l.b16 %v2395
        %v2435 = vunpack.c.l.b16 %v2396
        %v2436 = vunpack.c.l.b16 %v2397
        %v2437 = vunpack.c.l.b16 %v2398
        %v2438 = vunpack.c.l.b16 %v2399
        %v2439 = vunpack.c.l.b16 %v2400
        %v2440 = vunpack.c.l.b16 %v2401
        %v2441 = vunpack.c.l.b16 %v2402
        %v2442 = vunpack.c.l.b16 %v2403
        %v2443 = vunpack.c.l.b16 %v2404
        %v2444 = vpack.c.b16 %v2429, %v2428
        %v2445 = vpack.c.b16 %v2431, %v2430
        %v2446 = vpack.c.b16 %v2433, %v2432
        %v2447 = vpack.c.b16 %v2435, %v2434
        %v2448 = vpack.c.b16 %v2437, %v2436
        %v2449 = vpack.c.b16 %v2439, %v2438
        %v2450 = vpack.c.b16 %v2441, %v2440
        %v2451 = vpack.c.b16 %v2443, %v2442
        %2460 = vmatprep.subr.bf16.mxu0 0
        %2461 = vmatpush1.bf16.msra.mxu0 %v2444
        %2462 = vmatprep.subr.bf16.mxu0 0
        %2463 = vmatpush1.bf16.msra.mxu0 %v2445
        %2464 = vmatprep.subr.bf16.mxu0 0
        %2465 = vmatpush1.bf16.msra.mxu0 %v2446
        %2466 = vmatprep.subr.bf16.mxu0 0
        %2467 = vmatpush1.bf16.msra.mxu0 %v2447
        %2468 = vmatprep.subr.bf16.mxu0 0
        %2469 = vmatpush1.bf16.msra.mxu0 %v2448
        %2470 = vmatprep.subr.bf16.mxu0 0
        %2471 = vmatpush1.bf16.msra.mxu0 %v2449
        %2472 = vmatprep.subr.bf16.mxu0 0
        %2473 = vmatpush1.bf16.msra.mxu0 %v2450
        %2474 = vmatprep.subr.bf16.mxu0 0
        %2475 = vmatpush1.bf16.msra.mxu0 %v2451
        %2476 = vmatprep.subr.bf16.mxu0 0
        %2477 = vmatpush1.bf16.msra.mxu0 0
        %2478 = vmatprep.subr.bf16.mxu0 0
        %2479 = vmatpush1.bf16.msra.mxu0 0
        %2480 = vmatprep.subr.bf16.mxu0 0
        %2481 = vmatpush1.bf16.msra.mxu0 0
        %2482 = vmatprep.subr.bf16.mxu0 0
        %2483 = vmatpush1.bf16.msra.mxu0 0
        %2484 = vmatprep.subr.bf16.mxu0 0
        %2485 = vmatpush1.bf16.msra.mxu0 0
        %2486 = vmatprep.subr.bf16.mxu0 0
        %2487 = vmatpush1.bf16.msra.mxu0 0
        %2488 = vmatprep.subr.bf16.mxu0 0
        %2489 = vmatpush1.bf16.msra.mxu0 0
        %2490 = vmatprep.subr.bf16.mxu0 0
        %2491 = vmatpush1.bf16.msra.mxu0 0
        %2492 = vmatprep.mubr.bf16.mxu0 0
        %2493 = vmatmul.mubr.bf16.gmra.mrb[0].mxu0 %v2388
        %v2494 = vpop.f32.mrb[0].mxu0
        %v2495 = vadd.f32 %v2410, %v2494
        %v2496 = vpop.f32.mrb[0].mxu0
        %v2497 = vpop.f32.mrb[0].mxu0
        %v2498 = vadd.f32 %v2410, %v2497
        %v2499 = vpop.f32.mrb[0].mxu0
        %2500 = vdwg.mxu0
        %v2501 = vadd.f32 %v2386, %v2495
        %v2502 = vadd.f32 %v2387, %v2498
        %2503 = vst [vmem:[#allocation2] sm:$0xff] %v2501
        %2504 = vst [vmem:[#allocation2 + $0x8] sm:$0xff] %v2502
        %v2505 = vld [vmem:[#allocation2] ss:$2 sm:$0xff]
        %v2506 = vld [vmem:[%s1650] ss:$2 sm:$0xff]
        %v2507 = vadd.f32 %v2505, %v2506
        %v2508 = vmul.f32 %v2507, 0.5
        %vm2509 = vcmp.lt.s32.totalorder %v651, 0
        %v2510 = vsub.s32 0, %v651
        %v2511 = vsel %vm2509, %v2510, %v651
        %v2512 = vshrl.u32 %v2511, 3
        %v2513 = vand.u32 %v2511, 7
        %v2514 = vsub.s32 0, %v2513
        %v2515 = vsel %vm2509, %v2514, %v2513
        %vm2516 = vcmp.ne.s32.totalorder %v2515, 0
        %vm2517 = vcmp.lt.s32.totalorder %v2515, 0
        %vm2518 = vmand %vm2517, %vm2516
        %v2519 = vadd.s32 %v2515, 8
        %v2520 = vsel %vm2518, %v2519, %v2515
        %vm2521 = vcmp.ne.s32.totalorder %v2520, 0
        %vm2522 = vcmp.ne.s32.totalorder %v2520, 7
        %v2523 = vmul.f32 %v2508, 0.1
        %v2524 = vmax.f32 %v2508, %v2523
        %s2525 = scalar_lea.vmem [#allocation11], 192
        %v2526 = vld [vmem:[%s2525] sm:$0xf]
        %v2527 = vld [vmem:[%s2525 + $0x4] sm:$0xf]
        %v2528 = vld [vmem:[%s2525 + $0x8] sm:$0xf]
        %v2529 = vld [vmem:[%s2525 + $0xc] sm:$0xf]
        %v2530 = vld [vmem:[%s2525 + $0x10] sm:$0xf]
        %v2531 = vld [vmem:[%s2525 + $0x14] sm:$0xf]
        %v2532 = vld [vmem:[%s2525 + $0x18] sm:$0xf]
        %v2533 = vld [vmem:[%s2525 + $0x1c] sm:$0xf]
        %v2534 = vld [vmem:[%s2525 + $0x20] sm:$0xf]
        %v2535 = vld [vmem:[%s2525 + $0x24] sm:$0xf]
        %v2536 = vld [vmem:[%s2525 + $0x28] sm:$0xf]
        %v2537 = vld [vmem:[%s2525 + $0x2c] sm:$0xf]
        %v2538 = vld [vmem:[%s2525 + $0x30] sm:$0xf]
        %v2539 = vld [vmem:[%s2525 + $0x34] sm:$0xf]
        %v2540 = vld [vmem:[%s2525 + $0x38] sm:$0xf]
        %v2541 = vld [vmem:[%s2525 + $0x3c] sm:$0xf]
        %s2542 = scalar_lea.vmem [#allocation11], 256
        %v2543 = vld [vmem:[%s2542] sm:$0xf]
        %v2544 = vld [vmem:[%s2542 + $0x4] sm:$0xf]
        %v2545 = vld [vmem:[%s2542 + $0x8] sm:$0xf]
        %v2546 = vld [vmem:[%s2542 + $0xc] sm:$0xf]
        %v2547 = vld [vmem:[%s2542 + $0x10] sm:$0xf]
        %v2548 = vld [vmem:[%s2542 + $0x14] sm:$0xf]
        %v2549 = vld [vmem:[%s2542 + $0x18] sm:$0xf]
        %v2550 = vld [vmem:[%s2542 + $0x1c] sm:$0xf]
        %v2551 = vld [vmem:[%s2542 + $0x20] sm:$0xf]
        %v2552 = vld [vmem:[%s2542 + $0x24] sm:$0xf]
        %v2553 = vld [vmem:[%s2542 + $0x28] sm:$0xf]
        %v2554 = vld [vmem:[%s2542 + $0x2c] sm:$0xf]
        %v2555 = vld [vmem:[%s2542 + $0x30] sm:$0xf]
        %v2556 = vld [vmem:[%s2542 + $0x34] sm:$0xf]
        %v2557 = vld [vmem:[%s2542 + $0x38] sm:$0xf]
        %v2558 = vld [vmem:[%s2542 + $0x3c] sm:$0xf]
        %s2559 = scalar_lea.vmem [#allocation11], 320
        %v2560 = vld [vmem:[%s2559] sm:$0xf]
        %v2561 = vld [vmem:[%s2559 + $0x4] sm:$0xf]
        %v2562 = vld [vmem:[%s2559 + $0x8] sm:$0xf]
        %v2563 = vld [vmem:[%s2559 + $0xc] sm:$0xf]
        %v2564 = vld [vmem:[%s2559 + $0x10] sm:$0xf]
        %v2565 = vld [vmem:[%s2559 + $0x14] sm:$0xf]
        %v2566 = vld [vmem:[%s2559 + $0x18] sm:$0xf]
        %v2567 = vld [vmem:[%s2559 + $0x1c] sm:$0xf]
        %v2568 = vld [vmem:[%s2559 + $0x20] sm:$0xf]
        %v2569 = vld [vmem:[%s2559 + $0x24] sm:$0xf]
        %v2570 = vld [vmem:[%s2559 + $0x28] sm:$0xf]
        %v2571 = vld [vmem:[%s2559 + $0x2c] sm:$0xf]
        %v2572 = vld [vmem:[%s2559 + $0x30] sm:$0xf]
        %v2573 = vld [vmem:[%s2559 + $0x34] sm:$0xf]
        %v2574 = vld [vmem:[%s2559 + $0x38] sm:$0xf]
        %v2575 = vld [vmem:[%s2559 + $0x3c] sm:$0xf]
        %s2576 = scalar_lea.vmem %s9, 1
        %v2577 = vld [vmem:[%s2576] sm:$0x1]
        %v2578 = vrot.slane %v2524, 7
        %v2579 = vsel %vm2521, 1, 0
        %vm2580 = vcmp.eq.s32.totalorder %v2579, 1
        %v2581 = vsel %vm2580, %v2578, 0.0
        %v2582 = vrot.slane %v2524, 1
        %v2583 = vsel %vm2522, 1, 0
        %vm2584 = vcmp.eq.s32.totalorder %v2583, 1
        %v2585 = vsel %vm2584, %v2582, 0.0
        %v2586 = vpack.c.bf16 %v2581, %v2581
        %v2587 = vpack.c.bf16 %v2524, %v2524
        %v2604 = vunpack.c.l.b16 %v2543
        %v2605 = vunpack.c.l.b16 %v2544
        %v2606 = vunpack.c.l.b16 %v2545
        %v2607 = vunpack.c.l.b16 %v2546
        %v2608 = vunpack.c.l.b16 %v2547
        %v2609 = vunpack.c.l.b16 %v2548
        %v2610 = vunpack.c.l.b16 %v2549
        %v2611 = vunpack.c.l.b16 %v2550
        %v2612 = vunpack.c.l.b16 %v2551
        %v2613 = vunpack.c.l.b16 %v2552
        %v2614 = vunpack.c.l.b16 %v2553
        %v2615 = vunpack.c.l.b16 %v2554
        %v2616 = vunpack.c.l.b16 %v2555
        %v2617 = vunpack.c.l.b16 %v2556
        %v2618 = vunpack.c.l.b16 %v2557
        %v2619 = vunpack.c.l.b16 %v2558
        %v2620 = vpack.c.b16 %v2605, %v2604
        %v2621 = vpack.c.b16 %v2607, %v2606
        %v2622 = vpack.c.b16 %v2609, %v2608
        %v2623 = vpack.c.b16 %v2611, %v2610
        %v2624 = vpack.c.b16 %v2613, %v2612
        %v2625 = vpack.c.b16 %v2615, %v2614
        %v2626 = vpack.c.b16 %v2617, %v2616
        %v2627 = vpack.c.b16 %v2619, %v2618
        %2636 = vmatprep.subr.bf16.mxu0 0
        %2637 = vmatpush1.bf16.msra.mxu0 %v2620
        %2638 = vmatprep.subr.bf16.mxu0 0
        %2639 = vmatpush1.bf16.msra.mxu0 %v2621
        %2640 = vmatprep.subr.bf16.mxu0 0
        %2641 = vmatpush1.bf16.msra.mxu0 %v2622
        %2642 = vmatprep.subr.bf16.mxu0 0
        %2643 = vmatpush1.bf16.msra.mxu0 %v2623
        %2644 = vmatprep.subr.bf16.mxu0 0
        %2645 = vmatpush1.bf16.msra.mxu0 %v2624
        %2646 = vmatprep.subr.bf16.mxu0 0
        %2647 = vmatpush1.bf16.msra.mxu0 %v2625
        %2648 = vmatprep.subr.bf16.mxu0 0
        %2649 = vmatpush1.bf16.msra.mxu0 %v2626
        %2650 = vmatprep.subr.bf16.mxu0 0
        %2651 = vmatpush1.bf16.msra.mxu0 %v2627
        %2652 = vmatprep.subr.bf16.mxu0 0
        %2653 = vmatpush1.bf16.msra.mxu0 0
        %2654 = vmatprep.subr.bf16.mxu0 0
        %2655 = vmatpush1.bf16.msra.mxu0 0
        %2656 = vmatprep.subr.bf16.mxu0 0
        %2657 = vmatpush1.bf16.msra.mxu0 0
        %2658 = vmatprep.subr.bf16.mxu0 0
        %2659 = vmatpush1.bf16.msra.mxu0 0
        %2660 = vmatprep.subr.bf16.mxu0 0
        %2661 = vmatpush1.bf16.msra.mxu0 0
        %2662 = vmatprep.subr.bf16.mxu0 0
        %2663 = vmatpush1.bf16.msra.mxu0 0
        %2664 = vmatprep.subr.bf16.mxu0 0
        %2665 = vmatpush1.bf16.msra.mxu0 0
        %2666 = vmatprep.subr.bf16.mxu0 0
        %2667 = vmatpush1.bf16.msra.mxu0 0
        %2668 = vmatprep.mubr.bf16.mxu0 0
        %2669 = vmatmul.mubr.bf16.gmra.mrb[0].mxu0 %v2587
        %v2670 = vpop.f32.mrb[0].mxu0
        %v2671 = vadd.f32 0.0, %v2670
        %v2672 = vpop.f32.mrb[0].mxu0
        %v2673 = vpop.f32.mrb[0].mxu0
        %v2674 = vpop.f32.mrb[0].mxu0
        %2675 = vdwg.mxu0
        %v2692 = vunpack.c.l.b16 %v2526
        %v2693 = vunpack.c.l.b16 %v2527
        %v2694 = vunpack.c.l.b16 %v2528
        %v2695 = vunpack.c.l.b16 %v2529
        %v2696 = vunpack.c.l.b16 %v2530
        %v2697 = vunpack.c.l.b16 %v2531
        %v2698 = vunpack.c.l.b16 %v2532
        %v2699 = vunpack.c.l.b16 %v2533
        %v2700 = vunpack.c.l.b16 %v2534
        %v2701 = vunpack.c.l.b16 %v2535
        %v2702 = vunpack.c.l.b16 %v2536
        %v2703 = vunpack.c.l.b16 %v2537
        %v2704 = vunpack.c.l.b16 %v2538
        %v2705 = vunpack.c.l.b16 %v2539
        %v2706 = vunpack.c.l.b16 %v2540
        %v2707 = vunpack.c.l.b16 %v2541
        %v2708 = vpack.c.b16 %v2693, %v2692
        %v2709 = vpack.c.b16 %v2695, %v2694
        %v2710 = vpack.c.b16 %v2697, %v2696
        %v2711 = vpack.c.b16 %v2699, %v2698
        %v2712 = vpack.c.b16 %v2701, %v2700
        %v2713 = vpack.c.b16 %v2703, %v2702
        %v2714 = vpack.c.b16 %v2705, %v2704
        %v2715 = vpack.c.b16 %v2707, %v2706
        %2724 = vmatprep.subr.bf16.mxu0 0
        %2725 = vmatpush1.bf16.msra.mxu0 %v2708
        %2726 = vmatprep.subr.bf16.mxu0 0
        %2727 = vmatpush1.bf16.msra.mxu0 %v2709
        %2728 = vmatprep.subr.bf16.mxu0 0
        %2729 = vmatpush1.bf16.msra.mxu0 %v2710
        %2730 = vmatprep.subr.bf16.mxu0 0
        %2731 = vmatpush1.bf16.msra.mxu0 %v2711
        %2732 = vmatprep.subr.bf16.mxu0 0
        %2733 = vmatpush1.bf16.msra.mxu0 %v2712
        %2734 = vmatprep.subr.bf16.mxu0 0
        %2735 = vmatpush1.bf16.msra.mxu0 %v2713
        %2736 = vmatprep.subr.bf16.mxu0 0
        %2737 = vmatpush1.bf16.msra.mxu0 %v2714
        %2738 = vmatprep.subr.bf16.mxu0 0
        %2739 = vmatpush1.bf16.msra.mxu0 %v2715
        %2740 = vmatprep.subr.bf16.mxu0 0
        %2741 = vmatpush1.bf16.msra.mxu0 0
        %2742 = vmatprep.subr.bf16.mxu0 0
        %2743 = vmatpush1.bf16.msra.mxu0 0
        %2744 = vmatprep.subr.bf16.mxu0 0
        %2745 = vmatpush1.bf16.msra.mxu0 0
        %2746 = vmatprep.subr.bf16.mxu0 0
        %2747 = vmatpush1.bf16.msra.mxu0 0
        %2748 = vmatprep.subr.bf16.mxu0 0
        %2749 = vmatpush1.bf16.msra.mxu0 0
        %2750 = vmatprep.subr.bf16.mxu0 0
        %2751 = vmatpush1.bf16.msra.mxu0 0
        %2752 = vmatprep.subr.bf16.mxu0 0
        %2753 = vmatpush1.bf16.msra.mxu0 0
        %2754 = vmatprep.subr.bf16.mxu0 0
        %2755 = vmatpush1.bf16.msra.mxu0 0
        %2756 = vmatprep.mubr.bf16.mxu0 0
        %2757 = vmatmul.mubr.bf16.gmra.mrb[0].mxu0 %v2586
        %v2758 = vpop.f32.mrb[0].mxu0
        %v2759 = vadd.f32 %v2671, %v2758
        %v2760 = vpop.f32.mrb[0].mxu0
        %v2761 = vpop.f32.mrb[0].mxu0
        %v2762 = vpop.f32.mrb[0].mxu0
        %2763 = vdwg.mxu0
        %v2764 = vpack.c.bf16 %v2585, %v2585
        %v2781 = vunpack.c.l.b16 %v2560
        %v2782 = vunpack.c.l.b16 %v2561
        %v2783 = vunpack.c.l.b16 %v2562
        %v2784 = vunpack.c.l.b16 %v2563
        %v2785 = vunpack.c.l.b16 %v2564
        %v2786 = vunpack.c.l.b16 %v2565
        %v2787 = vunpack.c.l.b16 %v2566
        %v2788 = vunpack.c.l.b16 %v2567
        %v2789 = vunpack.c.l.b16 %v2568
        %v2790 = vunpack.c.l.b16 %v2569
        %v2791 = vunpack.c.l.b16 %v2570
        %v2792 = vunpack.c.l.b16 %v2571
        %v2793 = vunpack.c.l.b16 %v2572
        %v2794 = vunpack.c.l.b16 %v2573
        %v2795 = vunpack.c.l.b16 %v2574
        %v2796 = vunpack.c.l.b16 %v2575
        %v2797 = vpack.c.b16 %v2782, %v2781
        %v2798 = vpack.c.b16 %v2784, %v2783
        %v2799 = vpack.c.b16 %v2786, %v2785
        %v2800 = vpack.c.b16 %v2788, %v2787
        %v2801 = vpack.c.b16 %v2790, %v2789
        %v2802 = vpack.c.b16 %v2792, %v2791
        %v2803 = vpack.c.b16 %v2794, %v2793
        %v2804 = vpack.c.b16 %v2796, %v2795
        %2813 = vmatprep.subr.bf16.mxu0 0
        %2814 = vmatpush1.bf16.msra.mxu0 %v2797
        %2815 = vmatprep.subr.bf16.mxu0 0
        %2816 = vmatpush1.bf16.msra.mxu0 %v2798
        %2817 = vmatprep.subr.bf16.mxu0 0
        %2818 = vmatpush1.bf16.msra.mxu0 %v2799
        %2819 = vmatprep.subr.bf16.mxu0 0
        %2820 = vmatpush1.bf16.msra.mxu0 %v2800
        %2821 = vmatprep.subr.bf16.mxu0 0
        %2822 = vmatpush1.bf16.msra.mxu0 %v2801
        %2823 = vmatprep.subr.bf16.mxu0 0
        %2824 = vmatpush1.bf16.msra.mxu0 %v2802
        %2825 = vmatprep.subr.bf16.mxu0 0
        %2826 = vmatpush1.bf16.msra.mxu0 %v2803
        %2827 = vmatprep.subr.bf16.mxu0 0
        %2828 = vmatpush1.bf16.msra.mxu0 %v2804
        %2829 = vmatprep.subr.bf16.mxu0 0
        %2830 = vmatpush1.bf16.msra.mxu0 0
        %2831 = vmatprep.subr.bf16.mxu0 0
        %2832 = vmatpush1.bf16.msra.mxu0 0
        %2833 = vmatprep.subr.bf16.mxu0 0
        %2834 = vmatpush1.bf16.msra.mxu0 0
        %2835 = vmatprep.subr.bf16.mxu0 0
        %2836 = vmatpush1.bf16.msra.mxu0 0
        %2837 = vmatprep.subr.bf16.mxu0 0
        %2838 = vmatpush1.bf16.msra.mxu0 0
        %2839 = vmatprep.subr.bf16.mxu0 0
        %2840 = vmatpush1.bf16.msra.mxu0 0
        %2841 = vmatprep.subr.bf16.mxu0 0
        %2842 = vmatpush1.bf16.msra.mxu0 0
        %2843 = vmatprep.subr.bf16.mxu0 0
        %2844 = vmatpush1.bf16.msra.mxu0 0
        %2845 = vmatprep.mubr.bf16.mxu0 0
        %2846 = vmatmul.mubr.bf16.gmra.mrb[0].mxu0 %v2764
        %v2847 = vpop.f32.mrb[0].mxu0
        %v2848 = vadd.f32 0.0, %v2847
        %v2849 = vpop.f32.mrb[0].mxu0
        %v2850 = vpop.f32.mrb[0].mxu0
        %v2851 = vpop.f32.mrb[0].mxu0
        %2852 = vdwg.mxu0
        %v2853 = vadd.f32 %v2759, %v2848
        %v2855 = vlaneseq
        %v2856 = vshrl.u32 %v2855, 7
        %v2857 = vsub.s32 0, %v2856
        %v2858 = vrot.slane %v2577, %v2857
        %v2860 = vadd.f32 %v2853, %v2858
        %v2861 = vmul.f32 %v2860, 0.1
        %v2862 = vmax.f32 %v2860, %v2861
        %s2863 = scalar_lea.vmem [#allocation12], 192
        %v2864 = vld [vmem:[%s2863] sm:$0xf]
        %v2865 = vld [vmem:[%s2863 + $0x4] sm:$0xf]
        %v2866 = vld [vmem:[%s2863 + $0x8] sm:$0xf]
        %v2867 = vld [vmem:[%s2863 + $0xc] sm:$0xf]
        %v2868 = vld [vmem:[%s2863 + $0x10] sm:$0xf]
        %v2869 = vld [vmem:[%s2863 + $0x14] sm:$0xf]
        %v2870 = vld [vmem:[%s2863 + $0x18] sm:$0xf]
        %v2871 = vld [vmem:[%s2863 + $0x1c] sm:$0xf]
        %v2872 = vld [vmem:[%s2863 + $0x20] sm:$0xf]
        %v2873 = vld [vmem:[%s2863 + $0x24] sm:$0xf]
        %v2874 = vld [vmem:[%s2863 + $0x28] sm:$0xf]
        %v2875 = vld [vmem:[%s2863 + $0x2c] sm:$0xf]
        %v2876 = vld [vmem:[%s2863 + $0x30] sm:$0xf]
        %v2877 = vld [vmem:[%s2863 + $0x34] sm:$0xf]
        %v2878 = vld [vmem:[%s2863 + $0x38] sm:$0xf]
        %v2879 = vld [vmem:[%s2863 + $0x3c] sm:$0xf]
        %s2880 = scalar_lea.vmem [#allocation12], 256
        %v2881 = vld [vmem:[%s2880] sm:$0xf]
        %v2882 = vld [vmem:[%s2880 + $0x4] sm:$0xf]
        %v2883 = vld [vmem:[%s2880 + $0x8] sm:$0xf]
        %v2884 = vld [vmem:[%s2880 + $0xc] sm:$0xf]
        %v2885 = vld [vmem:[%s2880 + $0x10] sm:$0xf]
        %v2886 = vld [vmem:[%s2880 + $0x14] sm:$0xf]
        %v2887 = vld [vmem:[%s2880 + $0x18] sm:$0xf]
        %v2888 = vld [vmem:[%s2880 + $0x1c] sm:$0xf]
        %v2889 = vld [vmem:[%s2880 + $0x20] sm:$0xf]
        %v2890 = vld [vmem:[%s2880 + $0x24] sm:$0xf]
        %v2891 = vld [vmem:[%s2880 + $0x28] sm:$0xf]
        %v2892 = vld [vmem:[%s2880 + $0x2c] sm:$0xf]
        %v2893 = vld [vmem:[%s2880 + $0x30] sm:$0xf]
        %v2894 = vld [vmem:[%s2880 + $0x34] sm:$0xf]
        %v2895 = vld [vmem:[%s2880 + $0x38] sm:$0xf]
        %v2896 = vld [vmem:[%s2880 + $0x3c] sm:$0xf]
        %s2897 = scalar_lea.vmem [#allocation12], 320
        %v2898 = vld [vmem:[%s2897] sm:$0xf]
        %v2899 = vld [vmem:[%s2897 + $0x4] sm:$0xf]
        %v2900 = vld [vmem:[%s2897 + $0x8] sm:$0xf]
        %v2901 = vld [vmem:[%s2897 + $0xc] sm:$0xf]
        %v2902 = vld [vmem:[%s2897 + $0x10] sm:$0xf]
        %v2903 = vld [vmem:[%s2897 + $0x14] sm:$0xf]
        %v2904 = vld [vmem:[%s2897 + $0x18] sm:$0xf]
        %v2905 = vld [vmem:[%s2897 + $0x1c] sm:$0xf]
        %v2906 = vld [vmem:[%s2897 + $0x20] sm:$0xf]
        %v2907 = vld [vmem:[%s2897 + $0x24] sm:$0xf]
        %v2908 = vld [vmem:[%s2897 + $0x28] sm:$0xf]
        %v2909 = vld [vmem:[%s2897 + $0x2c] sm:$0xf]
        %v2910 = vld [vmem:[%s2897 + $0x30] sm:$0xf]
        %v2911 = vld [vmem:[%s2897 + $0x34] sm:$0xf]
        %v2912 = vld [vmem:[%s2897 + $0x38] sm:$0xf]
        %v2913 = vld [vmem:[%s2897 + $0x3c] sm:$0xf]
        %s2914 = scalar_lea.vmem %s11, 1
        %v2915 = vld [vmem:[%s2914] sm:$0x1]
        %v2916 = vrot.slane %v2862, 7
        %v2917 = vsel %vm2580, %v2916, 0.0
        %v2918 = vrot.slane %v2862, 1
        %v2919 = vsel %vm2584, %v2918, 0.0
        %v2920 = vpack.c.bf16 %v2917, %v2917
        %v2921 = vpack.c.bf16 %v2862, %v2862
        %v2938 = vunpack.c.l.b16 %v2881
        %v2939 = vunpack.c.l.b16 %v2882
        %v2940 = vunpack.c.l.b16 %v2883
        %v2941 = vunpack.c.l.b16 %v2884
        %v2942 = vunpack.c.l.b16 %v2885
        %v2943 = vunpack.c.l.b16 %v2886
        %v2944 = vunpack.c.l.b16 %v2887
        %v2945 = vunpack.c.l.b16 %v2888
        %v2946 = vunpack.c.l.b16 %v2889
        %v2947 = vunpack.c.l.b16 %v2890
        %v2948 = vunpack.c.l.b16 %v2891
        %v2949 = vunpack.c.l.b16 %v2892
        %v2950 = vunpack.c.l.b16 %v2893
        %v2951 = vunpack.c.l.b16 %v2894
        %v2952 = vunpack.c.l.b16 %v2895
        %v2953 = vunpack.c.l.b16 %v2896
        %v2954 = vpack.c.b16 %v2939, %v2938
        %v2955 = vpack.c.b16 %v2941, %v2940
        %v2956 = vpack.c.b16 %v2943, %v2942
        %v2957 = vpack.c.b16 %v2945, %v2944
        %v2958 = vpack.c.b16 %v2947, %v2946
        %v2959 = vpack.c.b16 %v2949, %v2948
        %v2960 = vpack.c.b16 %v2951, %v2950
        %v2961 = vpack.c.b16 %v2953, %v2952
        %2970 = vmatprep.subr.bf16.mxu0 0
        %2971 = vmatpush1.bf16.msra.mxu0 %v2954
        %2972 = vmatprep.subr.bf16.mxu0 0
        %2973 = vmatpush1.bf16.msra.mxu0 %v2955
        %2974 = vmatprep.subr.bf16.mxu0 0
        %2975 = vmatpush1.bf16.msra.mxu0 %v2956
        %2976 = vmatprep.subr.bf16.mxu0 0
        %2977 = vmatpush1.bf16.msra.mxu0 %v2957
        %2978 = vmatprep.subr.bf16.mxu0 0
        %2979 = vmatpush1.bf16.msra.mxu0 %v2958
        %2980 = vmatprep.subr.bf16.mxu0 0
        %2981 = vmatpush1.bf16.msra.mxu0 %v2959
        %2982 = vmatprep.subr.bf16.mxu0 0
        %2983 = vmatpush1.bf16.msra.mxu0 %v2960
        %2984 = vmatprep.subr.bf16.mxu0 0
        %2985 = vmatpush1.bf16.msra.mxu0 %v2961
        %2986 = vmatprep.subr.bf16.mxu0 0
        %2987 = vmatpush1.bf16.msra.mxu0 0
        %2988 = vmatprep.subr.bf16.mxu0 0
        %2989 = vmatpush1.bf16.msra.mxu0 0
        %2990 = vmatprep.subr.bf16.mxu0 0
        %2991 = vmatpush1.bf16.msra.mxu0 0
        %2992 = vmatprep.subr.bf16.mxu0 0
        %2993 = vmatpush1.bf16.msra.mxu0 0
        %2994 = vmatprep.subr.bf16.mxu0 0
        %2995 = vmatpush1.bf16.msra.mxu0 0
        %2996 = vmatprep.subr.bf16.mxu0 0
        %2997 = vmatpush1.bf16.msra.mxu0 0
        %2998 = vmatprep.subr.bf16.mxu0 0
        %2999 = vmatpush1.bf16.msra.mxu0 0
        %3000 = vmatprep.subr.bf16.mxu0 0
        %3001 = vmatpush1.bf16.msra.mxu0 0
        %3002 = vmatprep.mubr.bf16.mxu0 0
        %3003 = vmatmul.mubr.bf16.gmra.mrb[0].mxu0 %v2921
        %v3004 = vpop.f32.mrb[0].mxu0
        %v3005 = vadd.f32 0.0, %v3004
        %v3006 = vpop.f32.mrb[0].mxu0
        %v3007 = vpop.f32.mrb[0].mxu0
        %v3008 = vpop.f32.mrb[0].mxu0
        %3009 = vdwg.mxu0
        %v3026 = vunpack.c.l.b16 %v2864
        %v3027 = vunpack.c.l.b16 %v2865
        %v3028 = vunpack.c.l.b16 %v2866
        %v3029 = vunpack.c.l.b16 %v2867
        %v3030 = vunpack.c.l.b16 %v2868
        %v3031 = vunpack.c.l.b16 %v2869
        %v3032 = vunpack.c.l.b16 %v2870
        %v3033 = vunpack.c.l.b16 %v2871
        %v3034 = vunpack.c.l.b16 %v2872
        %v3035 = vunpack.c.l.b16 %v2873
        %v3036 = vunpack.c.l.b16 %v2874
        %v3037 = vunpack.c.l.b16 %v2875
        %v3038 = vunpack.c.l.b16 %v2876
        %v3039 = vunpack.c.l.b16 %v2877
        %v3040 = vunpack.c.l.b16 %v2878
        %v3041 = vunpack.c.l.b16 %v2879
        %v3042 = vpack.c.b16 %v3027, %v3026
        %v3043 = vpack.c.b16 %v3029, %v3028
        %v3044 = vpack.c.b16 %v3031, %v3030
        %v3045 = vpack.c.b16 %v3033, %v3032
        %v3046 = vpack.c.b16 %v3035, %v3034
        %v3047 = vpack.c.b16 %v3037, %v3036
        %v3048 = vpack.c.b16 %v3039, %v3038
        %v3049 = vpack.c.b16 %v3041, %v3040
        %3058 = vmatprep.subr.bf16.mxu0 0
        %3059 = vmatpush1.bf16.msra.mxu0 %v3042
        %3060 = vmatprep.subr.bf16.mxu0 0
        %3061 = vmatpush1.bf16.msra.mxu0 %v3043
        %3062 = vmatprep.subr.bf16.mxu0 0
        %3063 = vmatpush1.bf16.msra.mxu0 %v3044
        %3064 = vmatprep.subr.bf16.mxu0 0
        %3065 = vmatpush1.bf16.msra.mxu0 %v3045
        %3066 = vmatprep.subr.bf16.mxu0 0
        %3067 = vmatpush1.bf16.msra.mxu0 %v3046
        %3068 = vmatprep.subr.bf16.mxu0 0
        %3069 = vmatpush1.bf16.msra.mxu0 %v3047
        %3070 = vmatprep.subr.bf16.mxu0 0
        %3071 = vmatpush1.bf16.msra.mxu0 %v3048
        %3072 = vmatprep.subr.bf16.mxu0 0
        %3073 = vmatpush1.bf16.msra.mxu0 %v3049
        %3074 = vmatprep.subr.bf16.mxu0 0
        %3075 = vmatpush1.bf16.msra.mxu0 0
        %3076 = vmatprep.subr.bf16.mxu0 0
        %3077 = vmatpush1.bf16.msra.mxu0 0
        %3078 = vmatprep.subr.bf16.mxu0 0
        %3079 = vmatpush1.bf16.msra.mxu0 0
        %3080 = vmatprep.subr.bf16.mxu0 0
        %3081 = vmatpush1.bf16.msra.mxu0 0
        %3082 = vmatprep.subr.bf16.mxu0 0
        %3083 = vmatpush1.bf16.msra.mxu0 0
        %3084 = vmatprep.subr.bf16.mxu0 0
        %3085 = vmatpush1.bf16.msra.mxu0 0
        %3086 = vmatprep.subr.bf16.mxu0 0
        %3087 = vmatpush1.bf16.msra.mxu0 0
        %3088 = vmatprep.subr.bf16.mxu0 0
        %3089 = vmatpush1.bf16.msra.mxu0 0
        %3090 = vmatprep.mubr.bf16.mxu0 0
        %3091 = vmatmul.mubr.bf16.gmra.mrb[0].mxu0 %v2920
        %v3092 = vpop.f32.mrb[0].mxu0
        %v3093 = vadd.f32 %v3005, %v3092
        %v3094 = vpop.f32.mrb[0].mxu0
        %v3095 = vpop.f32.mrb[0].mxu0
        %v3096 = vpop.f32.mrb[0].mxu0
        %3097 = vdwg.mxu0
        %v3098 = vpack.c.bf16 %v2919, %v2919
        %v3115 = vunpack.c.l.b16 %v2898
        %v3116 = vunpack.c.l.b16 %v2899
        %v3117 = vunpack.c.l.b16 %v2900
        %v3118 = vunpack.c.l.b16 %v2901
        %v3119 = vunpack.c.l.b16 %v2902
        %v3120 = vunpack.c.l.b16 %v2903
        %v3121 = vunpack.c.l.b16 %v2904
        %v3122 = vunpack.c.l.b16 %v2905
        %v3123 = vunpack.c.l.b16 %v2906
        %v3124 = vunpack.c.l.b16 %v2907
        %v3125 = vunpack.c.l.b16 %v2908
        %v3126 = vunpack.c.l.b16 %v2909
        %v3127 = vunpack.c.l.b16 %v2910
        %v3128 = vunpack.c.l.b16 %v2911
        %v3129 = vunpack.c.l.b16 %v2912
        %v3130 = vunpack.c.l.b16 %v2913
        %v3131 = vpack.c.b16 %v3116, %v3115
        %v3132 = vpack.c.b16 %v3118, %v3117
        %v3133 = vpack.c.b16 %v3120, %v3119
        %v3134 = vpack.c.b16 %v3122, %v3121
        %v3135 = vpack.c.b16 %v3124, %v3123
        %v3136 = vpack.c.b16 %v3126, %v3125
        %v3137 = vpack.c.b16 %v3128, %v3127
        %v3138 = vpack.c.b16 %v3130, %v3129
        %3147 = vmatprep.subr.bf16.mxu0 0
        %3148 = vmatpush1.bf16.msra.mxu0 %v3131
        %3149 = vmatprep.subr.bf16.mxu0 0
        %3150 = vmatpush1.bf16.msra.mxu0 %v3132
        %3151 = vmatprep.subr.bf16.mxu0 0
        %3152 = vmatpush1.bf16.msra.mxu0 %v3133
        %3153 = vmatprep.subr.bf16.mxu0 0
        %3154 = vmatpush1.bf16.msra.mxu0 %v3134
        %3155 = vmatprep.subr.bf16.mxu0 0
        %3156 = vmatpush1.bf16.msra.mxu0 %v3135
        %3157 = vmatprep.subr.bf16.mxu0 0
        %3158 = vmatpush1.bf16.msra.mxu0 %v3136
        %3159 = vmatprep.subr.bf16.mxu0 0
        %3160 = vmatpush1.bf16.msra.mxu0 %v3137
        %3161 = vmatprep.subr.bf16.mxu0 0
        %3162 = vmatpush1.bf16.msra.mxu0 %v3138
        %3163 = vmatprep.subr.bf16.mxu0 0
        %3164 = vmatpush1.bf16.msra.mxu0 0
        %3165 = vmatprep.subr.bf16.mxu0 0
        %3166 = vmatpush1.bf16.msra.mxu0 0
        %3167 = vmatprep.subr.bf16.mxu0 0
        %3168 = vmatpush1.bf16.msra.mxu0 0
        %3169 = vmatprep.subr.bf16.mxu0 0
        %3170 = vmatpush1.bf16.msra.mxu0 0
        %3171 = vmatprep.subr.bf16.mxu0 0
        %3172 = vmatpush1.bf16.msra.mxu0 0
        %3173 = vmatprep.subr.bf16.mxu0 0
        %3174 = vmatpush1.bf16.msra.mxu0 0
        %3175 = vmatprep.subr.bf16.mxu0 0
        %3176 = vmatpush1.bf16.msra.mxu0 0
        %3177 = vmatprep.subr.bf16.mxu0 0
        %3178 = vmatpush1.bf16.msra.mxu0 0
        %3179 = vmatprep.mubr.bf16.mxu0 0
        %3180 = vmatmul.mubr.bf16.gmra.mrb[0].mxu0 %v3098
        %v3181 = vpop.f32.mrb[0].mxu0
        %v3182 = vadd.f32 0.0, %v3181
        %v3183 = vpop.f32.mrb[0].mxu0
        %v3184 = vpop.f32.mrb[0].mxu0
        %v3185 = vpop.f32.mrb[0].mxu0
        %3186 = vdwg.mxu0
        %v3187 = vadd.f32 %v3093, %v3182
        %v3189 = vlaneseq
        %v3190 = vshrl.u32 %v3189, 7
        %v3191 = vsub.s32 0, %v3190
        %v3192 = vrot.slane %v2915, %v3191
        %v3194 = vadd.f32 %v3187, %v3192
        %v3195 = vpack.c.bf16 %v2508, %v2508
        %s3196 = scalar_lea.vmem [#allocation14], 64
        %v3197 = vld [vmem:[%s3196] sm:$0xf]
        %v3198 = vld [vmem:[%s3196 + $0x4] sm:$0xf]
        %v3199 = vld [vmem:[%s3196 + $0x8] sm:$0xf]
        %v3200 = vld [vmem:[%s3196 + $0xc] sm:$0xf]
        %v3201 = vld [vmem:[%s3196 + $0x10] sm:$0xf]
        %v3202 = vld [vmem:[%s3196 + $0x14] sm:$0xf]
        %v3203 = vld [vmem:[%s3196 + $0x18] sm:$0xf]
        %v3204 = vld [vmem:[%s3196 + $0x1c] sm:$0xf]
        %v3205 = vld [vmem:[%s3196 + $0x20] sm:$0xf]
        %v3206 = vld [vmem:[%s3196 + $0x24] sm:$0xf]
        %v3207 = vld [vmem:[%s3196 + $0x28] sm:$0xf]
        %v3208 = vld [vmem:[%s3196 + $0x2c] sm:$0xf]
        %v3209 = vld [vmem:[%s3196 + $0x30] sm:$0xf]
        %v3210 = vld [vmem:[%s3196 + $0x34] sm:$0xf]
        %v3211 = vld [vmem:[%s3196 + $0x38] sm:$0xf]
        %v3212 = vld [vmem:[%s3196 + $0x3c] sm:$0xf]
        %s3213 = scalar_lea.vmem %s13, 1
        %v3214 = vld [vmem:[%s3213] sm:$0x1]
        %v3216 = vlaneseq
        %v3217 = vshrl.u32 %v3216, 7
        %v3218 = vsub.s32 0, %v3217
        %v3219 = vrot.slane %v3214, %v3218
        %v3237 = vunpack.c.l.b16 %v3197
        %v3238 = vunpack.c.l.b16 %v3198
        %v3239 = vunpack.c.l.b16 %v3199
        %v3240 = vunpack.c.l.b16 %v3200
        %v3241 = vunpack.c.l.b16 %v3201
        %v3242 = vunpack.c.l.b16 %v3202
        %v3243 = vunpack.c.l.b16 %v3203
        %v3244 = vunpack.c.l.b16 %v3204
        %v3245 = vunpack.c.l.b16 %v3205
        %v3246 = vunpack.c.l.b16 %v3206
        %v3247 = vunpack.c.l.b16 %v3207
        %v3248 = vunpack.c.l.b16 %v3208
        %v3249 = vunpack.c.l.b16 %v3209
        %v3250 = vunpack.c.l.b16 %v3210
        %v3251 = vunpack.c.l.b16 %v3211
        %v3252 = vunpack.c.l.b16 %v3212
        %v3253 = vpack.c.b16 %v3238, %v3237
        %v3254 = vpack.c.b16 %v3240, %v3239
        %v3255 = vpack.c.b16 %v3242, %v3241
        %v3256 = vpack.c.b16 %v3244, %v3243
        %v3257 = vpack.c.b16 %v3246, %v3245
        %v3258 = vpack.c.b16 %v3248, %v3247
        %v3259 = vpack.c.b16 %v3250, %v3249
        %v3260 = vpack.c.b16 %v3252, %v3251
        %3269 = vmatprep.subr.bf16.mxu0 0
        %3270 = vmatpush1.bf16.msra.mxu0 %v3253
        %3271 = vmatprep.subr.bf16.mxu0 0
        %3272 = vmatpush1.bf16.msra.mxu0 %v3254
        %3273 = vmatprep.subr.bf16.mxu0 0
        %3274 = vmatpush1.bf16.msra.mxu0 %v3255
        %3275 = vmatprep.subr.bf16.mxu0 0
        %3276 = vmatpush1.bf16.msra.mxu0 %v3256
        %3277 = vmatprep.subr.bf16.mxu0 0
        %3278 = vmatpush1.bf16.msra.mxu0 %v3257
        %3279 = vmatprep.subr.bf16.mxu0 0
        %3280 = vmatpush1.bf16.msra.mxu0 %v3258
        %3281 = vmatprep.subr.bf16.mxu0 0
        %3282 = vmatpush1.bf16.msra.mxu0 %v3259
        %3283 = vmatprep.subr.bf16.mxu0 0
        %3284 = vmatpush1.bf16.msra.mxu0 %v3260
        %3285 = vmatprep.subr.bf16.mxu0 0
        %3286 = vmatpush1.bf16.msra.mxu0 0
        %3287 = vmatprep.subr.bf16.mxu0 0
        %3288 = vmatpush1.bf16.msra.mxu0 0
        %3289 = vmatprep.subr.bf16.mxu0 0
        %3290 = vmatpush1.bf16.msra.mxu0 0
        %3291 = vmatprep.subr.bf16.mxu0 0
        %3292 = vmatpush1.bf16.msra.mxu0 0
        %3293 = vmatprep.subr.bf16.mxu0 0
        %3294 = vmatpush1.bf16.msra.mxu0 0
        %3295 = vmatprep.subr.bf16.mxu0 0
        %3296 = vmatpush1.bf16.msra.mxu0 0
        %3297 = vmatprep.subr.bf16.mxu0 0
        %3298 = vmatpush1.bf16.msra.mxu0 0
        %3299 = vmatprep.subr.bf16.mxu0 0
        %3300 = vmatpush1.bf16.msra.mxu0 0
        %3301 = vmatprep.mubr.bf16.mxu0 0
        %3302 = vmatmul.mubr.bf16.gmra.mrb[0].mxu0 %v3195
        %v3303 = vpop.f32.mrb[0].mxu0
        %v3304 = vadd.f32 %v3219, %v3303
        %v3305 = vpop.f32.mrb[0].mxu0
        %v3306 = vpop.f32.mrb[0].mxu0
        %v3307 = vpop.f32.mrb[0].mxu0
        %3308 = vdwg.mxu0
        %v3309 = vadd.f32 %v3194, %v3304
        %3310 = vst [vmem:[#allocation2] sm:$0xff] %v3309
        %v3311 = vld [vmem:[#allocation2] ss:$2 sm:$0xf]
        %v3312 = vld [vmem:[%s1650] ss:$2 sm:$0xf]
        %v3313 = vadd.f32 %v3311, %v3312
        %v3314 = vmul.f32 %v3313, 0.5
        %vm3315 = vcmp.lt.s32.totalorder %v651, 0
        %v3316 = vsub.s32 0, %v651
        %v3317 = vsel %vm3315, %v3316, %v651
        %v3318 = vshrl.u32 %v3317, 2
        %v3319 = vand.u32 %v3317, 3
        %v3320 = vsub.s32 0, %v3319
        %v3321 = vsel %vm3315, %v3320, %v3319
        %vm3322 = vcmp.ne.s32.totalorder %v3321, 0
        %vm3323 = vcmp.lt.s32.totalorder %v3321, 0
        %vm3324 = vmand %vm3323, %vm3322
        %v3325 = vadd.s32 %v3321, 4
        %v3326 = vsel %vm3324, %v3325, %v3321
        %vm3327 = vcmp.ne.s32.totalorder %v3326, 0
        %vm3328 = vcmp.ne.s32.totalorder %v3326, 3
        %v3329 = vmul.f32 %v3314, 0.1
        %v3330 = vmax.f32 %v3314, %v3329
        %s3331 = scalar_lea.vmem [#allocation11], 384
        %v3332 = vld [vmem:[%s3331] sm:$0xf]
        %v3333 = vld [vmem:[%s3331 + $0x4] sm:$0xf]
        %v3334 = vld [vmem:[%s3331 + $0x8] sm:$0xf]
        %v3335 = vld [vmem:[%s3331 + $0xc] sm:$0xf]
        %v3336 = vld [vmem:[%s3331 + $0x10] sm:$0xf]
        %v3337 = vld [vmem:[%s3331 + $0x14] sm:$0xf]
        %v3338 = vld [vmem:[%s3331 + $0x18] sm:$0xf]
        %v3339 = vld [vmem:[%s3331 + $0x1c] sm:$0xf]
        %v3340 = vld [vmem:[%s3331 + $0x20] sm:$0xf]
        %v3341 = vld [vmem:[%s3331 + $0x24] sm:$0xf]
        %v3342 = vld [vmem:[%s3331 + $0x28] sm:$0xf]
        %v3343 = vld [vmem:[%s3331 + $0x2c] sm:$0xf]
        %v3344 = vld [vmem:[%s3331 + $0x30] sm:$0xf]
        %v3345 = vld [vmem:[%s3331 + $0x34] sm:$0xf]
        %v3346 = vld [vmem:[%s3331 + $0x38] sm:$0xf]
        %v3347 = vld [vmem:[%s3331 + $0x3c] sm:$0xf]
        %s3348 = scalar_lea.vmem [#allocation11], 448
        %v3349 = vld [vmem:[%s3348] sm:$0xf]
        %v3350 = vld [vmem:[%s3348 + $0x4] sm:$0xf]
        %v3351 = vld [vmem:[%s3348 + $0x8] sm:$0xf]
        %v3352 = vld [vmem:[%s3348 + $0xc] sm:$0xf]
        %v3353 = vld [vmem:[%s3348 + $0x10] sm:$0xf]
        %v3354 = vld [vmem:[%s3348 + $0x14] sm:$0xf]
        %v3355 = vld [vmem:[%s3348 + $0x18] sm:$0xf]
        %v3356 = vld [vmem:[%s3348 + $0x1c] sm:$0xf]
        %v3357 = vld [vmem:[%s3348 + $0x20] sm:$0xf]
        %v3358 = vld [vmem:[%s3348 + $0x24] sm:$0xf]
        %v3359 = vld [vmem:[%s3348 + $0x28] sm:$0xf]
        %v3360 = vld [vmem:[%s3348 + $0x2c] sm:$0xf]
        %v3361 = vld [vmem:[%s3348 + $0x30] sm:$0xf]
        %v3362 = vld [vmem:[%s3348 + $0x34] sm:$0xf]
        %v3363 = vld [vmem:[%s3348 + $0x38] sm:$0xf]
        %v3364 = vld [vmem:[%s3348 + $0x3c] sm:$0xf]
        %s3365 = scalar_lea.vmem [#allocation11], 512
        %v3366 = vld [vmem:[%s3365] sm:$0xf]
        %v3367 = vld [vmem:[%s3365 + $0x4] sm:$0xf]
        %v3368 = vld [vmem:[%s3365 + $0x8] sm:$0xf]
        %v3369 = vld [vmem:[%s3365 + $0xc] sm:$0xf]
        %v3370 = vld [vmem:[%s3365 + $0x10] sm:$0xf]
        %v3371 = vld [vmem:[%s3365 + $0x14] sm:$0xf]
        %v3372 = vld [vmem:[%s3365 + $0x18] sm:$0xf]
        %v3373 = vld [vmem:[%s3365 + $0x1c] sm:$0xf]
        %v3374 = vld [vmem:[%s3365 + $0x20] sm:$0xf]
        %v3375 = vld [vmem:[%s3365 + $0x24] sm:$0xf]
        %v3376 = vld [vmem:[%s3365 + $0x28] sm:$0xf]
        %v3377 = vld [vmem:[%s3365 + $0x2c] sm:$0xf]
        %v3378 = vld [vmem:[%s3365 + $0x30] sm:$0xf]
        %v3379 = vld [vmem:[%s3365 + $0x34] sm:$0xf]
        %v3380 = vld [vmem:[%s3365 + $0x38] sm:$0xf]
        %v3381 = vld [vmem:[%s3365 + $0x3c] sm:$0xf]
        %s3382 = scalar_lea.vmem %s9, 2
        %v3383 = vld [vmem:[%s3382] sm:$0x1]
        %vm3384 = vcmask 1047556
        %v3385 = vrot.slane %v3330, 4
        %v3386 = vsel %vm3384, %v3385, %v3330
        %v3387 = vrot.slane %v3386, 4
        %v3388 = vsel %vm3384, %v3387, %v3330
        %v3389 = vsel %vm3327, 1, 0
        %vm3390 = vcmp.eq.s32.totalorder %v3389, 1
        %v3392 = vrot.slane %v3388, 3
        %v3394 = vsel %vm3390, %v3392, 0.0
        %v3395 = vsel %vm3328, 1, 0
        %vm3396 = vcmp.eq.s32.totalorder %v3395, 1
        %v3397 = vrot.slane %v3388, 1
        %v3399 = vsel %vm3396, %v3397, 0.0
        %v3400 = vpack.c.bf16 %v3394, %v3394
        %v3401 = vpack.c.bf16 %v3330, %v3330
        %v3418 = vunpack.c.l.b16 %v3349
        %v3419 = vunpack.c.l.b16 %v3350
        %v3420 = vunpack.c.l.b16 %v3351
        %v3421 = vunpack.c.l.b16 %v3352
        %v3422 = vunpack.c.l.b16 %v3353
        %v3423 = vunpack.c.l.b16 %v3354
        %v3424 = vunpack.c.l.b16 %v3355
        %v3425 = vunpack.c.l.b16 %v3356
        %v3426 = vunpack.c.l.b16 %v3357
        %v3427 = vunpack.c.l.b16 %v3358
        %v3428 = vunpack.c.l.b16 %v3359
        %v3429 = vunpack.c.l.b16 %v3360
        %v3430 = vunpack.c.l.b16 %v3361
        %v3431 = vunpack.c.l.b16 %v3362
        %v3432 = vunpack.c.l.b16 %v3363
        %v3433 = vunpack.c.l.b16 %v3364
        %v3434 = vpack.c.b16 %v3419, %v3418
        %v3435 = vpack.c.b16 %v3421, %v3420
        %v3436 = vpack.c.b16 %v3423, %v3422
        %v3437 = vpack.c.b16 %v3425, %v3424
        %v3438 = vpack.c.b16 %v3427, %v3426
        %v3439 = vpack.c.b16 %v3429, %v3428
        %v3440 = vpack.c.b16 %v3431, %v3430
        %v3441 = vpack.c.b16 %v3433, %v3432
        %3450 = vmatprep.subr.bf16.mxu0 0
        %3451 = vmatpush1.bf16.msra.mxu0 %v3434
        %3452 = vmatprep.subr.bf16.mxu0 0
        %3453 = vmatpush1.bf16.msra.mxu0 %v3435
        %3454 = vmatprep.subr.bf16.mxu0 0
        %3455 = vmatpush1.bf16.msra.mxu0 %v3436
        %3456 = vmatprep.subr.bf16.mxu0 0
        %3457 = vmatpush1.bf16.msra.mxu0 %v3437
        %3458 = vmatprep.subr.bf16.mxu0 0
        %3459 = vmatpush1.bf16.msra.mxu0 %v3438
        %3460 = vmatprep.subr.bf16.mxu0 0
        %3461 = vmatpush1.bf16.msra.mxu0 %v3439
        %3462 = vmatprep.subr.bf16.mxu0 0
        %3463 = vmatpush1.bf16.msra.mxu0 %v3440
        %3464 = vmatprep.subr.bf16.mxu0 0
        %3465 = vmatpush1.bf16.msra.mxu0 %v3441
        %3466 = vmatprep.subr.bf16.mxu0 0
        %3467 = vmatpush1.bf16.msra.mxu0 0
        %3468 = vmatprep.subr.bf16.mxu0 0
        %3469 = vmatpush1.bf16.msra.mxu0 0
        %3470 = vmatprep.subr.bf16.mxu0 0
        %3471 = vmatpush1.bf16.msra.mxu0 0
        %3472 = vmatprep.subr.bf16.mxu0 0
        %3473 = vmatpush1.bf16.msra.mxu0 0
        %3474 = vmatprep.subr.bf16.mxu0 0
        %3475 = vmatpush1.bf16.msra.mxu0 0
        %3476 = vmatprep.subr.bf16.mxu0 0
        %3477 = vmatpush1.bf16.msra.mxu0 0
        %3478 = vmatprep.subr.bf16.mxu0 0
        %3479 = vmatpush1.bf16.msra.mxu0 0
        %3480 = vmatprep.subr.bf16.mxu0 0
        %3481 = vmatpush1.bf16.msra.mxu0 0
        %3482 = vmatprep.mubr.bf16.mxu0 0
        %3483 = vmatmul.mubr.bf16.gmra.mrb[0].mxu0 %v3401
        %v3484 = vpop.f32.mrb[0].mxu0
        %v3485 = vadd.f32 0.0, %v3484
        %v3486 = vpop.f32.mrb[0].mxu0
        %v3487 = vpop.f32.mrb[0].mxu0
        %v3488 = vpop.f32.mrb[0].mxu0
        %3489 = vdwg.mxu0
        %v3506 = vunpack.c.l.b16 %v3332
        %v3507 = vunpack.c.l.b16 %v3333
        %v3508 = vunpack.c.l.b16 %v3334
        %v3509 = vunpack.c.l.b16 %v3335
        %v3510 = vunpack.c.l.b16 %v3336
        %v3511 = vunpack.c.l.b16 %v3337
        %v3512 = vunpack.c.l.b16 %v3338
        %v3513 = vunpack.c.l.b16 %v3339
        %v3514 = vunpack.c.l.b16 %v3340
        %v3515 = vunpack.c.l.b16 %v3341
        %v3516 = vunpack.c.l.b16 %v3342
        %v3517 = vunpack.c.l.b16 %v3343
        %v3518 = vunpack.c.l.b16 %v3344
        %v3519 = vunpack.c.l.b16 %v3345
        %v3520 = vunpack.c.l.b16 %v3346
        %v3521 = vunpack.c.l.b16 %v3347
        %v3522 = vpack.c.b16 %v3507, %v3506
        %v3523 = vpack.c.b16 %v3509, %v3508
        %v3524 = vpack.c.b16 %v3511, %v3510
        %v3525 = vpack.c.b16 %v3513, %v3512
        %v3526 = vpack.c.b16 %v3515, %v3514
        %v3527 = vpack.c.b16 %v3517, %v3516
        %v3528 = vpack.c.b16 %v3519, %v3518
        %v3529 = vpack.c.b16 %v3521, %v3520
        %3538 = vmatprep.subr.bf16.mxu0 0
        %3539 = vmatpush1.bf16.msra.mxu0 %v3522
        %3540 = vmatprep.subr.bf16.mxu0 0
        %3541 = vmatpush1.bf16.msra.mxu0 %v3523
        %3542 = vmatprep.subr.bf16.mxu0 0
        %3543 = vmatpush1.bf16.msra.mxu0 %v3524
        %3544 = vmatprep.subr.bf16.mxu0 0
        %3545 = vmatpush1.bf16.msra.mxu0 %v3525
        %3546 = vmatprep.subr.bf16.mxu0 0
        %3547 = vmatpush1.bf16.msra.mxu0 %v3526
        %3548 = vmatprep.subr.bf16.mxu0 0
        %3549 = vmatpush1.bf16.msra.mxu0 %v3527
        %3550 = vmatprep.subr.bf16.mxu0 0
        %3551 = vmatpush1.bf16.msra.mxu0 %v3528
        %3552 = vmatprep.subr.bf16.mxu0 0
        %3553 = vmatpush1.bf16.msra.mxu0 %v3529
        %3554 = vmatprep.subr.bf16.mxu0 0
        %3555 = vmatpush1.bf16.msra.mxu0 0
        %3556 = vmatprep.subr.bf16.mxu0 0
        %3557 = vmatpush1.bf16.msra.mxu0 0
        %3558 = vmatprep.subr.bf16.mxu0 0
        %3559 = vmatpush1.bf16.msra.mxu0 0
        %3560 = vmatprep.subr.bf16.mxu0 0
        %3561 = vmatpush1.bf16.msra.mxu0 0
        %3562 = vmatprep.subr.bf16.mxu0 0
        %3563 = vmatpush1.bf16.msra.mxu0 0
        %3564 = vmatprep.subr.bf16.mxu0 0
        %3565 = vmatpush1.bf16.msra.mxu0 0
        %3566 = vmatprep.subr.bf16.mxu0 0
        %3567 = vmatpush1.bf16.msra.mxu0 0
        %3568 = vmatprep.subr.bf16.mxu0 0
        %3569 = vmatpush1.bf16.msra.mxu0 0
        %3570 = vmatprep.mubr.bf16.mxu0 0
        %3571 = vmatmul.mubr.bf16.gmra.mrb[0].mxu0 %v3400
        %v3572 = vpop.f32.mrb[0].mxu0
        %v3573 = vadd.f32 %v3485, %v3572
        %v3574 = vpop.f32.mrb[0].mxu0
        %v3575 = vpop.f32.mrb[0].mxu0
        %v3576 = vpop.f32.mrb[0].mxu0
        %3577 = vdwg.mxu0
        %v3578 = vpack.c.bf16 %v3399, %v3399
        %v3595 = vunpack.c.l.b16 %v3366
        %v3596 = vunpack.c.l.b16 %v3367
        %v3597 = vunpack.c.l.b16 %v3368
        %v3598 = vunpack.c.l.b16 %v3369
        %v3599 = vunpack.c.l.b16 %v3370
        %v3600 = vunpack.c.l.b16 %v3371
        %v3601 = vunpack.c.l.b16 %v3372
        %v3602 = vunpack.c.l.b16 %v3373
        %v3603 = vunpack.c.l.b16 %v3374
        %v3604 = vunpack.c.l.b16 %v3375
        %v3605 = vunpack.c.l.b16 %v3376
        %v3606 = vunpack.c.l.b16 %v3377
        %v3607 = vunpack.c.l.b16 %v3378
        %v3608 = vunpack.c.l.b16 %v3379
        %v3609 = vunpack.c.l.b16 %v3380
        %v3610 = vunpack.c.l.b16 %v3381
        %v3611 = vpack.c.b16 %v3596, %v3595
        %v3612 = vpack.c.b16 %v3598, %v3597
        %v3613 = vpack.c.b16 %v3600, %v3599
        %v3614 = vpack.c.b16 %v3602, %v3601
        %v3615 = vpack.c.b16 %v3604, %v3603
        %v3616 = vpack.c.b16 %v3606, %v3605
        %v3617 = vpack.c.b16 %v3608, %v3607
        %v3618 = vpack.c.b16 %v3610, %v3609
        %3627 = vmatprep.subr.bf16.mxu0 0
        %3628 = vmatpush1.bf16.msra.mxu0 %v3611
        %3629 = vmatprep.subr.bf16.mxu0 0
        %3630 = vmatpush1.bf16.msra.mxu0 %v3612
        %3631 = vmatprep.subr.bf16.mxu0 0
        %3632 = vmatpush1.bf16.msra.mxu0 %v3613
        %3633 = vmatprep.subr.bf16.mxu0 0
        %3634 = vmatpush1.bf16.msra.mxu0 %v3614
        %3635 = vmatprep.subr.bf16.mxu0 0
        %3636 = vmatpush1.bf16.msra.mxu0 %v3615
        %3637 = vmatprep.subr.bf16.mxu0 0
        %3638 = vmatpush1.bf16.msra.mxu0 %v3616
        %3639 = vmatprep.subr.bf16.mxu0 0
        %3640 = vmatpush1.bf16.msra.mxu0 %v3617
        %3641 = vmatprep.subr.bf16.mxu0 0
        %3642 = vmatpush1.bf16.msra.mxu0 %v3618
        %3643 = vmatprep.subr.bf16.mxu0 0
        %3644 = vmatpush1.bf16.msra.mxu0 0
        %3645 = vmatprep.subr.bf16.mxu0 0
        %3646 = vmatpush1.bf16.msra.mxu0 0
        %3647 = vmatprep.subr.bf16.mxu0 0
        %3648 = vmatpush1.bf16.msra.mxu0 0
        %3649 = vmatprep.subr.bf16.mxu0 0
        %3650 = vmatpush1.bf16.msra.mxu0 0
        %3651 = vmatprep.subr.bf16.mxu0 0
        %3652 = vmatpush1.bf16.msra.mxu0 0
        %3653 = vmatprep.subr.bf16.mxu0 0
        %3654 = vmatpush1.bf16.msra.mxu0 0
        %3655 = vmatprep.subr.bf16.mxu0 0
        %3656 = vmatpush1.bf16.msra.mxu0 0
        %3657 = vmatprep.subr.bf16.mxu0 0
        %3658 = vmatpush1.bf16.msra.mxu0 0
        %3659 = vmatprep.mubr.bf16.mxu0 0
        %3660 = vmatmul.mubr.bf16.gmra.mrb[0].mxu0 %v3578
        %v3661 = vpop.f32.mrb[0].mxu0
        %v3662 = vadd.f32 0.0, %v3661
        %v3663 = vpop.f32.mrb[0].mxu0
        %v3664 = vpop.f32.mrb[0].mxu0
        %v3665 = vpop.f32.mrb[0].mxu0
        %3666 = vdwg.mxu0
        %v3667 = vadd.f32 %v3573, %v3662
        %v3669 = vlaneseq
        %v3670 = vshrl.u32 %v3669, 7
        %v3671 = vsub.s32 0, %v3670
        %v3672 = vrot.slane %v3383, %v3671
        %v3674 = vadd.f32 %v3667, %v3672
        %v3675 = vmul.f32 %v3674, 0.1
        %v3676 = vmax.f32 %v3674, %v3675
        %s3677 = scalar_lea.vmem [#allocation12], 384
        %v3678 = vld [vmem:[%s3677] sm:$0xf]
        %v3679 = vld [vmem:[%s3677 + $0x4] sm:$0xf]
        %v3680 = vld [vmem:[%s3677 + $0x8] sm:$0xf]
        %v3681 = vld [vmem:[%s3677 + $0xc] sm:$0xf]
        %v3682 = vld [vmem:[%s3677 + $0x10] sm:$0xf]
        %v3683 = vld [vmem:[%s3677 + $0x14] sm:$0xf]
        %v3684 = vld [vmem:[%s3677 + $0x18] sm:$0xf]
        %v3685 = vld [vmem:[%s3677 + $0x1c] sm:$0xf]
        %v3686 = vld [vmem:[%s3677 + $0x20] sm:$0xf]
        %v3687 = vld [vmem:[%s3677 + $0x24] sm:$0xf]
        %v3688 = vld [vmem:[%s3677 + $0x28] sm:$0xf]
        %v3689 = vld [vmem:[%s3677 + $0x2c] sm:$0xf]
        %v3690 = vld [vmem:[%s3677 + $0x30] sm:$0xf]
        %v3691 = vld [vmem:[%s3677 + $0x34] sm:$0xf]
        %v3692 = vld [vmem:[%s3677 + $0x38] sm:$0xf]
        %v3693 = vld [vmem:[%s3677 + $0x3c] sm:$0xf]
        %s3694 = scalar_lea.vmem [#allocation12], 448
        %v3695 = vld [vmem:[%s3694] sm:$0xf]
        %v3696 = vld [vmem:[%s3694 + $0x4] sm:$0xf]
        %v3697 = vld [vmem:[%s3694 + $0x8] sm:$0xf]
        %v3698 = vld [vmem:[%s3694 + $0xc] sm:$0xf]
        %v3699 = vld [vmem:[%s3694 + $0x10] sm:$0xf]
        %v3700 = vld [vmem:[%s3694 + $0x14] sm:$0xf]
        %v3701 = vld [vmem:[%s3694 + $0x18] sm:$0xf]
        %v3702 = vld [vmem:[%s3694 + $0x1c] sm:$0xf]
        %v3703 = vld [vmem:[%s3694 + $0x20] sm:$0xf]
        %v3704 = vld [vmem:[%s3694 + $0x24] sm:$0xf]
        %v3705 = vld [vmem:[%s3694 + $0x28] sm:$0xf]
        %v3706 = vld [vmem:[%s3694 + $0x2c] sm:$0xf]
        %v3707 = vld [vmem:[%s3694 + $0x30] sm:$0xf]
        %v3708 = vld [vmem:[%s3694 + $0x34] sm:$0xf]
        %v3709 = vld [vmem:[%s3694 + $0x38] sm:$0xf]
        %v3710 = vld [vmem:[%s3694 + $0x3c] sm:$0xf]
        %s3711 = scalar_lea.vmem [#allocation12], 512
        %v3712 = vld [vmem:[%s3711] sm:$0xf]
        %v3713 = vld [vmem:[%s3711 + $0x4] sm:$0xf]
        %v3714 = vld [vmem:[%s3711 + $0x8] sm:$0xf]
        %v3715 = vld [vmem:[%s3711 + $0xc] sm:$0xf]
        %v3716 = vld [vmem:[%s3711 + $0x10] sm:$0xf]
        %v3717 = vld [vmem:[%s3711 + $0x14] sm:$0xf]
        %v3718 = vld [vmem:[%s3711 + $0x18] sm:$0xf]
        %v3719 = vld [vmem:[%s3711 + $0x1c] sm:$0xf]
        %v3720 = vld [vmem:[%s3711 + $0x20] sm:$0xf]
        %v3721 = vld [vmem:[%s3711 + $0x24] sm:$0xf]
        %v3722 = vld [vmem:[%s3711 + $0x28] sm:$0xf]
        %v3723 = vld [vmem:[%s3711 + $0x2c] sm:$0xf]
        %v3724 = vld [vmem:[%s3711 + $0x30] sm:$0xf]
        %v3725 = vld [vmem:[%s3711 + $0x34] sm:$0xf]
        %v3726 = vld [vmem:[%s3711 + $0x38] sm:$0xf]
        %v3727 = vld [vmem:[%s3711 + $0x3c] sm:$0xf]
        %s3728 = scalar_lea.vmem %s11, 2
        %v3729 = vld [vmem:[%s3728] sm:$0x1]
        %v3730 = vrot.slane %v3676, 4
        %v3731 = vsel %vm3384, %v3730, %v3676
        %v3732 = vrot.slane %v3731, 4
        %v3733 = vsel %vm3384, %v3732, %v3676
        %v3735 = vrot.slane %v3733, 3
        %v3737 = vsel %vm3390, %v3735, 0.0
        %v3738 = vrot.slane %v3733, 1
        %v3740 = vsel %vm3396, %v3738, 0.0
        %v3741 = vpack.c.bf16 %v3737, %v3737
        %v3742 = vpack.c.bf16 %v3676, %v3676
        %v3759 = vunpack.c.l.b16 %v3695
        %v3760 = vunpack.c.l.b16 %v3696
        %v3761 = vunpack.c.l.b16 %v3697
        %v3762 = vunpack.c.l.b16 %v3698
        %v3763 = vunpack.c.l.b16 %v3699
        %v3764 = vunpack.c.l.b16 %v3700
        %v3765 = vunpack.c.l.b16 %v3701
        %v3766 = vunpack.c.l.b16 %v3702
        %v3767 = vunpack.c.l.b16 %v3703
        %v3768 = vunpack.c.l.b16 %v3704
        %v3769 = vunpack.c.l.b16 %v3705
        %v3770 = vunpack.c.l.b16 %v3706
        %v3771 = vunpack.c.l.b16 %v3707
        %v3772 = vunpack.c.l.b16 %v3708
        %v3773 = vunpack.c.l.b16 %v3709
        %v3774 = vunpack.c.l.b16 %v3710
        %v3775 = vpack.c.b16 %v3760, %v3759
        %v3776 = vpack.c.b16 %v3762, %v3761
        %v3777 = vpack.c.b16 %v3764, %v3763
        %v3778 = vpack.c.b16 %v3766, %v3765
        %v3779 = vpack.c.b16 %v3768, %v3767
        %v3780 = vpack.c.b16 %v3770, %v3769
        %v3781 = vpack.c.b16 %v3772, %v3771
        %v3782 = vpack.c.b16 %v3774, %v3773
        %3791 = vmatprep.subr.bf16.mxu0 0
        %3792 = vmatpush1.bf16.msra.mxu0 %v3775
        %3793 = vmatprep.subr.bf16.mxu0 0
        %3794 = vmatpush1.bf16.msra.mxu0 %v3776
        %3795 = vmatprep.subr.bf16.mxu0 0
        %3796 = vmatpush1.bf16.msra.mxu0 %v3777
        %3797 = vmatprep.subr.bf16.mxu0 0
        %3798 = vmatpush1.bf16.msra.mxu0 %v3778
        %3799 = vmatprep.subr.bf16.mxu0 0
        %3800 = vmatpush1.bf16.msra.mxu0 %v3779
        %3801 = vmatprep.subr.bf16.mxu0 0
        %3802 = vmatpush1.bf16.msra.mxu0 %v3780
        %3803 = vmatprep.subr.bf16.mxu0 0
        %3804 = vmatpush1.bf16.msra.mxu0 %v3781
        %3805 = vmatprep.subr.bf16.mxu0 0
        %3806 = vmatpush1.bf16.msra.mxu0 %v3782
        %3807 = vmatprep.subr.bf16.mxu0 0
        %3808 = vmatpush1.bf16.msra.mxu0 0
        %3809 = vmatprep.subr.bf16.mxu0 0
        %3810 = vmatpush1.bf16.msra.mxu0 0
        %3811 = vmatprep.subr.bf16.mxu0 0
        %3812 = vmatpush1.bf16.msra.mxu0 0
        %3813 = vmatprep.subr.bf16.mxu0 0
        %3814 = vmatpush1.bf16.msra.mxu0 0
        %3815 = vmatprep.subr.bf16.mxu0 0
        %3816 = vmatpush1.bf16.msra.mxu0 0
        %3817 = vmatprep.subr.bf16.mxu0 0
        %3818 = vmatpush1.bf16.msra.mxu0 0
        %3819 = vmatprep.subr.bf16.mxu0 0
        %3820 = vmatpush1.bf16.msra.mxu0 0
        %3821 = vmatprep.subr.bf16.mxu0 0
        %3822 = vmatpush1.bf16.msra.mxu0 0
        %3823 = vmatprep.mubr.bf16.mxu0 0
        %3824 = vmatmul.mubr.bf16.gmra.mrb[0].mxu0 %v3742
        %v3825 = vpop.f32.mrb[0].mxu0
        %v3826 = vadd.f32 0.0, %v3825
        %v3827 = vpop.f32.mrb[0].mxu0
        %v3828 = vpop.f32.mrb[0].mxu0
        %v3829 = vpop.f32.mrb[0].mxu0
        %3830 = vdwg.mxu0
        %v3847 = vunpack.c.l.b16 %v3678
        %v3848 = vunpack.c.l.b16 %v3679
        %v3849 = vunpack.c.l.b16 %v3680
        %v3850 = vunpack.c.l.b16 %v3681
        %v3851 = vunpack.c.l.b16 %v3682
        %v3852 = vunpack.c.l.b16 %v3683
        %v3853 = vunpack.c.l.b16 %v3684
        %v3854 = vunpack.c.l.b16 %v3685
        %v3855 = vunpack.c.l.b16 %v3686
        %v3856 = vunpack.c.l.b16 %v3687
        %v3857 = vunpack.c.l.b16 %v3688
        %v3858 = vunpack.c.l.b16 %v3689
        %v3859 = vunpack.c.l.b16 %v3690
        %v3860 = vunpack.c.l.b16 %v3691
        %v3861 = vunpack.c.l.b16 %v3692
        %v3862 = vunpack.c.l.b16 %v3693
        %v3863 = vpack.c.b16 %v3848, %v3847
        %v3864 = vpack.c.b16 %v3850, %v3849
        %v3865 = vpack.c.b16 %v3852, %v3851
        %v3866 = vpack.c.b16 %v3854, %v3853
        %v3867 = vpack.c.b16 %v3856, %v3855
        %v3868 = vpack.c.b16 %v3858, %v3857
        %v3869 = vpack.c.b16 %v3860, %v3859
        %v3870 = vpack.c.b16 %v3862, %v3861
        %3879 = vmatprep.subr.bf16.mxu0 0
        %3880 = vmatpush1.bf16.msra.mxu0 %v3863
        %3881 = vmatprep.subr.bf16.mxu0 0
        %3882 = vmatpush1.bf16.msra.mxu0 %v3864
        %3883 = vmatprep.subr.bf16.mxu0 0
        %3884 = vmatpush1.bf16.msra.mxu0 %v3865
        %3885 = vmatprep.subr.bf16.mxu0 0
        %3886 = vmatpush1.bf16.msra.mxu0 %v3866
        %3887 = vmatprep.subr.bf16.mxu0 0
        %3888 = vmatpush1.bf16.msra.mxu0 %v3867
        %3889 = vmatprep.subr.bf16.mxu0 0
        %3890 = vmatpush1.bf16.msra.mxu0 %v3868
        %3891 = vmatprep.subr.bf16.mxu0 0
        %3892 = vmatpush1.bf16.msra.mxu0 %v3869
        %3893 = vmatprep.subr.bf16.mxu0 0
        %3894 = vmatpush1.bf16.msra.mxu0 %v3870
        %3895 = vmatprep.subr.bf16.mxu0 0
        %3896 = vmatpush1.bf16.msra.mxu0 0
        %3897 = vmatprep.subr.bf16.mxu0 0
        %3898 = vmatpush1.bf16.msra.mxu0 0
        %3899 = vmatprep.subr.bf16.mxu0 0
        %3900 = vmatpush1.bf16.msra.mxu0 0
        %3901 = vmatprep.subr.bf16.mxu0 0
        %3902 = vmatpush1.bf16.msra.mxu0 0
        %3903 = vmatprep.subr.bf16.mxu0 0
        %3904 = vmatpush1.bf16.msra.mxu0 0
        %3905 = vmatprep.subr.bf16.mxu0 0
        %3906 = vmatpush1.bf16.msra.mxu0 0
        %3907 = vmatprep.subr.bf16.mxu0 0
        %3908 = vmatpush1.bf16.msra.mxu0 0
        %3909 = vmatprep.subr.bf16.mxu0 0
        %3910 = vmatpush1.bf16.msra.mxu0 0
        %3911 = vmatprep.mubr.bf16.mxu0 0
        %3912 = vmatmul.mubr.bf16.gmra.mrb[0].mxu0 %v3741
        %v3913 = vpop.f32.mrb[0].mxu0
        %v3914 = vadd.f32 %v3826, %v3913
        %v3915 = vpop.f32.mrb[0].mxu0
        %v3916 = vpop.f32.mrb[0].mxu0
        %v3917 = vpop.f32.mrb[0].mxu0
        %3918 = vdwg.mxu0
        %v3919 = vpack.c.bf16 %v3740, %v3740
        %v3936 = vunpack.c.l.b16 %v3712
        %v3937 = vunpack.c.l.b16 %v3713
        %v3938 = vunpack.c.l.b16 %v3714
        %v3939 = vunpack.c.l.b16 %v3715
        %v3940 = vunpack.c.l.b16 %v3716
        %v3941 = vunpack.c.l.b16 %v3717
        %v3942 = vunpack.c.l.b16 %v3718
        %v3943 = vunpack.c.l.b16 %v3719
        %v3944 = vunpack.c.l.b16 %v3720
        %v3945 = vunpack.c.l.b16 %v3721
        %v3946 = vunpack.c.l.b16 %v3722
        %v3947 = vunpack.c.l.b16 %v3723
        %v3948 = vunpack.c.l.b16 %v3724
        %v3949 = vunpack.c.l.b16 %v3725
        %v3950 = vunpack.c.l.b16 %v3726
        %v3951 = vunpack.c.l.b16 %v3727
        %v3952 = vpack.c.b16 %v3937, %v3936
        %v3953 = vpack.c.b16 %v3939, %v3938
        %v3954 = vpack.c.b16 %v3941, %v3940
        %v3955 = vpack.c.b16 %v3943, %v3942
        %v3956 = vpack.c.b16 %v3945, %v3944
        %v3957 = vpack.c.b16 %v3947, %v3946
        %v3958 = vpack.c.b16 %v3949, %v3948
        %v3959 = vpack.c.b16 %v3951, %v3950
        %3968 = vmatprep.subr.bf16.mxu0 0
        %3969 = vmatpush1.bf16.msra.mxu0 %v3952
        %3970 = vmatprep.subr.bf16.mxu0 0
        %3971 = vmatpush1.bf16.msra.mxu0 %v3953
        %3972 = vmatprep.subr.bf16.mxu0 0
        %3973 = vmatpush1.bf16.msra.mxu0 %v3954
        %3974 = vmatprep.subr.bf16.mxu0 0
        %3975 = vmatpush1.bf16.msra.mxu0 %v3955
        %3976 = vmatprep.subr.bf16.mxu0 0
        %3977 = vmatpush1.bf16.msra.mxu0 %v3956
        %3978 = vmatprep.subr.bf16.mxu0 0
        %3979 = vmatpush1.bf16.msra.mxu0 %v3957
        %3980 = vmatprep.subr.bf16.mxu0 0
        %3981 = vmatpush1.bf16.msra.mxu0 %v3958
        %3982 = vmatprep.subr.bf16.mxu0 0
        %3983 = vmatpush1.bf16.msra.mxu0 %v3959
        %3984 = vmatprep.subr.bf16.mxu0 0
        %3985 = vmatpush1.bf16.msra.mxu0 0
        %3986 = vmatprep.subr.bf16.mxu0 0
        %3987 = vmatpush1.bf16.msra.mxu0 0
        %3988 = vmatprep.subr.bf16.mxu0 0
        %3989 = vmatpush1.bf16.msra.mxu0 0
        %3990 = vmatprep.subr.bf16.mxu0 0
        %3991 = vmatpush1.bf16.msra.mxu0 0
        %3992 = vmatprep.subr.bf16.mxu0 0
        %3993 = vmatpush1.bf16.msra.mxu0 0
        %3994 = vmatprep.subr.bf16.mxu0 0
        %3995 = vmatpush1.bf16.msra.mxu0 0
        %3996 = vmatprep.subr.bf16.mxu0 0
        %3997 = vmatpush1.bf16.msra.mxu0 0
        %3998 = vmatprep.subr.bf16.mxu0 0
        %3999 = vmatpush1.bf16.msra.mxu0 0
        %4000 = vmatprep.mubr.bf16.mxu0 0
        %4001 = vmatmul.mubr.bf16.gmra.mrb[0].mxu0 %v3919
        %v4002 = vpop.f32.mrb[0].mxu0
        %v4003 = vadd.f32 0.0, %v4002
        %v4004 = vpop.f32.mrb[0].mxu0
        %v4005 = vpop.f32.mrb[0].mxu0
        %v4006 = vpop.f32.mrb[0].mxu0
        %4007 = vdwg.mxu0
        %v4008 = vadd.f32 %v3914, %v4003
        %v4010 = vlaneseq
        %v4011 = vshrl.u32 %v4010, 7
        %v4012 = vsub.s32 0, %v4011
        %v4013 = vrot.slane %v3729, %v4012
        %v4015 = vadd.f32 %v4008, %v4013
        %v4016 = vpack.c.bf16 %v3314, %v3314
        %s4017 = scalar_lea.vmem [#allocation14], 128
        %v4018 = vld [vmem:[%s4017] sm:$0xf]
        %v4019 = vld [vmem:[%s4017 + $0x4] sm:$0xf]
        %v4020 = vld [vmem:[%s4017 + $0x8] sm:$0xf]
        %v4021 = vld [vmem:[%s4017 + $0xc] sm:$0xf]
        %v4022 = vld [vmem:[%s4017 + $0x10] sm:$0xf]
        %v4023 = vld [vmem:[%s4017 + $0x14] sm:$0xf]
        %v4024 = vld [vmem:[%s4017 + $0x18] sm:$0xf]
        %v4025 = vld [vmem:[%s4017 + $0x1c] sm:$0xf]
        %v4026 = vld [vmem:[%s4017 + $0x20] sm:$0xf]
        %v4027 = vld [vmem:[%s4017 + $0x24] sm:$0xf]
        %v4028 = vld [vmem:[%s4017 + $0x28] sm:$0xf]
        %v4029 = vld [vmem:[%s4017 + $0x2c] sm:$0xf]
        %v4030 = vld [vmem:[%s4017 + $0x30] sm:$0xf]
        %v4031 = vld [vmem:[%s4017 + $0x34] sm:$0xf]
        %v4032 = vld [vmem:[%s4017 + $0x38] sm:$0xf]
        %v4033 = vld [vmem:[%s4017 + $0x3c] sm:$0xf]
        %s4034 = scalar_lea.vmem %s13, 2
        %v4035 = vld [vmem:[%s4034] sm:$0x1]
        %v4037 = vlaneseq
        %v4038 = vshrl.u32 %v4037, 7
        %v4039 = vsub.s32 0, %v4038
        %v4040 = vrot.slane %v4035, %v4039
        %v4058 = vunpack.c.l.b16 %v4018
        %v4059 = vunpack.c.l.b16 %v4019
        %v4060 = vunpack.c.l.b16 %v4020
        %v4061 = vunpack.c.l.b16 %v4021
        %v4062 = vunpack.c.l.b16 %v4022
        %v4063 = vunpack.c.l.b16 %v4023
        %v4064 = vunpack.c.l.b16 %v4024
        %v4065 = vunpack.c.l.b16 %v4025
        %v4066 = vunpack.c.l.b16 %v4026
        %v4067 = vunpack.c.l.b16 %v4027
        %v4068 = vunpack.c.l.b16 %v4028
        %v4069 = vunpack.c.l.b16 %v4029
        %v4070 = vunpack.c.l.b16 %v4030
        %v4071 = vunpack.c.l.b16 %v4031
        %v4072 = vunpack.c.l.b16 %v4032
        %v4073 = vunpack.c.l.b16 %v4033
        %v4074 = vpack.c.b16 %v4059, %v4058
        %v4075 = vpack.c.b16 %v4061, %v4060
        %v4076 = vpack.c.b16 %v4063, %v4062
        %v4077 = vpack.c.b16 %v4065, %v4064
        %v4078 = vpack.c.b16 %v4067, %v4066
        %v4079 = vpack.c.b16 %v4069, %v4068
        %v4080 = vpack.c.b16 %v4071, %v4070
        %v4081 = vpack.c.b16 %v4073, %v4072
        %4090 = vmatprep.subr.bf16.mxu0 0
        %4091 = vmatpush1.bf16.msra.mxu0 %v4074
        %4092 = vmatprep.subr.bf16.mxu0 0
        %4093 = vmatpush1.bf16.msra.mxu0 %v4075
        %4094 = vmatprep.subr.bf16.mxu0 0
        %4095 = vmatpush1.bf16.msra.mxu0 %v4076
        %4096 = vmatprep.subr.bf16.mxu0 0
        %4097 = vmatpush1.bf16.msra.mxu0 %v4077
        %4098 = vmatprep.subr.bf16.mxu0 0
        %4099 = vmatpush1.bf16.msra.mxu0 %v4078
        %4100 = vmatprep.subr.bf16.mxu0 0
        %4101 = vmatpush1.bf16.msra.mxu0 %v4079
        %4102 = vmatprep.subr.bf16.mxu0 0
        %4103 = vmatpush1.bf16.msra.mxu0 %v4080
        %4104 = vmatprep.subr.bf16.mxu0 0
        %4105 = vmatpush1.bf16.msra.mxu0 %v4081
        %4106 = vmatprep.subr.bf16.mxu0 0
        %4107 = vmatpush1.bf16.msra.mxu0 0
        %4108 = vmatprep.subr.bf16.mxu0 0
        %4109 = vmatpush1.bf16.msra.mxu0 0
        %4110 = vmatprep.subr.bf16.mxu0 0
        %4111 = vmatpush1.bf16.msra.mxu0 0
        %4112 = vmatprep.subr.bf16.mxu0 0
        %4113 = vmatpush1.bf16.msra.mxu0 0
        %4114 = vmatprep.subr.bf16.mxu0 0
        %4115 = vmatpush1.bf16.msra.mxu0 0
        %4116 = vmatprep.subr.bf16.mxu0 0
        %4117 = vmatpush1.bf16.msra.mxu0 0
        %4118 = vmatprep.subr.bf16.mxu0 0
        %4119 = vmatpush1.bf16.msra.mxu0 0
        %4120 = vmatprep.subr.bf16.mxu0 0
        %4121 = vmatpush1.bf16.msra.mxu0 0
        %4122 = vmatprep.mubr.bf16.mxu0 0
        %4123 = vmatmul.mubr.bf16.gmra.mrb[0].mxu0 %v4016
        %v4124 = vpop.f32.mrb[0].mxu0
        %v4125 = vadd.f32 %v4040, %v4124
        %v4126 = vpop.f32.mrb[0].mxu0
        %v4127 = vpop.f32.mrb[0].mxu0
        %v4128 = vpop.f32.mrb[0].mxu0
        %4129 = vdwg.mxu0
        %v4130 = vadd.f32 %v4015, %v4125
        %4131 = vst [vmem:[#allocation2] sm:$0xf] %v4130
        %v4132 = vld [vmem:[#allocation2] ss:$2 sm:$0x3]
        %v4133 = vld [vmem:[%s1650] ss:$2 sm:$0x3]
        %v4134 = vadd.f32 %v4132, %v4133
        %v4135 = vmul.f32 %v4134, 0.5
        %v4136 = vmul.f32 %v4135, 0.1
        %v4137 = vmax.f32 %v4135, %v4136
        %v4138 = vld [vmem:[%s1] sm:$0x1]
        %vm4139 = vcmask 15360
        %v4141 = vsel %vm4139, %v4138, 0
        %vm4143 = vcmask 1041408
        %v4145 = vsel %vm4143, %v4137, 0
        %4147 = vmatprep.subr.mxu0 0.0
        %4148 = vmatpush1.msra.mxu0 %v4145
        %4149 = vmatprep.subr.mxu0 0.0
        %4150 = vmatpush1.msra.mxu0 0.0
        %4151 = vmatprep.subr.mxu0 0.0
        %4152 = vmatpush1.msra.mxu0 0.0
        %4153 = vmatprep.subr.mxu0 0.0
        %4154 = vmatpush1.msra.mxu0 0.0
        %4155 = vmatprep.subr.mxu0 0.0
        %4156 = vmatpush1.msra.mxu0 0.0
        %4157 = vmatprep.subr.mxu0 0.0
        %4158 = vmatpush1.msra.mxu0 0.0
        %4159 = vmatprep.subr.mxu0 0.0
        %4160 = vmatpush1.msra.mxu0 0.0
        %4161 = vmatprep.subr.mxu0 0.0
        %4162 = vmatpush1.msra.mxu0 0.0
        %4163 = vmatprep.subr.mxu0 0.0
        %4164 = vmatpush1.msra.mxu0 0.0
        %4165 = vmatprep.subr.mxu0 0.0
        %4166 = vmatpush1.msra.mxu0 0.0
        %4167 = vmatprep.subr.mxu0 0.0
        %4168 = vmatpush1.msra.mxu0 0.0
        %4169 = vmatprep.subr.mxu0 0.0
        %4170 = vmatpush1.msra.mxu0 0.0
        %4171 = vmatprep.subr.mxu0 0.0
        %4172 = vmatpush1.msra.mxu0 0.0
        %4173 = vmatprep.subr.mxu0 0.0
        %4174 = vmatpush1.msra.mxu0 0.0
        %4175 = vmatprep.subr.mxu0 0.0
        %4176 = vmatpush1.msra.mxu0 0.0
        %4177 = vmatprep.subr.mxu0 0.0
        %4178 = vmatpush1.msra.mxu0 0.0
        %4179 = vmatprep.subr.mxu0 0.0
        %4180 = vmatpush1.msra.mxu0 0.0
        %4181 = vmatprep.subr.mxu0 0.0
        %4182 = vmatpush1.msra.mxu0 0.0
        %4183 = vmatprep.subr.mxu0 0.0
        %4184 = vmatpush1.msra.mxu0 0.0
        %4185 = vmatprep.subr.mxu0 0.0
        %4186 = vmatpush1.msra.mxu0 0.0
        %4187 = vmatprep.subr.mxu0 0.0
        %4188 = vmatpush1.msra.mxu0 0.0
        %4189 = vmatprep.subr.mxu0 0.0
        %4190 = vmatpush1.msra.mxu0 0.0
        %4191 = vmatprep.subr.mxu0 0.0
        %4192 = vmatpush1.msra.mxu0 0.0
        %4193 = vmatprep.subr.mxu0 0.0
        %4194 = vmatpush1.msra.mxu0 0.0
        %4195 = vmatprep.subr.mxu0 0.0
        %4196 = vmatpush1.msra.mxu0 0.0
        %4197 = vmatprep.subr.mxu0 0.0
        %4198 = vmatpush1.msra.mxu0 0.0
        %4199 = vmatprep.subr.mxu0 0.0
        %4200 = vmatpush1.msra.mxu0 0.0
        %4201 = vmatprep.subr.mxu0 0.0
        %4202 = vmatpush1.msra.mxu0 0.0
        %4203 = vmatprep.subr.mxu0 0.0
        %4204 = vmatpush1.msra.mxu0 0.0
        %4205 = vmatprep.subr.mxu0 0.0
        %4206 = vmatpush1.msra.mxu0 0.0
        %4207 = vmatprep.subr.mxu0 0.0
        %4208 = vmatpush1.msra.mxu0 0.0
        %4209 = vmatprep.subr.mxu0 0.0
        %4210 = vmatpush1.msra.mxu0 0.0
        %4211 = vmatprep.mubr.f32.mxu0 0.0
        %4212 = vmatmul.mubr.f32.gmra.mrb[0].mxu0 %v4141
        %v4213 = vpop.f32.mrb[0].mxu0
        %v4214 = vadd.f32 0.0, %v4213
        %v4215 = vpop.f32.mrb[0].mxu0
        %4216 = vdwg.mxu0
        %v4217 = vld [vmem:[#allocation15] sm:$0xff]
        %v4218 = vld [vmem:[#allocation15 + $0x8] sm:$0xff]
        %v4219 = vld [vmem:[#allocation15 + $0x10] sm:$0xff]
        %v4220 = vld [vmem:[#allocation15 + $0x18] sm:$0xff]
        %v4221 = vld [vmem:[#allocation15 + $0x20] sm:$0xff]
        %v4222 = vld [vmem:[#allocation15 + $0x28] sm:$0xff]
        %v4223 = vld [vmem:[#allocation15 + $0x30] sm:$0xff]
        %v4224 = vld [vmem:[#allocation15 + $0x38] sm:$0xff]
        %v4225 = vld [vmem:[#allocation15 + $0x40] sm:$0xff]
        %v4226 = vld [vmem:[#allocation15 + $0x48] sm:$0xff]
        %v4227 = vld [vmem:[#allocation15 + $0x50] sm:$0xff]
        %v4228 = vld [vmem:[#allocation15 + $0x58] sm:$0xff]
        %v4229 = vld [vmem:[#allocation15 + $0x60] sm:$0xff]
        %v4230 = vld [vmem:[#allocation15 + $0x68] sm:$0xff]
        %v4231 = vld [vmem:[#allocation15 + $0x70] sm:$0xff]
        %v4232 = vld [vmem:[#allocation15 + $0x78] sm:$0xff]
        %v4233 = vld [vmem:[%s15] sm:$0x1]
        %4234 = vmatprep.subr.mxu0 0.0
        %4235 = vmatpush1.msra.mxu0 %v4217
        %4236 = vmatprep.subr.mxu0 0.0
        %4237 = vmatpush1.msra.mxu0 %v4218
        %4238 = vmatprep.subr.mxu0 0.0
        %4239 = vmatpush1.msra.mxu0 %v4219
        %4240 = vmatprep.subr.mxu0 0.0
        %4241 = vmatpush1.msra.mxu0 %v4220
        %4242 = vmatprep.subr.mxu0 0.0
        %4243 = vmatpush1.msra.mxu0 %v4221
        %4244 = vmatprep.subr.mxu0 0.0
        %4245 = vmatpush1.msra.mxu0 %v4222
        %4246 = vmatprep.subr.mxu0 0.0
        %4247 = vmatpush1.msra.mxu0 %v4223
        %4248 = vmatprep.subr.mxu0 0.0
        %4249 = vmatpush1.msra.mxu0 %v4224
        %4250 = vmatprep.subr.mxu0 0.0
        %4251 = vmatpush1.msra.mxu0 %v4225
        %4252 = vmatprep.subr.mxu0 0.0
        %4253 = vmatpush1.msra.mxu0 %v4226
        %4254 = vmatprep.subr.mxu0 0.0
        %4255 = vmatpush1.msra.mxu0 %v4227
        %4256 = vmatprep.subr.mxu0 0.0
        %4257 = vmatpush1.msra.mxu0 %v4228
        %4258 = vmatprep.subr.mxu0 0.0
        %4259 = vmatpush1.msra.mxu0 %v4229
        %4260 = vmatprep.subr.mxu0 0.0
        %4261 = vmatpush1.msra.mxu0 %v4230
        %4262 = vmatprep.subr.mxu0 0.0
        %4263 = vmatpush1.msra.mxu0 %v4231
        %4264 = vmatprep.subr.mxu0 0.0
        %4265 = vmatpush1.msra.mxu0 %v4232
        %4266 = vmatprep.subr.mxu0 0.0
        %4267 = vmatpush1.msra.mxu0 0.0
        %4268 = vmatprep.subr.mxu0 0.0
        %4269 = vmatpush1.msra.mxu0 0.0
        %4270 = vmatprep.subr.mxu0 0.0
        %4271 = vmatpush1.msra.mxu0 0.0
        %4272 = vmatprep.subr.mxu0 0.0
        %4273 = vmatpush1.msra.mxu0 0.0
        %4274 = vmatprep.subr.mxu0 0.0
        %4275 = vmatpush1.msra.mxu0 0.0
        %4276 = vmatprep.subr.mxu0 0.0
        %4277 = vmatpush1.msra.mxu0 0.0
        %4278 = vmatprep.subr.mxu0 0.0
        %4279 = vmatpush1.msra.mxu0 0.0
        %4280 = vmatprep.subr.mxu0 0.0
        %4281 = vmatpush1.msra.mxu0 0.0
        %4282 = vmatprep.subr.mxu0 0.0
        %4283 = vmatpush1.msra.mxu0 0.0
        %4284 = vmatprep.subr.mxu0 0.0
        %4285 = vmatpush1.msra.mxu0 0.0
        %4286 = vmatprep.subr.mxu0 0.0
        %4287 = vmatpush1.msra.mxu0 0.0
        %4288 = vmatprep.subr.mxu0 0.0
        %4289 = vmatpush1.msra.mxu0 0.0
        %4290 = vmatprep.subr.mxu0 0.0
        %4291 = vmatpush1.msra.mxu0 0.0
        %4292 = vmatprep.subr.mxu0 0.0
        %4293 = vmatpush1.msra.mxu0 0.0
        %4294 = vmatprep.subr.mxu0 0.0
        %4295 = vmatpush1.msra.mxu0 0.0
        %4296 = vmatprep.subr.mxu0 0.0
        %4297 = vmatpush1.msra.mxu0 0.0
        %4298 = vmatprep.mubr.f32.mxu0 0.0
        %4299 = vmatmul.mubr.f32.gmra.mrb[0].mxu0 %v4214
        %v4300 = vpop.f32.mrb[0].mxu0
        %v4301 = vadd.f32 %v4233, %v4300
        %v4302 = vpop.f32.mrb[0].mxu0
        %4303 = vdwg.mxu0
        %4304 = vst [vmem:[%s640] sm:$0x1] %v4301
        %s4305 = sand.u32 %s386, 1
        %s4306 = scalar_lea.sflag [#allocation5], %s4305
        %s4307 = sand.u32 %s386, 1
        %s4308 = scalar_lea.vmem [#allocation17], %s4307
        // Predicated region
        $region117: #{tpu_custom_call.1} parent=83 // pred_check
          %p4309 = pneg %p396
        $region118: #{tpu_custom_call.1} parent=83 // pred_check_branch
          %4311 = sbr.rel (%p4309) target = $region120
        $region119: #{tpu_custom_call.1} parent=83 // pred_region
          %s4313 = ssub.s32 16, 16
          %4314 = vsyncadd %s4306, %s4313
          %s4315 = smul.addr %s37, 16
          %s4316 = scalar_lea.hbm %s16, %s4315
          %s4318 = sshll.u32 %s4308, 4
          %s4319 = int_to_ptr.vmem [resolvable:$true] %s4318
          %4321 = dma.vmem_to_hbm [thread:$0]  %s4319, 16, %s4316, %s4306
        $region120: #{tpu_custom_call.1} parent=83 // pred_fallthru
          _
      $region84: #{tpu_custom_call.1} parent=5 // pred_fallthru
        _
      %p4322 = scmp.le.s32.totalorder 2, %s32
      // Predicated region
      $region121: #{tpu_custom_call.1} parent=5 // pred_check
        %p4323 = pneg %p4322
      $region122: #{tpu_custom_call.1} parent=5 // pred_check_branch
        %4325 = sbr.rel (%p4323) target = $region124
      $region123: #{tpu_custom_call.1} parent=5 // pred_region
        %s4326 = ssub.s32 %s32, 2
        // Predicated region
        $region125: #{tpu_custom_call.1} parent=123 // pred_check
          %p4327 = pneg %p402
        $region126: #{tpu_custom_call.1} parent=123 // pred_check_branch
          %4329 = sbr.rel (%p4327) target = $region128
        $region127: #{tpu_custom_call.1} parent=123 // pred_region
          %s4330 = sand.u32 %s387, 1
          %s4331 = scalar_lea.sflag [#allocation5], %s4330
          %s4332 = sand.u32 %s387, 1
          %s4333 = scalar_lea.vmem [#allocation17], %s4332
          %4334 = dma.done %s4331, 16
        $region128: #{tpu_custom_call.1} parent=123 // pred_fallthru
          _
      $region124: #{tpu_custom_call.1} parent=5 // pred_fallthru
        _
    $region6: #{tpu_custom_call.1} parent=1 // loop_footer
      %s36 = sadd.s32 1, %s32
    $region7: #{tpu_custom_call.1} parent=1 // loop_footer_branch
      %31 = sbr.rel target = $region3
    $region8: #{tpu_custom_call.1} parent=1 // loop_exit
      _
    %4335 = vsyncpa [#allocation4], 1
    %s4336 = scalar_lea.sflag [#allocation4], 1
    %4337 = vsyncpa %s4336, 1
    %4338 = vsyncpa [#allocation7], 1
    %4339 = vsyncpa [#allocation10], 1
    %4340 = vsyncpa [#allocation13], 1
    %4341 = vsyncpa [#allocation16], 1
    %4342 = vsyncpa [#allocation5], 1
    %s4343 = scalar_lea.sflag [#allocation5], 1
    %4344 = vsyncpa %s4343, 1

</llo_original>
